<compile_context>
chip_gen: v6e
topology: v6e:2x2x1
jax: 0.10.0
libtpu: 0.0.40
codegen_flags: <defaults>
</compile_context>

<pallas_src>
import functools

import numpy as np
import jax
import jax.numpy as jnp
from jax import lax
from jax.experimental import pallas as pl
from jax.experimental.pallas import tpu as pltpu


MXU_DTYPE = jnp.bfloat16            # MXU operands; accumulation is always f32
LEAKY_SLOPE = 0.2
BN_EPS = 1e-5
VMEM_LIMIT_BYTES = 32 * 1024 * 1024  # safe on v5e/v6e (128 MiB) and v7x (64 MiB)


def _tensorcores_per_chip():
    """Best-effort TensorCores-per-chip (v4/v5p/v7x = 2, v5e/v6e = 1)."""
    try:
        kind = jax.devices()[0].device_kind.lower()
    except Exception:
        return 1
    if "v7" in kind or "v4" in kind or "v5p" in kind:
        return 2
    return 1


_TC_COUNT = _tensorcores_per_chip()


# ----------------------------------------------------------------------------
# Pallas kernels.  Layout: rows = channels, cols = N*Do*Ho*Wo (lane-dense
# stores, BN statistics = lane-direction reductions).
# ----------------------------------------------------------------------------
def _conv_act_kernel(w_ref, p_ref, b_ref, o_ref, *, slope):
    """o = leaky_relu(W @ patchesT + b)   (DownSampleConv, no BatchNorm)."""
    acc = jnp.dot(w_ref[...], p_ref[...], preferred_element_type=jnp.float32)
    acc = acc + b_ref[...]                       # (Cout, 1) broadcasts over M
    o_ref[...] = jnp.where(acc >= 0.0, acc, slope * acc).astype(o_ref.dtype)


def _fused_tail_kernel(w2_ref, p2_ref, g2_ref, bt2_ref,
                       w3_ref, s_ref, g3_ref, bt3_ref, wl_ref, bl_ref,
                       o_ref, p3_ref, *, eps, slope, n_batch, s3, c2, n_taps):
    """d2(conv+BN+leaky) -> in-VMEM im2col -> d3(conv+BN+leaky) -> Linear.

    Conv biases are omitted on purpose: a per-channel bias added before
    training-mode BatchNorm is exactly cancelled by the mean subtraction.
    """
    # ---------------- d2: Conv3d -> BatchNorm(train) -> LeakyReLU ----------
    acc2 = jnp.dot(w2_ref[...], p2_ref[...], preferred_element_type=jnp.float32)
    mu2 = jnp.mean(acc2, axis=1, keepdims=True)
    var2 = jnp.mean(jnp.square(acc2 - mu2), axis=1, keepdims=True)
    h2 = (acc2 - mu2) * lax.rsqrt(var2 + eps) * g2_ref[...] + bt2_ref[...]
    h2 = jnp.where(h2 >= 0.0, h2, slope * h2).astype(MXU_DTYPE)   # (C2, M2)

    # -------- in-kernel im2col for d3: stride-2 gather as 0/1 matmuls ------
    # p3 row order is (tap k, in-channel ci); w3_ref is pre-permuted to match.
    for k in range(n_taps):
        p3_ref[k * c2:(k + 1) * c2, :] = jnp.dot(
            h2, s_ref[k], preferred_element_type=jnp.float32)

    # ---------------- d3: Conv3d -> BatchNorm(train) -> LeakyReLU ----------
    acc3 = jnp.dot(w3_ref[...], p3_ref[...].astype(MXU_DTYPE),
                   preferred_element_type=jnp.float32)            # (C3, M3)
    mu3 = jnp.mean(acc3, axis=1, keepdims=True)
    var3 = jnp.mean(jnp.square(acc3 - mu3), axis=1, keepdims=True)
    h3 = (acc3 - mu3) * lax.rsqrt(var3 + eps) * g3_ref[...] + bt3_ref[...]
    h3 = jnp.where(h3 >= 0.0, h3, slope * h3)                     # (C3, M3) f32

    # ---------------- Linear(node, 1) head ---------------------------------
    # torch flattens per sample as (c, d, h, w); columns here are (n, s).
    wl_t = jnp.concatenate([wl_ref[...]] * n_batch, axis=1)       # (C3, M3)
    colsum = jnp.sum(h3 * wl_t, axis=0, keepdims=True)            # (1, M3)
    per_sample = [jnp.sum(colsum[:, n * s3:(n + 1) * s3], axis=1, keepdims=True)
                  for n in range(n_batch)]                        # N x (1, 1)
    out = jnp.concatenate(per_sample, axis=0) + bl_ref[...]       # (N, 1)
    o_ref[...] = out.astype(o_ref.dtype)


# ----------------------------------------------------------------------------
# pallas_call wrappers
# ----------------------------------------------------------------------------
def _pick_m_tile(m, k_rows, n_cores):
    """Lane-aligned M tile: one step per TensorCore, capped for VMEM."""
    tm = m
    if n_cores > 1 and m % (n_cores * 128) == 0:
        tm = m // n_cores                 # >=2 "parallel" steps on dual-TC parts
    max_block_bytes = 8 * 1024 * 1024     # bf16 patches block, double-buffered
    while k_rows * tm * 2 > max_block_bytes and tm % 256 == 0:
        tm //= 2
    return tm


def conv_act(w_bf16, patches_bf16, b):
    cout, k = w_bf16.shape
    _, m = patches_bf16.shape
    tm = _pick_m_tile(m, k, _TC_COUNT)
    assert m % tm == 0
    kernel = functools.partial(_conv_act_kernel, slope=LEAKY_SLOPE)
    return pl.pallas_call(
        kernel,
        out_shape=jax.ShapeDtypeStruct((cout, m), MXU_DTYPE),
        grid=(m // tm,),
        in_specs=[
            pl.BlockSpec((cout, k), lambda i: (0, 0)),
            pl.BlockSpec((k, tm), lambda i: (0, i)),
            pl.BlockSpec((cout, 1), lambda i: (0, 0)),
        ],
        out_specs=pl.BlockSpec((cout, tm), lambda i: (0, i)),
        compiler_params=pltpu.CompilerParams(
            dimension_semantics=("parallel",),
            vmem_limit_bytes=VMEM_LIMIT_BYTES),
    )(w_bf16, patches_bf16, b.reshape(cout, 1))


def fused_d2_d3_linear(w2_bf16, p2_bf16, g2, bt2, w3_bf16, s_mats,
                       g3, bt3, wl_r, bl, *, n_batch, s3):
    c2, k2 = w2_bf16.shape
    _, m2 = p2_bf16.shape
    c3, k3 = w3_bf16.shape
    n_taps, _, m3 = s_mats.shape
    assert k3 == n_taps * c2
    # Single block: BN needs the whole pre-activation for exact batch stats.
    # TODO(synk): for much larger N*spatial, tile the M axis with a two-pass
    # (running-stats) BN reduction so the (k2, m2) block fits v7x's 64 MiB VMEM.
    kernel = functools.partial(
        _fused_tail_kernel, eps=BN_EPS, slope=LEAKY_SLOPE,
        n_batch=n_batch, s3=s3, c2=c2, n_taps=n_taps)
    return pl.pallas_call(
        kernel,
        out_shape=jax.ShapeDtypeStruct((n_batch, 1), jnp.float32),
        grid=(1,),
        in_specs=[
            pl.BlockSpec((c2, k2), lambda i: (0, 0)),
            pl.BlockSpec((k2, m2), lambda i: (0, 0)),
            pl.BlockSpec((c2, 1), lambda i: (0, 0)),
            pl.BlockSpec((c2, 1), lambda i: (0, 0)),
            pl.BlockSpec((c3, k3), lambda i: (0, 0)),
            pl.BlockSpec((n_taps, m2, m3), lambda i: (0, 0, 0)),
            pl.BlockSpec((c3, 1), lambda i: (0, 0)),
            pl.BlockSpec((c3, 1), lambda i: (0, 0)),
            pl.BlockSpec((c3, s3), lambda i: (0, 0)),
            pl.BlockSpec((1, 1), lambda i: (0, 0)),
        ],
        out_specs=pl.BlockSpec((n_batch, 1), lambda i: (0, 0)),
        scratch_shapes=[pltpu.VMEM((k3, m3), jnp.float32)],
        compiler_params=pltpu.CompilerParams(
            dimension_semantics=("arbitrary",),
            vmem_limit_bytes=VMEM_LIMIT_BYTES),
    )(w2_bf16, p2_bf16, g2.reshape(c2, 1), bt2.reshape(c2, 1),
      w3_bf16, s_mats, g3.reshape(c3, 1), bt3.reshape(c3, 1),
      wl_r, bl.reshape(1, 1))


# ----------------------------------------------------------------------------
# Thin XLA glue: transposed im2col for Conv3d(k=4, s=2, p=1), channels-leading.
# ----------------------------------------------------------------------------
def im2col_t(x, kernel=4, stride=2, pad=1):
    """x: (C, N, D, H, W) -> bf16 patchesT (C*k^3, N*Do*Ho*Wo).

    Row order (c, kd, kh, kw), c slowest (matches torch_w.reshape(Cout, -1));
    column order (n, do, ho, wo).
    # TODO(synk): the layer1->layer2 stride-2 window extraction stays as thin
    # XLA glue; the layer2->layer3 one is done in-kernel (gather matmuls).
    """
    x = x.astype(MXU_DTYPE)
    c, n, d, h, w = x.shape
    xp = jnp.pad(x, ((0, 0), (0, 0), (pad, pad), (pad, pad), (pad, pad)))
    do = (d + 2 * pad - kernel) // stride + 1
    ho = (h + 2 * pad - kernel) // stride + 1
    wo = (w + 2 * pad - kernel) // stride + 1
    slabs = []
    for kd in range(kernel):
        for kh in range(kernel):
            for kw in range(kernel):
                slabs.append(
                    xp[:, :,
                       kd:kd + (do - 1) * stride + 1:stride,
                       kh:kh + (ho - 1) * stride + 1:stride,
                       kw:kw + (wo - 1) * stride + 1:stride])
    p = jnp.stack(slabs, axis=1)                  # (C, k^3, N, Do, Ho, Wo)
    return p.reshape(c * kernel ** 3, n * do * ho * wo), (do, ho, wo)


def _gather_mats(n_batch, d_in, h_in, w_in, kernel=4, stride=2, pad=1):
    """0/1 matrices S[k, m_in, m_out] expressing the stride-2 im2col gather."""
    d_out = (d_in + 2 * pad - kernel) // stride + 1
    h_out = (h_in + 2 * pad - kernel) // stride + 1
    w_out = (w_in + 2 * pad - kernel) // stride + 1
    m_in = n_batch * d_in * h_in * w_in
    m_out = n_batch * d_out * h_out * w_out
    s = np.zeros((kernel ** 3, m_in, m_out), np.float32)
    for kd in range(kernel):
        for kh in range(kernel):
            for kw in range(kernel):
                k = (kd * kernel + kh) * kernel + kw
                for n in range(n_batch):
                    for do in range(d_out):
                        di = do * stride - pad + kd
                        if not 0 <= di < d_in:
                            continue
                        for ho in range(h_out):
                            hi = ho * stride - pad + kh
                            if not 0 <= hi < h_in:
                                continue
                            for wo in range(w_out):
                                wi = wo * stride - pad + kw
                                if not 0 <= wi < w_in:
                                    continue
                                mi = ((n * d_in + di) * h_in + hi) * w_in + wi
                                mo = ((n * d_out + do) * h_out + ho) * w_out + wo
                                s[k, mi, mo] = 1.0
    return jnp.asarray(s, dtype=MXU_DTYPE), (d_out, h_out, w_out)


# ----------------------------------------------------------------------------
# WasDis forward
# ----------------------------------------------------------------------------
def init_params(key, input_channels, node):
    ks = jax.random.split(key, 4)
    scale = 0.05
    return {
        "w1": scale * jax.random.normal(ks[0], (4, input_channels, 4, 4, 4), jnp.float32),
        "b1": jnp.zeros((4,), jnp.float32),
        "w2": scale * jax.random.normal(ks[1], (8, 4, 4, 4, 4), jnp.float32),
        "b2": jnp.zeros((8,), jnp.float32),    # dead: cancelled by train-mode BN
        "g2": jnp.ones((8,), jnp.float32),
        "beta2": jnp.zeros((8,), jnp.float32),
        "w3": scale * jax.random.normal(ks[2], (16, 8, 4, 4, 4), jnp.float32),
        "b3": jnp.zeros((16,), jnp.float32),   # dead: cancelled by train-mode BN
        "g3": jnp.ones((16,), jnp.float32),
        "beta3": jnp.zeros((16,), jnp.float32),
        "wl": scale * jax.random.normal(ks[3], (1, node), jnp.float32),
        "bl": jnp.zeros((1,), jnp.float32),
    }


@jax.jit
def was_dis_forward(params, x, y):
    n = x.shape[0]
    h = jnp.concatenate([x, y], axis=1)              # (N, Cin, D, H, W)
    h = jnp.transpose(h, (1, 0, 2, 3, 4))            # (Cin, N, D, H, W)
    cin = h.shape[0]

    # --- d1: Conv3d -> LeakyReLU (no BN); Cout zero-padded 4 -> 8 -----------
    p1, (d1o, h1o, w1o) = im2col_t(h)
    w1 = params["w1"].reshape(4, cin * 64)
    w1p = jnp.concatenate([w1, jnp.zeros_like(w1)], axis=0)        # (8, cin*64)
    b1p = jnp.concatenate([params["b1"], jnp.zeros((4,), jnp.float32)])
    a1 = conv_act(w1p.astype(MXU_DTYPE), p1, b1p)                  # (8, M1) bf16
    a1 = a1.reshape(8, n, d1o, h1o, w1o)

    # --- d2 + d3 + Linear(node, 1), fully fused into one pallas_call --------
    p2, (d2o, h2o, w2o) = im2col_t(a1)                             # (512, N*64)
    w2 = params["w2"].reshape(8, 4, 64)
    w2p = jnp.concatenate([w2, jnp.zeros_like(w2)], axis=1).reshape(8, 8 * 64)
    # layer-3 weight permuted to the in-kernel p3 row order (tap, channel)
    w3p = jnp.transpose(params["w3"].reshape(16, 8, 64), (0, 2, 1)).reshape(16, 512)
    s_mats, (d3o, h3o, w3o) = _gather_mats(n, d2o, h2o, w2o)
    s3 = d3o * h3o * w3o
    assert params["wl"].shape[1] == 16 * s3
    wl_r = params["wl"].reshape(16, s3)
    out = fused_d2_d3_linear(
        w2p.astype(MXU_DTYPE), p2, params["g2"], params["beta2"],
        w3p.astype(MXU_DTYPE), s_mats, params["g3"], params["beta3"],
        wl_r, params["bl"], n_batch=n, s3=s3)
    return out                                                     # (N, 1)


# ----------------------------------------------------------------------------
# Pure-JAX reference (mirrors the torch module) for validation.
# ----------------------------------------------------------------------------
def _reference_forward(params, x, y):
    def conv3d(v, w, b):
        o = lax.conv_general_dilated(
            v, w, window_strides=(2, 2, 2), padding=[(1, 1)] * 3,
            dimension_numbers=("NCDHW", "OIDHW", "NCDHW"),
            precision=lax.Precision.HIGHEST)
        return o + b.reshape(1, -1, 1, 1, 1)

    def bn_train(v, g, bta, eps=BN_EPS):
        mean = v.mean(axis=(0, 2, 3, 4), keepdims=True)
        var = jnp.square(v - mean).mean(axis=(0, 2, 3, 4), keepdims=True)
        return ((v - mean) * lax.rsqrt(var + eps) * g.reshape(1, -1, 1, 1, 1)
                + bta.reshape(1, -1, 1, 1, 1))

    def leaky(v):
        return jnp.where(v >= 0.0, v, LEAKY_SLOPE * v)

    h = jnp.concatenate([x, y], axis=1)
    h = leaky(conv3d(h, params["w1"], params["b1"]))
    h = leaky(bn_train(conv3d(h, params["w2"], params["b2"]),
                       params["g2"], params["beta2"]))
    h = leaky(bn_train(conv3d(h, params["w3"], params["b3"]),
                       params["g3"], params["beta3"]))
    flat = h.reshape(h.shape[0], -1)
    return flat @ params["wl"].T + params["bl"]


if __name__ == "__main__":
    key = jax.random.PRNGKey(0)
    kx, ky, kp = jax.random.split(key, 3)

    # Small, self-consistent shapes: each input has 2 channels -> concat = 4.
    batch, cx, cy, spatial = 2, 2, 2, 16
    x = jax.random.normal(kx, (batch, cx, spatial, spatial, spatial), jnp.float32)
    y = jax.random.normal(ky, (batch, cy, spatial, spatial, spatial), jnp.float32)

    # Spatial 16 -> 8 -> 4 -> 2, so node = 16 * 2 * 2 * 2 = 128.
    node = 16 * (spatial // 8) ** 3
    params = init_params(kp, cx + cy, node)

    out = was_dis_forward(params, x, y)
    out = jax.block_until_ready(out)
    assert out.shape == (batch, 1), out.shape
    assert bool(jnp.all(jnp.isfinite(out)))

    # Validate against the plain-XLA reference (bf16 operands/activations on
    # the MXU path -> loose tolerance).
    ref = _reference_forward(params, x, y)
    assert jnp.allclose(out, ref, atol=8e-2, rtol=8e-2), (out, ref)

    print("KERNEL_OK")
</pallas_src>

<mosaic_0001>
module attributes {stable_mosaic.version = 11 : i64} {
  func.func @_conv_act_kernel(%arg0: i32, %arg1: memref<8x256xbf16, #tpu.memory_space<vmem>>, %arg2: memref<256x1024xbf16, #tpu.memory_space<vmem>>, %arg3: memref<8x1xf32, #tpu.memory_space<vmem>>, %arg4: memref<8x1024xbf16, #tpu.memory_space<vmem>>) attributes {dimension_semantics = [#tpu.dimension_semantics<parallel>], iteration_bounds = array<i64: 1>, scalar_prefetch = 0 : i64, scratch_operands = 0 : i64, tpu.core_type = #tpu.core_type<tc>, window_params = [{pipeline_mode = #tpu.pipeline_mode<synchronous>, transform_indices = @transform_0, window_bounds = array<i64: 8, 256>}, {transform_indices = @transform_1, window_bounds = array<i64: 256, 1024>}, {pipeline_mode = #tpu.pipeline_mode<synchronous>, transform_indices = @transform_2, window_bounds = array<i64: 8, 1>}, {transform_indices = @transform_3, window_bounds = array<i64: 8, 1024>}]} {
    %c0 = arith.constant 0 : index
    %c0_0 = arith.constant 0 : index
    %0 = vector.load %arg1[%c0, %c0_0] : memref<8x256xbf16, #tpu.memory_space<vmem>>, vector<8x256xbf16>
    %c0_1 = arith.constant 0 : index
    %c0_2 = arith.constant 0 : index
    %1 = vector.load %arg2[%c0_1, %c0_2] : memref<256x1024xbf16, #tpu.memory_space<vmem>>, vector<256x1024xbf16>
    %cst = arith.constant dense<0.000000e+00> : vector<8x1024xf32>
    %2 = tpu.matmul %0, %1, %cst {dimension_numbers = #tpu.dot_dimension_numbers<[1], [0], [0], [1], [0, 0, 1, 1], [], []>} : vector<8x256xbf16>, vector<256x1024xbf16>, vector<8x1024xf32> -> vector<8x1024xf32>
    %c0_3 = arith.constant 0 : index
    %c0_4 = arith.constant 0 : index
    %3 = vector.load %arg3[%c0_3, %c0_4] : memref<8x1xf32, #tpu.memory_space<vmem>>, vector<8x1xf32>
    %4 = vector.broadcast %3 : vector<8x1xf32> to vector<8x1024xf32>
    %5 = arith.addf %2, %4 : vector<8x1024xf32>
    %cst_5 = arith.constant 0.000000e+00 : f32
    %6 = vector.broadcast %cst_5 : f32 to vector<8x1024xf32>
    %7 = arith.cmpf oge, %5, %6 : vector<8x1024xf32>
    %cst_6 = arith.constant 2.000000e-01 : f32
    %8 = vector.broadcast %cst_6 : f32 to vector<8x1024xf32>
    %9 = arith.mulf %8, %5 : vector<8x1024xf32>
    %10 = arith.select %7, %5, %9 : vector<8x1024xi1>, vector<8x1024xf32>
    %11 = arith.truncf %10 : vector<8x1024xf32> to vector<8x1024xbf16>
    %c0_7 = arith.constant 0 : index
    %c0_8 = arith.constant 0 : index
    %12 = vector.load %arg4[%c0_7, %c0_8] : memref<8x1024xbf16, #tpu.memory_space<vmem>>, vector<8x1024xbf16>
    tpu.vector_store %arg4[%c0_7, %c0_8], %11 {strides = array<i32>} : memref<8x1024xbf16, #tpu.memory_space<vmem>>, vector<8x1024xbf16>,
    return
  }
  func.func @transform_0(%arg0: i32) -> (i32, i32) {
    %c0_i32 = arith.constant 0 : i32
    %c0_i32_0 = arith.constant 0 : i32
    %c0_i32_1 = arith.constant 0 : i32
    return %c0_i32, %c0_i32_0 : i32, i32
  }
  func.func @transform_1(%arg0: i32) -> (i32, i32) {
    %c0_i32 = arith.constant 0 : i32
    %c0_i32_0 = arith.constant 0 : i32
    return %c0_i32, %arg0 : i32, i32
  }
  func.func @transform_2(%arg0: i32) -> (i32, i32) {
    %c0_i32 = arith.constant 0 : i32
    %c0_i32_0 = arith.constant 0 : i32
    %c0_i32_1 = arith.constant 0 : i32
    return %c0_i32, %c0_i32_0 : i32, i32
  }
  func.func @transform_3(%arg0: i32) -> (i32, i32) {
    %c0_i32 = arith.constant 0 : i32
    %c0_i32_0 = arith.constant 0 : i32
    return %c0_i32, %arg0 : i32, i32
  }
}

module attributes {stable_mosaic.version = 11 : i64} {
  func.func @_fused_tail_kernel(%arg0: i32, %arg1: memref<8x512xbf16, #tpu.memory_space<vmem>>, %arg2: memref<512x128xbf16, #tpu.memory_space<vmem>>, %arg3: memref<8x1xf32, #tpu.memory_space<vmem>>, %arg4: memref<8x1xf32, #tpu.memory_space<vmem>>, %arg5: memref<16x512xbf16, #tpu.memory_space<vmem>>, %arg6: memref<64x128x16xbf16, #tpu.memory_space<vmem>>, %arg7: memref<16x1xf32, #tpu.memory_space<vmem>>, %arg8: memref<16x1xf32, #tpu.memory_space<vmem>>, %arg9: memref<16x8xf32, #tpu.memory_space<vmem>>, %arg10: memref<1x1xf32, #tpu.memory_space<vmem>>, %arg11: memref<2x1xf32, #tpu.memory_space<vmem>>, %arg12: memref<512x16xf32, #tpu.memory_space<vmem>>) attributes {dimension_semantics = [#tpu.dimension_semantics<arbitrary>], iteration_bounds = array<i64: 1>, scalar_prefetch = 0 : i64, scratch_operands = 1 : i64, tpu.core_type = #tpu.core_type<tc>, window_params = [{pipeline_mode = #tpu.pipeline_mode<synchronous>, transform_indices = @transform_0, window_bounds = array<i64: 8, 512>}, {pipeline_mode = #tpu.pipeline_mode<synchronous>, transform_indices = @transform_1, window_bounds = array<i64: 512, 128>}, {pipeline_mode = #tpu.pipeline_mode<synchronous>, transform_indices = @transform_2, window_bounds = array<i64: 8, 1>}, {pipeline_mode = #tpu.pipeline_mode<synchronous>, transform_indices = @transform_3, window_bounds = array<i64: 8, 1>}, {pipeline_mode = #tpu.pipeline_mode<synchronous>, transform_indices = @transform_4, window_bounds = array<i64: 16, 512>}, {pipeline_mode = #tpu.pipeline_mode<synchronous>, transform_indices = @transform_5, window_bounds = array<i64: 64, 128, 16>}, {pipeline_mode = #tpu.pipeline_mode<synchronous>, transform_indices = @transform_6, window_bounds = array<i64: 16, 1>}, {pipeline_mode = #tpu.pipeline_mode<synchronous>, transform_indices = @transform_7, window_bounds = array<i64: 16, 1>}, {pipeline_mode = #tpu.pipeline_mode<synchronous>, transform_indices = @transform_8, window_bounds = array<i64: 16, 8>}, {pipeline_mode = #tpu.pipeline_mode<synchronous>, transform_indices = @transform_9, window_bounds = array<i64: 1, 1>}, {pipeline_mode = #tpu.pipeline_mode<synchronous>, transform_indices = @transform_10, window_bounds = array<i64: 2, 1>}]} {
    %c0 = arith.constant 0 : index
    %c0_0 = arith.constant 0 : index
    %0 = vector.load %arg1[%c0, %c0_0] : memref<8x512xbf16, #tpu.memory_space<vmem>>, vector<8x512xbf16>
    %c0_1 = arith.constant 0 : index
    %c0_2 = arith.constant 0 : index
    %1 = vector.load %arg2[%c0_1, %c0_2] : memref<512x128xbf16, #tpu.memory_space<vmem>>, vector<512x128xbf16>
    %cst = arith.constant dense<0.000000e+00> : vector<8x128xf32>
    %2 = tpu.matmul %0, %1, %cst {dimension_numbers = #tpu.dot_dimension_numbers<[1], [0], [0], [1], [0, 0, 1, 1], [], []>} : vector<8x512xbf16>, vector<512x128xbf16>, vector<8x128xf32> -> vector<8x128xf32>
    %cst_3 = arith.constant dense<0.000000e+00> : vector<8xf32>
    %3 = vector.multi_reduction <add>, %2, %cst_3 [1] : vector<8x128xf32> to vector<8xf32>
    %4 = vector.shape_cast %3 : vector<8xf32> to vector<8x1xf32>
    %cst_4 = arith.constant 1.280000e+02 : f32
    %5 = vector.broadcast %cst_4 : f32 to vector<8x1xf32>
    %6 = arith.divf %4, %5 : vector<8x1xf32>
    %7 = vector.broadcast %6 : vector<8x1xf32> to vector<8x128xf32>
    %8 = arith.subf %2, %7 : vector<8x128xf32>
    %9 = arith.mulf %8, %8 : vector<8x128xf32>
    %cst_5 = arith.constant dense<0.000000e+00> : vector<8xf32>
    %10 = vector.multi_reduction <add>, %9, %cst_5 [1] : vector<8x128xf32> to vector<8xf32>
    %11 = vector.shape_cast %10 : vector<8xf32> to vector<8x1xf32>
    %cst_6 = arith.constant 1.280000e+02 : f32
    %12 = vector.broadcast %cst_6 : f32 to vector<8x1xf32>
    %13 = arith.divf %11, %12 : vector<8x1xf32>
    %14 = vector.broadcast %6 : vector<8x1xf32> to vector<8x128xf32>
    %15 = arith.subf %2, %14 : vector<8x128xf32>
    %cst_7 = arith.constant 9.99999974E-6 : f32
    %16 = vector.broadcast %cst_7 : f32 to vector<8x1xf32>
    %17 = arith.addf %13, %16 : vector<8x1xf32>
    %18 = math.rsqrt %17 : vector<8x1xf32>
    %19 = vector.broadcast %18 : vector<8x1xf32> to vector<8x128xf32>
    %20 = arith.mulf %15, %19 : vector<8x128xf32>
    %c0_8 = arith.constant 0 : index
    %c0_9 = arith.constant 0 : index
    %21 = vector.load %arg3[%c0_8, %c0_9] : memref<8x1xf32, #tpu.memory_space<vmem>>, vector<8x1xf32>
    %22 = vector.broadcast %21 : vector<8x1xf32> to vector<8x128xf32>
    %23 = arith.mulf %20, %22 : vector<8x128xf32>
    %c0_10 = arith.constant 0 : index
    %c0_11 = arith.constant 0 : index
    %24 = vector.load %arg4[%c0_10, %c0_11] : memref<8x1xf32, #tpu.memory_space<vmem>>, vector<8x1xf32>
    %25 = vector.broadcast %24 : vector<8x1xf32> to vector<8x128xf32>
    %26 = arith.addf %23, %25 : vector<8x128xf32>
    %cst_12 = arith.constant 0.000000e+00 : f32
    %27 = vector.broadcast %cst_12 : f32 to vector<8x128xf32>
    %28 = arith.cmpf oge, %26, %27 : vector<8x128xf32>
    %cst_13 = arith.constant 2.000000e-01 : f32
    %29 = vector.broadcast %cst_13 : f32 to vector<8x128xf32>
    %30 = arith.mulf %29, %26 : vector<8x128xf32>
    %31 = arith.select %28, %26, %30 : vector<8x128xi1>, vector<8x128xf32>
    %32 = arith.truncf %31 : vector<8x128xf32> to vector<8x128xbf16>
    %c0_14 = arith.constant 0 : index
    %c0_15 = arith.constant 0 : index
    %c0_16 = arith.constant 0 : index
    %33 = vector.load %arg6[%c0_14, %c0_15, %c0_16] : memref<64x128x16xbf16, #tpu.memory_space<vmem>>, vector<1x128x16xbf16>
    %34 = vector.shape_cast %33 : vector<1x128x16xbf16> to vector<128x16xbf16>
    %cst_17 = arith.constant dense<0.000000e+00> : vector<8x16xf32>
    %35 = tpu.matmul %32, %34, %cst_17 {dimension_numbers = #tpu.dot_dimension_numbers<[1], [0], [0], [1], [0, 0, 1, 1], [], []>} : vector<8x128xbf16>, vector<128x16xbf16>, vector<8x16xf32> -> vector<8x16xf32>
    %c0_18 = arith.constant 0 : index
    %c0_19 = arith.constant 0 : index
    %36 = vector.load %arg12[%c0_18, %c0_19] : memref<512x16xf32, #tpu.memory_space<vmem>>, vector<8x16xf32>
    tpu.vector_store %arg12[%c0_18, %c0_19], %35 {strides = array<i32>} : memref<512x16xf32, #tpu.memory_space<vmem>>, vector<8x16xf32>,
    %c1 = arith.constant 1 : index
    %c0_20 = arith.constant 0 : index
    %c0_21 = arith.constant 0 : index
    %37 = vector.load %arg6[%c1, %c0_20, %c0_21] : memref<64x128x16xbf16, #tpu.memory_space<vmem>>, vector<1x128x16xbf16>
    %38 = vector.shape_cast %37 : vector<1x128x16xbf16> to vector<128x16xbf16>
    %cst_22 = arith.constant dense<0.000000e+00> : vector<8x16xf32>
    %39 = tpu.matmul %32, %38, %cst_22 {dimension_numbers = #tpu.dot_dimension_numbers<[1], [0], [0], [1], [0, 0, 1, 1], [], []>} : vector<8x128xbf16>, vector<128x16xbf16>, vector<8x16xf32> -> vector<8x16xf32>
    %c8 = arith.constant 8 : index
    %c0_23 = arith.constant 0 : index
    %40 = vector.load %arg12[%c8, %c0_23] : memref<512x16xf32, #tpu.memory_space<vmem>>, vector<8x16xf32>
    tpu.vector_store %arg12[%c8, %c0_23], %39 {strides = array<i32>} : memref<512x16xf32, #tpu.memory_space<vmem>>, vector<8x16xf32>,
    %c2 = arith.constant 2 : index
    %c0_24 = arith.constant 0 : index
    %c0_25 = arith.constant 0 : index
    %41 = vector.load %arg6[%c2, %c0_24, %c0_25] : memref<64x128x16xbf16, #tpu.memory_space<vmem>>, vector<1x128x16xbf16>
    %42 = vector.shape_cast %41 : vector<1x128x16xbf16> to vector<128x16xbf16>
    %cst_26 = arith.constant dense<0.000000e+00> : vector<8x16xf32>
    %43 = tpu.matmul %32, %42, %cst_26 {dimension_numbers = #tpu.dot_dimension_numbers<[1], [0], [0], [1], [0, 0, 1, 1], [], []>} : vector<8x128xbf16>, vector<128x16xbf16>, vector<8x16xf32> -> vector<8x16xf32>
    %c16 = arith.constant 16 : index
    %c0_27 = arith.constant 0 : index
    %44 = vector.load %arg12[%c16, %c0_27] : memref<512x16xf32, #tpu.memory_space<vmem>>, vector<8x16xf32>
    tpu.vector_store %arg12[%c16, %c0_27], %43 {strides = array<i32>} : memref<512x16xf32, #tpu.memory_space<vmem>>, vector<8x16xf32>,
    %c3 = arith.constant 3 : index
    %c0_28 = arith.constant 0 : index
    %c0_29 = arith.constant 0 : index
    %45 = vector.load %arg6[%c3, %c0_28, %c0_29] : memref<64x128x16xbf16, #tpu.memory_space<vmem>>, vector<1x128x16xbf16>
    %46 = vector.shape_cast %45 : vector<1x128x16xbf16> to vector<128x16xbf16>
    %cst_30 = arith.constant dense<0.000000e+00> : vector<8x16xf32>
    %47 = tpu.matmul %32, %46, %cst_30 {dimension_numbers = #tpu.dot_dimension_numbers<[1], [0], [0], [1], [0, 0, 1, 1], [], []>} : vector<8x128xbf16>, vector<128x16xbf16>, vector<8x16xf32> -> vector<8x16xf32>
    %c24 = arith.constant 24 : index
    %c0_31 = arith.constant 0 : index
    %48 = vector.load %arg12[%c24, %c0_31] : memref<512x16xf32, #tpu.memory_space<vmem>>, vector<8x16xf32>
    tpu.vector_store %arg12[%c24, %c0_31], %47 {strides = array<i32>} : memref<512x16xf32, #tpu.memory_space<vmem>>, vector<8x16xf32>,
    %c4 = arith.constant 4 : index
    %c0_32 = arith.constant 0 : index
    %c0_33 = arith.constant 0 : index
    %49 = vector.load %arg6[%c4, %c0_32, %c0_33] : memref<64x128x16xbf16, #tpu.memory_space<vmem>>, vector<1x128x16xbf16>
    %50 = vector.shape_cast %49 : vector<1x128x16xbf16> to vector<128x16xbf16>
    %cst_34 = arith.constant dense<0.000000e+00> : vector<8x16xf32>
    %51 = tpu.matmul %32, %50, %cst_34 {dimension_numbers = #tpu.dot_dimension_numbers<[1], [0], [0], [1], [0, 0, 1, 1], [], []>} : vector<8x128xbf16>, vector<128x16xbf16>, vector<8x16xf32> -> vector<8x16xf32>
    %c32 = arith.constant 32 : index
    %c0_35 = arith.constant 0 : index
    %52 = vector.load %arg12[%c32, %c0_35] : memref<512x16xf32, #tpu.memory_space<vmem>>, vector<8x16xf32>
    tpu.vector_store %arg12[%c32, %c0_35], %51 {strides = array<i32>} : memref<512x16xf32, #tpu.memory_space<vmem>>, vector<8x16xf32>,
    %c5 = arith.constant 5 : index
    %c0_36 = arith.constant 0 : index
    %c0_37 = arith.constant 0 : index
    %53 = vector.load %arg6[%c5, %c0_36, %c0_37] : memref<64x128x16xbf16, #tpu.memory_space<vmem>>, vector<1x128x16xbf16>
    %54 = vector.shape_cast %53 : vector<1x128x16xbf16> to vector<128x16xbf16>
    %cst_38 = arith.constant dense<0.000000e+00> : vector<8x16xf32>
    %55 = tpu.matmul %32, %54, %cst_38 {dimension_numbers = #tpu.dot_dimension_numbers<[1], [0], [0], [1], [0, 0, 1, 1], [], []>} : vector<8x128xbf16>, vector<128x16xbf16>, vector<8x16xf32> -> vector<8x16xf32>
    %c40 = arith.constant 40 : index
    %c0_39 = arith.constant 0 : index
    %56 = vector.load %arg12[%c40, %c0_39] : memref<512x16xf32, #tpu.memory_space<vmem>>, vector<8x16xf32>
    tpu.vector_store %arg12[%c40, %c0_39], %55 {strides = array<i32>} : memref<512x16xf32, #tpu.memory_space<vmem>>, vector<8x16xf32>,
    %c6 = arith.constant 6 : index
    %c0_40 = arith.constant 0 : index
    %c0_41 = arith.constant 0 : index
    %57 = vector.load %arg6[%c6, %c0_40, %c0_41] : memref<64x128x16xbf16, #tpu.memory_space<vmem>>, vector<1x128x16xbf16>
    %58 = vector.shape_cast %57 : vector<1x128x16xbf16> to vector<128x16xbf16>
    %cst_42 = arith.constant dense<0.000000e+00> : vector<8x16xf32>
    %59 = tpu.matmul %32, %58, %cst_42 {dimension_numbers = #tpu.dot_dimension_numbers<[1], [0], [0], [1], [0, 0, 1, 1], [], []>} : vector<8x128xbf16>, vector<128x16xbf16>, vector<8x16xf32> -> vector<8x16xf32>
    %c48 = arith.constant 48 : index
    %c0_43 = arith.constant 0 : index
    %60 = vector.load %arg12[%c48, %c0_43] : memref<512x16xf32, #tpu.memory_space<vmem>>, vector<8x16xf32>
    tpu.vector_store %arg12[%c48, %c0_43], %59 {strides = array<i32>} : memref<512x16xf32, #tpu.memory_space<vmem>>, vector<8x16xf32>,
    %c7 = arith.constant 7 : index
    %c0_44 = arith.constant 0 : index
    %c0_45 = arith.constant 0 : index
    %61 = vector.load %arg6[%c7, %c0_44, %c0_45] : memref<64x128x16xbf16, #tpu.memory_space<vmem>>, vector<1x128x16xbf16>
    %62 = vector.shape_cast %61 : vector<1x128x16xbf16> to vector<128x16xbf16>
    %cst_46 = arith.constant dense<0.000000e+00> : vector<8x16xf32>
    %63 = tpu.matmul %32, %62, %cst_46 {dimension_numbers = #tpu.dot_dimension_numbers<[1], [0], [0], [1], [0, 0, 1, 1], [], []>} : vector<8x128xbf16>, vector<128x16xbf16>, vector<8x16xf32> -> vector<8x16xf32>
    %c56 = arith.constant 56 : index
    %c0_47 = arith.constant 0 : index
    %64 = vector.load %arg12[%c56, %c0_47] : memref<512x16xf32, #tpu.memory_space<vmem>>, vector<8x16xf32>
    tpu.vector_store %arg12[%c56, %c0_47], %63 {strides = array<i32>} : memref<512x16xf32, #tpu.memory_space<vmem>>, vector<8x16xf32>,
    %c8_48 = arith.constant 8 : index
    %c0_49 = arith.constant 0 : index
    %c0_50 = arith.constant 0 : index
    %65 = vector.load %arg6[%c8_48, %c0_49, %c0_50] : memref<64x128x16xbf16, #tpu.memory_space<vmem>>, vector<1x128x16xbf16>
    %66 = vector.shape_cast %65 : vector<1x128x16xbf16> to vector<128x16xbf16>
    %cst_51 = arith.constant dense<0.000000e+00> : vector<8x16xf32>
    %67 = tpu.matmul %32, %66, %cst_51 {dimension_numbers = #tpu.dot_dimension_numbers<[1], [0], [0], [1], [0, 0, 1, 1], [], []>} : vector<8x128xbf16>, vector<128x16xbf16>, vector<8x16xf32> -> vector<8x16xf32>
    %c64 = arith.constant 64 : index
    %c0_52 = arith.constant 0 : index
    %68 = vector.load %arg12[%c64, %c0_52] : memref<512x16xf32, #tpu.memory_space<vmem>>, vector<8x16xf32>
    tpu.vector_store %arg12[%c64, %c0_52], %67 {strides = array<i32>} : memref<512x16xf32, #tpu.memory_space<vmem>>, vector<8x16xf32>,
    %c9 = arith.constant 9 : index
    %c0_53 = arith.constant 0 : index
    %c0_54 = arith.constant 0 : index
    %69 = vector.load %arg6[%c9, %c0_53, %c0_54] : memref<64x128x16xbf16, #tpu.memory_space<vmem>>, vector<1x128x16xbf16>
    %70 = vector.shape_cast %69 : vector<1x128x16xbf16> to vector<128x16xbf16>
    %cst_55 = arith.constant dense<0.000000e+00> : vector<8x16xf32>
    %71 = tpu.matmul %32, %70, %cst_55 {dimension_numbers = #tpu.dot_dimension_numbers<[1], [0], [0], [1], [0, 0, 1, 1], [], []>} : vector<8x128xbf16>, vector<128x16xbf16>, vector<8x16xf32> -> vector<8x16xf32>
    %c72 = arith.constant 72 : index
    %c0_56 = arith.constant 0 : index
    %72 = vector.load %arg12[%c72, %c0_56] : memref<512x16xf32, #tpu.memory_space<vmem>>, vector<8x16xf32>
    tpu.vector_store %arg12[%c72, %c0_56], %71 {strides = array<i32>} : memref<512x16xf32, #tpu.memory_space<vmem>>, vector<8x16xf32>,
    %c10 = arith.constant 10 : index
    %c0_57 = arith.constant 0 : index
    %c0_58 = arith.constant 0 : index
    %73 = vector.load %arg6[%c10, %c0_57, %c0_58] : memref<64x128x16xbf16, #tpu.memory_space<vmem>>, vector<1x128x16xbf16>
    %74 = vector.shape_cast %73 : vector<1x128x16xbf16> to vector<128x16xbf16>
    %cst_59 = arith.constant dense<0.000000e+00> : vector<8x16xf32>
    %75 = tpu.matmul %32, %74, %cst_59 {dimension_numbers = #tpu.dot_dimension_numbers<[1], [0], [0], [1], [0, 0, 1, 1], [], []>} : vector<8x128xbf16>, vector<128x16xbf16>, vector<8x16xf32> -> vector<8x16xf32>
    %c80 = arith.constant 80 : index
    %c0_60 = arith.constant 0 : index
    %76 = vector.load %arg12[%c80, %c0_60] : memref<512x16xf32, #tpu.memory_space<vmem>>, vector<8x16xf32>
    tpu.vector_store %arg12[%c80, %c0_60], %75 {strides = array<i32>} : memref<512x16xf32, #tpu.memory_space<vmem>>, vector<8x16xf32>,
    %c11 = arith.constant 11 : index
    %c0_61 = arith.constant 0 : index
    %c0_62 = arith.constant 0 : index
    %77 = vector.load %arg6[%c11, %c0_61, %c0_62] : memref<64x128x16xbf16, #tpu.memory_space<vmem>>, vector<1x128x16xbf16>
    %78 = vector.shape_cast %77 : vector<1x128x16xbf16> to vector<128x16xbf16>
    %cst_63 = arith.constant dense<0.000000e+00> : vector<8x16xf32>
    %79 = tpu.matmul %32, %78, %cst_63 {dimension_numbers = #tpu.dot_dimension_numbers<[1], [0], [0], [1], [0, 0, 1, 1], [], []>} : vector<8x128xbf16>, vector<128x16xbf16>, vector<8x16xf32> -> vector<8x16xf32>
    %c88 = arith.constant 88 : index
    %c0_64 = arith.constant 0 : index
    %80 = vector.load %arg12[%c88, %c0_64] : memref<512x16xf32, #tpu.memory_space<vmem>>, vector<8x16xf32>
    tpu.vector_store %arg12[%c88, %c0_64], %79 {strides = array<i32>} : memref<512x16xf32, #tpu.memory_space<vmem>>, vector<8x16xf32>,
    %c12 = arith.constant 12 : index
    %c0_65 = arith.constant 0 : index
    %c0_66 = arith.constant 0 : index
    %81 = vector.load %arg6[%c12, %c0_65, %c0_66] : memref<64x128x16xbf16, #tpu.memory_space<vmem>>, vector<1x128x16xbf16>
    %82 = vector.shape_cast %81 : vector<1x128x16xbf16> to vector<128x16xbf16>
    %cst_67 = arith.constant dense<0.000000e+00> : vector<8x16xf32>
    %83 = tpu.matmul %32, %82, %cst_67 {dimension_numbers = #tpu.dot_dimension_numbers<[1], [0], [0], [1], [0, 0, 1, 1], [], []>} : vector<8x128xbf16>, vector<128x16xbf16>, vector<8x16xf32> -> vector<8x16xf32>
    %c96 = arith.constant 96 : index
    %c0_68 = arith.constant 0 : index
    %84 = vector.load %arg12[%c96, %c0_68] : memref<512x16xf32, #tpu.memory_space<vmem>>, vector<8x16xf32>
    tpu.vector_store %arg12[%c96, %c0_68], %83 {strides = array<i32>} : memref<512x16xf32, #tpu.memory_space<vmem>>, vector<8x16xf32>,
    %c13 = arith.constant 13 : index
    %c0_69 = arith.constant 0 : index
    %c0_70 = arith.constant 0 : index
    %85 = vector.load %arg6[%c13, %c0_69, %c0_70] : memref<64x128x16xbf16, #tpu.memory_space<vmem>>, vector<1x128x16xbf16>
    %86 = vector.shape_cast %85 : vector<1x128x16xbf16> to vector<128x16xbf16>
    %cst_71 = arith.constant dense<0.000000e+00> : vector<8x16xf32>
    %87 = tpu.matmul %32, %86, %cst_71 {dimension_numbers = #tpu.dot_dimension_numbers<[1], [0], [0], [1], [0, 0, 1, 1], [], []>} : vector<8x128xbf16>, vector<128x16xbf16>, vector<8x16xf32> -> vector<8x16xf32>
    %c104 = arith.constant 104 : index
    %c0_72 = arith.constant 0 : index
    %88 = vector.load %arg12[%c104, %c0_72] : memref<512x16xf32, #tpu.memory_space<vmem>>, vector<8x16xf32>
    tpu.vector_store %arg12[%c104, %c0_72], %87 {strides = array<i32>} : memref<512x16xf32, #tpu.memory_space<vmem>>, vector<8x16xf32>,
    %c14 = arith.constant 14 : index
    %c0_73 = arith.constant 0 : index
    %c0_74 = arith.constant 0 : index
    %89 = vector.load %arg6[%c14, %c0_73, %c0_74] : memref<64x128x16xbf16, #tpu.memory_space<vmem>>, vector<1x128x16xbf16>
    %90 = vector.shape_cast %89 : vector<1x128x16xbf16> to vector<128x16xbf16>
    %cst_75 = arith.constant dense<0.000000e+00> : vector<8x16xf32>
    %91 = tpu.matmul %32, %90, %cst_75 {dimension_numbers = #tpu.dot_dimension_numbers<[1], [0], [0], [1], [0, 0, 1, 1], [], []>} : vector<8x128xbf16>, vector<128x16xbf16>, vector<8x16xf32> -> vector<8x16xf32>
    %c112 = arith.constant 112 : index
    %c0_76 = arith.constant 0 : index
    %92 = vector.load %arg12[%c112, %c0_76] : memref<512x16xf32, #tpu.memory_space<vmem>>, vector<8x16xf32>
    tpu.vector_store %arg12[%c112, %c0_76], %91 {strides = array<i32>} : memref<512x16xf32, #tpu.memory_space<vmem>>, vector<8x16xf32>,
    %c15 = arith.constant 15 : index
    %c0_77 = arith.constant 0 : index
    %c0_78 = arith.constant 0 : index
    %93 = vector.load %arg6[%c15, %c0_77, %c0_78] : memref<64x128x16xbf16, #tpu.memory_space<vmem>>, vector<1x128x16xbf16>
    %94 = vector.shape_cast %93 : vector<1x128x16xbf16> to vector<128x16xbf16>
    %cst_79 = arith.constant dense<0.000000e+00> : vector<8x16xf32>
    %95 = tpu.matmul %32, %94, %cst_79 {dimension_numbers = #tpu.dot_dimension_numbers<[1], [0], [0], [1], [0, 0, 1, 1], [], []>} : vector<8x128xbf16>, vector<128x16xbf16>, vector<8x16xf32> -> vector<8x16xf32>
    %c120 = arith.constant 120 : index
    %c0_80 = arith.constant 0 : index
    %96 = vector.load %arg12[%c120, %c0_80] : memref<512x16xf32, #tpu.memory_space<vmem>>, vector<8x16xf32>
    tpu.vector_store %arg12[%c120, %c0_80], %95 {strides = array<i32>} : memref<512x16xf32, #tpu.memory_space<vmem>>, vector<8x16xf32>,
    %c16_81 = arith.constant 16 : index
    %c0_82 = arith.constant 0 : index
    %c0_83 = arith.constant 0 : index
    %97 = vector.load %arg6[%c16_81, %c0_82, %c0_83] : memref<64x128x16xbf16, #tpu.memory_space<vmem>>, vector<1x128x16xbf16>
    %98 = vector.shape_cast %97 : vector<1x128x16xbf16> to vector<128x16xbf16>
    %cst_84 = arith.constant dense<0.000000e+00> : vector<8x16xf32>
    %99 = tpu.matmul %32, %98, %cst_84 {dimension_numbers = #tpu.dot_dimension_numbers<[1], [0], [0], [1], [0, 0, 1, 1], [], []>} : vector<8x128xbf16>, vector<128x16xbf16>, vector<8x16xf32> -> vector<8x16xf32>
    %c128 = arith.constant 128 : index
    %c0_85 = arith.constant 0 : index
    %100 = vector.load %arg12[%c128, %c0_85] : memref<512x16xf32, #tpu.memory_space<vmem>>, vector<8x16xf32>
    tpu.vector_store %arg12[%c128, %c0_85], %99 {strides = array<i32>} : memref<512x16xf32, #tpu.memory_space<vmem>>, vector<8x16xf32>,
    %c17 = arith.constant 17 : index
    %c0_86 = arith.constant 0 : index
    %c0_87 = arith.constant 0 : index
    %101 = vector.load %arg6[%c17, %c0_86, %c0_87] : memref<64x128x16xbf16, #tpu.memory_space<vmem>>, vector<1x128x16xbf16>
    %102 = vector.shape_cast %101 : vector<1x128x16xbf16> to vector<128x16xbf16>
    %cst_88 = arith.constant dense<0.000000e+00> : vector<8x16xf32>
    %103 = tpu.matmul %32, %102, %cst_88 {dimension_numbers = #tpu.dot_dimension_numbers<[1], [0], [0], [1], [0, 0, 1, 1], [], []>} : vector<8x128xbf16>, vector<128x16xbf16>, vector<8x16xf32> -> vector<8x16xf32>
    %c136 = arith.constant 136 : index
    %c0_89 = arith.constant 0 : index
    %104 = vector.load %arg12[%c136, %c0_89] : memref<512x16xf32, #tpu.memory_space<vmem>>, vector<8x16xf32>
    tpu.vector_store %arg12[%c136, %c0_89], %103 {strides = array<i32>} : memref<512x16xf32, #tpu.memory_space<vmem>>, vector<8x16xf32>,
    %c18 = arith.constant 18 : index
    %c0_90 = arith.constant 0 : index
    %c0_91 = arith.constant 0 : index
    %105 = vector.load %arg6[%c18, %c0_90, %c0_91] : memref<64x128x16xbf16, #tpu.memory_space<vmem>>, vector<1x128x16xbf16>
    %106 = vector.shape_cast %105 : vector<1x128x16xbf16> to vector<128x16xbf16>
    %cst_92 = arith.constant dense<0.000000e+00> : vector<8x16xf32>
    %107 = tpu.matmul %32, %106, %cst_92 {dimension_numbers = #tpu.dot_dimension_numbers<[1], [0], [0], [1], [0, 0, 1, 1], [], []>} : vector<8x128xbf16>, vector<128x16xbf16>, vector<8x16xf32> -> vector<8x16xf32>
    %c144 = arith.constant 144 : index
    %c0_93 = arith.constant 0 : index
    %108 = vector.load %arg12[%c144, %c0_93] : memref<512x16xf32, #tpu.memory_space<vmem>>, vector<8x16xf32>
    tpu.vector_store %arg12[%c144, %c0_93], %107 {strides = array<i32>} : memref<512x16xf32, #tpu.memory_space<vmem>>, vector<8x16xf32>,
    %c19 = arith.constant 19 : index
    %c0_94 = arith.constant 0 : index
    %c0_95 = arith.constant 0 : index
    %109 = vector.load %arg6[%c19, %c0_94, %c0_95] : memref<64x128x16xbf16, #tpu.memory_space<vmem>>, vector<1x128x16xbf16>
    %110 = vector.shape_cast %109 : vector<1x128x16xbf16> to vector<128x16xbf16>
    %cst_96 = arith.constant dense<0.000000e+00> : vector<8x16xf32>
    %111 = tpu.matmul %32, %110, %cst_96 {dimension_numbers = #tpu.dot_dimension_numbers<[1], [0], [0], [1], [0, 0, 1, 1], [], []>} : vector<8x128xbf16>, vector<128x16xbf16>, vector<8x16xf32> -> vector<8x16xf32>
    %c152 = arith.constant 152 : index
    %c0_97 = arith.constant 0 : index
    %112 = vector.load %arg12[%c152, %c0_97] : memref<512x16xf32, #tpu.memory_space<vmem>>, vector<8x16xf32>
    tpu.vector_store %arg12[%c152, %c0_97], %111 {strides = array<i32>} : memref<512x16xf32, #tpu.memory_space<vmem>>, vector<8x16xf32>,
    %c20 = arith.constant 20 : index
    %c0_98 = arith.constant 0 : index
    %c0_99 = arith.constant 0 : index
    %113 = vector.load %arg6[%c20, %c0_98, %c0_99] : memref<64x128x16xbf16, #tpu.memory_space<vmem>>, vector<1x128x16xbf16>
    %114 = vector.shape_cast %113 : vector<1x128x16xbf16> to vector<128x16xbf16>
    %cst_100 = arith.constant dense<0.000000e+00> : vector<8x16xf32>
    %115 = tpu.matmul %32, %114, %cst_100 {dimension_numbers = #tpu.dot_dimension_numbers<[1], [0], [0], [1], [0, 0, 1, 1], [], []>} : vector<8x128xbf16>, vector<128x16xbf16>, vector<8x16xf32> -> vector<8x16xf32>
    %c160 = arith.constant 160 : index
    %c0_101 = arith.constant 0 : index
    %116 = vector.load %arg12[%c160, %c0_101] : memref<512x16xf32, #tpu.memory_space<vmem>>, vector<8x16xf32>
    tpu.vector_store %arg12[%c160, %c0_101], %115 {strides = array<i32>} : memref<512x16xf32, #tpu.memory_space<vmem>>, vector<8x16xf32>,
    %c21 = arith.constant 21 : index
    %c0_102 = arith.constant 0 : index
    %c0_103 = arith.constant 0 : index
    %117 = vector.load %arg6[%c21, %c0_102, %c0_103] : memref<64x128x16xbf16, #tpu.memory_space<vmem>>, vector<1x128x16xbf16>
    %118 = vector.shape_cast %117 : vector<1x128x16xbf16> to vector<128x16xbf16>
    %cst_104 = arith.constant dense<0.000000e+00> : vector<8x16xf32>
    %119 = tpu.matmul %32, %118, %cst_104 {dimension_numbers = #tpu.dot_dimension_numbers<[1], [0], [0], [1], [0, 0, 1, 1], [], []>} : vector<8x128xbf16>, vector<128x16xbf16>, vector<8x16xf32> -> vector<8x16xf32>
    %c168 = arith.constant 168 : index
    %c0_105 = arith.constant 0 : index
    %120 = vector.load %arg12[%c168, %c0_105] : memref<512x16xf32, #tpu.memory_space<vmem>>, vector<8x16xf32>
    tpu.vector_store %arg12[%c168, %c0_105], %119 {strides = array<i32>} : memref<512x16xf32, #tpu.memory_space<vmem>>, vector<8x16xf32>,
    %c22 = arith.constant 22 : index
    %c0_106 = arith.constant 0 : index
    %c0_107 = arith.constant 0 : index
    %121 = vector.load %arg6[%c22, %c0_106, %c0_107] : memref<64x128x16xbf16, #tpu.memory_space<vmem>>, vector<1x128x16xbf16>
    %122 = vector.shape_cast %121 : vector<1x128x16xbf16> to vector<128x16xbf16>
    %cst_108 = arith.constant dense<0.000000e+00> : vector<8x16xf32>
    %123 = tpu.matmul %32, %122, %cst_108 {dimension_numbers = #tpu.dot_dimension_numbers<[1], [0], [0], [1], [0, 0, 1, 1], [], []>} : vector<8x128xbf16>, vector<128x16xbf16>, vector<8x16xf32> -> vector<8x16xf32>
    %c176 = arith.constant 176 : index
    %c0_109 = arith.constant 0 : index
    %124 = vector.load %arg12[%c176, %c0_109] : memref<512x16xf32, #tpu.memory_space<vmem>>, vector<8x16xf32>
    tpu.vector_store %arg12[%c176, %c0_109], %123 {strides = array<i32>} : memref<512x16xf32, #tpu.memory_space<vmem>>, vector<8x16xf32>,
    %c23 = arith.constant 23 : index
    %c0_110 = arith.constant 0 : index
    %c0_111 = arith.constant 0 : index
    %125 = vector.load %arg6[%c23, %c0_110, %c0_111] : memref<64x128x16xbf16, #tpu.memory_space<vmem>>, vector<1x128x16xbf16>
    %126 = vector.shape_cast %125 : vector<1x128x16xbf16> to vector<128x16xbf16>
    %cst_112 = arith.constant dense<0.000000e+00> : vector<8x16xf32>
    %127 = tpu.matmul %32, %126, %cst_112 {dimension_numbers = #tpu.dot_dimension_numbers<[1], [0], [0], [1], [0, 0, 1, 1], [], []>} : vector<8x128xbf16>, vector<128x16xbf16>, vector<8x16xf32> -> vector<8x16xf32>
    %c184 = arith.constant 184 : index
    %c0_113 = arith.constant 0 : index
    %128 = vector.load %arg12[%c184, %c0_113] : memref<512x16xf32, #tpu.memory_space<vmem>>, vector<8x16xf32>
    tpu.vector_store %arg12[%c184, %c0_113], %127 {strides = array<i32>} : memref<512x16xf32, #tpu.memory_space<vmem>>, vector<8x16xf32>,
    %c24_114 = arith.constant 24 : index
    %c0_115 = arith.constant 0 : index
    %c0_116 = arith.constant 0 : index
    %129 = vector.load %arg6[%c24_114, %c0_115, %c0_116] : memref<64x128x16xbf16, #tpu.memory_space<vmem>>, vector<1x128x16xbf16>
    %130 = vector.shape_cast %129 : vector<1x128x16xbf16> to vector<128x16xbf16>
    %cst_117 = arith.constant dense<0.000000e+00> : vector<8x16xf32>
    %131 = tpu.matmul %32, %130, %cst_117 {dimension_numbers = #tpu.dot_dimension_numbers<[1], [0], [0], [1], [0, 0, 1, 1], [], []>} : vector<8x128xbf16>, vector<128x16xbf16>, vector<8x16xf32> -> vector<8x16xf32>
    %c192 = arith.constant 192 : index
    %c0_118 = arith.constant 0 : index
    %132 = vector.load %arg12[%c192, %c0_118] : memref<512x16xf32, #tpu.memory_space<vmem>>, vector<8x16xf32>
    tpu.vector_store %arg12[%c192, %c0_118], %131 {strides = array<i32>} : memref<512x16xf32, #tpu.memory_space<vmem>>, vector<8x16xf32>,
    %c25 = arith.constant 25 : index
    %c0_119 = arith.constant 0 : index
    %c0_120 = arith.constant 0 : index
    %133 = vector.load %arg6[%c25, %c0_119, %c0_120] : memref<64x128x16xbf16, #tpu.memory_space<vmem>>, vector<1x128x16xbf16>
    %134 = vector.shape_cast %133 : vector<1x128x16xbf16> to vector<128x16xbf16>
    %cst_121 = arith.constant dense<0.000000e+00> : vector<8x16xf32>
    %135 = tpu.matmul %32, %134, %cst_121 {dimension_numbers = #tpu.dot_dimension_numbers<[1], [0], [0], [1], [0, 0, 1, 1], [], []>} : vector<8x128xbf16>, vector<128x16xbf16>, vector<8x16xf32> -> vector<8x16xf32>
    %c200 = arith.constant 200 : index
    %c0_122 = arith.constant 0 : index
    %136 = vector.load %arg12[%c200, %c0_122] : memref<512x16xf32, #tpu.memory_space<vmem>>, vector<8x16xf32>
    tpu.vector_store %arg12[%c200, %c0_122], %135 {strides = array<i32>} : memref<512x16xf32, #tpu.memory_space<vmem>>, vector<8x16xf32>,
    %c26 = arith.constant 26 : index
    %c0_123 = arith.constant 0 : index
    %c0_124 = arith.constant 0 : index
    %137 = vector.load %arg6[%c26, %c0_123, %c0_124] : memref<64x128x16xbf16, #tpu.memory_space<vmem>>, vector<1x128x16xbf16>
    %138 = vector.shape_cast %137 : vector<1x128x16xbf16> to vector<128x16xbf16>
    %cst_125 = arith.constant dense<0.000000e+00> : vector<8x16xf32>
    %139 = tpu.matmul %32, %138, %cst_125 {dimension_numbers = #tpu.dot_dimension_numbers<[1], [0], [0], [1], [0, 0, 1, 1], [], []>} : vector<8x128xbf16>, vector<128x16xbf16>, vector<8x16xf32> -> vector<8x16xf32>
    %c208 = arith.constant 208 : index
    %c0_126 = arith.constant 0 : index
    %140 = vector.load %arg12[%c208, %c0_126] : memref<512x16xf32, #tpu.memory_space<vmem>>, vector<8x16xf32>
    tpu.vector_store %arg12[%c208, %c0_126], %139 {strides = array<i32>} : memref<512x16xf32, #tpu.memory_space<vmem>>, vector<8x16xf32>,
    %c27 = arith.constant 27 : index
    %c0_127 = arith.constant 0 : index
    %c0_128 = arith.constant 0 : index
    %141 = vector.load %arg6[%c27, %c0_127, %c0_128] : memref<64x128x16xbf16, #tpu.memory_space<vmem>>, vector<1x128x16xbf16>
    %142 = vector.shape_cast %141 : vector<1x128x16xbf16> to vector<128x16xbf16>
    %cst_129 = arith.constant dense<0.000000e+00> : vector<8x16xf32>
    %143 = tpu.matmul %32, %142, %cst_129 {dimension_numbers = #tpu.dot_dimension_numbers<[1], [0], [0], [1], [0, 0, 1, 1], [], []>} : vector<8x128xbf16>, vector<128x16xbf16>, vector<8x16xf32> -> vector<8x16xf32>
    %c216 = arith.constant 216 : index
    %c0_130 = arith.constant 0 : index
    %144 = vector.load %arg12[%c216, %c0_130] : memref<512x16xf32, #tpu.memory_space<vmem>>, vector<8x16xf32>
    tpu.vector_store %arg12[%c216, %c0_130], %143 {strides = array<i32>} : memref<512x16xf32, #tpu.memory_space<vmem>>, vector<8x16xf32>,
    %c28 = arith.constant 28 : index
    %c0_131 = arith.constant 0 : index
    %c0_132 = arith.constant 0 : index
    %145 = vector.load %arg6[%c28, %c0_131, %c0_132] : memref<64x128x16xbf16, #tpu.memory_space<vmem>>, vector<1x128x16xbf16>
    %146 = vector.shape_cast %145 : vector<1x128x16xbf16> to vector<128x16xbf16>
    %cst_133 = arith.constant dense<0.000000e+00> : vector<8x16xf32>
    %147 = tpu.matmul %32, %146, %cst_133 {dimension_numbers = #tpu.dot_dimension_numbers<[1], [0], [0], [1], [0, 0, 1, 1], [], []>} : vector<8x128xbf16>, vector<128x16xbf16>, vector<8x16xf32> -> vector<8x16xf32>
    %c224 = arith.constant 224 : index
    %c0_134 = arith.constant 0 : index
    %148 = vector.load %arg12[%c224, %c0_134] : memref<512x16xf32, #tpu.memory_space<vmem>>, vector<8x16xf32>
    tpu.vector_store %arg12[%c224, %c0_134], %147 {strides = array<i32>} : memref<512x16xf32, #tpu.memory_space<vmem>>, vector<8x16xf32>,
    %c29 = arith.constant 29 : index
    %c0_135 = arith.constant 0 : index
    %c0_136 = arith.constant 0 : index
    %149 = vector.load %arg6[%c29, %c0_135, %c0_136] : memref<64x128x16xbf16, #tpu.memory_space<vmem>>, vector<1x128x16xbf16>
    %150 = vector.shape_cast %149 : vector<1x128x16xbf16> to vector<128x16xbf16>
    %cst_137 = arith.constant dense<0.000000e+00> : vector<8x16xf32>
    %151 = tpu.matmul %32, %150, %cst_137 {dimension_numbers = #tpu.dot_dimension_numbers<[1], [0], [0], [1], [0, 0, 1, 1], [], []>} : vector<8x128xbf16>, vector<128x16xbf16>, vector<8x16xf32> -> vector<8x16xf32>
    %c232 = arith.constant 232 : index
    %c0_138 = arith.constant 0 : index
    %152 = vector.load %arg12[%c232, %c0_138] : memref<512x16xf32, #tpu.memory_space<vmem>>, vector<8x16xf32>
    tpu.vector_store %arg12[%c232, %c0_138], %151 {strides = array<i32>} : memref<512x16xf32, #tpu.memory_space<vmem>>, vector<8x16xf32>,
    %c30 = arith.constant 30 : index
    %c0_139 = arith.constant 0 : index
    %c0_140 = arith.constant 0 : index
    %153 = vector.load %arg6[%c30, %c0_139, %c0_140] : memref<64x128x16xbf16, #tpu.memory_space<vmem>>, vector<1x128x16xbf16>
    %154 = vector.shape_cast %153 : vector<1x128x16xbf16> to vector<128x16xbf16>
    %cst_141 = arith.constant dense<0.000000e+00> : vector<8x16xf32>
    %155 = tpu.matmul %32, %154, %cst_141 {dimension_numbers = #tpu.dot_dimension_numbers<[1], [0], [0], [1], [0, 0, 1, 1], [], []>} : vector<8x128xbf16>, vector<128x16xbf16>, vector<8x16xf32> -> vector<8x16xf32>
    %c240 = arith.constant 240 : index
    %c0_142 = arith.constant 0 : index
    %156 = vector.load %arg12[%c240, %c0_142] : memref<512x16xf32, #tpu.memory_space<vmem>>, vector<8x16xf32>
    tpu.vector_store %arg12[%c240, %c0_142], %155 {strides = array<i32>} : memref<512x16xf32, #tpu.memory_space<vmem>>, vector<8x16xf32>,
    %c31 = arith.constant 31 : index
    %c0_143 = arith.constant 0 : index
    %c0_144 = arith.constant 0 : index
    %157 = vector.load %arg6[%c31, %c0_143, %c0_144] : memref<64x128x16xbf16, #tpu.memory_space<vmem>>, vector<1x128x16xbf16>
    %158 = vector.shape_cast %157 : vector<1x128x16xbf16> to vector<128x16xbf16>
    %cst_145 = arith.constant dense<0.000000e+00> : vector<8x16xf32>
    %159 = tpu.matmul %32, %158, %cst_145 {dimension_numbers = #tpu.dot_dimension_numbers<[1], [0], [0], [1], [0, 0, 1, 1], [], []>} : vector<8x128xbf16>, vector<128x16xbf16>, vector<8x16xf32> -> vector<8x16xf32>
    %c248 = arith.constant 248 : index
    %c0_146 = arith.constant 0 : index
    %160 = vector.load %arg12[%c248, %c0_146] : memref<512x16xf32, #tpu.memory_space<vmem>>, vector<8x16xf32>
    tpu.vector_store %arg12[%c248, %c0_146], %159 {strides = array<i32>} : memref<512x16xf32, #tpu.memory_space<vmem>>, vector<8x16xf32>,
    %c32_147 = arith.constant 32 : index
    %c0_148 = arith.constant 0 : index
    %c0_149 = arith.constant 0 : index
    %161 = vector.load %arg6[%c32_147, %c0_148, %c0_149] : memref<64x128x16xbf16, #tpu.memory_space<vmem>>, vector<1x128x16xbf16>
    %162 = vector.shape_cast %161 : vector<1x128x16xbf16> to vector<128x16xbf16>
    %cst_150 = arith.constant dense<0.000000e+00> : vector<8x16xf32>
    %163 = tpu.matmul %32, %162, %cst_150 {dimension_numbers = #tpu.dot_dimension_numbers<[1], [0], [0], [1], [0, 0, 1, 1], [], []>} : vector<8x128xbf16>, vector<128x16xbf16>, vector<8x16xf32> -> vector<8x16xf32>
    %c256 = arith.constant 256 : index
    %c0_151 = arith.constant 0 : index
    %164 = vector.load %arg12[%c256, %c0_151] : memref<512x16xf32, #tpu.memory_space<vmem>>, vector<8x16xf32>
    tpu.vector_store %arg12[%c256, %c0_151], %163 {strides = array<i32>} : memref<512x16xf32, #tpu.memory_space<vmem>>, vector<8x16xf32>,
    %c33 = arith.constant 33 : index
    %c0_152 = arith.constant 0 : index
    %c0_153 = arith.constant 0 : index
    %165 = vector.load %arg6[%c33, %c0_152, %c0_153] : memref<64x128x16xbf16, #tpu.memory_space<vmem>>, vector<1x128x16xbf16>
    %166 = vector.shape_cast %165 : vector<1x128x16xbf16> to vector<128x16xbf16>
    %cst_154 = arith.constant dense<0.000000e+00> : vector<8x16xf32>
    %167 = tpu.matmul %32, %166, %cst_154 {dimension_numbers = #tpu.dot_dimension_numbers<[1], [0], [0], [1], [0, 0, 1, 1], [], []>} : vector<8x128xbf16>, vector<128x16xbf16>, vector<8x16xf32> -> vector<8x16xf32>
    %c264 = arith.constant 264 : index
    %c0_155 = arith.constant 0 : index
    %168 = vector.load %arg12[%c264, %c0_155] : memref<512x16xf32, #tpu.memory_space<vmem>>, vector<8x16xf32>
    tpu.vector_store %arg12[%c264, %c0_155], %167 {strides = array<i32>} : memref<512x16xf32, #tpu.memory_space<vmem>>, vector<8x16xf32>,
    %c34 = arith.constant 34 : index
    %c0_156 = arith.constant 0 : index
    %c0_157 = arith.constant 0 : index
    %169 = vector.load %arg6[%c34, %c0_156, %c0_157] : memref<64x128x16xbf16, #tpu.memory_space<vmem>>, vector<1x128x16xbf16>
    %170 = vector.shape_cast %169 : vector<1x128x16xbf16> to vector<128x16xbf16>
    %cst_158 = arith.constant dense<0.000000e+00> : vector<8x16xf32>
    %171 = tpu.matmul %32, %170, %cst_158 {dimension_numbers = #tpu.dot_dimension_numbers<[1], [0], [0], [1], [0, 0, 1, 1], [], []>} : vector<8x128xbf16>, vector<128x16xbf16>, vector<8x16xf32> -> vector<8x16xf32>
    %c272 = arith.constant 272 : index
    %c0_159 = arith.constant 0 : index
    %172 = vector.load %arg12[%c272, %c0_159] : memref<512x16xf32, #tpu.memory_space<vmem>>, vector<8x16xf32>
    tpu.vector_store %arg12[%c272, %c0_159], %171 {strides = array<i32>} : memref<512x16xf32, #tpu.memory_space<vmem>>, vector<8x16xf32>,
    %c35 = arith.constant 35 : index
    %c0_160 = arith.constant 0 : index
    %c0_161 = arith.constant 0 : index
    %173 = vector.load %arg6[%c35, %c0_160, %c0_161] : memref<64x128x16xbf16, #tpu.memory_space<vmem>>, vector<1x128x16xbf16>
    %174 = vector.shape_cast %173 : vector<1x128x16xbf16> to vector<128x16xbf16>
    %cst_162 = arith.constant dense<0.000000e+00> : vector<8x16xf32>
    %175 = tpu.matmul %32, %174, %cst_162 {dimension_numbers = #tpu.dot_dimension_numbers<[1], [0], [0], [1], [0, 0, 1, 1], [], []>} : vector<8x128xbf16>, vector<128x16xbf16>, vector<8x16xf32> -> vector<8x16xf32>
    %c280 = arith.constant 280 : index
    %c0_163 = arith.constant 0 : index
    %176 = vector.load %arg12[%c280, %c0_163] : memref<512x16xf32, #tpu.memory_space<vmem>>, vector<8x16xf32>
    tpu.vector_store %arg12[%c280, %c0_163], %175 {strides = array<i32>} : memref<512x16xf32, #tpu.memory_space<vmem>>, vector<8x16xf32>,
    %c36 = arith.constant 36 : index
    %c0_164 = arith.constant 0 : index
    %c0_165 = arith.constant 0 : index
    %177 = vector.load %arg6[%c36, %c0_164, %c0_165] : memref<64x128x16xbf16, #tpu.memory_space<vmem>>, vector<1x128x16xbf16>
    %178 = vector.shape_cast %177 : vector<1x128x16xbf16> to vector<128x16xbf16>
    %cst_166 = arith.constant dense<0.000000e+00> : vector<8x16xf32>
    %179 = tpu.matmul %32, %178, %cst_166 {dimension_numbers = #tpu.dot_dimension_numbers<[1], [0], [0], [1], [0, 0, 1, 1], [], []>} : vector<8x128xbf16>, vector<128x16xbf16>, vector<8x16xf32> -> vector<8x16xf32>
    %c288 = arith.constant 288 : index
    %c0_167 = arith.constant 0 : index
    %180 = vector.load %arg12[%c288, %c0_167] : memref<512x16xf32, #tpu.memory_space<vmem>>, vector<8x16xf32>
    tpu.vector_store %arg12[%c288, %c0_167], %179 {strides = array<i32>} : memref<512x16xf32, #tpu.memory_space<vmem>>, vector<8x16xf32>,
    %c37 = arith.constant 37 : index
    %c0_168 = arith.constant 0 : index
    %c0_169 = arith.constant 0 : index
    %181 = vector.load %arg6[%c37, %c0_168, %c0_169] : memref<64x128x16xbf16, #tpu.memory_space<vmem>>, vector<1x128x16xbf16>
    %182 = vector.shape_cast %181 : vector<1x128x16xbf16> to vector<128x16xbf16>
    %cst_170 = arith.constant dense<0.000000e+00> : vector<8x16xf32>
    %183 = tpu.matmul %32, %182, %cst_170 {dimension_numbers = #tpu.dot_dimension_numbers<[1], [0], [0], [1], [0, 0, 1, 1], [], []>} : vector<8x128xbf16>, vector<128x16xbf16>, vector<8x16xf32> -> vector<8x16xf32>
    %c296 = arith.constant 296 : index
    %c0_171 = arith.constant 0 : index
    %184 = vector.load %arg12[%c296, %c0_171] : memref<512x16xf32, #tpu.memory_space<vmem>>, vector<8x16xf32>
    tpu.vector_store %arg12[%c296, %c0_171], %183 {strides = array<i32>} : memref<512x16xf32, #tpu.memory_space<vmem>>, vector<8x16xf32>,
    %c38 = arith.constant 38 : index
    %c0_172 = arith.constant 0 : index
    %c0_173 = arith.constant 0 : index
    %185 = vector.load %arg6[%c38, %c0_172, %c0_173] : memref<64x128x16xbf16, #tpu.memory_space<vmem>>, vector<1x128x16xbf16>
    %186 = vector.shape_cast %185 : vector<1x128x16xbf16> to vector<128x16xbf16>
    %cst_174 = arith.constant dense<0.000000e+00> : vector<8x16xf32>
    %187 = tpu.matmul %32, %186, %cst_174 {dimension_numbers = #tpu.dot_dimension_numbers<[1], [0], [0], [1], [0, 0, 1, 1], [], []>} : vector<8x128xbf16>, vector<128x16xbf16>, vector<8x16xf32> -> vector<8x16xf32>
    %c304 = arith.constant 304 : index
    %c0_175 = arith.constant 0 : index
    %188 = vector.load %arg12[%c304, %c0_175] : memref<512x16xf32, #tpu.memory_space<vmem>>, vector<8x16xf32>
    tpu.vector_store %arg12[%c304, %c0_175], %187 {strides = array<i32>} : memref<512x16xf32, #tpu.memory_space<vmem>>, vector<8x16xf32>,
    %c39 = arith.constant 39 : index
    %c0_176 = arith.constant 0 : index
    %c0_177 = arith.constant 0 : index
    %189 = vector.load %arg6[%c39, %c0_176, %c0_177] : memref<64x128x16xbf16, #tpu.memory_space<vmem>>, vector<1x128x16xbf16>
    %190 = vector.shape_cast %189 : vector<1x128x16xbf16> to vector<128x16xbf16>
    %cst_178 = arith.constant dense<0.000000e+00> : vector<8x16xf32>
    %191 = tpu.matmul %32, %190, %cst_178 {dimension_numbers = #tpu.dot_dimension_numbers<[1], [0], [0], [1], [0, 0, 1, 1], [], []>} : vector<8x128xbf16>, vector<128x16xbf16>, vector<8x16xf32> -> vector<8x16xf32>
    %c312 = arith.constant 312 : index
    %c0_179 = arith.constant 0 : index
    %192 = vector.load %arg12[%c312, %c0_179] : memref<512x16xf32, #tpu.memory_space<vmem>>, vector<8x16xf32>
    tpu.vector_store %arg12[%c312, %c0_179], %191 {strides = array<i32>} : memref<512x16xf32, #tpu.memory_space<vmem>>, vector<8x16xf32>,
    %c40_180 = arith.constant 40 : index
    %c0_181 = arith.constant 0 : index
    %c0_182 = arith.constant 0 : index
    %193 = vector.load %arg6[%c40_180, %c0_181, %c0_182] : memref<64x128x16xbf16, #tpu.memory_space<vmem>>, vector<1x128x16xbf16>
    %194 = vector.shape_cast %193 : vector<1x128x16xbf16> to vector<128x16xbf16>
    %cst_183 = arith.constant dense<0.000000e+00> : vector<8x16xf32>
    %195 = tpu.matmul %32, %194, %cst_183 {dimension_numbers = #tpu.dot_dimension_numbers<[1], [0], [0], [1], [0, 0, 1, 1], [], []>} : vector<8x128xbf16>, vector<128x16xbf16>, vector<8x16xf32> -> vector<8x16xf32>
    %c320 = arith.constant 320 : index
    %c0_184 = arith.constant 0 : index
    %196 = vector.load %arg12[%c320, %c0_184] : memref<512x16xf32, #tpu.memory_space<vmem>>, vector<8x16xf32>
    tpu.vector_store %arg12[%c320, %c0_184], %195 {strides = array<i32>} : memref<512x16xf32, #tpu.memory_space<vmem>>, vector<8x16xf32>,
    %c41 = arith.constant 41 : index
    %c0_185 = arith.constant 0 : index
    %c0_186 = arith.constant 0 : index
    %197 = vector.load %arg6[%c41, %c0_185, %c0_186] : memref<64x128x16xbf16, #tpu.memory_space<vmem>>, vector<1x128x16xbf16>
    %198 = vector.shape_cast %197 : vector<1x128x16xbf16> to vector<128x16xbf16>
    %cst_187 = arith.constant dense<0.000000e+00> : vector<8x16xf32>
    %199 = tpu.matmul %32, %198, %cst_187 {dimension_numbers = #tpu.dot_dimension_numbers<[1], [0], [0], [1], [0, 0, 1, 1], [], []>} : vector<8x128xbf16>, vector<128x16xbf16>, vector<8x16xf32> -> vector<8x16xf32>
    %c328 = arith.constant 328 : index
    %c0_188 = arith.constant 0 : index
    %200 = vector.load %arg12[%c328, %c0_188] : memref<512x16xf32, #tpu.memory_space<vmem>>, vector<8x16xf32>
    tpu.vector_store %arg12[%c328, %c0_188], %199 {strides = array<i32>} : memref<512x16xf32, #tpu.memory_space<vmem>>, vector<8x16xf32>,
    %c42 = arith.constant 42 : index
    %c0_189 = arith.constant 0 : index
    %c0_190 = arith.constant 0 : index
    %201 = vector.load %arg6[%c42, %c0_189, %c0_190] : memref<64x128x16xbf16, #tpu.memory_space<vmem>>, vector<1x128x16xbf16>
    %202 = vector.shape_cast %201 : vector<1x128x16xbf16> to vector<128x16xbf16>
    %cst_191 = arith.constant dense<0.000000e+00> : vector<8x16xf32>
    %203 = tpu.matmul %32, %202, %cst_191 {dimension_numbers = #tpu.dot_dimension_numbers<[1], [0], [0], [1], [0, 0, 1, 1], [], []>} : vector<8x128xbf16>, vector<128x16xbf16>, vector<8x16xf32> -> vector<8x16xf32>
    %c336 = arith.constant 336 : index
    %c0_192 = arith.constant 0 : index
    %204 = vector.load %arg12[%c336, %c0_192] : memref<512x16xf32, #tpu.memory_space<vmem>>, vector<8x16xf32>
    tpu.vector_store %arg12[%c336, %c0_192], %203 {strides = array<i32>} : memref<512x16xf32, #tpu.memory_space<vmem>>, vector<8x16xf32>,
    %c43 = arith.constant 43 : index
    %c0_193 = arith.constant 0 : index
    %c0_194 = arith.constant 0 : index
    %205 = vector.load %arg6[%c43, %c0_193, %c0_194] : memref<64x128x16xbf16, #tpu.memory_space<vmem>>, vector<1x128x16xbf16>
    %206 = vector.shape_cast %205 : vector<1x128x16xbf16> to vector<128x16xbf16>
    %cst_195 = arith.constant dense<0.000000e+00> : vector<8x16xf32>
    %207 = tpu.matmul %32, %206, %cst_195 {dimension_numbers = #tpu.dot_dimension_numbers<[1], [0], [0], [1], [0, 0, 1, 1], [], []>} : vector<8x128xbf16>, vector<128x16xbf16>, vector<8x16xf32> -> vector<8x16xf32>
    %c344 = arith.constant 344 : index
    %c0_196 = arith.constant 0 : index
    %208 = vector.load %arg12[%c344, %c0_196] : memref<512x16xf32, #tpu.memory_space<vmem>>, vector<8x16xf32>
    tpu.vector_store %arg12[%c344, %c0_196], %207 {strides = array<i32>} : memref<512x16xf32, #tpu.memory_space<vmem>>, vector<8x16xf32>,
    %c44 = arith.constant 44 : index
    %c0_197 = arith.constant 0 : index
    %c0_198 = arith.constant 0 : index
    %209 = vector.load %arg6[%c44, %c0_197, %c0_198] : memref<64x128x16xbf16, #tpu.memory_space<vmem>>, vector<1x128x16xbf16>
    %210 = vector.shape_cast %209 : vector<1x128x16xbf16> to vector<128x16xbf16>
    %cst_199 = arith.constant dense<0.000000e+00> : vector<8x16xf32>
    %211 = tpu.matmul %32, %210, %cst_199 {dimension_numbers = #tpu.dot_dimension_numbers<[1], [0], [0], [1], [0, 0, 1, 1], [], []>} : vector<8x128xbf16>, vector<128x16xbf16>, vector<8x16xf32> -> vector<8x16xf32>
    %c352 = arith.constant 352 : index
    %c0_200 = arith.constant 0 : index
    %212 = vector.load %arg12[%c352, %c0_200] : memref<512x16xf32, #tpu.memory_space<vmem>>, vector<8x16xf32>
    tpu.vector_store %arg12[%c352, %c0_200], %211 {strides = array<i32>} : memref<512x16xf32, #tpu.memory_space<vmem>>, vector<8x16xf32>,
    %c45 = arith.constant 45 : index
    %c0_201 = arith.constant 0 : index
    %c0_202 = arith.constant 0 : index
    %213 = vector.load %arg6[%c45, %c0_201, %c0_202] : memref<64x128x16xbf16, #tpu.memory_space<vmem>>, vector<1x128x16xbf16>
    %214 = vector.shape_cast %213 : vector<1x128x16xbf16> to vector<128x16xbf16>
    %cst_203 = arith.constant dense<0.000000e+00> : vector<8x16xf32>
    %215 = tpu.matmul %32, %214, %cst_203 {dimension_numbers = #tpu.dot_dimension_numbers<[1], [0], [0], [1], [0, 0, 1, 1], [], []>} : vector<8x128xbf16>, vector<128x16xbf16>, vector<8x16xf32> -> vector<8x16xf32>
    %c360 = arith.constant 360 : index
    %c0_204 = arith.constant 0 : index
    %216 = vector.load %arg12[%c360, %c0_204] : memref<512x16xf32, #tpu.memory_space<vmem>>, vector<8x16xf32>
    tpu.vector_store %arg12[%c360, %c0_204], %215 {strides = array<i32>} : memref<512x16xf32, #tpu.memory_space<vmem>>, vector<8x16xf32>,
    %c46 = arith.constant 46 : index
    %c0_205 = arith.constant 0 : index
    %c0_206 = arith.constant 0 : index
    %217 = vector.load %arg6[%c46, %c0_205, %c0_206] : memref<64x128x16xbf16, #tpu.memory_space<vmem>>, vector<1x128x16xbf16>
    %218 = vector.shape_cast %217 : vector<1x128x16xbf16> to vector<128x16xbf16>
    %cst_207 = arith.constant dense<0.000000e+00> : vector<8x16xf32>
    %219 = tpu.matmul %32, %218, %cst_207 {dimension_numbers = #tpu.dot_dimension_numbers<[1], [0], [0], [1], [0, 0, 1, 1], [], []>} : vector<8x128xbf16>, vector<128x16xbf16>, vector<8x16xf32> -> vector<8x16xf32>
    %c368 = arith.constant 368 : index
    %c0_208 = arith.constant 0 : index
    %220 = vector.load %arg12[%c368, %c0_208] : memref<512x16xf32, #tpu.memory_space<vmem>>, vector<8x16xf32>
    tpu.vector_store %arg12[%c368, %c0_208], %219 {strides = array<i32>} : memref<512x16xf32, #tpu.memory_space<vmem>>, vector<8x16xf32>,
    %c47 = arith.constant 47 : index
    %c0_209 = arith.constant 0 : index
    %c0_210 = arith.constant 0 : index
    %221 = vector.load %arg6[%c47, %c0_209, %c0_210] : memref<64x128x16xbf16, #tpu.memory_space<vmem>>, vector<1x128x16xbf16>
    %222 = vector.shape_cast %221 : vector<1x128x16xbf16> to vector<128x16xbf16>
    %cst_211 = arith.constant dense<0.000000e+00> : vector<8x16xf32>
    %223 = tpu.matmul %32, %222, %cst_211 {dimension_numbers = #tpu.dot_dimension_numbers<[1], [0], [0], [1], [0, 0, 1, 1], [], []>} : vector<8x128xbf16>, vector<128x16xbf16>, vector<8x16xf32> -> vector<8x16xf32>
    %c376 = arith.constant 376 : index
    %c0_212 = arith.constant 0 : index
    %224 = vector.load %arg12[%c376, %c0_212] : memref<512x16xf32, #tpu.memory_space<vmem>>, vector<8x16xf32>
    tpu.vector_store %arg12[%c376, %c0_212], %223 {strides = array<i32>} : memref<512x16xf32, #tpu.memory_space<vmem>>, vector<8x16xf32>,
    %c48_213 = arith.constant 48 : index
    %c0_214 = arith.constant 0 : index
    %c0_215 = arith.constant 0 : index
    %225 = vector.load %arg6[%c48_213, %c0_214, %c0_215] : memref<64x128x16xbf16, #tpu.memory_space<vmem>>, vector<1x128x16xbf16>
    %226 = vector.shape_cast %225 : vector<1x128x16xbf16> to vector<128x16xbf16>
    %cst_216 = arith.constant dense<0.000000e+00> : vector<8x16xf32>
    %227 = tpu.matmul %32, %226, %cst_216 {dimension_numbers = #tpu.dot_dimension_numbers<[1], [0], [0], [1], [0, 0, 1, 1], [], []>} : vector<8x128xbf16>, vector<128x16xbf16>, vector<8x16xf32> -> vector<8x16xf32>
    %c384 = arith.constant 384 : index
    %c0_217 = arith.constant 0 : index
    %228 = vector.load %arg12[%c384, %c0_217] : memref<512x16xf32, #tpu.memory_space<vmem>>, vector<8x16xf32>
    tpu.vector_store %arg12[%c384, %c0_217], %227 {strides = array<i32>} : memref<512x16xf32, #tpu.memory_space<vmem>>, vector<8x16xf32>,
    %c49 = arith.constant 49 : index
    %c0_218 = arith.constant 0 : index
    %c0_219 = arith.constant 0 : index
    %229 = vector.load %arg6[%c49, %c0_218, %c0_219] : memref<64x128x16xbf16, #tpu.memory_space<vmem>>, vector<1x128x16xbf16>
    %230 = vector.shape_cast %229 : vector<1x128x16xbf16> to vector<128x16xbf16>
    %cst_220 = arith.constant dense<0.000000e+00> : vector<8x16xf32>
    %231 = tpu.matmul %32, %230, %cst_220 {dimension_numbers = #tpu.dot_dimension_numbers<[1], [0], [0], [1], [0, 0, 1, 1], [], []>} : vector<8x128xbf16>, vector<128x16xbf16>, vector<8x16xf32> -> vector<8x16xf32>
    %c392 = arith.constant 392 : index
    %c0_221 = arith.constant 0 : index
    %232 = vector.load %arg12[%c392, %c0_221] : memref<512x16xf32, #tpu.memory_space<vmem>>, vector<8x16xf32>
    tpu.vector_store %arg12[%c392, %c0_221], %231 {strides = array<i32>} : memref<512x16xf32, #tpu.memory_space<vmem>>, vector<8x16xf32>,
    %c50 = arith.constant 50 : index
    %c0_222 = arith.constant 0 : index
    %c0_223 = arith.constant 0 : index
    %233 = vector.load %arg6[%c50, %c0_222, %c0_223] : memref<64x128x16xbf16, #tpu.memory_space<vmem>>, vector<1x128x16xbf16>
    %234 = vector.shape_cast %233 : vector<1x128x16xbf16> to vector<128x16xbf16>
    %cst_224 = arith.constant dense<0.000000e+00> : vector<8x16xf32>
    %235 = tpu.matmul %32, %234, %cst_224 {dimension_numbers = #tpu.dot_dimension_numbers<[1], [0], [0], [1], [0, 0, 1, 1], [], []>} : vector<8x128xbf16>, vector<128x16xbf16>, vector<8x16xf32> -> vector<8x16xf32>
    %c400 = arith.constant 400 : index
    %c0_225 = arith.constant 0 : index
    %236 = vector.load %arg12[%c400, %c0_225] : memref<512x16xf32, #tpu.memory_space<vmem>>, vector<8x16xf32>
    tpu.vector_store %arg12[%c400, %c0_225], %235 {strides = array<i32>} : memref<512x16xf32, #tpu.memory_space<vmem>>, vector<8x16xf32>,
    %c51 = arith.constant 51 : index
    %c0_226 = arith.constant 0 : index
    %c0_227 = arith.constant 0 : index
    %237 = vector.load %arg6[%c51, %c0_226, %c0_227] : memref<64x128x16xbf16, #tpu.memory_space<vmem>>, vector<1x128x16xbf16>
    %238 = vector.shape_cast %237 : vector<1x128x16xbf16> to vector<128x16xbf16>
    %cst_228 = arith.constant dense<0.000000e+00> : vector<8x16xf32>
    %239 = tpu.matmul %32, %238, %cst_228 {dimension_numbers = #tpu.dot_dimension_numbers<[1], [0], [0], [1], [0, 0, 1, 1], [], []>} : vector<8x128xbf16>, vector<128x16xbf16>, vector<8x16xf32> -> vector<8x16xf32>
    %c408 = arith.constant 408 : index
    %c0_229 = arith.constant 0 : index
    %240 = vector.load %arg12[%c408, %c0_229] : memref<512x16xf32, #tpu.memory_space<vmem>>, vector<8x16xf32>
    tpu.vector_store %arg12[%c408, %c0_229], %239 {strides = array<i32>} : memref<512x16xf32, #tpu.memory_space<vmem>>, vector<8x16xf32>,
    %c52 = arith.constant 52 : index
    %c0_230 = arith.constant 0 : index
    %c0_231 = arith.constant 0 : index
    %241 = vector.load %arg6[%c52, %c0_230, %c0_231] : memref<64x128x16xbf16, #tpu.memory_space<vmem>>, vector<1x128x16xbf16>
    %242 = vector.shape_cast %241 : vector<1x128x16xbf16> to vector<128x16xbf16>
    %cst_232 = arith.constant dense<0.000000e+00> : vector<8x16xf32>
    %243 = tpu.matmul %32, %242, %cst_232 {dimension_numbers = #tpu.dot_dimension_numbers<[1], [0], [0], [1], [0, 0, 1, 1], [], []>} : vector<8x128xbf16>, vector<128x16xbf16>, vector<8x16xf32> -> vector<8x16xf32>
    %c416 = arith.constant 416 : index
    %c0_233 = arith.constant 0 : index
    %244 = vector.load %arg12[%c416, %c0_233] : memref<512x16xf32, #tpu.memory_space<vmem>>, vector<8x16xf32>
    tpu.vector_store %arg12[%c416, %c0_233], %243 {strides = array<i32>} : memref<512x16xf32, #tpu.memory_space<vmem>>, vector<8x16xf32>,
    %c53 = arith.constant 53 : index
    %c0_234 = arith.constant 0 : index
    %c0_235 = arith.constant 0 : index
    %245 = vector.load %arg6[%c53, %c0_234, %c0_235] : memref<64x128x16xbf16, #tpu.memory_space<vmem>>, vector<1x128x16xbf16>
    %246 = vector.shape_cast %245 : vector<1x128x16xbf16> to vector<128x16xbf16>
    %cst_236 = arith.constant dense<0.000000e+00> : vector<8x16xf32>
    %247 = tpu.matmul %32, %246, %cst_236 {dimension_numbers = #tpu.dot_dimension_numbers<[1], [0], [0], [1], [0, 0, 1, 1], [], []>} : vector<8x128xbf16>, vector<128x16xbf16>, vector<8x16xf32> -> vector<8x16xf32>
    %c424 = arith.constant 424 : index
    %c0_237 = arith.constant 0 : index
    %248 = vector.load %arg12[%c424, %c0_237] : memref<512x16xf32, #tpu.memory_space<vmem>>, vector<8x16xf32>
    tpu.vector_store %arg12[%c424, %c0_237], %247 {strides = array<i32>} : memref<512x16xf32, #tpu.memory_space<vmem>>, vector<8x16xf32>,
    %c54 = arith.constant 54 : index
    %c0_238 = arith.constant 0 : index
    %c0_239 = arith.constant 0 : index
    %249 = vector.load %arg6[%c54, %c0_238, %c0_239] : memref<64x128x16xbf16, #tpu.memory_space<vmem>>, vector<1x128x16xbf16>
    %250 = vector.shape_cast %249 : vector<1x128x16xbf16> to vector<128x16xbf16>
    %cst_240 = arith.constant dense<0.000000e+00> : vector<8x16xf32>
    %251 = tpu.matmul %32, %250, %cst_240 {dimension_numbers = #tpu.dot_dimension_numbers<[1], [0], [0], [1], [0, 0, 1, 1], [], []>} : vector<8x128xbf16>, vector<128x16xbf16>, vector<8x16xf32> -> vector<8x16xf32>
    %c432 = arith.constant 432 : index
    %c0_241 = arith.constant 0 : index
    %252 = vector.load %arg12[%c432, %c0_241] : memref<512x16xf32, #tpu.memory_space<vmem>>, vector<8x16xf32>
    tpu.vector_store %arg12[%c432, %c0_241], %251 {strides = array<i32>} : memref<512x16xf32, #tpu.memory_space<vmem>>, vector<8x16xf32>,
    %c55 = arith.constant 55 : index
    %c0_242 = arith.constant 0 : index
    %c0_243 = arith.constant 0 : index
    %253 = vector.load %arg6[%c55, %c0_242, %c0_243] : memref<64x128x16xbf16, #tpu.memory_space<vmem>>, vector<1x128x16xbf16>
    %254 = vector.shape_cast %253 : vector<1x128x16xbf16> to vector<128x16xbf16>
    %cst_244 = arith.constant dense<0.000000e+00> : vector<8x16xf32>
    %255 = tpu.matmul %32, %254, %cst_244 {dimension_numbers = #tpu.dot_dimension_numbers<[1], [0], [0], [1], [0, 0, 1, 1], [], []>} : vector<8x128xbf16>, vector<128x16xbf16>, vector<8x16xf32> -> vector<8x16xf32>
    %c440 = arith.constant 440 : index
    %c0_245 = arith.constant 0 : index
    %256 = vector.load %arg12[%c440, %c0_245] : memref<512x16xf32, #tpu.memory_space<vmem>>, vector<8x16xf32>
    tpu.vector_store %arg12[%c440, %c0_245], %255 {strides = array<i32>} : memref<512x16xf32, #tpu.memory_space<vmem>>, vector<8x16xf32>,
    %c56_246 = arith.constant 56 : index
    %c0_247 = arith.constant 0 : index
    %c0_248 = arith.constant 0 : index
    %257 = vector.load %arg6[%c56_246, %c0_247, %c0_248] : memref<64x128x16xbf16, #tpu.memory_space<vmem>>, vector<1x128x16xbf16>
    %258 = vector.shape_cast %257 : vector<1x128x16xbf16> to vector<128x16xbf16>
    %cst_249 = arith.constant dense<0.000000e+00> : vector<8x16xf32>
    %259 = tpu.matmul %32, %258, %cst_249 {dimension_numbers = #tpu.dot_dimension_numbers<[1], [0], [0], [1], [0, 0, 1, 1], [], []>} : vector<8x128xbf16>, vector<128x16xbf16>, vector<8x16xf32> -> vector<8x16xf32>
    %c448 = arith.constant 448 : index
    %c0_250 = arith.constant 0 : index
    %260 = vector.load %arg12[%c448, %c0_250] : memref<512x16xf32, #tpu.memory_space<vmem>>, vector<8x16xf32>
    tpu.vector_store %arg12[%c448, %c0_250], %259 {strides = array<i32>} : memref<512x16xf32, #tpu.memory_space<vmem>>, vector<8x16xf32>,
    %c57 = arith.constant 57 : index
    %c0_251 = arith.constant 0 : index
    %c0_252 = arith.constant 0 : index
    %261 = vector.load %arg6[%c57, %c0_251, %c0_252] : memref<64x128x16xbf16, #tpu.memory_space<vmem>>, vector<1x128x16xbf16>
    %262 = vector.shape_cast %261 : vector<1x128x16xbf16> to vector<128x16xbf16>
    %cst_253 = arith.constant dense<0.000000e+00> : vector<8x16xf32>
    %263 = tpu.matmul %32, %262, %cst_253 {dimension_numbers = #tpu.dot_dimension_numbers<[1], [0], [0], [1], [0, 0, 1, 1], [], []>} : vector<8x128xbf16>, vector<128x16xbf16>, vector<8x16xf32> -> vector<8x16xf32>
    %c456 = arith.constant 456 : index
    %c0_254 = arith.constant 0 : index
    %264 = vector.load %arg12[%c456, %c0_254] : memref<512x16xf32, #tpu.memory_space<vmem>>, vector<8x16xf32>
    tpu.vector_store %arg12[%c456, %c0_254], %263 {strides = array<i32>} : memref<512x16xf32, #tpu.memory_space<vmem>>, vector<8x16xf32>,
    %c58 = arith.constant 58 : index
    %c0_255 = arith.constant 0 : index
    %c0_256 = arith.constant 0 : index
    %265 = vector.load %arg6[%c58, %c0_255, %c0_256] : memref<64x128x16xbf16, #tpu.memory_space<vmem>>, vector<1x128x16xbf16>
    %266 = vector.shape_cast %265 : vector<1x128x16xbf16> to vector<128x16xbf16>
    %cst_257 = arith.constant dense<0.000000e+00> : vector<8x16xf32>
    %267 = tpu.matmul %32, %266, %cst_257 {dimension_numbers = #tpu.dot_dimension_numbers<[1], [0], [0], [1], [0, 0, 1, 1], [], []>} : vector<8x128xbf16>, vector<128x16xbf16>, vector<8x16xf32> -> vector<8x16xf32>
    %c464 = arith.constant 464 : index
    %c0_258 = arith.constant 0 : index
    %268 = vector.load %arg12[%c464, %c0_258] : memref<512x16xf32, #tpu.memory_space<vmem>>, vector<8x16xf32>
    tpu.vector_store %arg12[%c464, %c0_258], %267 {strides = array<i32>} : memref<512x16xf32, #tpu.memory_space<vmem>>, vector<8x16xf32>,
    %c59 = arith.constant 59 : index
    %c0_259 = arith.constant 0 : index
    %c0_260 = arith.constant 0 : index
    %269 = vector.load %arg6[%c59, %c0_259, %c0_260] : memref<64x128x16xbf16, #tpu.memory_space<vmem>>, vector<1x128x16xbf16>
    %270 = vector.shape_cast %269 : vector<1x128x16xbf16> to vector<128x16xbf16>
    %cst_261 = arith.constant dense<0.000000e+00> : vector<8x16xf32>
    %271 = tpu.matmul %32, %270, %cst_261 {dimension_numbers = #tpu.dot_dimension_numbers<[1], [0], [0], [1], [0, 0, 1, 1], [], []>} : vector<8x128xbf16>, vector<128x16xbf16>, vector<8x16xf32> -> vector<8x16xf32>
    %c472 = arith.constant 472 : index
    %c0_262 = arith.constant 0 : index
    %272 = vector.load %arg12[%c472, %c0_262] : memref<512x16xf32, #tpu.memory_space<vmem>>, vector<8x16xf32>
    tpu.vector_store %arg12[%c472, %c0_262], %271 {strides = array<i32>} : memref<512x16xf32, #tpu.memory_space<vmem>>, vector<8x16xf32>,
    %c60 = arith.constant 60 : index
    %c0_263 = arith.constant 0 : index
    %c0_264 = arith.constant 0 : index
    %273 = vector.load %arg6[%c60, %c0_263, %c0_264] : memref<64x128x16xbf16, #tpu.memory_space<vmem>>, vector<1x128x16xbf16>
    %274 = vector.shape_cast %273 : vector<1x128x16xbf16> to vector<128x16xbf16>
    %cst_265 = arith.constant dense<0.000000e+00> : vector<8x16xf32>
    %275 = tpu.matmul %32, %274, %cst_265 {dimension_numbers = #tpu.dot_dimension_numbers<[1], [0], [0], [1], [0, 0, 1, 1], [], []>} : vector<8x128xbf16>, vector<128x16xbf16>, vector<8x16xf32> -> vector<8x16xf32>
    %c480 = arith.constant 480 : index
    %c0_266 = arith.constant 0 : index
    %276 = vector.load %arg12[%c480, %c0_266] : memref<512x16xf32, #tpu.memory_space<vmem>>, vector<8x16xf32>
    tpu.vector_store %arg12[%c480, %c0_266], %275 {strides = array<i32>} : memref<512x16xf32, #tpu.memory_space<vmem>>, vector<8x16xf32>,
    %c61 = arith.constant 61 : index
    %c0_267 = arith.constant 0 : index
    %c0_268 = arith.constant 0 : index
    %277 = vector.load %arg6[%c61, %c0_267, %c0_268] : memref<64x128x16xbf16, #tpu.memory_space<vmem>>, vector<1x128x16xbf16>
    %278 = vector.shape_cast %277 : vector<1x128x16xbf16> to vector<128x16xbf16>
    %cst_269 = arith.constant dense<0.000000e+00> : vector<8x16xf32>
    %279 = tpu.matmul %32, %278, %cst_269 {dimension_numbers = #tpu.dot_dimension_numbers<[1], [0], [0], [1], [0, 0, 1, 1], [], []>} : vector<8x128xbf16>, vector<128x16xbf16>, vector<8x16xf32> -> vector<8x16xf32>
    %c488 = arith.constant 488 : index
    %c0_270 = arith.constant 0 : index
    %280 = vector.load %arg12[%c488, %c0_270] : memref<512x16xf32, #tpu.memory_space<vmem>>, vector<8x16xf32>
    tpu.vector_store %arg12[%c488, %c0_270], %279 {strides = array<i32>} : memref<512x16xf32, #tpu.memory_space<vmem>>, vector<8x16xf32>,
    %c62 = arith.constant 62 : index
    %c0_271 = arith.constant 0 : index
    %c0_272 = arith.constant 0 : index
    %281 = vector.load %arg6[%c62, %c0_271, %c0_272] : memref<64x128x16xbf16, #tpu.memory_space<vmem>>, vector<1x128x16xbf16>
    %282 = vector.shape_cast %281 : vector<1x128x16xbf16> to vector<128x16xbf16>
    %cst_273 = arith.constant dense<0.000000e+00> : vector<8x16xf32>
    %283 = tpu.matmul %32, %282, %cst_273 {dimension_numbers = #tpu.dot_dimension_numbers<[1], [0], [0], [1], [0, 0, 1, 1], [], []>} : vector<8x128xbf16>, vector<128x16xbf16>, vector<8x16xf32> -> vector<8x16xf32>
    %c496 = arith.constant 496 : index
    %c0_274 = arith.constant 0 : index
    %284 = vector.load %arg12[%c496, %c0_274] : memref<512x16xf32, #tpu.memory_space<vmem>>, vector<8x16xf32>
    tpu.vector_store %arg12[%c496, %c0_274], %283 {strides = array<i32>} : memref<512x16xf32, #tpu.memory_space<vmem>>, vector<8x16xf32>,
    %c63 = arith.constant 63 : index
    %c0_275 = arith.constant 0 : index
    %c0_276 = arith.constant 0 : index
    %285 = vector.load %arg6[%c63, %c0_275, %c0_276] : memref<64x128x16xbf16, #tpu.memory_space<vmem>>, vector<1x128x16xbf16>
    %286 = vector.shape_cast %285 : vector<1x128x16xbf16> to vector<128x16xbf16>
    %cst_277 = arith.constant dense<0.000000e+00> : vector<8x16xf32>
    %287 = tpu.matmul %32, %286, %cst_277 {dimension_numbers = #tpu.dot_dimension_numbers<[1], [0], [0], [1], [0, 0, 1, 1], [], []>} : vector<8x128xbf16>, vector<128x16xbf16>, vector<8x16xf32> -> vector<8x16xf32>
    %c504 = arith.constant 504 : index
    %c0_278 = arith.constant 0 : index
    %288 = vector.load %arg12[%c504, %c0_278] : memref<512x16xf32, #tpu.memory_space<vmem>>, vector<8x16xf32>
    tpu.vector_store %arg12[%c504, %c0_278], %287 {strides = array<i32>} : memref<512x16xf32, #tpu.memory_space<vmem>>, vector<8x16xf32>,
    %c0_279 = arith.constant 0 : index
    %c0_280 = arith.constant 0 : index
    %289 = vector.load %arg5[%c0_279, %c0_280] : memref<16x512xbf16, #tpu.memory_space<vmem>>, vector<16x512xbf16>
    %c0_281 = arith.constant 0 : index
    %c0_282 = arith.constant 0 : index
    %290 = vector.load %arg12[%c0_281, %c0_282] : memref<512x16xf32, #tpu.memory_space<vmem>>, vector<512x16xf32>
    %291 = arith.truncf %290 : vector<512x16xf32> to vector<512x16xbf16>
    %cst_283 = arith.constant dense<0.000000e+00> : vector<16x16xf32>
    %292 = tpu.matmul %289, %291, %cst_283 {dimension_numbers = #tpu.dot_dimension_numbers<[1], [0], [0], [1], [0, 0, 1, 1], [], []>} : vector<16x512xbf16>, vector<512x16xbf16>, vector<16x16xf32> -> vector<16x16xf32>
    %cst_284 = arith.constant dense<0.000000e+00> : vector<16xf32>
    %293 = vector.multi_reduction <add>, %292, %cst_284 [1] : vector<16x16xf32> to vector<16xf32>
    %294 = vector.shape_cast %293 : vector<16xf32> to vector<16x1xf32>
    %cst_285 = arith.constant 1.600000e+01 : f32
    %295 = vector.broadcast %cst_285 : f32 to vector<16x1xf32>
    %296 = arith.divf %294, %295 : vector<16x1xf32>
    %297 = vector.broadcast %296 : vector<16x1xf32> to vector<16x16xf32>
    %298 = arith.subf %292, %297 : vector<16x16xf32>
    %299 = arith.mulf %298, %298 : vector<16x16xf32>
    %cst_286 = arith.constant dense<0.000000e+00> : vector<16xf32>
    %300 = vector.multi_reduction <add>, %299, %cst_286 [1] : vector<16x16xf32> to vector<16xf32>
    %301 = vector.shape_cast %300 : vector<16xf32> to vector<16x1xf32>
    %cst_287 = arith.constant 1.600000e+01 : f32
    %302 = vector.broadcast %cst_287 : f32 to vector<16x1xf32>
    %303 = arith.divf %301, %302 : vector<16x1xf32>
    %304 = vector.broadcast %296 : vector<16x1xf32> to vector<16x16xf32>
    %305 = arith.subf %292, %304 : vector<16x16xf32>
    %cst_288 = arith.constant 9.99999974E-6 : f32
    %306 = vector.broadcast %cst_288 : f32 to vector<16x1xf32>
    %307 = arith.addf %303, %306 : vector<16x1xf32>
    %308 = math.rsqrt %307 : vector<16x1xf32>
    %309 = vector.broadcast %308 : vector<16x1xf32> to vector<16x16xf32>
    %310 = arith.mulf %305, %309 : vector<16x16xf32>
    %c0_289 = arith.constant 0 : index
    %c0_290 = arith.constant 0 : index
    %311 = vector.load %arg7[%c0_289, %c0_290] : memref<16x1xf32, #tpu.memory_space<vmem>>, vector<16x1xf32>
    %312 = vector.broadcast %311 : vector<16x1xf32> to vector<16x16xf32>
    %313 = arith.mulf %310, %312 : vector<16x16xf32>
    %c0_291 = arith.constant 0 : index
    %c0_292 = arith.constant 0 : index
    %314 = vector.load %arg8[%c0_291, %c0_292] : memref<16x1xf32, #tpu.memory_space<vmem>>, vector<16x1xf32>
    %315 = vector.broadcast %314 : vector<16x1xf32> to vector<16x16xf32>
    %316 = arith.addf %313, %315 : vector<16x16xf32>
    %cst_293 = arith.constant 0.000000e+00 : f32
    %317 = vector.broadcast %cst_293 : f32 to vector<16x16xf32>
    %318 = arith.cmpf oge, %316, %317 : vector<16x16xf32>
    %cst_294 = arith.constant 2.000000e-01 : f32
    %319 = vector.broadcast %cst_294 : f32 to vector<16x16xf32>
    %320 = arith.mulf %319, %316 : vector<16x16xf32>
    %321 = arith.select %318, %316, %320 : vector<16x16xi1>, vector<16x16xf32>
    %c0_295 = arith.constant 0 : index
    %c0_296 = arith.constant 0 : index
    %322 = vector.load %arg9[%c0_295, %c0_296] : memref<16x8xf32, #tpu.memory_space<vmem>>, vector<16x8xf32>
    %323 = tpu.concatenate %322, %322 in 1 : vector<16x8xf32>, vector<16x8xf32> -> vector<16x16xf32>
    %324 = arith.mulf %321, %323 : vector<16x16xf32>
    %cst_297 = arith.constant dense<0.000000e+00> : vector<16xf32>
    %325 = vector.multi_reduction <add>, %324, %cst_297 [0] : vector<16x16xf32> to vector<16xf32>
    %326 = vector.shape_cast %325 : vector<16xf32> to vector<1x16xf32>
    %327 = vector.extract_strided_slice %326 {offsets = [0, 0], sizes = [1, 8], strides = [1, 1]} : vector<1x16xf32> to vector<1x8xf32>
    %cst_298 = arith.constant dense<0.000000e+00> : vector<1xf32>
    %328 = vector.multi_reduction <add>, %327, %cst_298 [1] : vector<1x8xf32> to vector<1xf32>
    %329 = vector.shape_cast %328 : vector<1xf32> to vector<1x1xf32>
    %330 = vector.extract_strided_slice %326 {offsets = [0, 8], sizes = [1, 8], strides = [1, 1]} : vector<1x16xf32> to vector<1x8xf32>
    %cst_299 = arith.constant dense<0.000000e+00> : vector<1xf32>
    %331 = vector.multi_reduction <add>, %330, %cst_299 [1] : vector<1x8xf32> to vector<1xf32>
    %332 = vector.shape_cast %331 : vector<1xf32> to vector<1x1xf32>
    %333 = tpu.concatenate %329, %332 in 0 : vector<1x1xf32>, vector<1x1xf32> -> vector<2x1xf32>
    %c0_300 = arith.constant 0 : index
    %c0_301 = arith.constant 0 : index
    %334 = vector.load %arg10[%c0_300, %c0_301] : memref<1x1xf32, #tpu.memory_space<vmem>>, vector<1x1xf32>
    %335 = vector.broadcast %334 : vector<1x1xf32> to vector<2x1xf32>
    %336 = arith.addf %333, %335 : vector<2x1xf32>
    %c0_302 = arith.constant 0 : index
    %c0_303 = arith.constant 0 : index
    %337 = vector.load %arg11[%c0_302, %c0_303] : memref<2x1xf32, #tpu.memory_space<vmem>>, vector<2x1xf32>
    tpu.vector_store %arg11[%c0_302, %c0_303], %336 {strides = array<i32>} : memref<2x1xf32, #tpu.memory_space<vmem>>, vector<2x1xf32>,
    return
  }
  func.func @transform_0(%arg0: i32) -> (i32, i32) {
    %c0_i32 = arith.constant 0 : i32
    %c0_i32_0 = arith.constant 0 : i32
    %c0_i32_1 = arith.constant 0 : i32
    return %c0_i32, %c0_i32_0 : i32, i32
  }
  func.func @transform_1(%arg0: i32) -> (i32, i32) {
    %c0_i32 = arith.constant 0 : i32
    %c0_i32_0 = arith.constant 0 : i32
    %c0_i32_1 = arith.constant 0 : i32
    return %c0_i32, %c0_i32_0 : i32, i32
  }
  func.func @transform_2(%arg0: i32) -> (i32, i32) {
    %c0_i32 = arith.constant 0 : i32
    %c0_i32_0 = arith.constant 0 : i32
    %c0_i32_1 = arith.constant 0 : i32
    return %c0_i32, %c0_i32_0 : i32, i32
  }
  func.func @transform_3(%arg0: i32) -> (i32, i32) {
    %c0_i32 = arith.constant 0 : i32
    %c0_i32_0 = arith.constant 0 : i32
    %c0_i32_1 = arith.constant 0 : i32
    return %c0_i32, %c0_i32_0 : i32, i32
  }
  func.func @transform_4(%arg0: i32) -> (i32, i32) {
    %c0_i32 = arith.constant 0 : i32
    %c0_i32_0 = arith.constant 0 : i32
    %c0_i32_1 = arith.constant 0 : i32
    return %c0_i32, %c0_i32_0 : i32, i32
  }
  func.func @transform_5(%arg0: i32) -> (i32, i32, i32) {
    %c0_i32 = arith.constant 0 : i32
    %c0_i32_0 = arith.constant 0 : i32
    %c0_i32_1 = arith.constant 0 : i32
    %c0_i32_2 = arith.constant 0 : i32
    return %c0_i32, %c0_i32_0, %c0_i32_1 : i32, i32, i32
  }
  func.func @transform_6(%arg0: i32) -> (i32, i32) {
    %c0_i32 = arith.constant 0 : i32
    %c0_i32_0 = arith.constant 0 : i32
    %c0_i32_1 = arith.constant 0 : i32
    return %c0_i32, %c0_i32_0 : i32, i32
  }
  func.func @transform_7(%arg0: i32) -> (i32, i32) {
    %c0_i32 = arith.constant 0 : i32
    %c0_i32_0 = arith.constant 0 : i32
    %c0_i32_1 = arith.constant 0 : i32
    return %c0_i32, %c0_i32_0 : i32, i32
  }
  func.func @transform_8(%arg0: i32) -> (i32, i32) {
    %c0_i32 = arith.constant 0 : i32
    %c0_i32_0 = arith.constant 0 : i32
    %c0_i32_1 = arith.constant 0 : i32
    return %c0_i32, %c0_i32_0 : i32, i32
  }
  func.func @transform_9(%arg0: i32) -> (i32, i32) {
    %c0_i32 = arith.constant 0 : i32
    %c0_i32_0 = arith.constant 0 : i32
    %c0_i32_1 = arith.constant 0 : i32
    return %c0_i32, %c0_i32_0 : i32, i32
  }
  func.func @transform_10(%arg0: i32) -> (i32, i32) {
    %c0_i32 = arith.constant 0 : i32
    %c0_i32_0 = arith.constant 0 : i32
    %c0_i32_1 = arith.constant 0 : i32
    return %c0_i32, %c0_i32_0 : i32, i32
  }
}

</mosaic_0001>

<llo_original>
// kernel: was_dis_forward.2
$region0: #{was_dis_forward.2}
  #allocation0 [shape = 'u32[]', space=smem, size = 0x4, offset = 0x4, fixed_abs, tag = 'smem constant byte address 0x4 - core index']
  #allocation1 [shape = 'u32[144,128]{1,0:T(1,128)}', space=vmem, size = 0x12000, scoped, tag = 'internal scratch']
  %s0 = inlined_call_operand.vmem [shape: bf16[8,256], index: 0, kind: input, shape index: {}]
  %s1 = inlined_call_operand.vmem [shape: bf16[256,1024], index: 1, kind: input, shape index: {}]
  %s2 = inlined_call_operand.vmem [shape: f32[8,1], index: 2, kind: input, shape index: {}]
  %s3 = inlined_call_operand.vmem [shape: bf16[8,1024], index: 3, kind: output, shape index: {}]
  %s4 = sld [smem:[#allocation0]]
  $region22: #{was_dis_forward.2} parent=0
    _
  %s6 = ssub.s32 1, %s4
  %s7 = scalar_select 0, %s6, %s4
  // Predicated region
  $region2: #{was_dis_forward.2} parent=0 // pred_check
    _
  $region3: #{was_dis_forward.2} parent=0 // pred_check_branch
    %9 = sbr.rel (0) target = $region5
  $region4: #{was_dis_forward.2} parent=0 // pred_region
    _
  $region5: #{was_dis_forward.2} parent=0 // pred_fallthru
    _
  // Predicated region
  $region6: #{was_dis_forward.2} parent=0 // pred_check
    _
  $region7: #{was_dis_forward.2} parent=0 // pred_check_branch
    %11 = sbr.rel (0) target = $region9
  $region8: #{was_dis_forward.2} parent=0 // pred_region
    _
  $region9: #{was_dis_forward.2} parent=0 // pred_fallthru
    _
  // Predicated region
  $region10: #{was_dis_forward.2} parent=0 // pred_check
    _
  $region11: #{was_dis_forward.2} parent=0 // pred_check_branch
    %13 = sbr.rel (0) target = $region13
  $region12: #{was_dis_forward.2} parent=0 // pred_region
    _
  $region13: #{was_dis_forward.2} parent=0 // pred_fallthru
    _
  %v14 = vld [vmem:[%s0] sm:$0xff]
  %v15 = vld [vmem:[%s1] sm:$0xff]
  %v16 = vld [vmem:[%s1 + $0x8] sm:$0xff]
  %v17 = vld [vmem:[%s1 + $0x10] sm:$0xff]
  %v18 = vld [vmem:[%s1 + $0x18] sm:$0xff]
  %v19 = vld [vmem:[%s1 + $0x20] sm:$0xff]
  %v20 = vld [vmem:[%s1 + $0x28] sm:$0xff]
  %v21 = vld [vmem:[%s1 + $0x30] sm:$0xff]
  %v22 = vld [vmem:[%s1 + $0x38] sm:$0xff]
  %v23 = vld [vmem:[%s1 + $0x40] sm:$0xff]
  %v24 = vld [vmem:[%s1 + $0x48] sm:$0xff]
  %v25 = vld [vmem:[%s1 + $0x50] sm:$0xff]
  %v26 = vld [vmem:[%s1 + $0x58] sm:$0xff]
  %v27 = vld [vmem:[%s1 + $0x60] sm:$0xff]
  %v28 = vld [vmem:[%s1 + $0x68] sm:$0xff]
  %v29 = vld [vmem:[%s1 + $0x70] sm:$0xff]
  %v30 = vld [vmem:[%s1 + $0x78] sm:$0xff]
  %v31 = vld [vmem:[%s1 + $0x80] sm:$0xff]
  %v32 = vld [vmem:[%s1 + $0x88] sm:$0xff]
  %v33 = vld [vmem:[%s1 + $0x90] sm:$0xff]
  %v34 = vld [vmem:[%s1 + $0x98] sm:$0xff]
  %v35 = vld [vmem:[%s1 + $0xa0] sm:$0xff]
  %v36 = vld [vmem:[%s1 + $0xa8] sm:$0xff]
  %v37 = vld [vmem:[%s1 + $0xb0] sm:$0xff]
  %v38 = vld [vmem:[%s1 + $0xb8] sm:$0xff]
  %v39 = vld [vmem:[%s1 + $0xc0] sm:$0xff]
  %v40 = vld [vmem:[%s1 + $0xc8] sm:$0xff]
  %v41 = vld [vmem:[%s1 + $0xd0] sm:$0xff]
  %v42 = vld [vmem:[%s1 + $0xd8] sm:$0xff]
  %v43 = vld [vmem:[%s1 + $0xe0] sm:$0xff]
  %v44 = vld [vmem:[%s1 + $0xe8] sm:$0xff]
  %v45 = vld [vmem:[%s1 + $0xf0] sm:$0xff]
  %v46 = vld [vmem:[%s1 + $0xf8] sm:$0xff]
  %v47 = vld [vmem:[%s1 + $0x100] sm:$0xff]
  %v48 = vld [vmem:[%s1 + $0x108] sm:$0xff]
  %v49 = vld [vmem:[%s1 + $0x110] sm:$0xff]
  %v50 = vld [vmem:[%s1 + $0x118] sm:$0xff]
  %v51 = vld [vmem:[%s1 + $0x120] sm:$0xff]
  %v52 = vld [vmem:[%s1 + $0x128] sm:$0xff]
  %v53 = vld [vmem:[%s1 + $0x130] sm:$0xff]
  %v54 = vld [vmem:[%s1 + $0x138] sm:$0xff]
  %v55 = vld [vmem:[%s1 + $0x140] sm:$0xff]
  %v56 = vld [vmem:[%s1 + $0x148] sm:$0xff]
  %v57 = vld [vmem:[%s1 + $0x150] sm:$0xff]
  %v58 = vld [vmem:[%s1 + $0x158] sm:$0xff]
  %v59 = vld [vmem:[%s1 + $0x160] sm:$0xff]
  %v60 = vld [vmem:[%s1 + $0x168] sm:$0xff]
  %v61 = vld [vmem:[%s1 + $0x170] sm:$0xff]
  %v62 = vld [vmem:[%s1 + $0x178] sm:$0xff]
  %v63 = vld [vmem:[%s1 + $0x180] sm:$0xff]
  %v64 = vld [vmem:[%s1 + $0x188] sm:$0xff]
  %v65 = vld [vmem:[%s1 + $0x190] sm:$0xff]
  %v66 = vld [vmem:[%s1 + $0x198] sm:$0xff]
  %v67 = vld [vmem:[%s1 + $0x1a0] sm:$0xff]
  %v68 = vld [vmem:[%s1 + $0x1a8] sm:$0xff]
  %v69 = vld [vmem:[%s1 + $0x1b0] sm:$0xff]
  %v70 = vld [vmem:[%s1 + $0x1b8] sm:$0xff]
  %v71 = vld [vmem:[%s1 + $0x1c0] sm:$0xff]
  %v72 = vld [vmem:[%s1 + $0x1c8] sm:$0xff]
  %v73 = vld [vmem:[%s1 + $0x1d0] sm:$0xff]
  %v74 = vld [vmem:[%s1 + $0x1d8] sm:$0xff]
  %v75 = vld [vmem:[%s1 + $0x1e0] sm:$0xff]
  %v76 = vld [vmem:[%s1 + $0x1e8] sm:$0xff]
  %v77 = vld [vmem:[%s1 + $0x1f0] sm:$0xff]
  %v78 = vld [vmem:[%s1 + $0x1f8] sm:$0xff]
  %v79 = vld [vmem:[%s1 + $0x200] sm:$0xff]
  %v80 = vld [vmem:[%s1 + $0x208] sm:$0xff]
  %v81 = vld [vmem:[%s1 + $0x210] sm:$0xff]
  %v82 = vld [vmem:[%s1 + $0x218] sm:$0xff]
  %v83 = vld [vmem:[%s1 + $0x220] sm:$0xff]
  %v84 = vld [vmem:[%s1 + $0x228] sm:$0xff]
  %v85 = vld [vmem:[%s1 + $0x230] sm:$0xff]
  %v86 = vld [vmem:[%s1 + $0x238] sm:$0xff]
  %v87 = vld [vmem:[%s1 + $0x240] sm:$0xff]
  %v88 = vld [vmem:[%s1 + $0x248] sm:$0xff]
  %v89 = vld [vmem:[%s1 + $0x250] sm:$0xff]
  %v90 = vld [vmem:[%s1 + $0x258] sm:$0xff]
  %v91 = vld [vmem:[%s1 + $0x260] sm:$0xff]
  %v92 = vld [vmem:[%s1 + $0x268] sm:$0xff]
  %v93 = vld [vmem:[%s1 + $0x270] sm:$0xff]
  %v94 = vld [vmem:[%s1 + $0x278] sm:$0xff]
  %v95 = vld [vmem:[%s1 + $0x280] sm:$0xff]
  %v96 = vld [vmem:[%s1 + $0x288] sm:$0xff]
  %v97 = vld [vmem:[%s1 + $0x290] sm:$0xff]
  %v98 = vld [vmem:[%s1 + $0x298] sm:$0xff]
  %v99 = vld [vmem:[%s1 + $0x2a0] sm:$0xff]
  %v100 = vld [vmem:[%s1 + $0x2a8] sm:$0xff]
  %v101 = vld [vmem:[%s1 + $0x2b0] sm:$0xff]
  %v102 = vld [vmem:[%s1 + $0x2b8] sm:$0xff]
  %v103 = vld [vmem:[%s1 + $0x2c0] sm:$0xff]
  %v104 = vld [vmem:[%s1 + $0x2c8] sm:$0xff]
  %v105 = vld [vmem:[%s1 + $0x2d0] sm:$0xff]
  %v106 = vld [vmem:[%s1 + $0x2d8] sm:$0xff]
  %v107 = vld [vmem:[%s1 + $0x2e0] sm:$0xff]
  %v108 = vld [vmem:[%s1 + $0x2e8] sm:$0xff]
  %v109 = vld [vmem:[%s1 + $0x2f0] sm:$0xff]
  %v110 = vld [vmem:[%s1 + $0x2f8] sm:$0xff]
  %v111 = vld [vmem:[%s1 + $0x300] sm:$0xff]
  %v112 = vld [vmem:[%s1 + $0x308] sm:$0xff]
  %v113 = vld [vmem:[%s1 + $0x310] sm:$0xff]
  %v114 = vld [vmem:[%s1 + $0x318] sm:$0xff]
  %v115 = vld [vmem:[%s1 + $0x320] sm:$0xff]
  %v116 = vld [vmem:[%s1 + $0x328] sm:$0xff]
  %v117 = vld [vmem:[%s1 + $0x330] sm:$0xff]
  %v118 = vld [vmem:[%s1 + $0x338] sm:$0xff]
  %v119 = vld [vmem:[%s1 + $0x340] sm:$0xff]
  %v120 = vld [vmem:[%s1 + $0x348] sm:$0xff]
  %v121 = vld [vmem:[%s1 + $0x350] sm:$0xff]
  %v122 = vld [vmem:[%s1 + $0x358] sm:$0xff]
  %v123 = vld [vmem:[%s1 + $0x360] sm:$0xff]
  %v124 = vld [vmem:[%s1 + $0x368] sm:$0xff]
  %v125 = vld [vmem:[%s1 + $0x370] sm:$0xff]
  %v126 = vld [vmem:[%s1 + $0x378] sm:$0xff]
  %v127 = vld [vmem:[%s1 + $0x380] sm:$0xff]
  %v128 = vld [vmem:[%s1 + $0x388] sm:$0xff]
  %v129 = vld [vmem:[%s1 + $0x390] sm:$0xff]
  %v130 = vld [vmem:[%s1 + $0x398] sm:$0xff]
  %v131 = vld [vmem:[%s1 + $0x3a0] sm:$0xff]
  %v132 = vld [vmem:[%s1 + $0x3a8] sm:$0xff]
  %v133 = vld [vmem:[%s1 + $0x3b0] sm:$0xff]
  %v134 = vld [vmem:[%s1 + $0x3b8] sm:$0xff]
  %v135 = vld [vmem:[%s1 + $0x3c0] sm:$0xff]
  %v136 = vld [vmem:[%s1 + $0x3c8] sm:$0xff]
  %v137 = vld [vmem:[%s1 + $0x3d0] sm:$0xff]
  %v138 = vld [vmem:[%s1 + $0x3d8] sm:$0xff]
  %v139 = vld [vmem:[%s1 + $0x3e0] sm:$0xff]
  %v140 = vld [vmem:[%s1 + $0x3e8] sm:$0xff]
  %v141 = vld [vmem:[%s1 + $0x3f0] sm:$0xff]
  %v142 = vld [vmem:[%s1 + $0x3f8] sm:$0xff]
  %v143 = vld [vmem:[%s2] sm:$0xff]
  %145 = vset.pattern.permute.xlu0 0
  %146 = vperm.xlu0 %145, %v143
  %v147 = vpop.permute.xlu0 %146
  %v150 = vunpack.c.l.b16 %v14
  %v151 = vunpack.c.h.b16 %v14
  %v152 = vpack.c.b16 %v150, %v150
  %v153 = vpack.c.b16 %v151, %v151
  %v284 = vunpack.c.l.b16 %v15
  %v285 = vunpack.c.h.b16 %v15
  %v286 = vunpack.c.l.b16 %v16
  %v287 = vunpack.c.h.b16 %v16
  %v288 = vunpack.c.l.b16 %v17
  %v289 = vunpack.c.h.b16 %v17
  %v290 = vunpack.c.l.b16 %v18
  %v291 = vunpack.c.h.b16 %v18
  %v292 = vunpack.c.l.b16 %v19
  %v293 = vunpack.c.h.b16 %v19
  %v294 = vunpack.c.l.b16 %v20
  %v295 = vunpack.c.h.b16 %v20
  %v296 = vunpack.c.l.b16 %v21
  %v297 = vunpack.c.h.b16 %v21
  %v298 = vunpack.c.l.b16 %v22
  %v299 = vunpack.c.h.b16 %v22
  %v300 = vunpack.c.l.b16 %v23
  %v301 = vunpack.c.h.b16 %v23
  %v302 = vunpack.c.l.b16 %v24
  %v303 = vunpack.c.h.b16 %v24
  %v304 = vunpack.c.l.b16 %v25
  %v305 = vunpack.c.h.b16 %v25
  %v306 = vunpack.c.l.b16 %v26
  %v307 = vunpack.c.h.b16 %v26
  %v308 = vunpack.c.l.b16 %v27
  %v309 = vunpack.c.h.b16 %v27
  %v310 = vunpack.c.l.b16 %v28
  %v311 = vunpack.c.h.b16 %v28
  %v312 = vunpack.c.l.b16 %v29
  %v313 = vunpack.c.h.b16 %v29
  %v314 = vunpack.c.l.b16 %v30
  %v315 = vunpack.c.h.b16 %v30
  %v316 = vunpack.c.l.b16 %v31
  %v317 = vunpack.c.h.b16 %v31
  %v318 = vunpack.c.l.b16 %v32
  %v319 = vunpack.c.h.b16 %v32
  %v320 = vunpack.c.l.b16 %v33
  %v321 = vunpack.c.h.b16 %v33
  %v322 = vunpack.c.l.b16 %v34
  %v323 = vunpack.c.h.b16 %v34
  %v324 = vunpack.c.l.b16 %v35
  %v325 = vunpack.c.h.b16 %v35
  %v326 = vunpack.c.l.b16 %v36
  %v327 = vunpack.c.h.b16 %v36
  %v328 = vunpack.c.l.b16 %v37
  %v329 = vunpack.c.h.b16 %v37
  %v330 = vunpack.c.l.b16 %v38
  %v331 = vunpack.c.h.b16 %v38
  %v332 = vunpack.c.l.b16 %v39
  %v333 = vunpack.c.h.b16 %v39
  %v334 = vunpack.c.l.b16 %v40
  %v335 = vunpack.c.h.b16 %v40
  %v336 = vunpack.c.l.b16 %v41
  %v337 = vunpack.c.h.b16 %v41
  %v338 = vunpack.c.l.b16 %v42
  %v339 = vunpack.c.h.b16 %v42
  %v340 = vunpack.c.l.b16 %v43
  %v341 = vunpack.c.h.b16 %v43
  %v342 = vunpack.c.l.b16 %v44
  %v343 = vunpack.c.h.b16 %v44
  %v344 = vunpack.c.l.b16 %v45
  %v345 = vunpack.c.h.b16 %v45
  %v346 = vunpack.c.l.b16 %v46
  %v347 = vunpack.c.h.b16 %v46
  %v348 = vunpack.c.l.b16 %v47
  %v349 = vunpack.c.h.b16 %v47
  %v350 = vunpack.c.l.b16 %v48
  %v351 = vunpack.c.h.b16 %v48
  %v352 = vunpack.c.l.b16 %v49
  %v353 = vunpack.c.h.b16 %v49
  %v354 = vunpack.c.l.b16 %v50
  %v355 = vunpack.c.h.b16 %v50
  %v356 = vunpack.c.l.b16 %v51
  %v357 = vunpack.c.h.b16 %v51
  %v358 = vunpack.c.l.b16 %v52
  %v359 = vunpack.c.h.b16 %v52
  %v360 = vunpack.c.l.b16 %v53
  %v361 = vunpack.c.h.b16 %v53
  %v362 = vunpack.c.l.b16 %v54
  %v363 = vunpack.c.h.b16 %v54
  %v364 = vunpack.c.l.b16 %v55
  %v365 = vunpack.c.h.b16 %v55
  %v366 = vunpack.c.l.b16 %v56
  %v367 = vunpack.c.h.b16 %v56
  %v368 = vunpack.c.l.b16 %v57
  %v369 = vunpack.c.h.b16 %v57
  %v370 = vunpack.c.l.b16 %v58
  %v371 = vunpack.c.h.b16 %v58
  %v372 = vunpack.c.l.b16 %v59
  %v373 = vunpack.c.h.b16 %v59
  %v374 = vunpack.c.l.b16 %v60
  %v375 = vunpack.c.h.b16 %v60
  %v376 = vunpack.c.l.b16 %v61
  %v377 = vunpack.c.h.b16 %v61
  %v378 = vunpack.c.l.b16 %v62
  %v379 = vunpack.c.h.b16 %v62
  %v380 = vunpack.c.l.b16 %v63
  %v381 = vunpack.c.h.b16 %v63
  %v382 = vunpack.c.l.b16 %v64
  %v383 = vunpack.c.h.b16 %v64
  %v384 = vunpack.c.l.b16 %v65
  %v385 = vunpack.c.h.b16 %v65
  %v386 = vunpack.c.l.b16 %v66
  %v387 = vunpack.c.h.b16 %v66
  %v388 = vunpack.c.l.b16 %v67
  %v389 = vunpack.c.h.b16 %v67
  %v390 = vunpack.c.l.b16 %v68
  %v391 = vunpack.c.h.b16 %v68
  %v392 = vunpack.c.l.b16 %v69
  %v393 = vunpack.c.h.b16 %v69
  %v394 = vunpack.c.l.b16 %v70
  %v395 = vunpack.c.h.b16 %v70
  %v396 = vunpack.c.l.b16 %v71
  %v397 = vunpack.c.h.b16 %v71
  %v398 = vunpack.c.l.b16 %v72
  %v399 = vunpack.c.h.b16 %v72
  %v400 = vunpack.c.l.b16 %v73
  %v401 = vunpack.c.h.b16 %v73
  %v402 = vunpack.c.l.b16 %v74
  %v403 = vunpack.c.h.b16 %v74
  %v404 = vunpack.c.l.b16 %v75
  %v405 = vunpack.c.h.b16 %v75
  %v406 = vunpack.c.l.b16 %v76
  %v407 = vunpack.c.h.b16 %v76
  %v408 = vunpack.c.l.b16 %v77
  %v409 = vunpack.c.h.b16 %v77
  %v410 = vunpack.c.l.b16 %v78
  %v411 = vunpack.c.h.b16 %v78
  %v412 = vunpack.c.l.b16 %v79
  %v413 = vunpack.c.h.b16 %v79
  %v414 = vunpack.c.l.b16 %v80
  %v415 = vunpack.c.h.b16 %v80
  %v416 = vunpack.c.l.b16 %v81
  %v417 = vunpack.c.h.b16 %v81
  %v418 = vunpack.c.l.b16 %v82
  %v419 = vunpack.c.h.b16 %v82
  %v420 = vunpack.c.l.b16 %v83
  %v421 = vunpack.c.h.b16 %v83
  %v422 = vunpack.c.l.b16 %v84
  %v423 = vunpack.c.h.b16 %v84
  %v424 = vunpack.c.l.b16 %v85
  %v425 = vunpack.c.h.b16 %v85
  %v426 = vunpack.c.l.b16 %v86
  %v427 = vunpack.c.h.b16 %v86
  %v428 = vunpack.c.l.b16 %v87
  %v429 = vunpack.c.h.b16 %v87
  %v430 = vunpack.c.l.b16 %v88
  %v431 = vunpack.c.h.b16 %v88
  %v432 = vunpack.c.l.b16 %v89
  %v433 = vunpack.c.h.b16 %v89
  %v434 = vunpack.c.l.b16 %v90
  %v435 = vunpack.c.h.b16 %v90
  %v436 = vunpack.c.l.b16 %v91
  %v437 = vunpack.c.h.b16 %v91
  %v438 = vunpack.c.l.b16 %v92
  %v439 = vunpack.c.h.b16 %v92
  %v440 = vunpack.c.l.b16 %v93
  %v441 = vunpack.c.h.b16 %v93
  %v442 = vunpack.c.l.b16 %v94
  %v443 = vunpack.c.h.b16 %v94
  %v444 = vunpack.c.l.b16 %v95
  %v445 = vunpack.c.h.b16 %v95
  %v446 = vunpack.c.l.b16 %v96
  %v447 = vunpack.c.h.b16 %v96
  %v448 = vunpack.c.l.b16 %v97
  %v449 = vunpack.c.h.b16 %v97
  %v450 = vunpack.c.l.b16 %v98
  %v451 = vunpack.c.h.b16 %v98
  %v452 = vunpack.c.l.b16 %v99
  %v453 = vunpack.c.h.b16 %v99
  %v454 = vunpack.c.l.b16 %v100
  %v455 = vunpack.c.h.b16 %v100
  %v456 = vunpack.c.l.b16 %v101
  %v457 = vunpack.c.h.b16 %v101
  %v458 = vunpack.c.l.b16 %v102
  %v459 = vunpack.c.h.b16 %v102
  %v460 = vunpack.c.l.b16 %v103
  %v461 = vunpack.c.h.b16 %v103
  %v462 = vunpack.c.l.b16 %v104
  %v463 = vunpack.c.h.b16 %v104
  %v464 = vunpack.c.l.b16 %v105
  %v465 = vunpack.c.h.b16 %v105
  %v466 = vunpack.c.l.b16 %v106
  %v467 = vunpack.c.h.b16 %v106
  %v468 = vunpack.c.l.b16 %v107
  %v469 = vunpack.c.h.b16 %v107
  %v470 = vunpack.c.l.b16 %v108
  %v471 = vunpack.c.h.b16 %v108
  %v472 = vunpack.c.l.b16 %v109
  %v473 = vunpack.c.h.b16 %v109
  %v474 = vunpack.c.l.b16 %v110
  %v475 = vunpack.c.h.b16 %v110
  %v476 = vunpack.c.l.b16 %v111
  %v477 = vunpack.c.h.b16 %v111
  %v478 = vunpack.c.l.b16 %v112
  %v479 = vunpack.c.h.b16 %v112
  %v480 = vunpack.c.l.b16 %v113
  %v481 = vunpack.c.h.b16 %v113
  %v482 = vunpack.c.l.b16 %v114
  %v483 = vunpack.c.h.b16 %v114
  %v484 = vunpack.c.l.b16 %v115
  %v485 = vunpack.c.h.b16 %v115
  %v486 = vunpack.c.l.b16 %v116
  %v487 = vunpack.c.h.b16 %v116
  %v488 = vunpack.c.l.b16 %v117
  %v489 = vunpack.c.h.b16 %v117
  %v490 = vunpack.c.l.b16 %v118
  %v491 = vunpack.c.h.b16 %v118
  %v492 = vunpack.c.l.b16 %v119
  %v493 = vunpack.c.h.b16 %v119
  %v494 = vunpack.c.l.b16 %v120
  %v495 = vunpack.c.h.b16 %v120
  %v496 = vunpack.c.l.b16 %v121
  %v497 = vunpack.c.h.b16 %v121
  %v498 = vunpack.c.l.b16 %v122
  %v499 = vunpack.c.h.b16 %v122
  %v500 = vunpack.c.l.b16 %v123
  %v501 = vunpack.c.h.b16 %v123
  %v502 = vunpack.c.l.b16 %v124
  %v503 = vunpack.c.h.b16 %v124
  %v504 = vunpack.c.l.b16 %v125
  %v505 = vunpack.c.h.b16 %v125
  %v506 = vunpack.c.l.b16 %v126
  %v507 = vunpack.c.h.b16 %v126
  %v508 = vunpack.c.l.b16 %v127
  %v509 = vunpack.c.h.b16 %v127
  %v510 = vunpack.c.l.b16 %v128
  %v511 = vunpack.c.h.b16 %v128
  %v512 = vunpack.c.l.b16 %v129
  %v513 = vunpack.c.h.b16 %v129
  %v514 = vunpack.c.l.b16 %v130
  %v515 = vunpack.c.h.b16 %v130
  %v516 = vunpack.c.l.b16 %v131
  %v517 = vunpack.c.h.b16 %v131
  %v518 = vunpack.c.l.b16 %v132
  %v519 = vunpack.c.h.b16 %v132
  %v520 = vunpack.c.l.b16 %v133
  %v521 = vunpack.c.h.b16 %v133
  %v522 = vunpack.c.l.b16 %v134
  %v523 = vunpack.c.h.b16 %v134
  %v524 = vunpack.c.l.b16 %v135
  %v525 = vunpack.c.h.b16 %v135
  %v526 = vunpack.c.l.b16 %v136
  %v527 = vunpack.c.h.b16 %v136
  %v528 = vunpack.c.l.b16 %v137
  %v529 = vunpack.c.h.b16 %v137
  %v530 = vunpack.c.l.b16 %v138
  %v531 = vunpack.c.h.b16 %v138
  %v532 = vunpack.c.l.b16 %v139
  %v533 = vunpack.c.h.b16 %v139
  %v534 = vunpack.c.l.b16 %v140
  %v535 = vunpack.c.h.b16 %v140
  %v536 = vunpack.c.l.b16 %v141
  %v537 = vunpack.c.h.b16 %v141
  %v538 = vunpack.c.l.b16 %v142
  %v539 = vunpack.c.h.b16 %v142
  %v540 = vpack.c.b16 %v292, %v284
  %v541 = vpack.c.b16 %v293, %v285
  %v542 = vpack.c.b16 %v294, %v286
  %v543 = vpack.c.b16 %v295, %v287
  %v544 = vpack.c.b16 %v296, %v288
  %v545 = vpack.c.b16 %v297, %v289
  %v546 = vpack.c.b16 %v298, %v290
  %v547 = vpack.c.b16 %v299, %v291
  %v548 = vpack.c.b16 %v308, %v300
  %v549 = vpack.c.b16 %v309, %v301
  %v550 = vpack.c.b16 %v310, %v302
  %v551 = vpack.c.b16 %v311, %v303
  %v552 = vpack.c.b16 %v312, %v304
  %v553 = vpack.c.b16 %v313, %v305
  %v554 = vpack.c.b16 %v314, %v306
  %v555 = vpack.c.b16 %v315, %v307
  %v556 = vpack.c.b16 %v324, %v316
  %v557 = vpack.c.b16 %v325, %v317
  %v558 = vpack.c.b16 %v326, %v318
  %v559 = vpack.c.b16 %v327, %v319
  %v560 = vpack.c.b16 %v328, %v320
  %v561 = vpack.c.b16 %v329, %v321
  %v562 = vpack.c.b16 %v330, %v322
  %v563 = vpack.c.b16 %v331, %v323
  %v564 = vpack.c.b16 %v340, %v332
  %v565 = vpack.c.b16 %v341, %v333
  %v566 = vpack.c.b16 %v342, %v334
  %v567 = vpack.c.b16 %v343, %v335
  %v568 = vpack.c.b16 %v344, %v336
  %v569 = vpack.c.b16 %v345, %v337
  %v570 = vpack.c.b16 %v346, %v338
  %v571 = vpack.c.b16 %v347, %v339
  %v572 = vpack.c.b16 %v356, %v348
  %v573 = vpack.c.b16 %v357, %v349
  %v574 = vpack.c.b16 %v358, %v350
  %v575 = vpack.c.b16 %v359, %v351
  %v576 = vpack.c.b16 %v360, %v352
  %v577 = vpack.c.b16 %v361, %v353
  %v578 = vpack.c.b16 %v362, %v354
  %v579 = vpack.c.b16 %v363, %v355
  %v580 = vpack.c.b16 %v372, %v364
  %v581 = vpack.c.b16 %v373, %v365
  %v582 = vpack.c.b16 %v374, %v366
  %v583 = vpack.c.b16 %v375, %v367
  %v584 = vpack.c.b16 %v376, %v368
  %v585 = vpack.c.b16 %v377, %v369
  %v586 = vpack.c.b16 %v378, %v370
  %v587 = vpack.c.b16 %v379, %v371
  %v588 = vpack.c.b16 %v388, %v380
  %v589 = vpack.c.b16 %v389, %v381
  %v590 = vpack.c.b16 %v390, %v382
  %v591 = vpack.c.b16 %v391, %v383
  %v592 = vpack.c.b16 %v392, %v384
  %v593 = vpack.c.b16 %v393, %v385
  %v594 = vpack.c.b16 %v394, %v386
  %v595 = vpack.c.b16 %v395, %v387
  %v596 = vpack.c.b16 %v404, %v396
  %v597 = vpack.c.b16 %v405, %v397
  %v598 = vpack.c.b16 %v406, %v398
  %v599 = vpack.c.b16 %v407, %v399
  %v600 = vpack.c.b16 %v408, %v400
  %v601 = vpack.c.b16 %v409, %v401
  %v602 = vpack.c.b16 %v410, %v402
  %v603 = vpack.c.b16 %v411, %v403
  %v604 = vpack.c.b16 %v420, %v412
  %v605 = vpack.c.b16 %v421, %v413
  %v606 = vpack.c.b16 %v422, %v414
  %v607 = vpack.c.b16 %v423, %v415
  %v608 = vpack.c.b16 %v424, %v416
  %v609 = vpack.c.b16 %v425, %v417
  %v610 = vpack.c.b16 %v426, %v418
  %v611 = vpack.c.b16 %v427, %v419
  %v612 = vpack.c.b16 %v436, %v428
  %v613 = vpack.c.b16 %v437, %v429
  %v614 = vpack.c.b16 %v438, %v430
  %v615 = vpack.c.b16 %v439, %v431
  %v616 = vpack.c.b16 %v440, %v432
  %v617 = vpack.c.b16 %v441, %v433
  %v618 = vpack.c.b16 %v442, %v434
  %v619 = vpack.c.b16 %v443, %v435
  %v620 = vpack.c.b16 %v452, %v444
  %v621 = vpack.c.b16 %v453, %v445
  %v622 = vpack.c.b16 %v454, %v446
  %v623 = vpack.c.b16 %v455, %v447
  %v624 = vpack.c.b16 %v456, %v448
  %v625 = vpack.c.b16 %v457, %v449
  %v626 = vpack.c.b16 %v458, %v450
  %v627 = vpack.c.b16 %v459, %v451
  %v628 = vpack.c.b16 %v468, %v460
  %v629 = vpack.c.b16 %v469, %v461
  %v630 = vpack.c.b16 %v470, %v462
  %v631 = vpack.c.b16 %v471, %v463
  %v632 = vpack.c.b16 %v472, %v464
  %v633 = vpack.c.b16 %v473, %v465
  %v634 = vpack.c.b16 %v474, %v466
  %v635 = vpack.c.b16 %v475, %v467
  %v636 = vpack.c.b16 %v484, %v476
  %v637 = vpack.c.b16 %v485, %v477
  %v638 = vpack.c.b16 %v486, %v478
  %v639 = vpack.c.b16 %v487, %v479
  %v640 = vpack.c.b16 %v488, %v480
  %v641 = vpack.c.b16 %v489, %v481
  %v642 = vpack.c.b16 %v490, %v482
  %v643 = vpack.c.b16 %v491, %v483
  %v644 = vpack.c.b16 %v500, %v492
  %v645 = vpack.c.b16 %v501, %v493
  %v646 = vpack.c.b16 %v502, %v494
  %v647 = vpack.c.b16 %v503, %v495
  %v648 = vpack.c.b16 %v504, %v496
  %v649 = vpack.c.b16 %v505, %v497
  %v650 = vpack.c.b16 %v506, %v498
  %v651 = vpack.c.b16 %v507, %v499
  %v652 = vpack.c.b16 %v516, %v508
  %v653 = vpack.c.b16 %v517, %v509
  %v654 = vpack.c.b16 %v518, %v510
  %v655 = vpack.c.b16 %v519, %v511
  %v656 = vpack.c.b16 %v520, %v512
  %v657 = vpack.c.b16 %v521, %v513
  %v658 = vpack.c.b16 %v522, %v514
  %v659 = vpack.c.b16 %v523, %v515
  %v660 = vpack.c.b16 %v532, %v524
  %v661 = vpack.c.b16 %v533, %v525
  %v662 = vpack.c.b16 %v534, %v526
  %v663 = vpack.c.b16 %v535, %v527
  %v664 = vpack.c.b16 %v536, %v528
  %v665 = vpack.c.b16 %v537, %v529
  %v666 = vpack.c.b16 %v538, %v530
  %v667 = vpack.c.b16 %v539, %v531
  %796 = vmatprep.subr.bf16.mxu0 %v597
  %797 = vmatpush1.bf16.msra.mxu0 %v596
  %798 = vmatprep.subr.bf16.mxu0 %v589
  %799 = vmatpush1.bf16.msra.mxu0 %v588
  %800 = vmatprep.subr.bf16.mxu0 %v581
  %801 = vmatpush1.bf16.msra.mxu0 %v580
  %802 = vmatprep.subr.bf16.mxu0 %v573
  %803 = vmatpush1.bf16.msra.mxu0 %v572
  %804 = vmatprep.subr.bf16.mxu0 %v565
  %805 = vmatpush1.bf16.msra.mxu0 %v564
  %806 = vmatprep.subr.bf16.mxu0 %v557
  %807 = vmatpush1.bf16.msra.mxu0 %v556
  %808 = vmatprep.subr.bf16.mxu0 %v549
  %809 = vmatpush1.bf16.msra.mxu0 %v548
  %810 = vmatprep.subr.bf16.mxu0 %v541
  %811 = vmatpush1.bf16.msra.mxu0 %v540
  %812 = vmatprep.subr.bf16.mxu0 %v661
  %813 = vmatpush2.bf16.msra.mxu0 %v660
  %814 = vmatprep.subr.bf16.mxu0 %v653
  %815 = vmatpush2.bf16.msra.mxu0 %v652
  %816 = vmatprep.subr.bf16.mxu0 %v645
  %817 = vmatpush2.bf16.msra.mxu0 %v644
  %818 = vmatprep.subr.bf16.mxu0 %v637
  %819 = vmatpush2.bf16.msra.mxu0 %v636
  %820 = vmatprep.subr.bf16.mxu0 %v629
  %821 = vmatpush2.bf16.msra.mxu0 %v628
  %822 = vmatprep.subr.bf16.mxu0 %v621
  %823 = vmatpush2.bf16.msra.mxu0 %v620
  %824 = vmatprep.subr.bf16.mxu0 %v613
  %825 = vmatpush2.bf16.msra.mxu0 %v612
  %826 = vmatprep.subr.bf16.mxu0 %v605
  %827 = vmatpush2.bf16.msra.mxu0 %v604
  %828 = vmatprep.mubr.bf16.mxu0 %v153
  %829 = vmatmul.mubr.bf16.gmra.mxu0 %v152
  %v830 = vpop.f32.mrf.mxu0
  %v831 = vadd.f32 %v147, %v830
  %v832 = vpop.f32.mrf.mxu0
  %v833 = vadd.f32 %v147, %v832
  %v834 = vpop.f32.mrf.mxu0
  %v835 = vpop.f32.mrf.mxu0
  %836 = vdwg.mxu0
  %837 = vmatprep.subr.bf16.mxu0 %v599
  %838 = vmatpush1.bf16.msra.mxu0 %v598
  %839 = vmatprep.subr.bf16.mxu0 %v591
  %840 = vmatpush1.bf16.msra.mxu0 %v590
  %841 = vmatprep.subr.bf16.mxu0 %v583
  %842 = vmatpush1.bf16.msra.mxu0 %v582
  %843 = vmatprep.subr.bf16.mxu0 %v575
  %844 = vmatpush1.bf16.msra.mxu0 %v574
  %845 = vmatprep.subr.bf16.mxu0 %v567
  %846 = vmatpush1.bf16.msra.mxu0 %v566
  %847 = vmatprep.subr.bf16.mxu0 %v559
  %848 = vmatpush1.bf16.msra.mxu0 %v558
  %849 = vmatprep.subr.bf16.mxu0 %v551
  %850 = vmatpush1.bf16.msra.mxu0 %v550
  %851 = vmatprep.subr.bf16.mxu0 %v543
  %852 = vmatpush1.bf16.msra.mxu0 %v542
  %853 = vmatprep.subr.bf16.mxu0 %v663
  %854 = vmatpush2.bf16.msra.mxu0 %v662
  %855 = vmatprep.subr.bf16.mxu0 %v655
  %856 = vmatpush2.bf16.msra.mxu0 %v654
  %857 = vmatprep.subr.bf16.mxu0 %v647
  %858 = vmatpush2.bf16.msra.mxu0 %v646
  %859 = vmatprep.subr.bf16.mxu0 %v639
  %860 = vmatpush2.bf16.msra.mxu0 %v638
  %861 = vmatprep.subr.bf16.mxu0 %v631
  %862 = vmatpush2.bf16.msra.mxu0 %v630
  %863 = vmatprep.subr.bf16.mxu0 %v623
  %864 = vmatpush2.bf16.msra.mxu0 %v622
  %865 = vmatprep.subr.bf16.mxu0 %v615
  %866 = vmatpush2.bf16.msra.mxu0 %v614
  %867 = vmatprep.subr.bf16.mxu0 %v607
  %868 = vmatpush2.bf16.msra.mxu0 %v606
  %869 = vmatprep.mubr.bf16.mxu0 %v153
  %870 = vmatmul.mubr.bf16.gmra.mxu0 %v152
  %v871 = vpop.f32.mrf.mxu0
  %v872 = vadd.f32 %v147, %v871
  %v873 = vpop.f32.mrf.mxu0
  %v874 = vadd.f32 %v147, %v873
  %v875 = vpop.f32.mrf.mxu0
  %v876 = vpop.f32.mrf.mxu0
  %877 = vdwg.mxu0
  %878 = vmatprep.subr.bf16.mxu0 %v601
  %879 = vmatpush1.bf16.msra.mxu0 %v600
  %880 = vmatprep.subr.bf16.mxu0 %v593
  %881 = vmatpush1.bf16.msra.mxu0 %v592
  %882 = vmatprep.subr.bf16.mxu0 %v585
  %883 = vmatpush1.bf16.msra.mxu0 %v584
  %884 = vmatprep.subr.bf16.mxu0 %v577
  %885 = vmatpush1.bf16.msra.mxu0 %v576
  %886 = vmatprep.subr.bf16.mxu0 %v569
  %887 = vmatpush1.bf16.msra.mxu0 %v568
  %888 = vmatprep.subr.bf16.mxu0 %v561
  %889 = vmatpush1.bf16.msra.mxu0 %v560
  %890 = vmatprep.subr.bf16.mxu0 %v553
  %891 = vmatpush1.bf16.msra.mxu0 %v552
  %892 = vmatprep.subr.bf16.mxu0 %v545
  %893 = vmatpush1.bf16.msra.mxu0 %v544
  %894 = vmatprep.subr.bf16.mxu0 %v665
  %895 = vmatpush2.bf16.msra.mxu0 %v664
  %896 = vmatprep.subr.bf16.mxu0 %v657
  %897 = vmatpush2.bf16.msra.mxu0 %v656
  %898 = vmatprep.subr.bf16.mxu0 %v649
  %899 = vmatpush2.bf16.msra.mxu0 %v648
  %900 = vmatprep.subr.bf16.mxu0 %v641
  %901 = vmatpush2.bf16.msra.mxu0 %v640
  %902 = vmatprep.subr.bf16.mxu0 %v633
  %903 = vmatpush2.bf16.msra.mxu0 %v632
  %904 = vmatprep.subr.bf16.mxu0 %v625
  %905 = vmatpush2.bf16.msra.mxu0 %v624
  %906 = vmatprep.subr.bf16.mxu0 %v617
  %907 = vmatpush2.bf16.msra.mxu0 %v616
  %908 = vmatprep.subr.bf16.mxu0 %v609
  %909 = vmatpush2.bf16.msra.mxu0 %v608
  %910 = vmatprep.mubr.bf16.mxu0 %v153
  %911 = vmatmul.mubr.bf16.gmra.mxu0 %v152
  %v912 = vpop.f32.mrf.mxu0
  %v913 = vadd.f32 %v147, %v912
  %v914 = vpop.f32.mrf.mxu0
  %v915 = vadd.f32 %v147, %v914
  %v916 = vpop.f32.mrf.mxu0
  %v917 = vpop.f32.mrf.mxu0
  %918 = vdwg.mxu0
  %919 = vmatprep.subr.bf16.mxu0 %v603
  %920 = vmatpush1.bf16.msra.mxu0 %v602
  %921 = vmatprep.subr.bf16.mxu0 %v595
  %922 = vmatpush1.bf16.msra.mxu0 %v594
  %923 = vmatprep.subr.bf16.mxu0 %v587
  %924 = vmatpush1.bf16.msra.mxu0 %v586
  %925 = vmatprep.subr.bf16.mxu0 %v579
  %926 = vmatpush1.bf16.msra.mxu0 %v578
  %927 = vmatprep.subr.bf16.mxu0 %v571
  %928 = vmatpush1.bf16.msra.mxu0 %v570
  %929 = vmatprep.subr.bf16.mxu0 %v563
  %930 = vmatpush1.bf16.msra.mxu0 %v562
  %931 = vmatprep.subr.bf16.mxu0 %v555
  %932 = vmatpush1.bf16.msra.mxu0 %v554
  %933 = vmatprep.subr.bf16.mxu0 %v547
  %934 = vmatpush1.bf16.msra.mxu0 %v546
  %935 = vmatprep.subr.bf16.mxu0 %v667
  %936 = vmatpush2.bf16.msra.mxu0 %v666
  %937 = vmatprep.subr.bf16.mxu0 %v659
  %938 = vmatpush2.bf16.msra.mxu0 %v658
  %939 = vmatprep.subr.bf16.mxu0 %v651
  %940 = vmatpush2.bf16.msra.mxu0 %v650
  %941 = vmatprep.subr.bf16.mxu0 %v643
  %942 = vmatpush2.bf16.msra.mxu0 %v642
  %943 = vmatprep.subr.bf16.mxu0 %v635
  %944 = vmatpush2.bf16.msra.mxu0 %v634
  %945 = vmatprep.subr.bf16.mxu0 %v627
  %946 = vmatpush2.bf16.msra.mxu0 %v626
  %947 = vmatprep.subr.bf16.mxu0 %v619
  %948 = vmatpush2.bf16.msra.mxu0 %v618
  %949 = vmatprep.subr.bf16.mxu0 %v611
  %950 = vmatpush2.bf16.msra.mxu0 %v610
  %951 = vmatprep.mubr.bf16.mxu0 %v153
  %952 = vmatmul.mubr.bf16.gmra.mxu0 %v152
  %v953 = vpop.f32.mrf.mxu0
  %v954 = vadd.f32 %v147, %v953
  %v955 = vpop.f32.mrf.mxu0
  %v956 = vadd.f32 %v147, %v955
  %v957 = vpop.f32.mrf.mxu0
  %v958 = vpop.f32.mrf.mxu0
  %959 = vdwg.mxu0
  %vm960 = vcmp.ge.f32.partialorder %v831, 0.0
  %vm961 = vcmp.ge.f32.partialorder %v833, 0.0
  %vm962 = vcmp.ge.f32.partialorder %v872, 0.0
  %vm963 = vcmp.ge.f32.partialorder %v874, 0.0
  %vm964 = vcmp.ge.f32.partialorder %v913, 0.0
  %vm965 = vcmp.ge.f32.partialorder %v915, 0.0
  %vm966 = vcmp.ge.f32.partialorder %v954, 0.0
  %vm967 = vcmp.ge.f32.partialorder %v956, 0.0
  %v968 = vmul.f32 %v831, 0.2
  %v969 = vmul.f32 %v833, 0.2
  %v970 = vmul.f32 %v872, 0.2
  %v971 = vmul.f32 %v874, 0.2
  %v972 = vmul.f32 %v913, 0.2
  %v973 = vmul.f32 %v915, 0.2
  %v974 = vmul.f32 %v954, 0.2
  %v975 = vmul.f32 %v956, 0.2
  %v976 = vsel %vm960, %v831, %v968
  %v977 = vsel %vm961, %v833, %v969
  %v978 = vsel %vm962, %v872, %v970
  %v979 = vsel %vm963, %v874, %v971
  %v980 = vsel %vm964, %v913, %v972
  %v981 = vsel %vm965, %v915, %v973
  %v982 = vsel %vm966, %v954, %v974
  %v983 = vsel %vm967, %v956, %v975
  %v984 = vpack.c.bf16 %v976, %v976
  %v985 = vpack.c.bf16 %v977, %v977
  %v986 = vpack.c.bf16 %v978, %v978
  %v987 = vpack.c.bf16 %v979, %v979
  %v988 = vpack.c.bf16 %v980, %v980
  %v989 = vpack.c.bf16 %v981, %v981
  %v990 = vpack.c.bf16 %v982, %v982
  %v991 = vpack.c.bf16 %v983, %v983
  %v1000 = vunpack.c.l.b16 %v984
  %v1001 = vunpack.c.l.b16 %v985
  %v1002 = vunpack.c.l.b16 %v986
  %v1003 = vunpack.c.l.b16 %v987
  %v1004 = vunpack.c.l.b16 %v988
  %v1005 = vunpack.c.l.b16 %v989
  %v1006 = vunpack.c.l.b16 %v990
  %v1007 = vunpack.c.l.b16 %v991
  %v1008 = vpack.c.b16 %v1001, %v1000
  %v1009 = vpack.c.b16 %v1003, %v1002
  %v1010 = vpack.c.b16 %v1005, %v1004
  %v1011 = vpack.c.b16 %v1007, %v1006
  %1016 = vst [vmem:[%s3] sm:$0xff] %v1008
  %1017 = vst [vmem:[%s3 + $0x8] sm:$0xff] %v1009
  %1018 = vst [vmem:[%s3 + $0x10] sm:$0xff] %v1010
  %1019 = vst [vmem:[%s3 + $0x18] sm:$0xff] %v1011
  // Predicated region
  $region14: #{was_dis_forward.2} parent=0 // pred_check
    _
  $region15: #{was_dis_forward.2} parent=0 // pred_check_branch
    %1021 = sbr.rel (0) target = $region17
  $region16: #{was_dis_forward.2} parent=0 // pred_region
    _
  $region17: #{was_dis_forward.2} parent=0 // pred_fallthru
    _
  // Predicated region
  $region18: #{was_dis_forward.2} parent=0 // pred_check
    _
  $region19: #{was_dis_forward.2} parent=0 // pred_check_branch
    %1023 = sbr.rel (0) target = $region21
  $region20: #{was_dis_forward.2} parent=0 // pred_region
    _
  $region21: #{was_dis_forward.2} parent=0 // pred_fallthru
    _

// kernel: was_dis_forward.3
$region0: #{was_dis_forward.3}
  #allocation0 [shape = 'u32[]', space=smem, size = 0x4, offset = 0x4, fixed_abs, tag = 'smem constant byte address 0x4 - core index']
  #allocation1 [shape = 'u32[144,128]{1,0:T(1,128)}', space=vmem, size = 0x12000, scoped, tag = 'internal scratch']
  #allocation2 [shape = 'f32[512,16]{1,0:T(8,128)}', space=vmem, size = 0x40000, scoped, tag = 'scratch operand']
  #allocation3 [shape = 'f32[1,1]{1,0:T(1,128)S(1)}', space=vmem, size = 0x200, scoped, tag = 'scoped memory for was_dis_forward.3']
  %s0 = inlined_call_operand.vmem [shape: bf16[8,512], index: 0, kind: input, shape index: {}]
  %s1 = inlined_call_operand.vmem [shape: bf16[512,128], index: 1, kind: input, shape index: {}]
  %s2 = inlined_call_operand.vmem [shape: f32[8,1], index: 2, kind: input, shape index: {}]
  %s3 = inlined_call_operand.vmem [shape: f32[8,1], index: 3, kind: input, shape index: {}]
  %s4 = inlined_call_operand.vmem [shape: bf16[16,512], index: 4, kind: input, shape index: {}]
  %s5 = inlined_call_operand.vmem [shape: bf16[64,128,16], index: 5, kind: input, shape index: {}]
  %s6 = inlined_call_operand.vmem [shape: f32[16,1], index: 6, kind: input, shape index: {}]
  %s7 = inlined_call_operand.vmem [shape: f32[16,1], index: 7, kind: input, shape index: {}]
  %s8 = inlined_call_operand.vmem [shape: f32[16,8], index: 8, kind: input, shape index: {}]
  %s9 = inlined_call_operand.<no memory space> [shape: f32[1,1], index: 9, kind: input, shape index: {}]
  %s10 = inlined_call_operand.vmem [shape: f32[2,1], index: 10, kind: output, shape index: {}]
  %s11 = sld [smem:[#allocation0]]
  $region50: #{was_dis_forward.3} parent=0
    _
  %s13 = ssub.s32 1, %s11
  %s14 = scalar_select 0, %s13, %s11
  %v15 = vstv %s9
  %16 = vst [vmem:[#allocation3] sm:$0x1] %v15
  // Predicated region
  $region2: #{was_dis_forward.3} parent=0 // pred_check
    _
  $region3: #{was_dis_forward.3} parent=0 // pred_check_branch
    %18 = sbr.rel (0) target = $region5
  $region4: #{was_dis_forward.3} parent=0 // pred_region
    _
  $region5: #{was_dis_forward.3} parent=0 // pred_fallthru
    _
  // Predicated region
  $region6: #{was_dis_forward.3} parent=0 // pred_check
    _
  $region7: #{was_dis_forward.3} parent=0 // pred_check_branch
    %20 = sbr.rel (0) target = $region9
  $region8: #{was_dis_forward.3} parent=0 // pred_region
    _
  $region9: #{was_dis_forward.3} parent=0 // pred_fallthru
    _
  // Predicated region
  $region10: #{was_dis_forward.3} parent=0 // pred_check
    _
  $region11: #{was_dis_forward.3} parent=0 // pred_check_branch
    %22 = sbr.rel (0) target = $region13
  $region12: #{was_dis_forward.3} parent=0 // pred_region
    _
  $region13: #{was_dis_forward.3} parent=0 // pred_fallthru
    _
  // Predicated region
  $region14: #{was_dis_forward.3} parent=0 // pred_check
    _
  $region15: #{was_dis_forward.3} parent=0 // pred_check_branch
    %24 = sbr.rel (0) target = $region17
  $region16: #{was_dis_forward.3} parent=0 // pred_region
    _
  $region17: #{was_dis_forward.3} parent=0 // pred_fallthru
    _
  // Predicated region
  $region18: #{was_dis_forward.3} parent=0 // pred_check
    _
  $region19: #{was_dis_forward.3} parent=0 // pred_check_branch
    %26 = sbr.rel (0) target = $region21
  $region20: #{was_dis_forward.3} parent=0 // pred_region
    _
  $region21: #{was_dis_forward.3} parent=0 // pred_fallthru
    _
  // Predicated region
  $region22: #{was_dis_forward.3} parent=0 // pred_check
    _
  $region23: #{was_dis_forward.3} parent=0 // pred_check_branch
    %28 = sbr.rel (0) target = $region25
  $region24: #{was_dis_forward.3} parent=0 // pred_region
    _
  $region25: #{was_dis_forward.3} parent=0 // pred_fallthru
    _
  // Predicated region
  $region26: #{was_dis_forward.3} parent=0 // pred_check
    _
  $region27: #{was_dis_forward.3} parent=0 // pred_check_branch
    %30 = sbr.rel (0) target = $region29
  $region28: #{was_dis_forward.3} parent=0 // pred_region
    _
  $region29: #{was_dis_forward.3} parent=0 // pred_fallthru
    _
  // Predicated region
  $region30: #{was_dis_forward.3} parent=0 // pred_check
    _
  $region31: #{was_dis_forward.3} parent=0 // pred_check_branch
    %32 = sbr.rel (0) target = $region33
  $region32: #{was_dis_forward.3} parent=0 // pred_region
    _
  $region33: #{was_dis_forward.3} parent=0 // pred_fallthru
    _
  // Predicated region
  $region34: #{was_dis_forward.3} parent=0 // pred_check
    _
  $region35: #{was_dis_forward.3} parent=0 // pred_check_branch
    %34 = sbr.rel (0) target = $region37
  $region36: #{was_dis_forward.3} parent=0 // pred_region
    _
  $region37: #{was_dis_forward.3} parent=0 // pred_fallthru
    _
  // Predicated region
  $region38: #{was_dis_forward.3} parent=0 // pred_check
    _
  $region39: #{was_dis_forward.3} parent=0 // pred_check_branch
    %36 = sbr.rel (0) target = $region41
  $region40: #{was_dis_forward.3} parent=0 // pred_region
    _
  $region41: #{was_dis_forward.3} parent=0 // pred_fallthru
    _
  %v38 = vld [vmem:[%s0] sm:$0xff]
  %v39 = vld [vmem:[%s0 + $0x8] sm:$0xff]
  %v40 = vld [vmem:[%s1] sm:$0xf]
  %v41 = vld [vmem:[%s1 + $0x4] sm:$0xf]
  %v42 = vld [vmem:[%s1 + $0x8] sm:$0xf]
  %v43 = vld [vmem:[%s1 + $0xc] sm:$0xf]
  %v44 = vld [vmem:[%s1 + $0x10] sm:$0xf]
  %v45 = vld [vmem:[%s1 + $0x14] sm:$0xf]
  %v46 = vld [vmem:[%s1 + $0x18] sm:$0xf]
  %v47 = vld [vmem:[%s1 + $0x1c] sm:$0xf]
  %v48 = vld [vmem:[%s1 + $0x20] sm:$0xf]
  %v49 = vld [vmem:[%s1 + $0x24] sm:$0xf]
  %v50 = vld [vmem:[%s1 + $0x28] sm:$0xf]
  %v51 = vld [vmem:[%s1 + $0x2c] sm:$0xf]
  %v52 = vld [vmem:[%s1 + $0x30] sm:$0xf]
  %v53 = vld [vmem:[%s1 + $0x34] sm:$0xf]
  %v54 = vld [vmem:[%s1 + $0x38] sm:$0xf]
  %v55 = vld [vmem:[%s1 + $0x3c] sm:$0xf]
  %v56 = vld [vmem:[%s1 + $0x40] sm:$0xf]
  %v57 = vld [vmem:[%s1 + $0x44] sm:$0xf]
  %v58 = vld [vmem:[%s1 + $0x48] sm:$0xf]
  %v59 = vld [vmem:[%s1 + $0x4c] sm:$0xf]
  %v60 = vld [vmem:[%s1 + $0x50] sm:$0xf]
  %v61 = vld [vmem:[%s1 + $0x54] sm:$0xf]
  %v62 = vld [vmem:[%s1 + $0x58] sm:$0xf]
  %v63 = vld [vmem:[%s1 + $0x5c] sm:$0xf]
  %v64 = vld [vmem:[%s1 + $0x60] sm:$0xf]
  %v65 = vld [vmem:[%s1 + $0x64] sm:$0xf]
  %v66 = vld [vmem:[%s1 + $0x68] sm:$0xf]
  %v67 = vld [vmem:[%s1 + $0x6c] sm:$0xf]
  %v68 = vld [vmem:[%s1 + $0x70] sm:$0xf]
  %v69 = vld [vmem:[%s1 + $0x74] sm:$0xf]
  %v70 = vld [vmem:[%s1 + $0x78] sm:$0xf]
  %v71 = vld [vmem:[%s1 + $0x7c] sm:$0xf]
  %v72 = vld [vmem:[%s1 + $0x80] sm:$0xf]
  %v73 = vld [vmem:[%s1 + $0x84] sm:$0xf]
  %v74 = vld [vmem:[%s1 + $0x88] sm:$0xf]
  %v75 = vld [vmem:[%s1 + $0x8c] sm:$0xf]
  %v76 = vld [vmem:[%s1 + $0x90] sm:$0xf]
  %v77 = vld [vmem:[%s1 + $0x94] sm:$0xf]
  %v78 = vld [vmem:[%s1 + $0x98] sm:$0xf]
  %v79 = vld [vmem:[%s1 + $0x9c] sm:$0xf]
  %v80 = vld [vmem:[%s1 + $0xa0] sm:$0xf]
  %v81 = vld [vmem:[%s1 + $0xa4] sm:$0xf]
  %v82 = vld [vmem:[%s1 + $0xa8] sm:$0xf]
  %v83 = vld [vmem:[%s1 + $0xac] sm:$0xf]
  %v84 = vld [vmem:[%s1 + $0xb0] sm:$0xf]
  %v85 = vld [vmem:[%s1 + $0xb4] sm:$0xf]
  %v86 = vld [vmem:[%s1 + $0xb8] sm:$0xf]
  %v87 = vld [vmem:[%s1 + $0xbc] sm:$0xf]
  %v88 = vld [vmem:[%s1 + $0xc0] sm:$0xf]
  %v89 = vld [vmem:[%s1 + $0xc4] sm:$0xf]
  %v90 = vld [vmem:[%s1 + $0xc8] sm:$0xf]
  %v91 = vld [vmem:[%s1 + $0xcc] sm:$0xf]
  %v92 = vld [vmem:[%s1 + $0xd0] sm:$0xf]
  %v93 = vld [vmem:[%s1 + $0xd4] sm:$0xf]
  %v94 = vld [vmem:[%s1 + $0xd8] sm:$0xf]
  %v95 = vld [vmem:[%s1 + $0xdc] sm:$0xf]
  %v96 = vld [vmem:[%s1 + $0xe0] sm:$0xf]
  %v97 = vld [vmem:[%s1 + $0xe4] sm:$0xf]
  %v98 = vld [vmem:[%s1 + $0xe8] sm:$0xf]
  %v99 = vld [vmem:[%s1 + $0xec] sm:$0xf]
  %v100 = vld [vmem:[%s1 + $0xf0] sm:$0xf]
  %v101 = vld [vmem:[%s1 + $0xf4] sm:$0xf]
  %v102 = vld [vmem:[%s1 + $0xf8] sm:$0xf]
  %v103 = vld [vmem:[%s1 + $0xfc] sm:$0xf]
  %v106 = vunpack.c.l.b16 %v38
  %v107 = vunpack.c.h.b16 %v38
  %v108 = vunpack.c.l.b16 %v39
  %v109 = vunpack.c.h.b16 %v39
  %v110 = vpack.c.b16 %v106, %v106
  %v111 = vpack.c.b16 %v107, %v107
  %v112 = vpack.c.b16 %v108, %v108
  %v113 = vpack.c.b16 %v109, %v109
  %v182 = vunpack.c.l.b16 %v40
  %v183 = vunpack.c.l.b16 %v41
  %v184 = vunpack.c.l.b16 %v42
  %v185 = vunpack.c.l.b16 %v43
  %v186 = vunpack.c.l.b16 %v44
  %v187 = vunpack.c.l.b16 %v45
  %v188 = vunpack.c.l.b16 %v46
  %v189 = vunpack.c.l.b16 %v47
  %v190 = vunpack.c.l.b16 %v48
  %v191 = vunpack.c.l.b16 %v49
  %v192 = vunpack.c.l.b16 %v50
  %v193 = vunpack.c.l.b16 %v51
  %v194 = vunpack.c.l.b16 %v52
  %v195 = vunpack.c.l.b16 %v53
  %v196 = vunpack.c.l.b16 %v54
  %v197 = vunpack.c.l.b16 %v55
  %v198 = vunpack.c.l.b16 %v56
  %v199 = vunpack.c.l.b16 %v57
  %v200 = vunpack.c.l.b16 %v58
  %v201 = vunpack.c.l.b16 %v59
  %v202 = vunpack.c.l.b16 %v60
  %v203 = vunpack.c.l.b16 %v61
  %v204 = vunpack.c.l.b16 %v62
  %v205 = vunpack.c.l.b16 %v63
  %v206 = vunpack.c.l.b16 %v64
  %v207 = vunpack.c.l.b16 %v65
  %v208 = vunpack.c.l.b16 %v66
  %v209 = vunpack.c.l.b16 %v67
  %v210 = vunpack.c.l.b16 %v68
  %v211 = vunpack.c.l.b16 %v69
  %v212 = vunpack.c.l.b16 %v70
  %v213 = vunpack.c.l.b16 %v71
  %v214 = vunpack.c.l.b16 %v72
  %v215 = vunpack.c.l.b16 %v73
  %v216 = vunpack.c.l.b16 %v74
  %v217 = vunpack.c.l.b16 %v75
  %v218 = vunpack.c.l.b16 %v76
  %v219 = vunpack.c.l.b16 %v77
  %v220 = vunpack.c.l.b16 %v78
  %v221 = vunpack.c.l.b16 %v79
  %v222 = vunpack.c.l.b16 %v80
  %v223 = vunpack.c.l.b16 %v81
  %v224 = vunpack.c.l.b16 %v82
  %v225 = vunpack.c.l.b16 %v83
  %v226 = vunpack.c.l.b16 %v84
  %v227 = vunpack.c.l.b16 %v85
  %v228 = vunpack.c.l.b16 %v86
  %v229 = vunpack.c.l.b16 %v87
  %v230 = vunpack.c.l.b16 %v88
  %v231 = vunpack.c.l.b16 %v89
  %v232 = vunpack.c.l.b16 %v90
  %v233 = vunpack.c.l.b16 %v91
  %v234 = vunpack.c.l.b16 %v92
  %v235 = vunpack.c.l.b16 %v93
  %v236 = vunpack.c.l.b16 %v94
  %v237 = vunpack.c.l.b16 %v95
  %v238 = vunpack.c.l.b16 %v96
  %v239 = vunpack.c.l.b16 %v97
  %v240 = vunpack.c.l.b16 %v98
  %v241 = vunpack.c.l.b16 %v99
  %v242 = vunpack.c.l.b16 %v100
  %v243 = vunpack.c.l.b16 %v101
  %v244 = vunpack.c.l.b16 %v102
  %v245 = vunpack.c.l.b16 %v103
  %v246 = vpack.c.b16 %v183, %v182
  %v247 = vpack.c.b16 %v185, %v184
  %v248 = vpack.c.b16 %v187, %v186
  %v249 = vpack.c.b16 %v189, %v188
  %v250 = vpack.c.b16 %v191, %v190
  %v251 = vpack.c.b16 %v193, %v192
  %v252 = vpack.c.b16 %v195, %v194
  %v253 = vpack.c.b16 %v197, %v196
  %v254 = vpack.c.b16 %v199, %v198
  %v255 = vpack.c.b16 %v201, %v200
  %v256 = vpack.c.b16 %v203, %v202
  %v257 = vpack.c.b16 %v205, %v204
  %v258 = vpack.c.b16 %v207, %v206
  %v259 = vpack.c.b16 %v209, %v208
  %v260 = vpack.c.b16 %v211, %v210
  %v261 = vpack.c.b16 %v213, %v212
  %v262 = vpack.c.b16 %v215, %v214
  %v263 = vpack.c.b16 %v217, %v216
  %v264 = vpack.c.b16 %v219, %v218
  %v265 = vpack.c.b16 %v221, %v220
  %v266 = vpack.c.b16 %v223, %v222
  %v267 = vpack.c.b16 %v225, %v224
  %v268 = vpack.c.b16 %v227, %v226
  %v269 = vpack.c.b16 %v229, %v228
  %v270 = vpack.c.b16 %v231, %v230
  %v271 = vpack.c.b16 %v233, %v232
  %v272 = vpack.c.b16 %v235, %v234
  %v273 = vpack.c.b16 %v237, %v236
  %v274 = vpack.c.b16 %v239, %v238
  %v275 = vpack.c.b16 %v241, %v240
  %v276 = vpack.c.b16 %v243, %v242
  %v277 = vpack.c.b16 %v245, %v244
  %310 = vmatprep.subr.bf16.mxu0 0
  %311 = vmatpush1.bf16.msra.mxu0 %v253
  %312 = vmatprep.subr.bf16.mxu0 0
  %313 = vmatpush1.bf16.msra.mxu0 %v252
  %314 = vmatprep.subr.bf16.mxu0 0
  %315 = vmatpush1.bf16.msra.mxu0 %v251
  %316 = vmatprep.subr.bf16.mxu0 0
  %317 = vmatpush1.bf16.msra.mxu0 %v250
  %318 = vmatprep.subr.bf16.mxu0 0
  %319 = vmatpush1.bf16.msra.mxu0 %v249
  %320 = vmatprep.subr.bf16.mxu0 0
  %321 = vmatpush1.bf16.msra.mxu0 %v248
  %322 = vmatprep.subr.bf16.mxu0 0
  %323 = vmatpush1.bf16.msra.mxu0 %v247
  %324 = vmatprep.subr.bf16.mxu0 0
  %325 = vmatpush1.bf16.msra.mxu0 %v246
  %326 = vmatprep.subr.bf16.mxu0 0
  %327 = vmatpush2.bf16.msra.mxu0 %v261
  %328 = vmatprep.subr.bf16.mxu0 0
  %329 = vmatpush2.bf16.msra.mxu0 %v260
  %330 = vmatprep.subr.bf16.mxu0 0
  %331 = vmatpush2.bf16.msra.mxu0 %v259
  %332 = vmatprep.subr.bf16.mxu0 0
  %333 = vmatpush2.bf16.msra.mxu0 %v258
  %334 = vmatprep.subr.bf16.mxu0 0
  %335 = vmatpush2.bf16.msra.mxu0 %v257
  %336 = vmatprep.subr.bf16.mxu0 0
  %337 = vmatpush2.bf16.msra.mxu0 %v256
  %338 = vmatprep.subr.bf16.mxu0 0
  %339 = vmatpush2.bf16.msra.mxu0 %v255
  %340 = vmatprep.subr.bf16.mxu0 0
  %341 = vmatpush2.bf16.msra.mxu0 %v254
  %342 = vmatprep.mubr.bf16.mxu0 %v111
  %343 = vmatmul.mubr.bf16.gmra.mxu0 %v110
  %v344 = vpop.f32.mrf.mxu0
  %v345 = vadd.f32 0.0, %v344
  %v346 = vpop.f32.mrf.mxu0
  %v347 = vpop.f32.mrf.mxu0
  %v348 = vpop.f32.mrf.mxu0
  %349 = vdwg.mxu0
  %350 = vmatprep.subr.bf16.mxu0 0
  %351 = vmatpush1.bf16.msra.mxu0 %v269
  %352 = vmatprep.subr.bf16.mxu0 0
  %353 = vmatpush1.bf16.msra.mxu0 %v268
  %354 = vmatprep.subr.bf16.mxu0 0
  %355 = vmatpush1.bf16.msra.mxu0 %v267
  %356 = vmatprep.subr.bf16.mxu0 0
  %357 = vmatpush1.bf16.msra.mxu0 %v266
  %358 = vmatprep.subr.bf16.mxu0 0
  %359 = vmatpush1.bf16.msra.mxu0 %v265
  %360 = vmatprep.subr.bf16.mxu0 0
  %361 = vmatpush1.bf16.msra.mxu0 %v264
  %362 = vmatprep.subr.bf16.mxu0 0
  %363 = vmatpush1.bf16.msra.mxu0 %v263
  %364 = vmatprep.subr.bf16.mxu0 0
  %365 = vmatpush1.bf16.msra.mxu0 %v262
  %366 = vmatprep.subr.bf16.mxu0 0
  %367 = vmatpush2.bf16.msra.mxu0 %v277
  %368 = vmatprep.subr.bf16.mxu0 0
  %369 = vmatpush2.bf16.msra.mxu0 %v276
  %370 = vmatprep.subr.bf16.mxu0 0
  %371 = vmatpush2.bf16.msra.mxu0 %v275
  %372 = vmatprep.subr.bf16.mxu0 0
  %373 = vmatpush2.bf16.msra.mxu0 %v274
  %374 = vmatprep.subr.bf16.mxu0 0
  %375 = vmatpush2.bf16.msra.mxu0 %v273
  %376 = vmatprep.subr.bf16.mxu0 0
  %377 = vmatpush2.bf16.msra.mxu0 %v272
  %378 = vmatprep.subr.bf16.mxu0 0
  %379 = vmatpush2.bf16.msra.mxu0 %v271
  %380 = vmatprep.subr.bf16.mxu0 0
  %381 = vmatpush2.bf16.msra.mxu0 %v270
  %382 = vmatprep.mubr.bf16.mxu0 %v113
  %383 = vmatmul.mubr.bf16.gmra.mxu0 %v112
  %v384 = vpop.f32.mrf.mxu0
  %v385 = vadd.f32 %v345, %v384
  %v386 = vpop.f32.mrf.mxu0
  %v387 = vpop.f32.mrf.mxu0
  %v388 = vpop.f32.mrf.mxu0
  %389 = vdwg.mxu0
  %390 = vadd.xlane.f32.xlu0 %v385
  %v391 = vpop.xlane.xlu0 %390
  %v392 = vrcp.pop 128.0
  %v393 = vmul.f32 %v391, %v392
  %v394 = vsub.f32 %v385, %v393
  %v395 = vmul.f32 %v394, %v394
  %396 = vadd.xlane.f32.xlu0 %v395
  %v397 = vpop.xlane.xlu0 %396
  %v398 = vmul.f32 %v397, %v392
  %v399 = vadd.f32 %v398, 1e-05
  %v400 = vrsqrt.pop %v399
  %v401 = vmul.f32 %v394, %v400
  %v402 = vld [vmem:[%s2] sm:$0xff]
  %404 = vset.pattern.permute.xlu0 0
  %405 = vperm.xlu0 %404, %v402
  %v406 = vpop.permute.xlu0 %405
  %v408 = vmul.f32 %v401, %v406
  %v409 = vld [vmem:[%s3] sm:$0xff]
  %411 = vset.pattern.permute.xlu0 0
  %412 = vperm.xlu0 %411, %v409
  %v413 = vpop.permute.xlu0 %412
  %v415 = vadd.f32 %v408, %v413
  %vm416 = vcmp.ge.f32.partialorder %v415, 0.0
  %v417 = vmul.f32 %v415, 0.2
  %v418 = vsel %vm416, %v415, %v417
  %v419 = vpack.c.bf16 %v418, %v418
  %v420 = vld [vmem:[%s5] sm:$0xf]
  %v421 = vld [vmem:[%s5 + $0x4] sm:$0xf]
  %v422 = vld [vmem:[%s5 + $0x8] sm:$0xf]
  %v423 = vld [vmem:[%s5 + $0xc] sm:$0xf]
  %v424 = vld [vmem:[%s5 + $0x10] sm:$0xf]
  %v425 = vld [vmem:[%s5 + $0x14] sm:$0xf]
  %v426 = vld [vmem:[%s5 + $0x18] sm:$0xf]
  %v427 = vld [vmem:[%s5 + $0x1c] sm:$0xf]
  %v428 = vld [vmem:[%s5 + $0x20] sm:$0xf]
  %v429 = vld [vmem:[%s5 + $0x24] sm:$0xf]
  %v430 = vld [vmem:[%s5 + $0x28] sm:$0xf]
  %v431 = vld [vmem:[%s5 + $0x2c] sm:$0xf]
  %v432 = vld [vmem:[%s5 + $0x30] sm:$0xf]
  %v433 = vld [vmem:[%s5 + $0x34] sm:$0xf]
  %v434 = vld [vmem:[%s5 + $0x38] sm:$0xf]
  %v435 = vld [vmem:[%s5 + $0x3c] sm:$0xf]
  %v452 = vunpack.c.l.b16 %v420
  %v453 = vunpack.c.l.b16 %v421
  %v454 = vunpack.c.l.b16 %v422
  %v455 = vunpack.c.l.b16 %v423
  %v456 = vunpack.c.l.b16 %v424
  %v457 = vunpack.c.l.b16 %v425
  %v458 = vunpack.c.l.b16 %v426
  %v459 = vunpack.c.l.b16 %v427
  %v460 = vunpack.c.l.b16 %v428
  %v461 = vunpack.c.l.b16 %v429
  %v462 = vunpack.c.l.b16 %v430
  %v463 = vunpack.c.l.b16 %v431
  %v464 = vunpack.c.l.b16 %v432
  %v465 = vunpack.c.l.b16 %v433
  %v466 = vunpack.c.l.b16 %v434
  %v467 = vunpack.c.l.b16 %v435
  %v468 = vpack.c.b16 %v453, %v452
  %v469 = vpack.c.b16 %v455, %v454
  %v470 = vpack.c.b16 %v457, %v456
  %v471 = vpack.c.b16 %v459, %v458
  %v472 = vpack.c.b16 %v461, %v460
  %v473 = vpack.c.b16 %v463, %v462
  %v474 = vpack.c.b16 %v465, %v464
  %v475 = vpack.c.b16 %v467, %v466
  %484 = vmatprep.subr.bf16.mxu0 0
  %485 = vmatpush1.bf16.msra.mxu0 %v475
  %486 = vmatprep.subr.bf16.mxu0 0
  %487 = vmatpush1.bf16.msra.mxu0 %v474
  %488 = vmatprep.subr.bf16.mxu0 0
  %489 = vmatpush1.bf16.msra.mxu0 %v473
  %490 = vmatprep.subr.bf16.mxu0 0
  %491 = vmatpush1.bf16.msra.mxu0 %v472
  %492 = vmatprep.subr.bf16.mxu0 0
  %493 = vmatpush1.bf16.msra.mxu0 %v471
  %494 = vmatprep.subr.bf16.mxu0 0
  %495 = vmatpush1.bf16.msra.mxu0 %v470
  %496 = vmatprep.subr.bf16.mxu0 0
  %497 = vmatpush1.bf16.msra.mxu0 %v469
  %498 = vmatprep.subr.bf16.mxu0 0
  %499 = vmatpush1.bf16.msra.mxu0 %v468
  %500 = vmatprep.subr.bf16.mxu0 0
  %501 = vmatpush2.bf16.msra.mxu0 0
  %502 = vmatprep.subr.bf16.mxu0 0
  %503 = vmatpush2.bf16.msra.mxu0 0
  %504 = vmatprep.subr.bf16.mxu0 0
  %505 = vmatpush2.bf16.msra.mxu0 0
  %506 = vmatprep.subr.bf16.mxu0 0
  %507 = vmatpush2.bf16.msra.mxu0 0
  %508 = vmatprep.subr.bf16.mxu0 0
  %509 = vmatpush2.bf16.msra.mxu0 0
  %510 = vmatprep.subr.bf16.mxu0 0
  %511 = vmatpush2.bf16.msra.mxu0 0
  %512 = vmatprep.subr.bf16.mxu0 0
  %513 = vmatpush2.bf16.msra.mxu0 0
  %514 = vmatprep.subr.bf16.mxu0 0
  %515 = vmatpush2.bf16.msra.mxu0 0
  %516 = vmatprep.mubr.bf16.mxu0 0
  %517 = vmatmul.mubr.bf16.gmra.mxu0 %v419
  %v518 = vpop.f32.mrf.mxu0
  %v519 = vadd.f32 0.0, %v518
  %v520 = vpop.f32.mrf.mxu0
  %v521 = vpop.f32.mrf.mxu0
  %v522 = vpop.f32.mrf.mxu0
  %523 = vdwg.mxu0
  %vm524 = vcmask 130048
  %525 = vst.msk [vmem:[#allocation2] sm:$0xff] %vm524, %v519
  %s526 = scalar_lea.vmem %s5, 64
  %v527 = vld [vmem:[%s526] sm:$0xf]
  %v528 = vld [vmem:[%s526 + $0x4] sm:$0xf]
  %v529 = vld [vmem:[%s526 + $0x8] sm:$0xf]
  %v530 = vld [vmem:[%s526 + $0xc] sm:$0xf]
  %v531 = vld [vmem:[%s526 + $0x10] sm:$0xf]
  %v532 = vld [vmem:[%s526 + $0x14] sm:$0xf]
  %v533 = vld [vmem:[%s526 + $0x18] sm:$0xf]
  %v534 = vld [vmem:[%s526 + $0x1c] sm:$0xf]
  %v535 = vld [vmem:[%s526 + $0x20] sm:$0xf]
  %v536 = vld [vmem:[%s526 + $0x24] sm:$0xf]
  %v537 = vld [vmem:[%s526 + $0x28] sm:$0xf]
  %v538 = vld [vmem:[%s526 + $0x2c] sm:$0xf]
  %v539 = vld [vmem:[%s526 + $0x30] sm:$0xf]
  %v540 = vld [vmem:[%s526 + $0x34] sm:$0xf]
  %v541 = vld [vmem:[%s526 + $0x38] sm:$0xf]
  %v542 = vld [vmem:[%s526 + $0x3c] sm:$0xf]
  %v559 = vunpack.c.l.b16 %v527
  %v560 = vunpack.c.l.b16 %v528
  %v561 = vunpack.c.l.b16 %v529
  %v562 = vunpack.c.l.b16 %v530
  %v563 = vunpack.c.l.b16 %v531
  %v564 = vunpack.c.l.b16 %v532
  %v565 = vunpack.c.l.b16 %v533
  %v566 = vunpack.c.l.b16 %v534
  %v567 = vunpack.c.l.b16 %v535
  %v568 = vunpack.c.l.b16 %v536
  %v569 = vunpack.c.l.b16 %v537
  %v570 = vunpack.c.l.b16 %v538
  %v571 = vunpack.c.l.b16 %v539
  %v572 = vunpack.c.l.b16 %v540
  %v573 = vunpack.c.l.b16 %v541
  %v574 = vunpack.c.l.b16 %v542
  %v575 = vpack.c.b16 %v560, %v559
  %v576 = vpack.c.b16 %v562, %v561
  %v577 = vpack.c.b16 %v564, %v563
  %v578 = vpack.c.b16 %v566, %v565
  %v579 = vpack.c.b16 %v568, %v567
  %v580 = vpack.c.b16 %v570, %v569
  %v581 = vpack.c.b16 %v572, %v571
  %v582 = vpack.c.b16 %v574, %v573
  %591 = vmatprep.subr.bf16.mxu0 0
  %592 = vmatpush1.bf16.msra.mxu0 %v582
  %593 = vmatprep.subr.bf16.mxu0 0
  %594 = vmatpush1.bf16.msra.mxu0 %v581
  %595 = vmatprep.subr.bf16.mxu0 0
  %596 = vmatpush1.bf16.msra.mxu0 %v580
  %597 = vmatprep.subr.bf16.mxu0 0
  %598 = vmatpush1.bf16.msra.mxu0 %v579
  %599 = vmatprep.subr.bf16.mxu0 0
  %600 = vmatpush1.bf16.msra.mxu0 %v578
  %601 = vmatprep.subr.bf16.mxu0 0
  %602 = vmatpush1.bf16.msra.mxu0 %v577
  %603 = vmatprep.subr.bf16.mxu0 0
  %604 = vmatpush1.bf16.msra.mxu0 %v576
  %605 = vmatprep.subr.bf16.mxu0 0
  %606 = vmatpush1.bf16.msra.mxu0 %v575
  %607 = vmatprep.subr.bf16.mxu0 0
  %608 = vmatpush2.bf16.msra.mxu0 0
  %609 = vmatprep.subr.bf16.mxu0 0
  %610 = vmatpush2.bf16.msra.mxu0 0
  %611 = vmatprep.subr.bf16.mxu0 0
  %612 = vmatpush2.bf16.msra.mxu0 0
  %613 = vmatprep.subr.bf16.mxu0 0
  %614 = vmatpush2.bf16.msra.mxu0 0
  %615 = vmatprep.subr.bf16.mxu0 0
  %616 = vmatpush2.bf16.msra.mxu0 0
  %617 = vmatprep.subr.bf16.mxu0 0
  %618 = vmatpush2.bf16.msra.mxu0 0
  %619 = vmatprep.subr.bf16.mxu0 0
  %620 = vmatpush2.bf16.msra.mxu0 0
  %621 = vmatprep.subr.bf16.mxu0 0
  %622 = vmatpush2.bf16.msra.mxu0 0
  %623 = vmatprep.mubr.bf16.mxu0 0
  %624 = vmatmul.mubr.bf16.gmra.mxu0 %v419
  %v625 = vpop.f32.mrf.mxu0
  %v626 = vadd.f32 0.0, %v625
  %v627 = vpop.f32.mrf.mxu0
  %v628 = vpop.f32.mrf.mxu0
  %v629 = vpop.f32.mrf.mxu0
  %630 = vdwg.mxu0
  %631 = vst.msk [vmem:[#allocation2 + $0x8] sm:$0xff] %vm524, %v626
  %s632 = scalar_lea.vmem %s5, 128
  %v633 = vld [vmem:[%s632] sm:$0xf]
  %v634 = vld [vmem:[%s632 + $0x4] sm:$0xf]
  %v635 = vld [vmem:[%s632 + $0x8] sm:$0xf]
  %v636 = vld [vmem:[%s632 + $0xc] sm:$0xf]
  %v637 = vld [vmem:[%s632 + $0x10] sm:$0xf]
  %v638 = vld [vmem:[%s632 + $0x14] sm:$0xf]
  %v639 = vld [vmem:[%s632 + $0x18] sm:$0xf]
  %v640 = vld [vmem:[%s632 + $0x1c] sm:$0xf]
  %v641 = vld [vmem:[%s632 + $0x20] sm:$0xf]
  %v642 = vld [vmem:[%s632 + $0x24] sm:$0xf]
  %v643 = vld [vmem:[%s632 + $0x28] sm:$0xf]
  %v644 = vld [vmem:[%s632 + $0x2c] sm:$0xf]
  %v645 = vld [vmem:[%s632 + $0x30] sm:$0xf]
  %v646 = vld [vmem:[%s632 + $0x34] sm:$0xf]
  %v647 = vld [vmem:[%s632 + $0x38] sm:$0xf]
  %v648 = vld [vmem:[%s632 + $0x3c] sm:$0xf]
  %v665 = vunpack.c.l.b16 %v633
  %v666 = vunpack.c.l.b16 %v634
  %v667 = vunpack.c.l.b16 %v635
  %v668 = vunpack.c.l.b16 %v636
  %v669 = vunpack.c.l.b16 %v637
  %v670 = vunpack.c.l.b16 %v638
  %v671 = vunpack.c.l.b16 %v639
  %v672 = vunpack.c.l.b16 %v640
  %v673 = vunpack.c.l.b16 %v641
  %v674 = vunpack.c.l.b16 %v642
  %v675 = vunpack.c.l.b16 %v643
  %v676 = vunpack.c.l.b16 %v644
  %v677 = vunpack.c.l.b16 %v645
  %v678 = vunpack.c.l.b16 %v646
  %v679 = vunpack.c.l.b16 %v647
  %v680 = vunpack.c.l.b16 %v648
  %v681 = vpack.c.b16 %v666, %v665
  %v682 = vpack.c.b16 %v668, %v667
  %v683 = vpack.c.b16 %v670, %v669
  %v684 = vpack.c.b16 %v672, %v671
  %v685 = vpack.c.b16 %v674, %v673
  %v686 = vpack.c.b16 %v676, %v675
  %v687 = vpack.c.b16 %v678, %v677
  %v688 = vpack.c.b16 %v680, %v679
  %697 = vmatprep.subr.bf16.mxu0 0
  %698 = vmatpush1.bf16.msra.mxu0 %v688
  %699 = vmatprep.subr.bf16.mxu0 0
  %700 = vmatpush1.bf16.msra.mxu0 %v687
  %701 = vmatprep.subr.bf16.mxu0 0
  %702 = vmatpush1.bf16.msra.mxu0 %v686
  %703 = vmatprep.subr.bf16.mxu0 0
  %704 = vmatpush1.bf16.msra.mxu0 %v685
  %705 = vmatprep.subr.bf16.mxu0 0
  %706 = vmatpush1.bf16.msra.mxu0 %v684
  %707 = vmatprep.subr.bf16.mxu0 0
  %708 = vmatpush1.bf16.msra.mxu0 %v683
  %709 = vmatprep.subr.bf16.mxu0 0
  %710 = vmatpush1.bf16.msra.mxu0 %v682
  %711 = vmatprep.subr.bf16.mxu0 0
  %712 = vmatpush1.bf16.msra.mxu0 %v681
  %713 = vmatprep.subr.bf16.mxu0 0
  %714 = vmatpush2.bf16.msra.mxu0 0
  %715 = vmatprep.subr.bf16.mxu0 0
  %716 = vmatpush2.bf16.msra.mxu0 0
  %717 = vmatprep.subr.bf16.mxu0 0
  %718 = vmatpush2.bf16.msra.mxu0 0
  %719 = vmatprep.subr.bf16.mxu0 0
  %720 = vmatpush2.bf16.msra.mxu0 0
  %721 = vmatprep.subr.bf16.mxu0 0
  %722 = vmatpush2.bf16.msra.mxu0 0
  %723 = vmatprep.subr.bf16.mxu0 0
  %724 = vmatpush2.bf16.msra.mxu0 0
  %725 = vmatprep.subr.bf16.mxu0 0
  %726 = vmatpush2.bf16.msra.mxu0 0
  %727 = vmatprep.subr.bf16.mxu0 0
  %728 = vmatpush2.bf16.msra.mxu0 0
  %729 = vmatprep.mubr.bf16.mxu0 0
  %730 = vmatmul.mubr.bf16.gmra.mxu0 %v419
  %v731 = vpop.f32.mrf.mxu0
  %v732 = vadd.f32 0.0, %v731
  %v733 = vpop.f32.mrf.mxu0
  %v734 = vpop.f32.mrf.mxu0
  %v735 = vpop.f32.mrf.mxu0
  %736 = vdwg.mxu0
  %737 = vst.msk [vmem:[#allocation2 + $0x10] sm:$0xff] %vm524, %v732
  %s738 = scalar_lea.vmem %s5, 192
  %v739 = vld [vmem:[%s738] sm:$0xf]
  %v740 = vld [vmem:[%s738 + $0x4] sm:$0xf]
  %v741 = vld [vmem:[%s738 + $0x8] sm:$0xf]
  %v742 = vld [vmem:[%s738 + $0xc] sm:$0xf]
  %v743 = vld [vmem:[%s738 + $0x10] sm:$0xf]
  %v744 = vld [vmem:[%s738 + $0x14] sm:$0xf]
  %v745 = vld [vmem:[%s738 + $0x18] sm:$0xf]
  %v746 = vld [vmem:[%s738 + $0x1c] sm:$0xf]
  %v747 = vld [vmem:[%s738 + $0x20] sm:$0xf]
  %v748 = vld [vmem:[%s738 + $0x24] sm:$0xf]
  %v749 = vld [vmem:[%s738 + $0x28] sm:$0xf]
  %v750 = vld [vmem:[%s738 + $0x2c] sm:$0xf]
  %v751 = vld [vmem:[%s738 + $0x30] sm:$0xf]
  %v752 = vld [vmem:[%s738 + $0x34] sm:$0xf]
  %v753 = vld [vmem:[%s738 + $0x38] sm:$0xf]
  %v754 = vld [vmem:[%s738 + $0x3c] sm:$0xf]
  %v771 = vunpack.c.l.b16 %v739
  %v772 = vunpack.c.l.b16 %v740
  %v773 = vunpack.c.l.b16 %v741
  %v774 = vunpack.c.l.b16 %v742
  %v775 = vunpack.c.l.b16 %v743
  %v776 = vunpack.c.l.b16 %v744
  %v777 = vunpack.c.l.b16 %v745
  %v778 = vunpack.c.l.b16 %v746
  %v779 = vunpack.c.l.b16 %v747
  %v780 = vunpack.c.l.b16 %v748
  %v781 = vunpack.c.l.b16 %v749
  %v782 = vunpack.c.l.b16 %v750
  %v783 = vunpack.c.l.b16 %v751
  %v784 = vunpack.c.l.b16 %v752
  %v785 = vunpack.c.l.b16 %v753
  %v786 = vunpack.c.l.b16 %v754
  %v787 = vpack.c.b16 %v772, %v771
  %v788 = vpack.c.b16 %v774, %v773
  %v789 = vpack.c.b16 %v776, %v775
  %v790 = vpack.c.b16 %v778, %v777
  %v791 = vpack.c.b16 %v780, %v779
  %v792 = vpack.c.b16 %v782, %v781
  %v793 = vpack.c.b16 %v784, %v783
  %v794 = vpack.c.b16 %v786, %v785
  %803 = vmatprep.subr.bf16.mxu0 0
  %804 = vmatpush1.bf16.msra.mxu0 %v794
  %805 = vmatprep.subr.bf16.mxu0 0
  %806 = vmatpush1.bf16.msra.mxu0 %v793
  %807 = vmatprep.subr.bf16.mxu0 0
  %808 = vmatpush1.bf16.msra.mxu0 %v792
  %809 = vmatprep.subr.bf16.mxu0 0
  %810 = vmatpush1.bf16.msra.mxu0 %v791
  %811 = vmatprep.subr.bf16.mxu0 0
  %812 = vmatpush1.bf16.msra.mxu0 %v790
  %813 = vmatprep.subr.bf16.mxu0 0
  %814 = vmatpush1.bf16.msra.mxu0 %v789
  %815 = vmatprep.subr.bf16.mxu0 0
  %816 = vmatpush1.bf16.msra.mxu0 %v788
  %817 = vmatprep.subr.bf16.mxu0 0
  %818 = vmatpush1.bf16.msra.mxu0 %v787
  %819 = vmatprep.subr.bf16.mxu0 0
  %820 = vmatpush2.bf16.msra.mxu0 0
  %821 = vmatprep.subr.bf16.mxu0 0
  %822 = vmatpush2.bf16.msra.mxu0 0
  %823 = vmatprep.subr.bf16.mxu0 0
  %824 = vmatpush2.bf16.msra.mxu0 0
  %825 = vmatprep.subr.bf16.mxu0 0
  %826 = vmatpush2.bf16.msra.mxu0 0
  %827 = vmatprep.subr.bf16.mxu0 0
  %828 = vmatpush2.bf16.msra.mxu0 0
  %829 = vmatprep.subr.bf16.mxu0 0
  %830 = vmatpush2.bf16.msra.mxu0 0
  %831 = vmatprep.subr.bf16.mxu0 0
  %832 = vmatpush2.bf16.msra.mxu0 0
  %833 = vmatprep.subr.bf16.mxu0 0
  %834 = vmatpush2.bf16.msra.mxu0 0
  %835 = vmatprep.mubr.bf16.mxu0 0
  %836 = vmatmul.mubr.bf16.gmra.mxu0 %v419
  %v837 = vpop.f32.mrf.mxu0
  %v838 = vadd.f32 0.0, %v837
  %v839 = vpop.f32.mrf.mxu0
  %v840 = vpop.f32.mrf.mxu0
  %v841 = vpop.f32.mrf.mxu0
  %842 = vdwg.mxu0
  %843 = vst.msk [vmem:[#allocation2 + $0x18] sm:$0xff] %vm524, %v838
  %s844 = scalar_lea.vmem %s5, 256
  %v845 = vld [vmem:[%s844] sm:$0xf]
  %v846 = vld [vmem:[%s844 + $0x4] sm:$0xf]
  %v847 = vld [vmem:[%s844 + $0x8] sm:$0xf]
  %v848 = vld [vmem:[%s844 + $0xc] sm:$0xf]
  %v849 = vld [vmem:[%s844 + $0x10] sm:$0xf]
  %v850 = vld [vmem:[%s844 + $0x14] sm:$0xf]
  %v851 = vld [vmem:[%s844 + $0x18] sm:$0xf]
  %v852 = vld [vmem:[%s844 + $0x1c] sm:$0xf]
  %v853 = vld [vmem:[%s844 + $0x20] sm:$0xf]
  %v854 = vld [vmem:[%s844 + $0x24] sm:$0xf]
  %v855 = vld [vmem:[%s844 + $0x28] sm:$0xf]
  %v856 = vld [vmem:[%s844 + $0x2c] sm:$0xf]
  %v857 = vld [vmem:[%s844 + $0x30] sm:$0xf]
  %v858 = vld [vmem:[%s844 + $0x34] sm:$0xf]
  %v859 = vld [vmem:[%s844 + $0x38] sm:$0xf]
  %v860 = vld [vmem:[%s844 + $0x3c] sm:$0xf]
  %v877 = vunpack.c.l.b16 %v845
  %v878 = vunpack.c.l.b16 %v846
  %v879 = vunpack.c.l.b16 %v847
  %v880 = vunpack.c.l.b16 %v848
  %v881 = vunpack.c.l.b16 %v849
  %v882 = vunpack.c.l.b16 %v850
  %v883 = vunpack.c.l.b16 %v851
  %v884 = vunpack.c.l.b16 %v852
  %v885 = vunpack.c.l.b16 %v853
  %v886 = vunpack.c.l.b16 %v854
  %v887 = vunpack.c.l.b16 %v855
  %v888 = vunpack.c.l.b16 %v856
  %v889 = vunpack.c.l.b16 %v857
  %v890 = vunpack.c.l.b16 %v858
  %v891 = vunpack.c.l.b16 %v859
  %v892 = vunpack.c.l.b16 %v860
  %v893 = vpack.c.b16 %v878, %v877
  %v894 = vpack.c.b16 %v880, %v879
  %v895 = vpack.c.b16 %v882, %v881
  %v896 = vpack.c.b16 %v884, %v883
  %v897 = vpack.c.b16 %v886, %v885
  %v898 = vpack.c.b16 %v888, %v887
  %v899 = vpack.c.b16 %v890, %v889
  %v900 = vpack.c.b16 %v892, %v891
  %909 = vmatprep.subr.bf16.mxu0 0
  %910 = vmatpush1.bf16.msra.mxu0 %v900
  %911 = vmatprep.subr.bf16.mxu0 0
  %912 = vmatpush1.bf16.msra.mxu0 %v899
  %913 = vmatprep.subr.bf16.mxu0 0
  %914 = vmatpush1.bf16.msra.mxu0 %v898
  %915 = vmatprep.subr.bf16.mxu0 0
  %916 = vmatpush1.bf16.msra.mxu0 %v897
  %917 = vmatprep.subr.bf16.mxu0 0
  %918 = vmatpush1.bf16.msra.mxu0 %v896
  %919 = vmatprep.subr.bf16.mxu0 0
  %920 = vmatpush1.bf16.msra.mxu0 %v895
  %921 = vmatprep.subr.bf16.mxu0 0
  %922 = vmatpush1.bf16.msra.mxu0 %v894
  %923 = vmatprep.subr.bf16.mxu0 0
  %924 = vmatpush1.bf16.msra.mxu0 %v893
  %925 = vmatprep.subr.bf16.mxu0 0
  %926 = vmatpush2.bf16.msra.mxu0 0
  %927 = vmatprep.subr.bf16.mxu0 0
  %928 = vmatpush2.bf16.msra.mxu0 0
  %929 = vmatprep.subr.bf16.mxu0 0
  %930 = vmatpush2.bf16.msra.mxu0 0
  %931 = vmatprep.subr.bf16.mxu0 0
  %932 = vmatpush2.bf16.msra.mxu0 0
  %933 = vmatprep.subr.bf16.mxu0 0
  %934 = vmatpush2.bf16.msra.mxu0 0
  %935 = vmatprep.subr.bf16.mxu0 0
  %936 = vmatpush2.bf16.msra.mxu0 0
  %937 = vmatprep.subr.bf16.mxu0 0
  %938 = vmatpush2.bf16.msra.mxu0 0
  %939 = vmatprep.subr.bf16.mxu0 0
  %940 = vmatpush2.bf16.msra.mxu0 0
  %941 = vmatprep.mubr.bf16.mxu0 0
  %942 = vmatmul.mubr.bf16.gmra.mxu0 %v419
  %v943 = vpop.f32.mrf.mxu0
  %v944 = vadd.f32 0.0, %v943
  %v945 = vpop.f32.mrf.mxu0
  %v946 = vpop.f32.mrf.mxu0
  %v947 = vpop.f32.mrf.mxu0
  %948 = vdwg.mxu0
  %949 = vst.msk [vmem:[#allocation2 + $0x20] sm:$0xff] %vm524, %v944
  %s950 = scalar_lea.vmem %s5, 320
  %v951 = vld [vmem:[%s950] sm:$0xf]
  %v952 = vld [vmem:[%s950 + $0x4] sm:$0xf]
  %v953 = vld [vmem:[%s950 + $0x8] sm:$0xf]
  %v954 = vld [vmem:[%s950 + $0xc] sm:$0xf]
  %v955 = vld [vmem:[%s950 + $0x10] sm:$0xf]
  %v956 = vld [vmem:[%s950 + $0x14] sm:$0xf]
  %v957 = vld [vmem:[%s950 + $0x18] sm:$0xf]
  %v958 = vld [vmem:[%s950 + $0x1c] sm:$0xf]
  %v959 = vld [vmem:[%s950 + $0x20] sm:$0xf]
  %v960 = vld [vmem:[%s950 + $0x24] sm:$0xf]
  %v961 = vld [vmem:[%s950 + $0x28] sm:$0xf]
  %v962 = vld [vmem:[%s950 + $0x2c] sm:$0xf]
  %v963 = vld [vmem:[%s950 + $0x30] sm:$0xf]
  %v964 = vld [vmem:[%s950 + $0x34] sm:$0xf]
  %v965 = vld [vmem:[%s950 + $0x38] sm:$0xf]
  %v966 = vld [vmem:[%s950 + $0x3c] sm:$0xf]
  %v983 = vunpack.c.l.b16 %v951
  %v984 = vunpack.c.l.b16 %v952
  %v985 = vunpack.c.l.b16 %v953
  %v986 = vunpack.c.l.b16 %v954
  %v987 = vunpack.c.l.b16 %v955
  %v988 = vunpack.c.l.b16 %v956
  %v989 = vunpack.c.l.b16 %v957
  %v990 = vunpack.c.l.b16 %v958
  %v991 = vunpack.c.l.b16 %v959
  %v992 = vunpack.c.l.b16 %v960
  %v993 = vunpack.c.l.b16 %v961
  %v994 = vunpack.c.l.b16 %v962
  %v995 = vunpack.c.l.b16 %v963
  %v996 = vunpack.c.l.b16 %v964
  %v997 = vunpack.c.l.b16 %v965
  %v998 = vunpack.c.l.b16 %v966
  %v999 = vpack.c.b16 %v984, %v983
  %v1000 = vpack.c.b16 %v986, %v985
  %v1001 = vpack.c.b16 %v988, %v987
  %v1002 = vpack.c.b16 %v990, %v989
  %v1003 = vpack.c.b16 %v992, %v991
  %v1004 = vpack.c.b16 %v994, %v993
  %v1005 = vpack.c.b16 %v996, %v995
  %v1006 = vpack.c.b16 %v998, %v997
  %1015 = vmatprep.subr.bf16.mxu0 0
  %1016 = vmatpush1.bf16.msra.mxu0 %v1006
  %1017 = vmatprep.subr.bf16.mxu0 0
  %1018 = vmatpush1.bf16.msra.mxu0 %v1005
  %1019 = vmatprep.subr.bf16.mxu0 0
  %1020 = vmatpush1.bf16.msra.mxu0 %v1004
  %1021 = vmatprep.subr.bf16.mxu0 0
  %1022 = vmatpush1.bf16.msra.mxu0 %v1003
  %1023 = vmatprep.subr.bf16.mxu0 0
  %1024 = vmatpush1.bf16.msra.mxu0 %v1002
  %1025 = vmatprep.subr.bf16.mxu0 0
  %1026 = vmatpush1.bf16.msra.mxu0 %v1001
  %1027 = vmatprep.subr.bf16.mxu0 0
  %1028 = vmatpush1.bf16.msra.mxu0 %v1000
  %1029 = vmatprep.subr.bf16.mxu0 0
  %1030 = vmatpush1.bf16.msra.mxu0 %v999
  %1031 = vmatprep.subr.bf16.mxu0 0
  %1032 = vmatpush2.bf16.msra.mxu0 0
  %1033 = vmatprep.subr.bf16.mxu0 0
  %1034 = vmatpush2.bf16.msra.mxu0 0
  %1035 = vmatprep.subr.bf16.mxu0 0
  %1036 = vmatpush2.bf16.msra.mxu0 0
  %1037 = vmatprep.subr.bf16.mxu0 0
  %1038 = vmatpush2.bf16.msra.mxu0 0
  %1039 = vmatprep.subr.bf16.mxu0 0
  %1040 = vmatpush2.bf16.msra.mxu0 0
  %1041 = vmatprep.subr.bf16.mxu0 0
  %1042 = vmatpush2.bf16.msra.mxu0 0
  %1043 = vmatprep.subr.bf16.mxu0 0
  %1044 = vmatpush2.bf16.msra.mxu0 0
  %1045 = vmatprep.subr.bf16.mxu0 0
  %1046 = vmatpush2.bf16.msra.mxu0 0
  %1047 = vmatprep.mubr.bf16.mxu0 0
  %1048 = vmatmul.mubr.bf16.gmra.mxu0 %v419
  %v1049 = vpop.f32.mrf.mxu0
  %v1050 = vadd.f32 0.0, %v1049
  %v1051 = vpop.f32.mrf.mxu0
  %v1052 = vpop.f32.mrf.mxu0
  %v1053 = vpop.f32.mrf.mxu0
  %1054 = vdwg.mxu0
  %1055 = vst.msk [vmem:[#allocation2 + $0x28] sm:$0xff] %vm524, %v1050
  %s1056 = scalar_lea.vmem %s5, 384
  %v1057 = vld [vmem:[%s1056] sm:$0xf]
  %v1058 = vld [vmem:[%s1056 + $0x4] sm:$0xf]
  %v1059 = vld [vmem:[%s1056 + $0x8] sm:$0xf]
  %v1060 = vld [vmem:[%s1056 + $0xc] sm:$0xf]
  %v1061 = vld [vmem:[%s1056 + $0x10] sm:$0xf]
  %v1062 = vld [vmem:[%s1056 + $0x14] sm:$0xf]
  %v1063 = vld [vmem:[%s1056 + $0x18] sm:$0xf]
  %v1064 = vld [vmem:[%s1056 + $0x1c] sm:$0xf]
  %v1065 = vld [vmem:[%s1056 + $0x20] sm:$0xf]
  %v1066 = vld [vmem:[%s1056 + $0x24] sm:$0xf]
  %v1067 = vld [vmem:[%s1056 + $0x28] sm:$0xf]
  %v1068 = vld [vmem:[%s1056 + $0x2c] sm:$0xf]
  %v1069 = vld [vmem:[%s1056 + $0x30] sm:$0xf]
  %v1070 = vld [vmem:[%s1056 + $0x34] sm:$0xf]
  %v1071 = vld [vmem:[%s1056 + $0x38] sm:$0xf]
  %v1072 = vld [vmem:[%s1056 + $0x3c] sm:$0xf]
  %v1089 = vunpack.c.l.b16 %v1057
  %v1090 = vunpack.c.l.b16 %v1058
  %v1091 = vunpack.c.l.b16 %v1059
  %v1092 = vunpack.c.l.b16 %v1060
  %v1093 = vunpack.c.l.b16 %v1061
  %v1094 = vunpack.c.l.b16 %v1062
  %v1095 = vunpack.c.l.b16 %v1063
  %v1096 = vunpack.c.l.b16 %v1064
  %v1097 = vunpack.c.l.b16 %v1065
  %v1098 = vunpack.c.l.b16 %v1066
  %v1099 = vunpack.c.l.b16 %v1067
  %v1100 = vunpack.c.l.b16 %v1068
  %v1101 = vunpack.c.l.b16 %v1069
  %v1102 = vunpack.c.l.b16 %v1070
  %v1103 = vunpack.c.l.b16 %v1071
  %v1104 = vunpack.c.l.b16 %v1072
  %v1105 = vpack.c.b16 %v1090, %v1089
  %v1106 = vpack.c.b16 %v1092, %v1091
  %v1107 = vpack.c.b16 %v1094, %v1093
  %v1108 = vpack.c.b16 %v1096, %v1095
  %v1109 = vpack.c.b16 %v1098, %v1097
  %v1110 = vpack.c.b16 %v1100, %v1099
  %v1111 = vpack.c.b16 %v1102, %v1101
  %v1112 = vpack.c.b16 %v1104, %v1103
  %1121 = vmatprep.subr.bf16.mxu0 0
  %1122 = vmatpush1.bf16.msra.mxu0 %v1112
  %1123 = vmatprep.subr.bf16.mxu0 0
  %1124 = vmatpush1.bf16.msra.mxu0 %v1111
  %1125 = vmatprep.subr.bf16.mxu0 0
  %1126 = vmatpush1.bf16.msra.mxu0 %v1110
  %1127 = vmatprep.subr.bf16.mxu0 0
  %1128 = vmatpush1.bf16.msra.mxu0 %v1109
  %1129 = vmatprep.subr.bf16.mxu0 0
  %1130 = vmatpush1.bf16.msra.mxu0 %v1108
  %1131 = vmatprep.subr.bf16.mxu0 0
  %1132 = vmatpush1.bf16.msra.mxu0 %v1107
  %1133 = vmatprep.subr.bf16.mxu0 0
  %1134 = vmatpush1.bf16.msra.mxu0 %v1106
  %1135 = vmatprep.subr.bf16.mxu0 0
  %1136 = vmatpush1.bf16.msra.mxu0 %v1105
  %1137 = vmatprep.subr.bf16.mxu0 0
  %1138 = vmatpush2.bf16.msra.mxu0 0
  %1139 = vmatprep.subr.bf16.mxu0 0
  %1140 = vmatpush2.bf16.msra.mxu0 0
  %1141 = vmatprep.subr.bf16.mxu0 0
  %1142 = vmatpush2.bf16.msra.mxu0 0
  %1143 = vmatprep.subr.bf16.mxu0 0
  %1144 = vmatpush2.bf16.msra.mxu0 0
  %1145 = vmatprep.subr.bf16.mxu0 0
  %1146 = vmatpush2.bf16.msra.mxu0 0
  %1147 = vmatprep.subr.bf16.mxu0 0
  %1148 = vmatpush2.bf16.msra.mxu0 0
  %1149 = vmatprep.subr.bf16.mxu0 0
  %1150 = vmatpush2.bf16.msra.mxu0 0
  %1151 = vmatprep.subr.bf16.mxu0 0
  %1152 = vmatpush2.bf16.msra.mxu0 0
  %1153 = vmatprep.mubr.bf16.mxu0 0
  %1154 = vmatmul.mubr.bf16.gmra.mxu0 %v419
  %v1155 = vpop.f32.mrf.mxu0
  %v1156 = vadd.f32 0.0, %v1155
  %v1157 = vpop.f32.mrf.mxu0
  %v1158 = vpop.f32.mrf.mxu0
  %v1159 = vpop.f32.mrf.mxu0
  %1160 = vdwg.mxu0
  %1161 = vst.msk [vmem:[#allocation2 + $0x30] sm:$0xff] %vm524, %v1156
  %s1162 = scalar_lea.vmem %s5, 448
  %v1163 = vld [vmem:[%s1162] sm:$0xf]
  %v1164 = vld [vmem:[%s1162 + $0x4] sm:$0xf]
  %v1165 = vld [vmem:[%s1162 + $0x8] sm:$0xf]
  %v1166 = vld [vmem:[%s1162 + $0xc] sm:$0xf]
  %v1167 = vld [vmem:[%s1162 + $0x10] sm:$0xf]
  %v1168 = vld [vmem:[%s1162 + $0x14] sm:$0xf]
  %v1169 = vld [vmem:[%s1162 + $0x18] sm:$0xf]
  %v1170 = vld [vmem:[%s1162 + $0x1c] sm:$0xf]
  %v1171 = vld [vmem:[%s1162 + $0x20] sm:$0xf]
  %v1172 = vld [vmem:[%s1162 + $0x24] sm:$0xf]
  %v1173 = vld [vmem:[%s1162 + $0x28] sm:$0xf]
  %v1174 = vld [vmem:[%s1162 + $0x2c] sm:$0xf]
  %v1175 = vld [vmem:[%s1162 + $0x30] sm:$0xf]
  %v1176 = vld [vmem:[%s1162 + $0x34] sm:$0xf]
  %v1177 = vld [vmem:[%s1162 + $0x38] sm:$0xf]
  %v1178 = vld [vmem:[%s1162 + $0x3c] sm:$0xf]
  %v1195 = vunpack.c.l.b16 %v1163
  %v1196 = vunpack.c.l.b16 %v1164
  %v1197 = vunpack.c.l.b16 %v1165
  %v1198 = vunpack.c.l.b16 %v1166
  %v1199 = vunpack.c.l.b16 %v1167
  %v1200 = vunpack.c.l.b16 %v1168
  %v1201 = vunpack.c.l.b16 %v1169
  %v1202 = vunpack.c.l.b16 %v1170
  %v1203 = vunpack.c.l.b16 %v1171
  %v1204 = vunpack.c.l.b16 %v1172
  %v1205 = vunpack.c.l.b16 %v1173
  %v1206 = vunpack.c.l.b16 %v1174
  %v1207 = vunpack.c.l.b16 %v1175
  %v1208 = vunpack.c.l.b16 %v1176
  %v1209 = vunpack.c.l.b16 %v1177
  %v1210 = vunpack.c.l.b16 %v1178
  %v1211 = vpack.c.b16 %v1196, %v1195
  %v1212 = vpack.c.b16 %v1198, %v1197
  %v1213 = vpack.c.b16 %v1200, %v1199
  %v1214 = vpack.c.b16 %v1202, %v1201
  %v1215 = vpack.c.b16 %v1204, %v1203
  %v1216 = vpack.c.b16 %v1206, %v1205
  %v1217 = vpack.c.b16 %v1208, %v1207
  %v1218 = vpack.c.b16 %v1210, %v1209
  %1227 = vmatprep.subr.bf16.mxu0 0
  %1228 = vmatpush1.bf16.msra.mxu0 %v1218
  %1229 = vmatprep.subr.bf16.mxu0 0
  %1230 = vmatpush1.bf16.msra.mxu0 %v1217
  %1231 = vmatprep.subr.bf16.mxu0 0
  %1232 = vmatpush1.bf16.msra.mxu0 %v1216
  %1233 = vmatprep.subr.bf16.mxu0 0
  %1234 = vmatpush1.bf16.msra.mxu0 %v1215
  %1235 = vmatprep.subr.bf16.mxu0 0
  %1236 = vmatpush1.bf16.msra.mxu0 %v1214
  %1237 = vmatprep.subr.bf16.mxu0 0
  %1238 = vmatpush1.bf16.msra.mxu0 %v1213
  %1239 = vmatprep.subr.bf16.mxu0 0
  %1240 = vmatpush1.bf16.msra.mxu0 %v1212
  %1241 = vmatprep.subr.bf16.mxu0 0
  %1242 = vmatpush1.bf16.msra.mxu0 %v1211
  %1243 = vmatprep.subr.bf16.mxu0 0
  %1244 = vmatpush2.bf16.msra.mxu0 0
  %1245 = vmatprep.subr.bf16.mxu0 0
  %1246 = vmatpush2.bf16.msra.mxu0 0
  %1247 = vmatprep.subr.bf16.mxu0 0
  %1248 = vmatpush2.bf16.msra.mxu0 0
  %1249 = vmatprep.subr.bf16.mxu0 0
  %1250 = vmatpush2.bf16.msra.mxu0 0
  %1251 = vmatprep.subr.bf16.mxu0 0
  %1252 = vmatpush2.bf16.msra.mxu0 0
  %1253 = vmatprep.subr.bf16.mxu0 0
  %1254 = vmatpush2.bf16.msra.mxu0 0
  %1255 = vmatprep.subr.bf16.mxu0 0
  %1256 = vmatpush2.bf16.msra.mxu0 0
  %1257 = vmatprep.subr.bf16.mxu0 0
  %1258 = vmatpush2.bf16.msra.mxu0 0
  %1259 = vmatprep.mubr.bf16.mxu0 0
  %1260 = vmatmul.mubr.bf16.gmra.mxu0 %v419
  %v1261 = vpop.f32.mrf.mxu0
  %v1262 = vadd.f32 0.0, %v1261
  %v1263 = vpop.f32.mrf.mxu0
  %v1264 = vpop.f32.mrf.mxu0
  %v1265 = vpop.f32.mrf.mxu0
  %1266 = vdwg.mxu0
  %1267 = vst.msk [vmem:[#allocation2 + $0x38] sm:$0xff] %vm524, %v1262
  %s1268 = scalar_lea.vmem %s5, 512
  %v1269 = vld [vmem:[%s1268] sm:$0xf]
  %v1270 = vld [vmem:[%s1268 + $0x4] sm:$0xf]
  %v1271 = vld [vmem:[%s1268 + $0x8] sm:$0xf]
  %v1272 = vld [vmem:[%s1268 + $0xc] sm:$0xf]
  %v1273 = vld [vmem:[%s1268 + $0x10] sm:$0xf]
  %v1274 = vld [vmem:[%s1268 + $0x14] sm:$0xf]
  %v1275 = vld [vmem:[%s1268 + $0x18] sm:$0xf]
  %v1276 = vld [vmem:[%s1268 + $0x1c] sm:$0xf]
  %v1277 = vld [vmem:[%s1268 + $0x20] sm:$0xf]
  %v1278 = vld [vmem:[%s1268 + $0x24] sm:$0xf]
  %v1279 = vld [vmem:[%s1268 + $0x28] sm:$0xf]
  %v1280 = vld [vmem:[%s1268 + $0x2c] sm:$0xf]
  %v1281 = vld [vmem:[%s1268 + $0x30] sm:$0xf]
  %v1282 = vld [vmem:[%s1268 + $0x34] sm:$0xf]
  %v1283 = vld [vmem:[%s1268 + $0x38] sm:$0xf]
  %v1284 = vld [vmem:[%s1268 + $0x3c] sm:$0xf]
  %v1301 = vunpack.c.l.b16 %v1269
  %v1302 = vunpack.c.l.b16 %v1270
  %v1303 = vunpack.c.l.b16 %v1271
  %v1304 = vunpack.c.l.b16 %v1272
  %v1305 = vunpack.c.l.b16 %v1273
  %v1306 = vunpack.c.l.b16 %v1274
  %v1307 = vunpack.c.l.b16 %v1275
  %v1308 = vunpack.c.l.b16 %v1276
  %v1309 = vunpack.c.l.b16 %v1277
  %v1310 = vunpack.c.l.b16 %v1278
  %v1311 = vunpack.c.l.b16 %v1279
  %v1312 = vunpack.c.l.b16 %v1280
  %v1313 = vunpack.c.l.b16 %v1281
  %v1314 = vunpack.c.l.b16 %v1282
  %v1315 = vunpack.c.l.b16 %v1283
  %v1316 = vunpack.c.l.b16 %v1284
  %v1317 = vpack.c.b16 %v1302, %v1301
  %v1318 = vpack.c.b16 %v1304, %v1303
  %v1319 = vpack.c.b16 %v1306, %v1305
  %v1320 = vpack.c.b16 %v1308, %v1307
  %v1321 = vpack.c.b16 %v1310, %v1309
  %v1322 = vpack.c.b16 %v1312, %v1311
  %v1323 = vpack.c.b16 %v1314, %v1313
  %v1324 = vpack.c.b16 %v1316, %v1315
  %1333 = vmatprep.subr.bf16.mxu0 0
  %1334 = vmatpush1.bf16.msra.mxu0 %v1324
  %1335 = vmatprep.subr.bf16.mxu0 0
  %1336 = vmatpush1.bf16.msra.mxu0 %v1323
  %1337 = vmatprep.subr.bf16.mxu0 0
  %1338 = vmatpush1.bf16.msra.mxu0 %v1322
  %1339 = vmatprep.subr.bf16.mxu0 0
  %1340 = vmatpush1.bf16.msra.mxu0 %v1321
  %1341 = vmatprep.subr.bf16.mxu0 0
  %1342 = vmatpush1.bf16.msra.mxu0 %v1320
  %1343 = vmatprep.subr.bf16.mxu0 0
  %1344 = vmatpush1.bf16.msra.mxu0 %v1319
  %1345 = vmatprep.subr.bf16.mxu0 0
  %1346 = vmatpush1.bf16.msra.mxu0 %v1318
  %1347 = vmatprep.subr.bf16.mxu0 0
  %1348 = vmatpush1.bf16.msra.mxu0 %v1317
  %1349 = vmatprep.subr.bf16.mxu0 0
  %1350 = vmatpush2.bf16.msra.mxu0 0
  %1351 = vmatprep.subr.bf16.mxu0 0
  %1352 = vmatpush2.bf16.msra.mxu0 0
  %1353 = vmatprep.subr.bf16.mxu0 0
  %1354 = vmatpush2.bf16.msra.mxu0 0
  %1355 = vmatprep.subr.bf16.mxu0 0
  %1356 = vmatpush2.bf16.msra.mxu0 0
  %1357 = vmatprep.subr.bf16.mxu0 0
  %1358 = vmatpush2.bf16.msra.mxu0 0
  %1359 = vmatprep.subr.bf16.mxu0 0
  %1360 = vmatpush2.bf16.msra.mxu0 0
  %1361 = vmatprep.subr.bf16.mxu0 0
  %1362 = vmatpush2.bf16.msra.mxu0 0
  %1363 = vmatprep.subr.bf16.mxu0 0
  %1364 = vmatpush2.bf16.msra.mxu0 0
  %1365 = vmatprep.mubr.bf16.mxu0 0
  %1366 = vmatmul.mubr.bf16.gmra.mxu0 %v419
  %v1367 = vpop.f32.mrf.mxu0
  %v1368 = vadd.f32 0.0, %v1367
  %v1369 = vpop.f32.mrf.mxu0
  %v1370 = vpop.f32.mrf.mxu0
  %v1371 = vpop.f32.mrf.mxu0
  %1372 = vdwg.mxu0
  %1373 = vst.msk [vmem:[#allocation2 + $0x40] sm:$0xff] %vm524, %v1368
  %s1374 = scalar_lea.vmem %s5, 576
  %v1375 = vld [vmem:[%s1374] sm:$0xf]
  %v1376 = vld [vmem:[%s1374 + $0x4] sm:$0xf]
  %v1377 = vld [vmem:[%s1374 + $0x8] sm:$0xf]
  %v1378 = vld [vmem:[%s1374 + $0xc] sm:$0xf]
  %v1379 = vld [vmem:[%s1374 + $0x10] sm:$0xf]
  %v1380 = vld [vmem:[%s1374 + $0x14] sm:$0xf]
  %v1381 = vld [vmem:[%s1374 + $0x18] sm:$0xf]
  %v1382 = vld [vmem:[%s1374 + $0x1c] sm:$0xf]
  %v1383 = vld [vmem:[%s1374 + $0x20] sm:$0xf]
  %v1384 = vld [vmem:[%s1374 + $0x24] sm:$0xf]
  %v1385 = vld [vmem:[%s1374 + $0x28] sm:$0xf]
  %v1386 = vld [vmem:[%s1374 + $0x2c] sm:$0xf]
  %v1387 = vld [vmem:[%s1374 + $0x30] sm:$0xf]
  %v1388 = vld [vmem:[%s1374 + $0x34] sm:$0xf]
  %v1389 = vld [vmem:[%s1374 + $0x38] sm:$0xf]
  %v1390 = vld [vmem:[%s1374 + $0x3c] sm:$0xf]
  %v1407 = vunpack.c.l.b16 %v1375
  %v1408 = vunpack.c.l.b16 %v1376
  %v1409 = vunpack.c.l.b16 %v1377
  %v1410 = vunpack.c.l.b16 %v1378
  %v1411 = vunpack.c.l.b16 %v1379
  %v1412 = vunpack.c.l.b16 %v1380
  %v1413 = vunpack.c.l.b16 %v1381
  %v1414 = vunpack.c.l.b16 %v1382
  %v1415 = vunpack.c.l.b16 %v1383
  %v1416 = vunpack.c.l.b16 %v1384
  %v1417 = vunpack.c.l.b16 %v1385
  %v1418 = vunpack.c.l.b16 %v1386
  %v1419 = vunpack.c.l.b16 %v1387
  %v1420 = vunpack.c.l.b16 %v1388
  %v1421 = vunpack.c.l.b16 %v1389
  %v1422 = vunpack.c.l.b16 %v1390
  %v1423 = vpack.c.b16 %v1408, %v1407
  %v1424 = vpack.c.b16 %v1410, %v1409
  %v1425 = vpack.c.b16 %v1412, %v1411
  %v1426 = vpack.c.b16 %v1414, %v1413
  %v1427 = vpack.c.b16 %v1416, %v1415
  %v1428 = vpack.c.b16 %v1418, %v1417
  %v1429 = vpack.c.b16 %v1420, %v1419
  %v1430 = vpack.c.b16 %v1422, %v1421
  %1439 = vmatprep.subr.bf16.mxu0 0
  %1440 = vmatpush1.bf16.msra.mxu0 %v1430
  %1441 = vmatprep.subr.bf16.mxu0 0
  %1442 = vmatpush1.bf16.msra.mxu0 %v1429
  %1443 = vmatprep.subr.bf16.mxu0 0
  %1444 = vmatpush1.bf16.msra.mxu0 %v1428
  %1445 = vmatprep.subr.bf16.mxu0 0
  %1446 = vmatpush1.bf16.msra.mxu0 %v1427
  %1447 = vmatprep.subr.bf16.mxu0 0
  %1448 = vmatpush1.bf16.msra.mxu0 %v1426
  %1449 = vmatprep.subr.bf16.mxu0 0
  %1450 = vmatpush1.bf16.msra.mxu0 %v1425
  %1451 = vmatprep.subr.bf16.mxu0 0
  %1452 = vmatpush1.bf16.msra.mxu0 %v1424
  %1453 = vmatprep.subr.bf16.mxu0 0
  %1454 = vmatpush1.bf16.msra.mxu0 %v1423
  %1455 = vmatprep.subr.bf16.mxu0 0
  %1456 = vmatpush2.bf16.msra.mxu0 0
  %1457 = vmatprep.subr.bf16.mxu0 0
  %1458 = vmatpush2.bf16.msra.mxu0 0
  %1459 = vmatprep.subr.bf16.mxu0 0
  %1460 = vmatpush2.bf16.msra.mxu0 0
  %1461 = vmatprep.subr.bf16.mxu0 0
  %1462 = vmatpush2.bf16.msra.mxu0 0
  %1463 = vmatprep.subr.bf16.mxu0 0
  %1464 = vmatpush2.bf16.msra.mxu0 0
  %1465 = vmatprep.subr.bf16.mxu0 0
  %1466 = vmatpush2.bf16.msra.mxu0 0
  %1467 = vmatprep.subr.bf16.mxu0 0
  %1468 = vmatpush2.bf16.msra.mxu0 0
  %1469 = vmatprep.subr.bf16.mxu0 0
  %1470 = vmatpush2.bf16.msra.mxu0 0
  %1471 = vmatprep.mubr.bf16.mxu0 0
  %1472 = vmatmul.mubr.bf16.gmra.mxu0 %v419
  %v1473 = vpop.f32.mrf.mxu0
  %v1474 = vadd.f32 0.0, %v1473
  %v1475 = vpop.f32.mrf.mxu0
  %v1476 = vpop.f32.mrf.mxu0
  %v1477 = vpop.f32.mrf.mxu0
  %1478 = vdwg.mxu0
  %1479 = vst.msk [vmem:[#allocation2 + $0x48] sm:$0xff] %vm524, %v1474
  %s1480 = scalar_lea.vmem %s5, 640
  %v1481 = vld [vmem:[%s1480] sm:$0xf]
  %v1482 = vld [vmem:[%s1480 + $0x4] sm:$0xf]
  %v1483 = vld [vmem:[%s1480 + $0x8] sm:$0xf]
  %v1484 = vld [vmem:[%s1480 + $0xc] sm:$0xf]
  %v1485 = vld [vmem:[%s1480 + $0x10] sm:$0xf]
  %v1486 = vld [vmem:[%s1480 + $0x14] sm:$0xf]
  %v1487 = vld [vmem:[%s1480 + $0x18] sm:$0xf]
  %v1488 = vld [vmem:[%s1480 + $0x1c] sm:$0xf]
  %v1489 = vld [vmem:[%s1480 + $0x20] sm:$0xf]
  %v1490 = vld [vmem:[%s1480 + $0x24] sm:$0xf]
  %v1491 = vld [vmem:[%s1480 + $0x28] sm:$0xf]
  %v1492 = vld [vmem:[%s1480 + $0x2c] sm:$0xf]
  %v1493 = vld [vmem:[%s1480 + $0x30] sm:$0xf]
  %v1494 = vld [vmem:[%s1480 + $0x34] sm:$0xf]
  %v1495 = vld [vmem:[%s1480 + $0x38] sm:$0xf]
  %v1496 = vld [vmem:[%s1480 + $0x3c] sm:$0xf]
  %v1513 = vunpack.c.l.b16 %v1481
  %v1514 = vunpack.c.l.b16 %v1482
  %v1515 = vunpack.c.l.b16 %v1483
  %v1516 = vunpack.c.l.b16 %v1484
  %v1517 = vunpack.c.l.b16 %v1485
  %v1518 = vunpack.c.l.b16 %v1486
  %v1519 = vunpack.c.l.b16 %v1487
  %v1520 = vunpack.c.l.b16 %v1488
  %v1521 = vunpack.c.l.b16 %v1489
  %v1522 = vunpack.c.l.b16 %v1490
  %v1523 = vunpack.c.l.b16 %v1491
  %v1524 = vunpack.c.l.b16 %v1492
  %v1525 = vunpack.c.l.b16 %v1493
  %v1526 = vunpack.c.l.b16 %v1494
  %v1527 = vunpack.c.l.b16 %v1495
  %v1528 = vunpack.c.l.b16 %v1496
  %v1529 = vpack.c.b16 %v1514, %v1513
  %v1530 = vpack.c.b16 %v1516, %v1515
  %v1531 = vpack.c.b16 %v1518, %v1517
  %v1532 = vpack.c.b16 %v1520, %v1519
  %v1533 = vpack.c.b16 %v1522, %v1521
  %v1534 = vpack.c.b16 %v1524, %v1523
  %v1535 = vpack.c.b16 %v1526, %v1525
  %v1536 = vpack.c.b16 %v1528, %v1527
  %1545 = vmatprep.subr.bf16.mxu0 0
  %1546 = vmatpush1.bf16.msra.mxu0 %v1536
  %1547 = vmatprep.subr.bf16.mxu0 0
  %1548 = vmatpush1.bf16.msra.mxu0 %v1535
  %1549 = vmatprep.subr.bf16.mxu0 0
  %1550 = vmatpush1.bf16.msra.mxu0 %v1534
  %1551 = vmatprep.subr.bf16.mxu0 0
  %1552 = vmatpush1.bf16.msra.mxu0 %v1533
  %1553 = vmatprep.subr.bf16.mxu0 0
  %1554 = vmatpush1.bf16.msra.mxu0 %v1532
  %1555 = vmatprep.subr.bf16.mxu0 0
  %1556 = vmatpush1.bf16.msra.mxu0 %v1531
  %1557 = vmatprep.subr.bf16.mxu0 0
  %1558 = vmatpush1.bf16.msra.mxu0 %v1530
  %1559 = vmatprep.subr.bf16.mxu0 0
  %1560 = vmatpush1.bf16.msra.mxu0 %v1529
  %1561 = vmatprep.subr.bf16.mxu0 0
  %1562 = vmatpush2.bf16.msra.mxu0 0
  %1563 = vmatprep.subr.bf16.mxu0 0
  %1564 = vmatpush2.bf16.msra.mxu0 0
  %1565 = vmatprep.subr.bf16.mxu0 0
  %1566 = vmatpush2.bf16.msra.mxu0 0
  %1567 = vmatprep.subr.bf16.mxu0 0
  %1568 = vmatpush2.bf16.msra.mxu0 0
  %1569 = vmatprep.subr.bf16.mxu0 0
  %1570 = vmatpush2.bf16.msra.mxu0 0
  %1571 = vmatprep.subr.bf16.mxu0 0
  %1572 = vmatpush2.bf16.msra.mxu0 0
  %1573 = vmatprep.subr.bf16.mxu0 0
  %1574 = vmatpush2.bf16.msra.mxu0 0
  %1575 = vmatprep.subr.bf16.mxu0 0
  %1576 = vmatpush2.bf16.msra.mxu0 0
  %1577 = vmatprep.mubr.bf16.mxu0 0
  %1578 = vmatmul.mubr.bf16.gmra.mxu0 %v419
  %v1579 = vpop.f32.mrf.mxu0
  %v1580 = vadd.f32 0.0, %v1579
  %v1581 = vpop.f32.mrf.mxu0
  %v1582 = vpop.f32.mrf.mxu0
  %v1583 = vpop.f32.mrf.mxu0
  %1584 = vdwg.mxu0
  %1585 = vst.msk [vmem:[#allocation2 + $0x50] sm:$0xff] %vm524, %v1580
  %s1586 = scalar_lea.vmem %s5, 704
  %v1587 = vld [vmem:[%s1586] sm:$0xf]
  %v1588 = vld [vmem:[%s1586 + $0x4] sm:$0xf]
  %v1589 = vld [vmem:[%s1586 + $0x8] sm:$0xf]
  %v1590 = vld [vmem:[%s1586 + $0xc] sm:$0xf]
  %v1591 = vld [vmem:[%s1586 + $0x10] sm:$0xf]
  %v1592 = vld [vmem:[%s1586 + $0x14] sm:$0xf]
  %v1593 = vld [vmem:[%s1586 + $0x18] sm:$0xf]
  %v1594 = vld [vmem:[%s1586 + $0x1c] sm:$0xf]
  %v1595 = vld [vmem:[%s1586 + $0x20] sm:$0xf]
  %v1596 = vld [vmem:[%s1586 + $0x24] sm:$0xf]
  %v1597 = vld [vmem:[%s1586 + $0x28] sm:$0xf]
  %v1598 = vld [vmem:[%s1586 + $0x2c] sm:$0xf]
  %v1599 = vld [vmem:[%s1586 + $0x30] sm:$0xf]
  %v1600 = vld [vmem:[%s1586 + $0x34] sm:$0xf]
  %v1601 = vld [vmem:[%s1586 + $0x38] sm:$0xf]
  %v1602 = vld [vmem:[%s1586 + $0x3c] sm:$0xf]
  %v1619 = vunpack.c.l.b16 %v1587
  %v1620 = vunpack.c.l.b16 %v1588
  %v1621 = vunpack.c.l.b16 %v1589
  %v1622 = vunpack.c.l.b16 %v1590
  %v1623 = vunpack.c.l.b16 %v1591
  %v1624 = vunpack.c.l.b16 %v1592
  %v1625 = vunpack.c.l.b16 %v1593
  %v1626 = vunpack.c.l.b16 %v1594
  %v1627 = vunpack.c.l.b16 %v1595
  %v1628 = vunpack.c.l.b16 %v1596
  %v1629 = vunpack.c.l.b16 %v1597
  %v1630 = vunpack.c.l.b16 %v1598
  %v1631 = vunpack.c.l.b16 %v1599
  %v1632 = vunpack.c.l.b16 %v1600
  %v1633 = vunpack.c.l.b16 %v1601
  %v1634 = vunpack.c.l.b16 %v1602
  %v1635 = vpack.c.b16 %v1620, %v1619
  %v1636 = vpack.c.b16 %v1622, %v1621
  %v1637 = vpack.c.b16 %v1624, %v1623
  %v1638 = vpack.c.b16 %v1626, %v1625
  %v1639 = vpack.c.b16 %v1628, %v1627
  %v1640 = vpack.c.b16 %v1630, %v1629
  %v1641 = vpack.c.b16 %v1632, %v1631
  %v1642 = vpack.c.b16 %v1634, %v1633
  %1651 = vmatprep.subr.bf16.mxu0 0
  %1652 = vmatpush1.bf16.msra.mxu0 %v1642
  %1653 = vmatprep.subr.bf16.mxu0 0
  %1654 = vmatpush1.bf16.msra.mxu0 %v1641
  %1655 = vmatprep.subr.bf16.mxu0 0
  %1656 = vmatpush1.bf16.msra.mxu0 %v1640
  %1657 = vmatprep.subr.bf16.mxu0 0
  %1658 = vmatpush1.bf16.msra.mxu0 %v1639
  %1659 = vmatprep.subr.bf16.mxu0 0
  %1660 = vmatpush1.bf16.msra.mxu0 %v1638
  %1661 = vmatprep.subr.bf16.mxu0 0
  %1662 = vmatpush1.bf16.msra.mxu0 %v1637
  %1663 = vmatprep.subr.bf16.mxu0 0
  %1664 = vmatpush1.bf16.msra.mxu0 %v1636
  %1665 = vmatprep.subr.bf16.mxu0 0
  %1666 = vmatpush1.bf16.msra.mxu0 %v1635
  %1667 = vmatprep.subr.bf16.mxu0 0
  %1668 = vmatpush2.bf16.msra.mxu0 0
  %1669 = vmatprep.subr.bf16.mxu0 0
  %1670 = vmatpush2.bf16.msra.mxu0 0
  %1671 = vmatprep.subr.bf16.mxu0 0
  %1672 = vmatpush2.bf16.msra.mxu0 0
  %1673 = vmatprep.subr.bf16.mxu0 0
  %1674 = vmatpush2.bf16.msra.mxu0 0
  %1675 = vmatprep.subr.bf16.mxu0 0
  %1676 = vmatpush2.bf16.msra.mxu0 0
  %1677 = vmatprep.subr.bf16.mxu0 0
  %1678 = vmatpush2.bf16.msra.mxu0 0
  %1679 = vmatprep.subr.bf16.mxu0 0
  %1680 = vmatpush2.bf16.msra.mxu0 0
  %1681 = vmatprep.subr.bf16.mxu0 0
  %1682 = vmatpush2.bf16.msra.mxu0 0
  %1683 = vmatprep.mubr.bf16.mxu0 0
  %1684 = vmatmul.mubr.bf16.gmra.mxu0 %v419
  %v1685 = vpop.f32.mrf.mxu0
  %v1686 = vadd.f32 0.0, %v1685
  %v1687 = vpop.f32.mrf.mxu0
  %v1688 = vpop.f32.mrf.mxu0
  %v1689 = vpop.f32.mrf.mxu0
  %1690 = vdwg.mxu0
  %1691 = vst.msk [vmem:[#allocation2 + $0x58] sm:$0xff] %vm524, %v1686
  %s1692 = scalar_lea.vmem %s5, 768
  %v1693 = vld [vmem:[%s1692] sm:$0xf]
  %v1694 = vld [vmem:[%s1692 + $0x4] sm:$0xf]
  %v1695 = vld [vmem:[%s1692 + $0x8] sm:$0xf]
  %v1696 = vld [vmem:[%s1692 + $0xc] sm:$0xf]
  %v1697 = vld [vmem:[%s1692 + $0x10] sm:$0xf]
  %v1698 = vld [vmem:[%s1692 + $0x14] sm:$0xf]
  %v1699 = vld [vmem:[%s1692 + $0x18] sm:$0xf]
  %v1700 = vld [vmem:[%s1692 + $0x1c] sm:$0xf]
  %v1701 = vld [vmem:[%s1692 + $0x20] sm:$0xf]
  %v1702 = vld [vmem:[%s1692 + $0x24] sm:$0xf]
  %v1703 = vld [vmem:[%s1692 + $0x28] sm:$0xf]
  %v1704 = vld [vmem:[%s1692 + $0x2c] sm:$0xf]
  %v1705 = vld [vmem:[%s1692 + $0x30] sm:$0xf]
  %v1706 = vld [vmem:[%s1692 + $0x34] sm:$0xf]
  %v1707 = vld [vmem:[%s1692 + $0x38] sm:$0xf]
  %v1708 = vld [vmem:[%s1692 + $0x3c] sm:$0xf]
  %v1725 = vunpack.c.l.b16 %v1693
  %v1726 = vunpack.c.l.b16 %v1694
  %v1727 = vunpack.c.l.b16 %v1695
  %v1728 = vunpack.c.l.b16 %v1696
  %v1729 = vunpack.c.l.b16 %v1697
  %v1730 = vunpack.c.l.b16 %v1698
  %v1731 = vunpack.c.l.b16 %v1699
  %v1732 = vunpack.c.l.b16 %v1700
  %v1733 = vunpack.c.l.b16 %v1701
  %v1734 = vunpack.c.l.b16 %v1702
  %v1735 = vunpack.c.l.b16 %v1703
  %v1736 = vunpack.c.l.b16 %v1704
  %v1737 = vunpack.c.l.b16 %v1705
  %v1738 = vunpack.c.l.b16 %v1706
  %v1739 = vunpack.c.l.b16 %v1707
  %v1740 = vunpack.c.l.b16 %v1708
  %v1741 = vpack.c.b16 %v1726, %v1725
  %v1742 = vpack.c.b16 %v1728, %v1727
  %v1743 = vpack.c.b16 %v1730, %v1729
  %v1744 = vpack.c.b16 %v1732, %v1731
  %v1745 = vpack.c.b16 %v1734, %v1733
  %v1746 = vpack.c.b16 %v1736, %v1735
  %v1747 = vpack.c.b16 %v1738, %v1737
  %v1748 = vpack.c.b16 %v1740, %v1739
  %1757 = vmatprep.subr.bf16.mxu0 0
  %1758 = vmatpush1.bf16.msra.mxu0 %v1748
  %1759 = vmatprep.subr.bf16.mxu0 0
  %1760 = vmatpush1.bf16.msra.mxu0 %v1747
  %1761 = vmatprep.subr.bf16.mxu0 0
  %1762 = vmatpush1.bf16.msra.mxu0 %v1746
  %1763 = vmatprep.subr.bf16.mxu0 0
  %1764 = vmatpush1.bf16.msra.mxu0 %v1745
  %1765 = vmatprep.subr.bf16.mxu0 0
  %1766 = vmatpush1.bf16.msra.mxu0 %v1744
  %1767 = vmatprep.subr.bf16.mxu0 0
  %1768 = vmatpush1.bf16.msra.mxu0 %v1743
  %1769 = vmatprep.subr.bf16.mxu0 0
  %1770 = vmatpush1.bf16.msra.mxu0 %v1742
  %1771 = vmatprep.subr.bf16.mxu0 0
  %1772 = vmatpush1.bf16.msra.mxu0 %v1741
  %1773 = vmatprep.subr.bf16.mxu0 0
  %1774 = vmatpush2.bf16.msra.mxu0 0
  %1775 = vmatprep.subr.bf16.mxu0 0
  %1776 = vmatpush2.bf16.msra.mxu0 0
  %1777 = vmatprep.subr.bf16.mxu0 0
  %1778 = vmatpush2.bf16.msra.mxu0 0
  %1779 = vmatprep.subr.bf16.mxu0 0
  %1780 = vmatpush2.bf16.msra.mxu0 0
  %1781 = vmatprep.subr.bf16.mxu0 0
  %1782 = vmatpush2.bf16.msra.mxu0 0
  %1783 = vmatprep.subr.bf16.mxu0 0
  %1784 = vmatpush2.bf16.msra.mxu0 0
  %1785 = vmatprep.subr.bf16.mxu0 0
  %1786 = vmatpush2.bf16.msra.mxu0 0
  %1787 = vmatprep.subr.bf16.mxu0 0
  %1788 = vmatpush2.bf16.msra.mxu0 0
  %1789 = vmatprep.mubr.bf16.mxu0 0
  %1790 = vmatmul.mubr.bf16.gmra.mxu0 %v419
  %v1791 = vpop.f32.mrf.mxu0
  %v1792 = vadd.f32 0.0, %v1791
  %v1793 = vpop.f32.mrf.mxu0
  %v1794 = vpop.f32.mrf.mxu0
  %v1795 = vpop.f32.mrf.mxu0
  %1796 = vdwg.mxu0
  %1797 = vst.msk [vmem:[#allocation2 + $0x60] sm:$0xff] %vm524, %v1792
  %s1798 = scalar_lea.vmem %s5, 832
  %v1799 = vld [vmem:[%s1798] sm:$0xf]
  %v1800 = vld [vmem:[%s1798 + $0x4] sm:$0xf]
  %v1801 = vld [vmem:[%s1798 + $0x8] sm:$0xf]
  %v1802 = vld [vmem:[%s1798 + $0xc] sm:$0xf]
  %v1803 = vld [vmem:[%s1798 + $0x10] sm:$0xf]
  %v1804 = vld [vmem:[%s1798 + $0x14] sm:$0xf]
  %v1805 = vld [vmem:[%s1798 + $0x18] sm:$0xf]
  %v1806 = vld [vmem:[%s1798 + $0x1c] sm:$0xf]
  %v1807 = vld [vmem:[%s1798 + $0x20] sm:$0xf]
  %v1808 = vld [vmem:[%s1798 + $0x24] sm:$0xf]
  %v1809 = vld [vmem:[%s1798 + $0x28] sm:$0xf]
  %v1810 = vld [vmem:[%s1798 + $0x2c] sm:$0xf]
  %v1811 = vld [vmem:[%s1798 + $0x30] sm:$0xf]
  %v1812 = vld [vmem:[%s1798 + $0x34] sm:$0xf]
  %v1813 = vld [vmem:[%s1798 + $0x38] sm:$0xf]
  %v1814 = vld [vmem:[%s1798 + $0x3c] sm:$0xf]
  %v1831 = vunpack.c.l.b16 %v1799
  %v1832 = vunpack.c.l.b16 %v1800
  %v1833 = vunpack.c.l.b16 %v1801
  %v1834 = vunpack.c.l.b16 %v1802
  %v1835 = vunpack.c.l.b16 %v1803
  %v1836 = vunpack.c.l.b16 %v1804
  %v1837 = vunpack.c.l.b16 %v1805
  %v1838 = vunpack.c.l.b16 %v1806
  %v1839 = vunpack.c.l.b16 %v1807
  %v1840 = vunpack.c.l.b16 %v1808
  %v1841 = vunpack.c.l.b16 %v1809
  %v1842 = vunpack.c.l.b16 %v1810
  %v1843 = vunpack.c.l.b16 %v1811
  %v1844 = vunpack.c.l.b16 %v1812
  %v1845 = vunpack.c.l.b16 %v1813
  %v1846 = vunpack.c.l.b16 %v1814
  %v1847 = vpack.c.b16 %v1832, %v1831
  %v1848 = vpack.c.b16 %v1834, %v1833
  %v1849 = vpack.c.b16 %v1836, %v1835
  %v1850 = vpack.c.b16 %v1838, %v1837
  %v1851 = vpack.c.b16 %v1840, %v1839
  %v1852 = vpack.c.b16 %v1842, %v1841
  %v1853 = vpack.c.b16 %v1844, %v1843
  %v1854 = vpack.c.b16 %v1846, %v1845
  %1863 = vmatprep.subr.bf16.mxu0 0
  %1864 = vmatpush1.bf16.msra.mxu0 %v1854
  %1865 = vmatprep.subr.bf16.mxu0 0
  %1866 = vmatpush1.bf16.msra.mxu0 %v1853
  %1867 = vmatprep.subr.bf16.mxu0 0
  %1868 = vmatpush1.bf16.msra.mxu0 %v1852
  %1869 = vmatprep.subr.bf16.mxu0 0
  %1870 = vmatpush1.bf16.msra.mxu0 %v1851
  %1871 = vmatprep.subr.bf16.mxu0 0
  %1872 = vmatpush1.bf16.msra.mxu0 %v1850
  %1873 = vmatprep.subr.bf16.mxu0 0
  %1874 = vmatpush1.bf16.msra.mxu0 %v1849
  %1875 = vmatprep.subr.bf16.mxu0 0
  %1876 = vmatpush1.bf16.msra.mxu0 %v1848
  %1877 = vmatprep.subr.bf16.mxu0 0
  %1878 = vmatpush1.bf16.msra.mxu0 %v1847
  %1879 = vmatprep.subr.bf16.mxu0 0
  %1880 = vmatpush2.bf16.msra.mxu0 0
  %1881 = vmatprep.subr.bf16.mxu0 0
  %1882 = vmatpush2.bf16.msra.mxu0 0
  %1883 = vmatprep.subr.bf16.mxu0 0
  %1884 = vmatpush2.bf16.msra.mxu0 0
  %1885 = vmatprep.subr.bf16.mxu0 0
  %1886 = vmatpush2.bf16.msra.mxu0 0
  %1887 = vmatprep.subr.bf16.mxu0 0
  %1888 = vmatpush2.bf16.msra.mxu0 0
  %1889 = vmatprep.subr.bf16.mxu0 0
  %1890 = vmatpush2.bf16.msra.mxu0 0
  %1891 = vmatprep.subr.bf16.mxu0 0
  %1892 = vmatpush2.bf16.msra.mxu0 0
  %1893 = vmatprep.subr.bf16.mxu0 0
  %1894 = vmatpush2.bf16.msra.mxu0 0
  %1895 = vmatprep.mubr.bf16.mxu0 0
  %1896 = vmatmul.mubr.bf16.gmra.mxu0 %v419
  %v1897 = vpop.f32.mrf.mxu0
  %v1898 = vadd.f32 0.0, %v1897
  %v1899 = vpop.f32.mrf.mxu0
  %v1900 = vpop.f32.mrf.mxu0
  %v1901 = vpop.f32.mrf.mxu0
  %1902 = vdwg.mxu0
  %1903 = vst.msk [vmem:[#allocation2 + $0x68] sm:$0xff] %vm524, %v1898
  %s1904 = scalar_lea.vmem %s5, 896
  %v1905 = vld [vmem:[%s1904] sm:$0xf]
  %v1906 = vld [vmem:[%s1904 + $0x4] sm:$0xf]
  %v1907 = vld [vmem:[%s1904 + $0x8] sm:$0xf]
  %v1908 = vld [vmem:[%s1904 + $0xc] sm:$0xf]
  %v1909 = vld [vmem:[%s1904 + $0x10] sm:$0xf]
  %v1910 = vld [vmem:[%s1904 + $0x14] sm:$0xf]
  %v1911 = vld [vmem:[%s1904 + $0x18] sm:$0xf]
  %v1912 = vld [vmem:[%s1904 + $0x1c] sm:$0xf]
  %v1913 = vld [vmem:[%s1904 + $0x20] sm:$0xf]
  %v1914 = vld [vmem:[%s1904 + $0x24] sm:$0xf]
  %v1915 = vld [vmem:[%s1904 + $0x28] sm:$0xf]
  %v1916 = vld [vmem:[%s1904 + $0x2c] sm:$0xf]
  %v1917 = vld [vmem:[%s1904 + $0x30] sm:$0xf]
  %v1918 = vld [vmem:[%s1904 + $0x34] sm:$0xf]
  %v1919 = vld [vmem:[%s1904 + $0x38] sm:$0xf]
  %v1920 = vld [vmem:[%s1904 + $0x3c] sm:$0xf]
  %v1937 = vunpack.c.l.b16 %v1905
  %v1938 = vunpack.c.l.b16 %v1906
  %v1939 = vunpack.c.l.b16 %v1907
  %v1940 = vunpack.c.l.b16 %v1908
  %v1941 = vunpack.c.l.b16 %v1909
  %v1942 = vunpack.c.l.b16 %v1910
  %v1943 = vunpack.c.l.b16 %v1911
  %v1944 = vunpack.c.l.b16 %v1912
  %v1945 = vunpack.c.l.b16 %v1913
  %v1946 = vunpack.c.l.b16 %v1914
  %v1947 = vunpack.c.l.b16 %v1915
  %v1948 = vunpack.c.l.b16 %v1916
  %v1949 = vunpack.c.l.b16 %v1917
  %v1950 = vunpack.c.l.b16 %v1918
  %v1951 = vunpack.c.l.b16 %v1919
  %v1952 = vunpack.c.l.b16 %v1920
  %v1953 = vpack.c.b16 %v1938, %v1937
  %v1954 = vpack.c.b16 %v1940, %v1939
  %v1955 = vpack.c.b16 %v1942, %v1941
  %v1956 = vpack.c.b16 %v1944, %v1943
  %v1957 = vpack.c.b16 %v1946, %v1945
  %v1958 = vpack.c.b16 %v1948, %v1947
  %v1959 = vpack.c.b16 %v1950, %v1949
  %v1960 = vpack.c.b16 %v1952, %v1951
  %1969 = vmatprep.subr.bf16.mxu0 0
  %1970 = vmatpush1.bf16.msra.mxu0 %v1960
  %1971 = vmatprep.subr.bf16.mxu0 0
  %1972 = vmatpush1.bf16.msra.mxu0 %v1959
  %1973 = vmatprep.subr.bf16.mxu0 0
  %1974 = vmatpush1.bf16.msra.mxu0 %v1958
  %1975 = vmatprep.subr.bf16.mxu0 0
  %1976 = vmatpush1.bf16.msra.mxu0 %v1957
  %1977 = vmatprep.subr.bf16.mxu0 0
  %1978 = vmatpush1.bf16.msra.mxu0 %v1956
  %1979 = vmatprep.subr.bf16.mxu0 0
  %1980 = vmatpush1.bf16.msra.mxu0 %v1955
  %1981 = vmatprep.subr.bf16.mxu0 0
  %1982 = vmatpush1.bf16.msra.mxu0 %v1954
  %1983 = vmatprep.subr.bf16.mxu0 0
  %1984 = vmatpush1.bf16.msra.mxu0 %v1953
  %1985 = vmatprep.subr.bf16.mxu0 0
  %1986 = vmatpush2.bf16.msra.mxu0 0
  %1987 = vmatprep.subr.bf16.mxu0 0
  %1988 = vmatpush2.bf16.msra.mxu0 0
  %1989 = vmatprep.subr.bf16.mxu0 0
  %1990 = vmatpush2.bf16.msra.mxu0 0
  %1991 = vmatprep.subr.bf16.mxu0 0
  %1992 = vmatpush2.bf16.msra.mxu0 0
  %1993 = vmatprep.subr.bf16.mxu0 0
  %1994 = vmatpush2.bf16.msra.mxu0 0
  %1995 = vmatprep.subr.bf16.mxu0 0
  %1996 = vmatpush2.bf16.msra.mxu0 0
  %1997 = vmatprep.subr.bf16.mxu0 0
  %1998 = vmatpush2.bf16.msra.mxu0 0
  %1999 = vmatprep.subr.bf16.mxu0 0
  %2000 = vmatpush2.bf16.msra.mxu0 0
  %2001 = vmatprep.mubr.bf16.mxu0 0
  %2002 = vmatmul.mubr.bf16.gmra.mxu0 %v419
  %v2003 = vpop.f32.mrf.mxu0
  %v2004 = vadd.f32 0.0, %v2003
  %v2005 = vpop.f32.mrf.mxu0
  %v2006 = vpop.f32.mrf.mxu0
  %v2007 = vpop.f32.mrf.mxu0
  %2008 = vdwg.mxu0
  %2009 = vst.msk [vmem:[#allocation2 + $0x70] sm:$0xff] %vm524, %v2004
  %s2010 = scalar_lea.vmem %s5, 960
  %v2011 = vld [vmem:[%s2010] sm:$0xf]
  %v2012 = vld [vmem:[%s2010 + $0x4] sm:$0xf]
  %v2013 = vld [vmem:[%s2010 + $0x8] sm:$0xf]
  %v2014 = vld [vmem:[%s2010 + $0xc] sm:$0xf]
  %v2015 = vld [vmem:[%s2010 + $0x10] sm:$0xf]
  %v2016 = vld [vmem:[%s2010 + $0x14] sm:$0xf]
  %v2017 = vld [vmem:[%s2010 + $0x18] sm:$0xf]
  %v2018 = vld [vmem:[%s2010 + $0x1c] sm:$0xf]
  %v2019 = vld [vmem:[%s2010 + $0x20] sm:$0xf]
  %v2020 = vld [vmem:[%s2010 + $0x24] sm:$0xf]
  %v2021 = vld [vmem:[%s2010 + $0x28] sm:$0xf]
  %v2022 = vld [vmem:[%s2010 + $0x2c] sm:$0xf]
  %v2023 = vld [vmem:[%s2010 + $0x30] sm:$0xf]
  %v2024 = vld [vmem:[%s2010 + $0x34] sm:$0xf]
  %v2025 = vld [vmem:[%s2010 + $0x38] sm:$0xf]
  %v2026 = vld [vmem:[%s2010 + $0x3c] sm:$0xf]
  %v2043 = vunpack.c.l.b16 %v2011
  %v2044 = vunpack.c.l.b16 %v2012
  %v2045 = vunpack.c.l.b16 %v2013
  %v2046 = vunpack.c.l.b16 %v2014
  %v2047 = vunpack.c.l.b16 %v2015
  %v2048 = vunpack.c.l.b16 %v2016
  %v2049 = vunpack.c.l.b16 %v2017
  %v2050 = vunpack.c.l.b16 %v2018
  %v2051 = vunpack.c.l.b16 %v2019
  %v2052 = vunpack.c.l.b16 %v2020
  %v2053 = vunpack.c.l.b16 %v2021
  %v2054 = vunpack.c.l.b16 %v2022
  %v2055 = vunpack.c.l.b16 %v2023
  %v2056 = vunpack.c.l.b16 %v2024
  %v2057 = vunpack.c.l.b16 %v2025
  %v2058 = vunpack.c.l.b16 %v2026
  %v2059 = vpack.c.b16 %v2044, %v2043
  %v2060 = vpack.c.b16 %v2046, %v2045
  %v2061 = vpack.c.b16 %v2048, %v2047
  %v2062 = vpack.c.b16 %v2050, %v2049
  %v2063 = vpack.c.b16 %v2052, %v2051
  %v2064 = vpack.c.b16 %v2054, %v2053
  %v2065 = vpack.c.b16 %v2056, %v2055
  %v2066 = vpack.c.b16 %v2058, %v2057
  %2075 = vmatprep.subr.bf16.mxu0 0
  %2076 = vmatpush1.bf16.msra.mxu0 %v2066
  %2077 = vmatprep.subr.bf16.mxu0 0
  %2078 = vmatpush1.bf16.msra.mxu0 %v2065
  %2079 = vmatprep.subr.bf16.mxu0 0
  %2080 = vmatpush1.bf16.msra.mxu0 %v2064
  %2081 = vmatprep.subr.bf16.mxu0 0
  %2082 = vmatpush1.bf16.msra.mxu0 %v2063
  %2083 = vmatprep.subr.bf16.mxu0 0
  %2084 = vmatpush1.bf16.msra.mxu0 %v2062
  %2085 = vmatprep.subr.bf16.mxu0 0
  %2086 = vmatpush1.bf16.msra.mxu0 %v2061
  %2087 = vmatprep.subr.bf16.mxu0 0
  %2088 = vmatpush1.bf16.msra.mxu0 %v2060
  %2089 = vmatprep.subr.bf16.mxu0 0
  %2090 = vmatpush1.bf16.msra.mxu0 %v2059
  %2091 = vmatprep.subr.bf16.mxu0 0
  %2092 = vmatpush2.bf16.msra.mxu0 0
  %2093 = vmatprep.subr.bf16.mxu0 0
  %2094 = vmatpush2.bf16.msra.mxu0 0
  %2095 = vmatprep.subr.bf16.mxu0 0
  %2096 = vmatpush2.bf16.msra.mxu0 0
  %2097 = vmatprep.subr.bf16.mxu0 0
  %2098 = vmatpush2.bf16.msra.mxu0 0
  %2099 = vmatprep.subr.bf16.mxu0 0
  %2100 = vmatpush2.bf16.msra.mxu0 0
  %2101 = vmatprep.subr.bf16.mxu0 0
  %2102 = vmatpush2.bf16.msra.mxu0 0
  %2103 = vmatprep.subr.bf16.mxu0 0
  %2104 = vmatpush2.bf16.msra.mxu0 0
  %2105 = vmatprep.subr.bf16.mxu0 0
  %2106 = vmatpush2.bf16.msra.mxu0 0
  %2107 = vmatprep.mubr.bf16.mxu0 0
  %2108 = vmatmul.mubr.bf16.gmra.mxu0 %v419
  %v2109 = vpop.f32.mrf.mxu0
  %v2110 = vadd.f32 0.0, %v2109
  %v2111 = vpop.f32.mrf.mxu0
  %v2112 = vpop.f32.mrf.mxu0
  %v2113 = vpop.f32.mrf.mxu0
  %2114 = vdwg.mxu0
  %2115 = vst.msk [vmem:[#allocation2 + $0x78] sm:$0xff] %vm524, %v2110
  %s2116 = scalar_lea.vmem %s5, 1024
  %v2117 = vld [vmem:[%s2116] sm:$0xf]
  %v2118 = vld [vmem:[%s2116 + $0x4] sm:$0xf]
  %v2119 = vld [vmem:[%s2116 + $0x8] sm:$0xf]
  %v2120 = vld [vmem:[%s2116 + $0xc] sm:$0xf]
  %v2121 = vld [vmem:[%s2116 + $0x10] sm:$0xf]
  %v2122 = vld [vmem:[%s2116 + $0x14] sm:$0xf]
  %v2123 = vld [vmem:[%s2116 + $0x18] sm:$0xf]
  %v2124 = vld [vmem:[%s2116 + $0x1c] sm:$0xf]
  %v2125 = vld [vmem:[%s2116 + $0x20] sm:$0xf]
  %v2126 = vld [vmem:[%s2116 + $0x24] sm:$0xf]
  %v2127 = vld [vmem:[%s2116 + $0x28] sm:$0xf]
  %v2128 = vld [vmem:[%s2116 + $0x2c] sm:$0xf]
  %v2129 = vld [vmem:[%s2116 + $0x30] sm:$0xf]
  %v2130 = vld [vmem:[%s2116 + $0x34] sm:$0xf]
  %v2131 = vld [vmem:[%s2116 + $0x38] sm:$0xf]
  %v2132 = vld [vmem:[%s2116 + $0x3c] sm:$0xf]
  %v2149 = vunpack.c.l.b16 %v2117
  %v2150 = vunpack.c.l.b16 %v2118
  %v2151 = vunpack.c.l.b16 %v2119
  %v2152 = vunpack.c.l.b16 %v2120
  %v2153 = vunpack.c.l.b16 %v2121
  %v2154 = vunpack.c.l.b16 %v2122
  %v2155 = vunpack.c.l.b16 %v2123
  %v2156 = vunpack.c.l.b16 %v2124
  %v2157 = vunpack.c.l.b16 %v2125
  %v2158 = vunpack.c.l.b16 %v2126
  %v2159 = vunpack.c.l.b16 %v2127
  %v2160 = vunpack.c.l.b16 %v2128
  %v2161 = vunpack.c.l.b16 %v2129
  %v2162 = vunpack.c.l.b16 %v2130
  %v2163 = vunpack.c.l.b16 %v2131
  %v2164 = vunpack.c.l.b16 %v2132
  %v2165 = vpack.c.b16 %v2150, %v2149
  %v2166 = vpack.c.b16 %v2152, %v2151
  %v2167 = vpack.c.b16 %v2154, %v2153
  %v2168 = vpack.c.b16 %v2156, %v2155
  %v2169 = vpack.c.b16 %v2158, %v2157
  %v2170 = vpack.c.b16 %v2160, %v2159
  %v2171 = vpack.c.b16 %v2162, %v2161
  %v2172 = vpack.c.b16 %v2164, %v2163
  %2181 = vmatprep.subr.bf16.mxu0 0
  %2182 = vmatpush1.bf16.msra.mxu0 %v2172
  %2183 = vmatprep.subr.bf16.mxu0 0
  %2184 = vmatpush1.bf16.msra.mxu0 %v2171
  %2185 = vmatprep.subr.bf16.mxu0 0
  %2186 = vmatpush1.bf16.msra.mxu0 %v2170
  %2187 = vmatprep.subr.bf16.mxu0 0
  %2188 = vmatpush1.bf16.msra.mxu0 %v2169
  %2189 = vmatprep.subr.bf16.mxu0 0
  %2190 = vmatpush1.bf16.msra.mxu0 %v2168
  %2191 = vmatprep.subr.bf16.mxu0 0
  %2192 = vmatpush1.bf16.msra.mxu0 %v2167
  %2193 = vmatprep.subr.bf16.mxu0 0
  %2194 = vmatpush1.bf16.msra.mxu0 %v2166
  %2195 = vmatprep.subr.bf16.mxu0 0
  %2196 = vmatpush1.bf16.msra.mxu0 %v2165
  %2197 = vmatprep.subr.bf16.mxu0 0
  %2198 = vmatpush2.bf16.msra.mxu0 0
  %2199 = vmatprep.subr.bf16.mxu0 0
  %2200 = vmatpush2.bf16.msra.mxu0 0
  %2201 = vmatprep.subr.bf16.mxu0 0
  %2202 = vmatpush2.bf16.msra.mxu0 0
  %2203 = vmatprep.subr.bf16.mxu0 0
  %2204 = vmatpush2.bf16.msra.mxu0 0
  %2205 = vmatprep.subr.bf16.mxu0 0
  %2206 = vmatpush2.bf16.msra.mxu0 0
  %2207 = vmatprep.subr.bf16.mxu0 0
  %2208 = vmatpush2.bf16.msra.mxu0 0
  %2209 = vmatprep.subr.bf16.mxu0 0
  %2210 = vmatpush2.bf16.msra.mxu0 0
  %2211 = vmatprep.subr.bf16.mxu0 0
  %2212 = vmatpush2.bf16.msra.mxu0 0
  %2213 = vmatprep.mubr.bf16.mxu0 0
  %2214 = vmatmul.mubr.bf16.gmra.mxu0 %v419
  %v2215 = vpop.f32.mrf.mxu0
  %v2216 = vadd.f32 0.0, %v2215
  %v2217 = vpop.f32.mrf.mxu0
  %v2218 = vpop.f32.mrf.mxu0
  %v2219 = vpop.f32.mrf.mxu0
  %2220 = vdwg.mxu0
  %2221 = vst.msk [vmem:[#allocation2 + $0x80] sm:$0xff] %vm524, %v2216
  %s2222 = scalar_lea.vmem %s5, 1088
  %v2223 = vld [vmem:[%s2222] sm:$0xf]
  %v2224 = vld [vmem:[%s2222 + $0x4] sm:$0xf]
  %v2225 = vld [vmem:[%s2222 + $0x8] sm:$0xf]
  %v2226 = vld [vmem:[%s2222 + $0xc] sm:$0xf]
  %v2227 = vld [vmem:[%s2222 + $0x10] sm:$0xf]
  %v2228 = vld [vmem:[%s2222 + $0x14] sm:$0xf]
  %v2229 = vld [vmem:[%s2222 + $0x18] sm:$0xf]
  %v2230 = vld [vmem:[%s2222 + $0x1c] sm:$0xf]
  %v2231 = vld [vmem:[%s2222 + $0x20] sm:$0xf]
  %v2232 = vld [vmem:[%s2222 + $0x24] sm:$0xf]
  %v2233 = vld [vmem:[%s2222 + $0x28] sm:$0xf]
  %v2234 = vld [vmem:[%s2222 + $0x2c] sm:$0xf]
  %v2235 = vld [vmem:[%s2222 + $0x30] sm:$0xf]
  %v2236 = vld [vmem:[%s2222 + $0x34] sm:$0xf]
  %v2237 = vld [vmem:[%s2222 + $0x38] sm:$0xf]
  %v2238 = vld [vmem:[%s2222 + $0x3c] sm:$0xf]
  %v2255 = vunpack.c.l.b16 %v2223
  %v2256 = vunpack.c.l.b16 %v2224
  %v2257 = vunpack.c.l.b16 %v2225
  %v2258 = vunpack.c.l.b16 %v2226
  %v2259 = vunpack.c.l.b16 %v2227
  %v2260 = vunpack.c.l.b16 %v2228
  %v2261 = vunpack.c.l.b16 %v2229
  %v2262 = vunpack.c.l.b16 %v2230
  %v2263 = vunpack.c.l.b16 %v2231
  %v2264 = vunpack.c.l.b16 %v2232
  %v2265 = vunpack.c.l.b16 %v2233
  %v2266 = vunpack.c.l.b16 %v2234
  %v2267 = vunpack.c.l.b16 %v2235
  %v2268 = vunpack.c.l.b16 %v2236
  %v2269 = vunpack.c.l.b16 %v2237
  %v2270 = vunpack.c.l.b16 %v2238
  %v2271 = vpack.c.b16 %v2256, %v2255
  %v2272 = vpack.c.b16 %v2258, %v2257
  %v2273 = vpack.c.b16 %v2260, %v2259
  %v2274 = vpack.c.b16 %v2262, %v2261
  %v2275 = vpack.c.b16 %v2264, %v2263
  %v2276 = vpack.c.b16 %v2266, %v2265
  %v2277 = vpack.c.b16 %v2268, %v2267
  %v2278 = vpack.c.b16 %v2270, %v2269
  %2287 = vmatprep.subr.bf16.mxu0 0
  %2288 = vmatpush1.bf16.msra.mxu0 %v2278
  %2289 = vmatprep.subr.bf16.mxu0 0
  %2290 = vmatpush1.bf16.msra.mxu0 %v2277
  %2291 = vmatprep.subr.bf16.mxu0 0
  %2292 = vmatpush1.bf16.msra.mxu0 %v2276
  %2293 = vmatprep.subr.bf16.mxu0 0
  %2294 = vmatpush1.bf16.msra.mxu0 %v2275
  %2295 = vmatprep.subr.bf16.mxu0 0
  %2296 = vmatpush1.bf16.msra.mxu0 %v2274
  %2297 = vmatprep.subr.bf16.mxu0 0
  %2298 = vmatpush1.bf16.msra.mxu0 %v2273
  %2299 = vmatprep.subr.bf16.mxu0 0
  %2300 = vmatpush1.bf16.msra.mxu0 %v2272
  %2301 = vmatprep.subr.bf16.mxu0 0
  %2302 = vmatpush1.bf16.msra.mxu0 %v2271
  %2303 = vmatprep.subr.bf16.mxu0 0
  %2304 = vmatpush2.bf16.msra.mxu0 0
  %2305 = vmatprep.subr.bf16.mxu0 0
  %2306 = vmatpush2.bf16.msra.mxu0 0
  %2307 = vmatprep.subr.bf16.mxu0 0
  %2308 = vmatpush2.bf16.msra.mxu0 0
  %2309 = vmatprep.subr.bf16.mxu0 0
  %2310 = vmatpush2.bf16.msra.mxu0 0
  %2311 = vmatprep.subr.bf16.mxu0 0
  %2312 = vmatpush2.bf16.msra.mxu0 0
  %2313 = vmatprep.subr.bf16.mxu0 0
  %2314 = vmatpush2.bf16.msra.mxu0 0
  %2315 = vmatprep.subr.bf16.mxu0 0
  %2316 = vmatpush2.bf16.msra.mxu0 0
  %2317 = vmatprep.subr.bf16.mxu0 0
  %2318 = vmatpush2.bf16.msra.mxu0 0
  %2319 = vmatprep.mubr.bf16.mxu0 0
  %2320 = vmatmul.mubr.bf16.gmra.mxu0 %v419
  %v2321 = vpop.f32.mrf.mxu0
  %v2322 = vadd.f32 0.0, %v2321
  %v2323 = vpop.f32.mrf.mxu0
  %v2324 = vpop.f32.mrf.mxu0
  %v2325 = vpop.f32.mrf.mxu0
  %2326 = vdwg.mxu0
  %2327 = vst.msk [vmem:[#allocation2 + $0x88] sm:$0xff] %vm524, %v2322
  %s2328 = scalar_lea.vmem %s5, 1152
  %v2329 = vld [vmem:[%s2328] sm:$0xf]
  %v2330 = vld [vmem:[%s2328 + $0x4] sm:$0xf]
  %v2331 = vld [vmem:[%s2328 + $0x8] sm:$0xf]
  %v2332 = vld [vmem:[%s2328 + $0xc] sm:$0xf]
  %v2333 = vld [vmem:[%s2328 + $0x10] sm:$0xf]
  %v2334 = vld [vmem:[%s2328 + $0x14] sm:$0xf]
  %v2335 = vld [vmem:[%s2328 + $0x18] sm:$0xf]
  %v2336 = vld [vmem:[%s2328 + $0x1c] sm:$0xf]
  %v2337 = vld [vmem:[%s2328 + $0x20] sm:$0xf]
  %v2338 = vld [vmem:[%s2328 + $0x24] sm:$0xf]
  %v2339 = vld [vmem:[%s2328 + $0x28] sm:$0xf]
  %v2340 = vld [vmem:[%s2328 + $0x2c] sm:$0xf]
  %v2341 = vld [vmem:[%s2328 + $0x30] sm:$0xf]
  %v2342 = vld [vmem:[%s2328 + $0x34] sm:$0xf]
  %v2343 = vld [vmem:[%s2328 + $0x38] sm:$0xf]
  %v2344 = vld [vmem:[%s2328 + $0x3c] sm:$0xf]
  %v2361 = vunpack.c.l.b16 %v2329
  %v2362 = vunpack.c.l.b16 %v2330
  %v2363 = vunpack.c.l.b16 %v2331
  %v2364 = vunpack.c.l.b16 %v2332
  %v2365 = vunpack.c.l.b16 %v2333
  %v2366 = vunpack.c.l.b16 %v2334
  %v2367 = vunpack.c.l.b16 %v2335
  %v2368 = vunpack.c.l.b16 %v2336
  %v2369 = vunpack.c.l.b16 %v2337
  %v2370 = vunpack.c.l.b16 %v2338
  %v2371 = vunpack.c.l.b16 %v2339
  %v2372 = vunpack.c.l.b16 %v2340
  %v2373 = vunpack.c.l.b16 %v2341
  %v2374 = vunpack.c.l.b16 %v2342
  %v2375 = vunpack.c.l.b16 %v2343
  %v2376 = vunpack.c.l.b16 %v2344
  %v2377 = vpack.c.b16 %v2362, %v2361
  %v2378 = vpack.c.b16 %v2364, %v2363
  %v2379 = vpack.c.b16 %v2366, %v2365
  %v2380 = vpack.c.b16 %v2368, %v2367
  %v2381 = vpack.c.b16 %v2370, %v2369
  %v2382 = vpack.c.b16 %v2372, %v2371
  %v2383 = vpack.c.b16 %v2374, %v2373
  %v2384 = vpack.c.b16 %v2376, %v2375
  %2393 = vmatprep.subr.bf16.mxu0 0
  %2394 = vmatpush1.bf16.msra.mxu0 %v2384
  %2395 = vmatprep.subr.bf16.mxu0 0
  %2396 = vmatpush1.bf16.msra.mxu0 %v2383
  %2397 = vmatprep.subr.bf16.mxu0 0
  %2398 = vmatpush1.bf16.msra.mxu0 %v2382
  %2399 = vmatprep.subr.bf16.mxu0 0
  %2400 = vmatpush1.bf16.msra.mxu0 %v2381
  %2401 = vmatprep.subr.bf16.mxu0 0
  %2402 = vmatpush1.bf16.msra.mxu0 %v2380
  %2403 = vmatprep.subr.bf16.mxu0 0
  %2404 = vmatpush1.bf16.msra.mxu0 %v2379
  %2405 = vmatprep.subr.bf16.mxu0 0
  %2406 = vmatpush1.bf16.msra.mxu0 %v2378
  %2407 = vmatprep.subr.bf16.mxu0 0
  %2408 = vmatpush1.bf16.msra.mxu0 %v2377
  %2409 = vmatprep.subr.bf16.mxu0 0
  %2410 = vmatpush2.bf16.msra.mxu0 0
  %2411 = vmatprep.subr.bf16.mxu0 0
  %2412 = vmatpush2.bf16.msra.mxu0 0
  %2413 = vmatprep.subr.bf16.mxu0 0
  %2414 = vmatpush2.bf16.msra.mxu0 0
  %2415 = vmatprep.subr.bf16.mxu0 0
  %2416 = vmatpush2.bf16.msra.mxu0 0
  %2417 = vmatprep.subr.bf16.mxu0 0
  %2418 = vmatpush2.bf16.msra.mxu0 0
  %2419 = vmatprep.subr.bf16.mxu0 0
  %2420 = vmatpush2.bf16.msra.mxu0 0
  %2421 = vmatprep.subr.bf16.mxu0 0
  %2422 = vmatpush2.bf16.msra.mxu0 0
  %2423 = vmatprep.subr.bf16.mxu0 0
  %2424 = vmatpush2.bf16.msra.mxu0 0
  %2425 = vmatprep.mubr.bf16.mxu0 0
  %2426 = vmatmul.mubr.bf16.gmra.mxu0 %v419
  %v2427 = vpop.f32.mrf.mxu0
  %v2428 = vadd.f32 0.0, %v2427
  %v2429 = vpop.f32.mrf.mxu0
  %v2430 = vpop.f32.mrf.mxu0
  %v2431 = vpop.f32.mrf.mxu0
  %2432 = vdwg.mxu0
  %2433 = vst.msk [vmem:[#allocation2 + $0x90] sm:$0xff] %vm524, %v2428
  %s2434 = scalar_lea.vmem %s5, 1216
  %v2435 = vld [vmem:[%s2434] sm:$0xf]
  %v2436 = vld [vmem:[%s2434 + $0x4] sm:$0xf]
  %v2437 = vld [vmem:[%s2434 + $0x8] sm:$0xf]
  %v2438 = vld [vmem:[%s2434 + $0xc] sm:$0xf]
  %v2439 = vld [vmem:[%s2434 + $0x10] sm:$0xf]
  %v2440 = vld [vmem:[%s2434 + $0x14] sm:$0xf]
  %v2441 = vld [vmem:[%s2434 + $0x18] sm:$0xf]
  %v2442 = vld [vmem:[%s2434 + $0x1c] sm:$0xf]
  %v2443 = vld [vmem:[%s2434 + $0x20] sm:$0xf]
  %v2444 = vld [vmem:[%s2434 + $0x24] sm:$0xf]
  %v2445 = vld [vmem:[%s2434 + $0x28] sm:$0xf]
  %v2446 = vld [vmem:[%s2434 + $0x2c] sm:$0xf]
  %v2447 = vld [vmem:[%s2434 + $0x30] sm:$0xf]
  %v2448 = vld [vmem:[%s2434 + $0x34] sm:$0xf]
  %v2449 = vld [vmem:[%s2434 + $0x38] sm:$0xf]
  %v2450 = vld [vmem:[%s2434 + $0x3c] sm:$0xf]
  %v2467 = vunpack.c.l.b16 %v2435
  %v2468 = vunpack.c.l.b16 %v2436
  %v2469 = vunpack.c.l.b16 %v2437
  %v2470 = vunpack.c.l.b16 %v2438
  %v2471 = vunpack.c.l.b16 %v2439
  %v2472 = vunpack.c.l.b16 %v2440
  %v2473 = vunpack.c.l.b16 %v2441
  %v2474 = vunpack.c.l.b16 %v2442
  %v2475 = vunpack.c.l.b16 %v2443
  %v2476 = vunpack.c.l.b16 %v2444
  %v2477 = vunpack.c.l.b16 %v2445
  %v2478 = vunpack.c.l.b16 %v2446
  %v2479 = vunpack.c.l.b16 %v2447
  %v2480 = vunpack.c.l.b16 %v2448
  %v2481 = vunpack.c.l.b16 %v2449
  %v2482 = vunpack.c.l.b16 %v2450
  %v2483 = vpack.c.b16 %v2468, %v2467
  %v2484 = vpack.c.b16 %v2470, %v2469
  %v2485 = vpack.c.b16 %v2472, %v2471
  %v2486 = vpack.c.b16 %v2474, %v2473
  %v2487 = vpack.c.b16 %v2476, %v2475
  %v2488 = vpack.c.b16 %v2478, %v2477
  %v2489 = vpack.c.b16 %v2480, %v2479
  %v2490 = vpack.c.b16 %v2482, %v2481
  %2499 = vmatprep.subr.bf16.mxu0 0
  %2500 = vmatpush1.bf16.msra.mxu0 %v2490
  %2501 = vmatprep.subr.bf16.mxu0 0
  %2502 = vmatpush1.bf16.msra.mxu0 %v2489
  %2503 = vmatprep.subr.bf16.mxu0 0
  %2504 = vmatpush1.bf16.msra.mxu0 %v2488
  %2505 = vmatprep.subr.bf16.mxu0 0
  %2506 = vmatpush1.bf16.msra.mxu0 %v2487
  %2507 = vmatprep.subr.bf16.mxu0 0
  %2508 = vmatpush1.bf16.msra.mxu0 %v2486
  %2509 = vmatprep.subr.bf16.mxu0 0
  %2510 = vmatpush1.bf16.msra.mxu0 %v2485
  %2511 = vmatprep.subr.bf16.mxu0 0
  %2512 = vmatpush1.bf16.msra.mxu0 %v2484
  %2513 = vmatprep.subr.bf16.mxu0 0
  %2514 = vmatpush1.bf16.msra.mxu0 %v2483
  %2515 = vmatprep.subr.bf16.mxu0 0
  %2516 = vmatpush2.bf16.msra.mxu0 0
  %2517 = vmatprep.subr.bf16.mxu0 0
  %2518 = vmatpush2.bf16.msra.mxu0 0
  %2519 = vmatprep.subr.bf16.mxu0 0
  %2520 = vmatpush2.bf16.msra.mxu0 0
  %2521 = vmatprep.subr.bf16.mxu0 0
  %2522 = vmatpush2.bf16.msra.mxu0 0
  %2523 = vmatprep.subr.bf16.mxu0 0
  %2524 = vmatpush2.bf16.msra.mxu0 0
  %2525 = vmatprep.subr.bf16.mxu0 0
  %2526 = vmatpush2.bf16.msra.mxu0 0
  %2527 = vmatprep.subr.bf16.mxu0 0
  %2528 = vmatpush2.bf16.msra.mxu0 0
  %2529 = vmatprep.subr.bf16.mxu0 0
  %2530 = vmatpush2.bf16.msra.mxu0 0
  %2531 = vmatprep.mubr.bf16.mxu0 0
  %2532 = vmatmul.mubr.bf16.gmra.mxu0 %v419
  %v2533 = vpop.f32.mrf.mxu0
  %v2534 = vadd.f32 0.0, %v2533
  %v2535 = vpop.f32.mrf.mxu0
  %v2536 = vpop.f32.mrf.mxu0
  %v2537 = vpop.f32.mrf.mxu0
  %2538 = vdwg.mxu0
  %2539 = vst.msk [vmem:[#allocation2 + $0x98] sm:$0xff] %vm524, %v2534
  %s2540 = scalar_lea.vmem %s5, 1280
  %v2541 = vld [vmem:[%s2540] sm:$0xf]
  %v2542 = vld [vmem:[%s2540 + $0x4] sm:$0xf]
  %v2543 = vld [vmem:[%s2540 + $0x8] sm:$0xf]
  %v2544 = vld [vmem:[%s2540 + $0xc] sm:$0xf]
  %v2545 = vld [vmem:[%s2540 + $0x10] sm:$0xf]
  %v2546 = vld [vmem:[%s2540 + $0x14] sm:$0xf]
  %v2547 = vld [vmem:[%s2540 + $0x18] sm:$0xf]
  %v2548 = vld [vmem:[%s2540 + $0x1c] sm:$0xf]
  %v2549 = vld [vmem:[%s2540 + $0x20] sm:$0xf]
  %v2550 = vld [vmem:[%s2540 + $0x24] sm:$0xf]
  %v2551 = vld [vmem:[%s2540 + $0x28] sm:$0xf]
  %v2552 = vld [vmem:[%s2540 + $0x2c] sm:$0xf]
  %v2553 = vld [vmem:[%s2540 + $0x30] sm:$0xf]
  %v2554 = vld [vmem:[%s2540 + $0x34] sm:$0xf]
  %v2555 = vld [vmem:[%s2540 + $0x38] sm:$0xf]
  %v2556 = vld [vmem:[%s2540 + $0x3c] sm:$0xf]
  %v2573 = vunpack.c.l.b16 %v2541
  %v2574 = vunpack.c.l.b16 %v2542
  %v2575 = vunpack.c.l.b16 %v2543
  %v2576 = vunpack.c.l.b16 %v2544
  %v2577 = vunpack.c.l.b16 %v2545
  %v2578 = vunpack.c.l.b16 %v2546
  %v2579 = vunpack.c.l.b16 %v2547
  %v2580 = vunpack.c.l.b16 %v2548
  %v2581 = vunpack.c.l.b16 %v2549
  %v2582 = vunpack.c.l.b16 %v2550
  %v2583 = vunpack.c.l.b16 %v2551
  %v2584 = vunpack.c.l.b16 %v2552
  %v2585 = vunpack.c.l.b16 %v2553
  %v2586 = vunpack.c.l.b16 %v2554
  %v2587 = vunpack.c.l.b16 %v2555
  %v2588 = vunpack.c.l.b16 %v2556
  %v2589 = vpack.c.b16 %v2574, %v2573
  %v2590 = vpack.c.b16 %v2576, %v2575
  %v2591 = vpack.c.b16 %v2578, %v2577
  %v2592 = vpack.c.b16 %v2580, %v2579
  %v2593 = vpack.c.b16 %v2582, %v2581
  %v2594 = vpack.c.b16 %v2584, %v2583
  %v2595 = vpack.c.b16 %v2586, %v2585
  %v2596 = vpack.c.b16 %v2588, %v2587
  %2605 = vmatprep.subr.bf16.mxu0 0
  %2606 = vmatpush1.bf16.msra.mxu0 %v2596
  %2607 = vmatprep.subr.bf16.mxu0 0
  %2608 = vmatpush1.bf16.msra.mxu0 %v2595
  %2609 = vmatprep.subr.bf16.mxu0 0
  %2610 = vmatpush1.bf16.msra.mxu0 %v2594
  %2611 = vmatprep.subr.bf16.mxu0 0
  %2612 = vmatpush1.bf16.msra.mxu0 %v2593
  %2613 = vmatprep.subr.bf16.mxu0 0
  %2614 = vmatpush1.bf16.msra.mxu0 %v2592
  %2615 = vmatprep.subr.bf16.mxu0 0
  %2616 = vmatpush1.bf16.msra.mxu0 %v2591
  %2617 = vmatprep.subr.bf16.mxu0 0
  %2618 = vmatpush1.bf16.msra.mxu0 %v2590
  %2619 = vmatprep.subr.bf16.mxu0 0
  %2620 = vmatpush1.bf16.msra.mxu0 %v2589
  %2621 = vmatprep.subr.bf16.mxu0 0
  %2622 = vmatpush2.bf16.msra.mxu0 0
  %2623 = vmatprep.subr.bf16.mxu0 0
  %2624 = vmatpush2.bf16.msra.mxu0 0
  %2625 = vmatprep.subr.bf16.mxu0 0
  %2626 = vmatpush2.bf16.msra.mxu0 0
  %2627 = vmatprep.subr.bf16.mxu0 0
  %2628 = vmatpush2.bf16.msra.mxu0 0
  %2629 = vmatprep.subr.bf16.mxu0 0
  %2630 = vmatpush2.bf16.msra.mxu0 0
  %2631 = vmatprep.subr.bf16.mxu0 0
  %2632 = vmatpush2.bf16.msra.mxu0 0
  %2633 = vmatprep.subr.bf16.mxu0 0
  %2634 = vmatpush2.bf16.msra.mxu0 0
  %2635 = vmatprep.subr.bf16.mxu0 0
  %2636 = vmatpush2.bf16.msra.mxu0 0
  %2637 = vmatprep.mubr.bf16.mxu0 0
  %2638 = vmatmul.mubr.bf16.gmra.mxu0 %v419
  %v2639 = vpop.f32.mrf.mxu0
  %v2640 = vadd.f32 0.0, %v2639
  %v2641 = vpop.f32.mrf.mxu0
  %v2642 = vpop.f32.mrf.mxu0
  %v2643 = vpop.f32.mrf.mxu0
  %2644 = vdwg.mxu0
  %2645 = vst.msk [vmem:[#allocation2 + $0xa0] sm:$0xff] %vm524, %v2640
  %s2646 = scalar_lea.vmem %s5, 1344
  %v2647 = vld [vmem:[%s2646] sm:$0xf]
  %v2648 = vld [vmem:[%s2646 + $0x4] sm:$0xf]
  %v2649 = vld [vmem:[%s2646 + $0x8] sm:$0xf]
  %v2650 = vld [vmem:[%s2646 + $0xc] sm:$0xf]
  %v2651 = vld [vmem:[%s2646 + $0x10] sm:$0xf]
  %v2652 = vld [vmem:[%s2646 + $0x14] sm:$0xf]
  %v2653 = vld [vmem:[%s2646 + $0x18] sm:$0xf]
  %v2654 = vld [vmem:[%s2646 + $0x1c] sm:$0xf]
  %v2655 = vld [vmem:[%s2646 + $0x20] sm:$0xf]
  %v2656 = vld [vmem:[%s2646 + $0x24] sm:$0xf]
  %v2657 = vld [vmem:[%s2646 + $0x28] sm:$0xf]
  %v2658 = vld [vmem:[%s2646 + $0x2c] sm:$0xf]
  %v2659 = vld [vmem:[%s2646 + $0x30] sm:$0xf]
  %v2660 = vld [vmem:[%s2646 + $0x34] sm:$0xf]
  %v2661 = vld [vmem:[%s2646 + $0x38] sm:$0xf]
  %v2662 = vld [vmem:[%s2646 + $0x3c] sm:$0xf]
  %v2679 = vunpack.c.l.b16 %v2647
  %v2680 = vunpack.c.l.b16 %v2648
  %v2681 = vunpack.c.l.b16 %v2649
  %v2682 = vunpack.c.l.b16 %v2650
  %v2683 = vunpack.c.l.b16 %v2651
  %v2684 = vunpack.c.l.b16 %v2652
  %v2685 = vunpack.c.l.b16 %v2653
  %v2686 = vunpack.c.l.b16 %v2654
  %v2687 = vunpack.c.l.b16 %v2655
  %v2688 = vunpack.c.l.b16 %v2656
  %v2689 = vunpack.c.l.b16 %v2657
  %v2690 = vunpack.c.l.b16 %v2658
  %v2691 = vunpack.c.l.b16 %v2659
  %v2692 = vunpack.c.l.b16 %v2660
  %v2693 = vunpack.c.l.b16 %v2661
  %v2694 = vunpack.c.l.b16 %v2662
  %v2695 = vpack.c.b16 %v2680, %v2679
  %v2696 = vpack.c.b16 %v2682, %v2681
  %v2697 = vpack.c.b16 %v2684, %v2683
  %v2698 = vpack.c.b16 %v2686, %v2685
  %v2699 = vpack.c.b16 %v2688, %v2687
  %v2700 = vpack.c.b16 %v2690, %v2689
  %v2701 = vpack.c.b16 %v2692, %v2691
  %v2702 = vpack.c.b16 %v2694, %v2693
  %2711 = vmatprep.subr.bf16.mxu0 0
  %2712 = vmatpush1.bf16.msra.mxu0 %v2702
  %2713 = vmatprep.subr.bf16.mxu0 0
  %2714 = vmatpush1.bf16.msra.mxu0 %v2701
  %2715 = vmatprep.subr.bf16.mxu0 0
  %2716 = vmatpush1.bf16.msra.mxu0 %v2700
  %2717 = vmatprep.subr.bf16.mxu0 0
  %2718 = vmatpush1.bf16.msra.mxu0 %v2699
  %2719 = vmatprep.subr.bf16.mxu0 0
  %2720 = vmatpush1.bf16.msra.mxu0 %v2698
  %2721 = vmatprep.subr.bf16.mxu0 0
  %2722 = vmatpush1.bf16.msra.mxu0 %v2697
  %2723 = vmatprep.subr.bf16.mxu0 0
  %2724 = vmatpush1.bf16.msra.mxu0 %v2696
  %2725 = vmatprep.subr.bf16.mxu0 0
  %2726 = vmatpush1.bf16.msra.mxu0 %v2695
  %2727 = vmatprep.subr.bf16.mxu0 0
  %2728 = vmatpush2.bf16.msra.mxu0 0
  %2729 = vmatprep.subr.bf16.mxu0 0
  %2730 = vmatpush2.bf16.msra.mxu0 0
  %2731 = vmatprep.subr.bf16.mxu0 0
  %2732 = vmatpush2.bf16.msra.mxu0 0
  %2733 = vmatprep.subr.bf16.mxu0 0
  %2734 = vmatpush2.bf16.msra.mxu0 0
  %2735 = vmatprep.subr.bf16.mxu0 0
  %2736 = vmatpush2.bf16.msra.mxu0 0
  %2737 = vmatprep.subr.bf16.mxu0 0
  %2738 = vmatpush2.bf16.msra.mxu0 0
  %2739 = vmatprep.subr.bf16.mxu0 0
  %2740 = vmatpush2.bf16.msra.mxu0 0
  %2741 = vmatprep.subr.bf16.mxu0 0
  %2742 = vmatpush2.bf16.msra.mxu0 0
  %2743 = vmatprep.mubr.bf16.mxu0 0
  %2744 = vmatmul.mubr.bf16.gmra.mxu0 %v419
  %v2745 = vpop.f32.mrf.mxu0
  %v2746 = vadd.f32 0.0, %v2745
  %v2747 = vpop.f32.mrf.mxu0
  %v2748 = vpop.f32.mrf.mxu0
  %v2749 = vpop.f32.mrf.mxu0
  %2750 = vdwg.mxu0
  %2751 = vst.msk [vmem:[#allocation2 + $0xa8] sm:$0xff] %vm524, %v2746
  %s2752 = scalar_lea.vmem %s5, 1408
  %v2753 = vld [vmem:[%s2752] sm:$0xf]
  %v2754 = vld [vmem:[%s2752 + $0x4] sm:$0xf]
  %v2755 = vld [vmem:[%s2752 + $0x8] sm:$0xf]
  %v2756 = vld [vmem:[%s2752 + $0xc] sm:$0xf]
  %v2757 = vld [vmem:[%s2752 + $0x10] sm:$0xf]
  %v2758 = vld [vmem:[%s2752 + $0x14] sm:$0xf]
  %v2759 = vld [vmem:[%s2752 + $0x18] sm:$0xf]
  %v2760 = vld [vmem:[%s2752 + $0x1c] sm:$0xf]
  %v2761 = vld [vmem:[%s2752 + $0x20] sm:$0xf]
  %v2762 = vld [vmem:[%s2752 + $0x24] sm:$0xf]
  %v2763 = vld [vmem:[%s2752 + $0x28] sm:$0xf]
  %v2764 = vld [vmem:[%s2752 + $0x2c] sm:$0xf]
  %v2765 = vld [vmem:[%s2752 + $0x30] sm:$0xf]
  %v2766 = vld [vmem:[%s2752 + $0x34] sm:$0xf]
  %v2767 = vld [vmem:[%s2752 + $0x38] sm:$0xf]
  %v2768 = vld [vmem:[%s2752 + $0x3c] sm:$0xf]
  %v2785 = vunpack.c.l.b16 %v2753
  %v2786 = vunpack.c.l.b16 %v2754
  %v2787 = vunpack.c.l.b16 %v2755
  %v2788 = vunpack.c.l.b16 %v2756
  %v2789 = vunpack.c.l.b16 %v2757
  %v2790 = vunpack.c.l.b16 %v2758
  %v2791 = vunpack.c.l.b16 %v2759
  %v2792 = vunpack.c.l.b16 %v2760
  %v2793 = vunpack.c.l.b16 %v2761
  %v2794 = vunpack.c.l.b16 %v2762
  %v2795 = vunpack.c.l.b16 %v2763
  %v2796 = vunpack.c.l.b16 %v2764
  %v2797 = vunpack.c.l.b16 %v2765
  %v2798 = vunpack.c.l.b16 %v2766
  %v2799 = vunpack.c.l.b16 %v2767
  %v2800 = vunpack.c.l.b16 %v2768
  %v2801 = vpack.c.b16 %v2786, %v2785
  %v2802 = vpack.c.b16 %v2788, %v2787
  %v2803 = vpack.c.b16 %v2790, %v2789
  %v2804 = vpack.c.b16 %v2792, %v2791
  %v2805 = vpack.c.b16 %v2794, %v2793
  %v2806 = vpack.c.b16 %v2796, %v2795
  %v2807 = vpack.c.b16 %v2798, %v2797
  %v2808 = vpack.c.b16 %v2800, %v2799
  %2817 = vmatprep.subr.bf16.mxu0 0
  %2818 = vmatpush1.bf16.msra.mxu0 %v2808
  %2819 = vmatprep.subr.bf16.mxu0 0
  %2820 = vmatpush1.bf16.msra.mxu0 %v2807
  %2821 = vmatprep.subr.bf16.mxu0 0
  %2822 = vmatpush1.bf16.msra.mxu0 %v2806
  %2823 = vmatprep.subr.bf16.mxu0 0
  %2824 = vmatpush1.bf16.msra.mxu0 %v2805
  %2825 = vmatprep.subr.bf16.mxu0 0
  %2826 = vmatpush1.bf16.msra.mxu0 %v2804
  %2827 = vmatprep.subr.bf16.mxu0 0
  %2828 = vmatpush1.bf16.msra.mxu0 %v2803
  %2829 = vmatprep.subr.bf16.mxu0 0
  %2830 = vmatpush1.bf16.msra.mxu0 %v2802
  %2831 = vmatprep.subr.bf16.mxu0 0
  %2832 = vmatpush1.bf16.msra.mxu0 %v2801
  %2833 = vmatprep.subr.bf16.mxu0 0
  %2834 = vmatpush2.bf16.msra.mxu0 0
  %2835 = vmatprep.subr.bf16.mxu0 0
  %2836 = vmatpush2.bf16.msra.mxu0 0
  %2837 = vmatprep.subr.bf16.mxu0 0
  %2838 = vmatpush2.bf16.msra.mxu0 0
  %2839 = vmatprep.subr.bf16.mxu0 0
  %2840 = vmatpush2.bf16.msra.mxu0 0
  %2841 = vmatprep.subr.bf16.mxu0 0
  %2842 = vmatpush2.bf16.msra.mxu0 0
  %2843 = vmatprep.subr.bf16.mxu0 0
  %2844 = vmatpush2.bf16.msra.mxu0 0
  %2845 = vmatprep.subr.bf16.mxu0 0
  %2846 = vmatpush2.bf16.msra.mxu0 0
  %2847 = vmatprep.subr.bf16.mxu0 0
  %2848 = vmatpush2.bf16.msra.mxu0 0
  %2849 = vmatprep.mubr.bf16.mxu0 0
  %2850 = vmatmul.mubr.bf16.gmra.mxu0 %v419
  %v2851 = vpop.f32.mrf.mxu0
  %v2852 = vadd.f32 0.0, %v2851
  %v2853 = vpop.f32.mrf.mxu0
  %v2854 = vpop.f32.mrf.mxu0
  %v2855 = vpop.f32.mrf.mxu0
  %2856 = vdwg.mxu0
  %2857 = vst.msk [vmem:[#allocation2 + $0xb0] sm:$0xff] %vm524, %v2852
  %s2858 = scalar_lea.vmem %s5, 1472
  %v2859 = vld [vmem:[%s2858] sm:$0xf]
  %v2860 = vld [vmem:[%s2858 + $0x4] sm:$0xf]
  %v2861 = vld [vmem:[%s2858 + $0x8] sm:$0xf]
  %v2862 = vld [vmem:[%s2858 + $0xc] sm:$0xf]
  %v2863 = vld [vmem:[%s2858 + $0x10] sm:$0xf]
  %v2864 = vld [vmem:[%s2858 + $0x14] sm:$0xf]
  %v2865 = vld [vmem:[%s2858 + $0x18] sm:$0xf]
  %v2866 = vld [vmem:[%s2858 + $0x1c] sm:$0xf]
  %v2867 = vld [vmem:[%s2858 + $0x20] sm:$0xf]
  %v2868 = vld [vmem:[%s2858 + $0x24] sm:$0xf]
  %v2869 = vld [vmem:[%s2858 + $0x28] sm:$0xf]
  %v2870 = vld [vmem:[%s2858 + $0x2c] sm:$0xf]
  %v2871 = vld [vmem:[%s2858 + $0x30] sm:$0xf]
  %v2872 = vld [vmem:[%s2858 + $0x34] sm:$0xf]
  %v2873 = vld [vmem:[%s2858 + $0x38] sm:$0xf]
  %v2874 = vld [vmem:[%s2858 + $0x3c] sm:$0xf]
  %v2891 = vunpack.c.l.b16 %v2859
  %v2892 = vunpack.c.l.b16 %v2860
  %v2893 = vunpack.c.l.b16 %v2861
  %v2894 = vunpack.c.l.b16 %v2862
  %v2895 = vunpack.c.l.b16 %v2863
  %v2896 = vunpack.c.l.b16 %v2864
  %v2897 = vunpack.c.l.b16 %v2865
  %v2898 = vunpack.c.l.b16 %v2866
  %v2899 = vunpack.c.l.b16 %v2867
  %v2900 = vunpack.c.l.b16 %v2868
  %v2901 = vunpack.c.l.b16 %v2869
  %v2902 = vunpack.c.l.b16 %v2870
  %v2903 = vunpack.c.l.b16 %v2871
  %v2904 = vunpack.c.l.b16 %v2872
  %v2905 = vunpack.c.l.b16 %v2873
  %v2906 = vunpack.c.l.b16 %v2874
  %v2907 = vpack.c.b16 %v2892, %v2891
  %v2908 = vpack.c.b16 %v2894, %v2893
  %v2909 = vpack.c.b16 %v2896, %v2895
  %v2910 = vpack.c.b16 %v2898, %v2897
  %v2911 = vpack.c.b16 %v2900, %v2899
  %v2912 = vpack.c.b16 %v2902, %v2901
  %v2913 = vpack.c.b16 %v2904, %v2903
  %v2914 = vpack.c.b16 %v2906, %v2905
  %2923 = vmatprep.subr.bf16.mxu0 0
  %2924 = vmatpush1.bf16.msra.mxu0 %v2914
  %2925 = vmatprep.subr.bf16.mxu0 0
  %2926 = vmatpush1.bf16.msra.mxu0 %v2913
  %2927 = vmatprep.subr.bf16.mxu0 0
  %2928 = vmatpush1.bf16.msra.mxu0 %v2912
  %2929 = vmatprep.subr.bf16.mxu0 0
  %2930 = vmatpush1.bf16.msra.mxu0 %v2911
  %2931 = vmatprep.subr.bf16.mxu0 0
  %2932 = vmatpush1.bf16.msra.mxu0 %v2910
  %2933 = vmatprep.subr.bf16.mxu0 0
  %2934 = vmatpush1.bf16.msra.mxu0 %v2909
  %2935 = vmatprep.subr.bf16.mxu0 0
  %2936 = vmatpush1.bf16.msra.mxu0 %v2908
  %2937 = vmatprep.subr.bf16.mxu0 0
  %2938 = vmatpush1.bf16.msra.mxu0 %v2907
  %2939 = vmatprep.subr.bf16.mxu0 0
  %2940 = vmatpush2.bf16.msra.mxu0 0
  %2941 = vmatprep.subr.bf16.mxu0 0
  %2942 = vmatpush2.bf16.msra.mxu0 0
  %2943 = vmatprep.subr.bf16.mxu0 0
  %2944 = vmatpush2.bf16.msra.mxu0 0
  %2945 = vmatprep.subr.bf16.mxu0 0
  %2946 = vmatpush2.bf16.msra.mxu0 0
  %2947 = vmatprep.subr.bf16.mxu0 0
  %2948 = vmatpush2.bf16.msra.mxu0 0
  %2949 = vmatprep.subr.bf16.mxu0 0
  %2950 = vmatpush2.bf16.msra.mxu0 0
  %2951 = vmatprep.subr.bf16.mxu0 0
  %2952 = vmatpush2.bf16.msra.mxu0 0
  %2953 = vmatprep.subr.bf16.mxu0 0
  %2954 = vmatpush2.bf16.msra.mxu0 0
  %2955 = vmatprep.mubr.bf16.mxu0 0
  %2956 = vmatmul.mubr.bf16.gmra.mxu0 %v419
  %v2957 = vpop.f32.mrf.mxu0
  %v2958 = vadd.f32 0.0, %v2957
  %v2959 = vpop.f32.mrf.mxu0
  %v2960 = vpop.f32.mrf.mxu0
  %v2961 = vpop.f32.mrf.mxu0
  %2962 = vdwg.mxu0
  %2963 = vst.msk [vmem:[#allocation2 + $0xb8] sm:$0xff] %vm524, %v2958
  %s2964 = scalar_lea.vmem %s5, 1536
  %v2965 = vld [vmem:[%s2964] sm:$0xf]
  %v2966 = vld [vmem:[%s2964 + $0x4] sm:$0xf]
  %v2967 = vld [vmem:[%s2964 + $0x8] sm:$0xf]
  %v2968 = vld [vmem:[%s2964 + $0xc] sm:$0xf]
  %v2969 = vld [vmem:[%s2964 + $0x10] sm:$0xf]
  %v2970 = vld [vmem:[%s2964 + $0x14] sm:$0xf]
  %v2971 = vld [vmem:[%s2964 + $0x18] sm:$0xf]
  %v2972 = vld [vmem:[%s2964 + $0x1c] sm:$0xf]
  %v2973 = vld [vmem:[%s2964 + $0x20] sm:$0xf]
  %v2974 = vld [vmem:[%s2964 + $0x24] sm:$0xf]
  %v2975 = vld [vmem:[%s2964 + $0x28] sm:$0xf]
  %v2976 = vld [vmem:[%s2964 + $0x2c] sm:$0xf]
  %v2977 = vld [vmem:[%s2964 + $0x30] sm:$0xf]
  %v2978 = vld [vmem:[%s2964 + $0x34] sm:$0xf]
  %v2979 = vld [vmem:[%s2964 + $0x38] sm:$0xf]
  %v2980 = vld [vmem:[%s2964 + $0x3c] sm:$0xf]
  %v2997 = vunpack.c.l.b16 %v2965
  %v2998 = vunpack.c.l.b16 %v2966
  %v2999 = vunpack.c.l.b16 %v2967
  %v3000 = vunpack.c.l.b16 %v2968
  %v3001 = vunpack.c.l.b16 %v2969
  %v3002 = vunpack.c.l.b16 %v2970
  %v3003 = vunpack.c.l.b16 %v2971
  %v3004 = vunpack.c.l.b16 %v2972
  %v3005 = vunpack.c.l.b16 %v2973
  %v3006 = vunpack.c.l.b16 %v2974
  %v3007 = vunpack.c.l.b16 %v2975
  %v3008 = vunpack.c.l.b16 %v2976
  %v3009 = vunpack.c.l.b16 %v2977
  %v3010 = vunpack.c.l.b16 %v2978
  %v3011 = vunpack.c.l.b16 %v2979
  %v3012 = vunpack.c.l.b16 %v2980
  %v3013 = vpack.c.b16 %v2998, %v2997
  %v3014 = vpack.c.b16 %v3000, %v2999
  %v3015 = vpack.c.b16 %v3002, %v3001
  %v3016 = vpack.c.b16 %v3004, %v3003
  %v3017 = vpack.c.b16 %v3006, %v3005
  %v3018 = vpack.c.b16 %v3008, %v3007
  %v3019 = vpack.c.b16 %v3010, %v3009
  %v3020 = vpack.c.b16 %v3012, %v3011
  %3029 = vmatprep.subr.bf16.mxu0 0
  %3030 = vmatpush1.bf16.msra.mxu0 %v3020
  %3031 = vmatprep.subr.bf16.mxu0 0
  %3032 = vmatpush1.bf16.msra.mxu0 %v3019
  %3033 = vmatprep.subr.bf16.mxu0 0
  %3034 = vmatpush1.bf16.msra.mxu0 %v3018
  %3035 = vmatprep.subr.bf16.mxu0 0
  %3036 = vmatpush1.bf16.msra.mxu0 %v3017
  %3037 = vmatprep.subr.bf16.mxu0 0
  %3038 = vmatpush1.bf16.msra.mxu0 %v3016
  %3039 = vmatprep.subr.bf16.mxu0 0
  %3040 = vmatpush1.bf16.msra.mxu0 %v3015
  %3041 = vmatprep.subr.bf16.mxu0 0
  %3042 = vmatpush1.bf16.msra.mxu0 %v3014
  %3043 = vmatprep.subr.bf16.mxu0 0
  %3044 = vmatpush1.bf16.msra.mxu0 %v3013
  %3045 = vmatprep.subr.bf16.mxu0 0
  %3046 = vmatpush2.bf16.msra.mxu0 0
  %3047 = vmatprep.subr.bf16.mxu0 0
  %3048 = vmatpush2.bf16.msra.mxu0 0
  %3049 = vmatprep.subr.bf16.mxu0 0
  %3050 = vmatpush2.bf16.msra.mxu0 0
  %3051 = vmatprep.subr.bf16.mxu0 0
  %3052 = vmatpush2.bf16.msra.mxu0 0
  %3053 = vmatprep.subr.bf16.mxu0 0
  %3054 = vmatpush2.bf16.msra.mxu0 0
  %3055 = vmatprep.subr.bf16.mxu0 0
  %3056 = vmatpush2.bf16.msra.mxu0 0
  %3057 = vmatprep.subr.bf16.mxu0 0
  %3058 = vmatpush2.bf16.msra.mxu0 0
  %3059 = vmatprep.subr.bf16.mxu0 0
  %3060 = vmatpush2.bf16.msra.mxu0 0
  %3061 = vmatprep.mubr.bf16.mxu0 0
  %3062 = vmatmul.mubr.bf16.gmra.mxu0 %v419
  %v3063 = vpop.f32.mrf.mxu0
  %v3064 = vadd.f32 0.0, %v3063
  %v3065 = vpop.f32.mrf.mxu0
  %v3066 = vpop.f32.mrf.mxu0
  %v3067 = vpop.f32.mrf.mxu0
  %3068 = vdwg.mxu0
  %3069 = vst.msk [vmem:[#allocation2 + $0xc0] sm:$0xff] %vm524, %v3064
  %s3070 = scalar_lea.vmem %s5, 1600
  %v3071 = vld [vmem:[%s3070] sm:$0xf]
  %v3072 = vld [vmem:[%s3070 + $0x4] sm:$0xf]
  %v3073 = vld [vmem:[%s3070 + $0x8] sm:$0xf]
  %v3074 = vld [vmem:[%s3070 + $0xc] sm:$0xf]
  %v3075 = vld [vmem:[%s3070 + $0x10] sm:$0xf]
  %v3076 = vld [vmem:[%s3070 + $0x14] sm:$0xf]
  %v3077 = vld [vmem:[%s3070 + $0x18] sm:$0xf]
  %v3078 = vld [vmem:[%s3070 + $0x1c] sm:$0xf]
  %v3079 = vld [vmem:[%s3070 + $0x20] sm:$0xf]
  %v3080 = vld [vmem:[%s3070 + $0x24] sm:$0xf]
  %v3081 = vld [vmem:[%s3070 + $0x28] sm:$0xf]
  %v3082 = vld [vmem:[%s3070 + $0x2c] sm:$0xf]
  %v3083 = vld [vmem:[%s3070 + $0x30] sm:$0xf]
  %v3084 = vld [vmem:[%s3070 + $0x34] sm:$0xf]
  %v3085 = vld [vmem:[%s3070 + $0x38] sm:$0xf]
  %v3086 = vld [vmem:[%s3070 + $0x3c] sm:$0xf]
  %v3103 = vunpack.c.l.b16 %v3071
  %v3104 = vunpack.c.l.b16 %v3072
  %v3105 = vunpack.c.l.b16 %v3073
  %v3106 = vunpack.c.l.b16 %v3074
  %v3107 = vunpack.c.l.b16 %v3075
  %v3108 = vunpack.c.l.b16 %v3076
  %v3109 = vunpack.c.l.b16 %v3077
  %v3110 = vunpack.c.l.b16 %v3078
  %v3111 = vunpack.c.l.b16 %v3079
  %v3112 = vunpack.c.l.b16 %v3080
  %v3113 = vunpack.c.l.b16 %v3081
  %v3114 = vunpack.c.l.b16 %v3082
  %v3115 = vunpack.c.l.b16 %v3083
  %v3116 = vunpack.c.l.b16 %v3084
  %v3117 = vunpack.c.l.b16 %v3085
  %v3118 = vunpack.c.l.b16 %v3086
  %v3119 = vpack.c.b16 %v3104, %v3103
  %v3120 = vpack.c.b16 %v3106, %v3105
  %v3121 = vpack.c.b16 %v3108, %v3107
  %v3122 = vpack.c.b16 %v3110, %v3109
  %v3123 = vpack.c.b16 %v3112, %v3111
  %v3124 = vpack.c.b16 %v3114, %v3113
  %v3125 = vpack.c.b16 %v3116, %v3115
  %v3126 = vpack.c.b16 %v3118, %v3117
  %3135 = vmatprep.subr.bf16.mxu0 0
  %3136 = vmatpush1.bf16.msra.mxu0 %v3126
  %3137 = vmatprep.subr.bf16.mxu0 0
  %3138 = vmatpush1.bf16.msra.mxu0 %v3125
  %3139 = vmatprep.subr.bf16.mxu0 0
  %3140 = vmatpush1.bf16.msra.mxu0 %v3124
  %3141 = vmatprep.subr.bf16.mxu0 0
  %3142 = vmatpush1.bf16.msra.mxu0 %v3123
  %3143 = vmatprep.subr.bf16.mxu0 0
  %3144 = vmatpush1.bf16.msra.mxu0 %v3122
  %3145 = vmatprep.subr.bf16.mxu0 0
  %3146 = vmatpush1.bf16.msra.mxu0 %v3121
  %3147 = vmatprep.subr.bf16.mxu0 0
  %3148 = vmatpush1.bf16.msra.mxu0 %v3120
  %3149 = vmatprep.subr.bf16.mxu0 0
  %3150 = vmatpush1.bf16.msra.mxu0 %v3119
  %3151 = vmatprep.subr.bf16.mxu0 0
  %3152 = vmatpush2.bf16.msra.mxu0 0
  %3153 = vmatprep.subr.bf16.mxu0 0
  %3154 = vmatpush2.bf16.msra.mxu0 0
  %3155 = vmatprep.subr.bf16.mxu0 0
  %3156 = vmatpush2.bf16.msra.mxu0 0
  %3157 = vmatprep.subr.bf16.mxu0 0
  %3158 = vmatpush2.bf16.msra.mxu0 0
  %3159 = vmatprep.subr.bf16.mxu0 0
  %3160 = vmatpush2.bf16.msra.mxu0 0
  %3161 = vmatprep.subr.bf16.mxu0 0
  %3162 = vmatpush2.bf16.msra.mxu0 0
  %3163 = vmatprep.subr.bf16.mxu0 0
  %3164 = vmatpush2.bf16.msra.mxu0 0
  %3165 = vmatprep.subr.bf16.mxu0 0
  %3166 = vmatpush2.bf16.msra.mxu0 0
  %3167 = vmatprep.mubr.bf16.mxu0 0
  %3168 = vmatmul.mubr.bf16.gmra.mxu0 %v419
  %v3169 = vpop.f32.mrf.mxu0
  %v3170 = vadd.f32 0.0, %v3169
  %v3171 = vpop.f32.mrf.mxu0
  %v3172 = vpop.f32.mrf.mxu0
  %v3173 = vpop.f32.mrf.mxu0
  %3174 = vdwg.mxu0
  %3175 = vst.msk [vmem:[#allocation2 + $0xc8] sm:$0xff] %vm524, %v3170
  %s3176 = scalar_lea.vmem %s5, 1664
  %v3177 = vld [vmem:[%s3176] sm:$0xf]
  %v3178 = vld [vmem:[%s3176 + $0x4] sm:$0xf]
  %v3179 = vld [vmem:[%s3176 + $0x8] sm:$0xf]
  %v3180 = vld [vmem:[%s3176 + $0xc] sm:$0xf]
  %v3181 = vld [vmem:[%s3176 + $0x10] sm:$0xf]
  %v3182 = vld [vmem:[%s3176 + $0x14] sm:$0xf]
  %v3183 = vld [vmem:[%s3176 + $0x18] sm:$0xf]
  %v3184 = vld [vmem:[%s3176 + $0x1c] sm:$0xf]
  %v3185 = vld [vmem:[%s3176 + $0x20] sm:$0xf]
  %v3186 = vld [vmem:[%s3176 + $0x24] sm:$0xf]
  %v3187 = vld [vmem:[%s3176 + $0x28] sm:$0xf]
  %v3188 = vld [vmem:[%s3176 + $0x2c] sm:$0xf]
  %v3189 = vld [vmem:[%s3176 + $0x30] sm:$0xf]
  %v3190 = vld [vmem:[%s3176 + $0x34] sm:$0xf]
  %v3191 = vld [vmem:[%s3176 + $0x38] sm:$0xf]
  %v3192 = vld [vmem:[%s3176 + $0x3c] sm:$0xf]
  %v3209 = vunpack.c.l.b16 %v3177
  %v3210 = vunpack.c.l.b16 %v3178
  %v3211 = vunpack.c.l.b16 %v3179
  %v3212 = vunpack.c.l.b16 %v3180
  %v3213 = vunpack.c.l.b16 %v3181
  %v3214 = vunpack.c.l.b16 %v3182
  %v3215 = vunpack.c.l.b16 %v3183
  %v3216 = vunpack.c.l.b16 %v3184
  %v3217 = vunpack.c.l.b16 %v3185
  %v3218 = vunpack.c.l.b16 %v3186
  %v3219 = vunpack.c.l.b16 %v3187
  %v3220 = vunpack.c.l.b16 %v3188
  %v3221 = vunpack.c.l.b16 %v3189
  %v3222 = vunpack.c.l.b16 %v3190
  %v3223 = vunpack.c.l.b16 %v3191
  %v3224 = vunpack.c.l.b16 %v3192
  %v3225 = vpack.c.b16 %v3210, %v3209
  %v3226 = vpack.c.b16 %v3212, %v3211
  %v3227 = vpack.c.b16 %v3214, %v3213
  %v3228 = vpack.c.b16 %v3216, %v3215
  %v3229 = vpack.c.b16 %v3218, %v3217
  %v3230 = vpack.c.b16 %v3220, %v3219
  %v3231 = vpack.c.b16 %v3222, %v3221
  %v3232 = vpack.c.b16 %v3224, %v3223
  %3241 = vmatprep.subr.bf16.mxu0 0
  %3242 = vmatpush1.bf16.msra.mxu0 %v3232
  %3243 = vmatprep.subr.bf16.mxu0 0
  %3244 = vmatpush1.bf16.msra.mxu0 %v3231
  %3245 = vmatprep.subr.bf16.mxu0 0
  %3246 = vmatpush1.bf16.msra.mxu0 %v3230
  %3247 = vmatprep.subr.bf16.mxu0 0
  %3248 = vmatpush1.bf16.msra.mxu0 %v3229
  %3249 = vmatprep.subr.bf16.mxu0 0
  %3250 = vmatpush1.bf16.msra.mxu0 %v3228
  %3251 = vmatprep.subr.bf16.mxu0 0
  %3252 = vmatpush1.bf16.msra.mxu0 %v3227
  %3253 = vmatprep.subr.bf16.mxu0 0
  %3254 = vmatpush1.bf16.msra.mxu0 %v3226
  %3255 = vmatprep.subr.bf16.mxu0 0
  %3256 = vmatpush1.bf16.msra.mxu0 %v3225
  %3257 = vmatprep.subr.bf16.mxu0 0
  %3258 = vmatpush2.bf16.msra.mxu0 0
  %3259 = vmatprep.subr.bf16.mxu0 0
  %3260 = vmatpush2.bf16.msra.mxu0 0
  %3261 = vmatprep.subr.bf16.mxu0 0
  %3262 = vmatpush2.bf16.msra.mxu0 0
  %3263 = vmatprep.subr.bf16.mxu0 0
  %3264 = vmatpush2.bf16.msra.mxu0 0
  %3265 = vmatprep.subr.bf16.mxu0 0
  %3266 = vmatpush2.bf16.msra.mxu0 0
  %3267 = vmatprep.subr.bf16.mxu0 0
  %3268 = vmatpush2.bf16.msra.mxu0 0
  %3269 = vmatprep.subr.bf16.mxu0 0
  %3270 = vmatpush2.bf16.msra.mxu0 0
  %3271 = vmatprep.subr.bf16.mxu0 0
  %3272 = vmatpush2.bf16.msra.mxu0 0
  %3273 = vmatprep.mubr.bf16.mxu0 0
  %3274 = vmatmul.mubr.bf16.gmra.mxu0 %v419
  %v3275 = vpop.f32.mrf.mxu0
  %v3276 = vadd.f32 0.0, %v3275
  %v3277 = vpop.f32.mrf.mxu0
  %v3278 = vpop.f32.mrf.mxu0
  %v3279 = vpop.f32.mrf.mxu0
  %3280 = vdwg.mxu0
  %3281 = vst.msk [vmem:[#allocation2 + $0xd0] sm:$0xff] %vm524, %v3276
  %s3282 = scalar_lea.vmem %s5, 1728
  %v3283 = vld [vmem:[%s3282] sm:$0xf]
  %v3284 = vld [vmem:[%s3282 + $0x4] sm:$0xf]
  %v3285 = vld [vmem:[%s3282 + $0x8] sm:$0xf]
  %v3286 = vld [vmem:[%s3282 + $0xc] sm:$0xf]
  %v3287 = vld [vmem:[%s3282 + $0x10] sm:$0xf]
  %v3288 = vld [vmem:[%s3282 + $0x14] sm:$0xf]
  %v3289 = vld [vmem:[%s3282 + $0x18] sm:$0xf]
  %v3290 = vld [vmem:[%s3282 + $0x1c] sm:$0xf]
  %v3291 = vld [vmem:[%s3282 + $0x20] sm:$0xf]
  %v3292 = vld [vmem:[%s3282 + $0x24] sm:$0xf]
  %v3293 = vld [vmem:[%s3282 + $0x28] sm:$0xf]
  %v3294 = vld [vmem:[%s3282 + $0x2c] sm:$0xf]
  %v3295 = vld [vmem:[%s3282 + $0x30] sm:$0xf]
  %v3296 = vld [vmem:[%s3282 + $0x34] sm:$0xf]
  %v3297 = vld [vmem:[%s3282 + $0x38] sm:$0xf]
  %v3298 = vld [vmem:[%s3282 + $0x3c] sm:$0xf]
  %v3315 = vunpack.c.l.b16 %v3283
  %v3316 = vunpack.c.l.b16 %v3284
  %v3317 = vunpack.c.l.b16 %v3285
  %v3318 = vunpack.c.l.b16 %v3286
  %v3319 = vunpack.c.l.b16 %v3287
  %v3320 = vunpack.c.l.b16 %v3288
  %v3321 = vunpack.c.l.b16 %v3289
  %v3322 = vunpack.c.l.b16 %v3290
  %v3323 = vunpack.c.l.b16 %v3291
  %v3324 = vunpack.c.l.b16 %v3292
  %v3325 = vunpack.c.l.b16 %v3293
  %v3326 = vunpack.c.l.b16 %v3294
  %v3327 = vunpack.c.l.b16 %v3295
  %v3328 = vunpack.c.l.b16 %v3296
  %v3329 = vunpack.c.l.b16 %v3297
  %v3330 = vunpack.c.l.b16 %v3298
  %v3331 = vpack.c.b16 %v3316, %v3315
  %v3332 = vpack.c.b16 %v3318, %v3317
  %v3333 = vpack.c.b16 %v3320, %v3319
  %v3334 = vpack.c.b16 %v3322, %v3321
  %v3335 = vpack.c.b16 %v3324, %v3323
  %v3336 = vpack.c.b16 %v3326, %v3325
  %v3337 = vpack.c.b16 %v3328, %v3327
  %v3338 = vpack.c.b16 %v3330, %v3329
  %3347 = vmatprep.subr.bf16.mxu0 0
  %3348 = vmatpush1.bf16.msra.mxu0 %v3338
  %3349 = vmatprep.subr.bf16.mxu0 0
  %3350 = vmatpush1.bf16.msra.mxu0 %v3337
  %3351 = vmatprep.subr.bf16.mxu0 0
  %3352 = vmatpush1.bf16.msra.mxu0 %v3336
  %3353 = vmatprep.subr.bf16.mxu0 0
  %3354 = vmatpush1.bf16.msra.mxu0 %v3335
  %3355 = vmatprep.subr.bf16.mxu0 0
  %3356 = vmatpush1.bf16.msra.mxu0 %v3334
  %3357 = vmatprep.subr.bf16.mxu0 0
  %3358 = vmatpush1.bf16.msra.mxu0 %v3333
  %3359 = vmatprep.subr.bf16.mxu0 0
  %3360 = vmatpush1.bf16.msra.mxu0 %v3332
  %3361 = vmatprep.subr.bf16.mxu0 0
  %3362 = vmatpush1.bf16.msra.mxu0 %v3331
  %3363 = vmatprep.subr.bf16.mxu0 0
  %3364 = vmatpush2.bf16.msra.mxu0 0
  %3365 = vmatprep.subr.bf16.mxu0 0
  %3366 = vmatpush2.bf16.msra.mxu0 0
  %3367 = vmatprep.subr.bf16.mxu0 0
  %3368 = vmatpush2.bf16.msra.mxu0 0
  %3369 = vmatprep.subr.bf16.mxu0 0
  %3370 = vmatpush2.bf16.msra.mxu0 0
  %3371 = vmatprep.subr.bf16.mxu0 0
  %3372 = vmatpush2.bf16.msra.mxu0 0
  %3373 = vmatprep.subr.bf16.mxu0 0
  %3374 = vmatpush2.bf16.msra.mxu0 0
  %3375 = vmatprep.subr.bf16.mxu0 0
  %3376 = vmatpush2.bf16.msra.mxu0 0
  %3377 = vmatprep.subr.bf16.mxu0 0
  %3378 = vmatpush2.bf16.msra.mxu0 0
  %3379 = vmatprep.mubr.bf16.mxu0 0
  %3380 = vmatmul.mubr.bf16.gmra.mxu0 %v419
  %v3381 = vpop.f32.mrf.mxu0
  %v3382 = vadd.f32 0.0, %v3381
  %v3383 = vpop.f32.mrf.mxu0
  %v3384 = vpop.f32.mrf.mxu0
  %v3385 = vpop.f32.mrf.mxu0
  %3386 = vdwg.mxu0
  %3387 = vst.msk [vmem:[#allocation2 + $0xd8] sm:$0xff] %vm524, %v3382
  %s3388 = scalar_lea.vmem %s5, 1792
  %v3389 = vld [vmem:[%s3388] sm:$0xf]
  %v3390 = vld [vmem:[%s3388 + $0x4] sm:$0xf]
  %v3391 = vld [vmem:[%s3388 + $0x8] sm:$0xf]
  %v3392 = vld [vmem:[%s3388 + $0xc] sm:$0xf]
  %v3393 = vld [vmem:[%s3388 + $0x10] sm:$0xf]
  %v3394 = vld [vmem:[%s3388 + $0x14] sm:$0xf]
  %v3395 = vld [vmem:[%s3388 + $0x18] sm:$0xf]
  %v3396 = vld [vmem:[%s3388 + $0x1c] sm:$0xf]
  %v3397 = vld [vmem:[%s3388 + $0x20] sm:$0xf]
  %v3398 = vld [vmem:[%s3388 + $0x24] sm:$0xf]
  %v3399 = vld [vmem:[%s3388 + $0x28] sm:$0xf]
  %v3400 = vld [vmem:[%s3388 + $0x2c] sm:$0xf]
  %v3401 = vld [vmem:[%s3388 + $0x30] sm:$0xf]
  %v3402 = vld [vmem:[%s3388 + $0x34] sm:$0xf]
  %v3403 = vld [vmem:[%s3388 + $0x38] sm:$0xf]
  %v3404 = vld [vmem:[%s3388 + $0x3c] sm:$0xf]
  %v3421 = vunpack.c.l.b16 %v3389
  %v3422 = vunpack.c.l.b16 %v3390
  %v3423 = vunpack.c.l.b16 %v3391
  %v3424 = vunpack.c.l.b16 %v3392
  %v3425 = vunpack.c.l.b16 %v3393
  %v3426 = vunpack.c.l.b16 %v3394
  %v3427 = vunpack.c.l.b16 %v3395
  %v3428 = vunpack.c.l.b16 %v3396
  %v3429 = vunpack.c.l.b16 %v3397
  %v3430 = vunpack.c.l.b16 %v3398
  %v3431 = vunpack.c.l.b16 %v3399
  %v3432 = vunpack.c.l.b16 %v3400
  %v3433 = vunpack.c.l.b16 %v3401
  %v3434 = vunpack.c.l.b16 %v3402
  %v3435 = vunpack.c.l.b16 %v3403
  %v3436 = vunpack.c.l.b16 %v3404
  %v3437 = vpack.c.b16 %v3422, %v3421
  %v3438 = vpack.c.b16 %v3424, %v3423
  %v3439 = vpack.c.b16 %v3426, %v3425
  %v3440 = vpack.c.b16 %v3428, %v3427
  %v3441 = vpack.c.b16 %v3430, %v3429
  %v3442 = vpack.c.b16 %v3432, %v3431
  %v3443 = vpack.c.b16 %v3434, %v3433
  %v3444 = vpack.c.b16 %v3436, %v3435
  %3453 = vmatprep.subr.bf16.mxu0 0
  %3454 = vmatpush1.bf16.msra.mxu0 %v3444
  %3455 = vmatprep.subr.bf16.mxu0 0
  %3456 = vmatpush1.bf16.msra.mxu0 %v3443
  %3457 = vmatprep.subr.bf16.mxu0 0
  %3458 = vmatpush1.bf16.msra.mxu0 %v3442
  %3459 = vmatprep.subr.bf16.mxu0 0
  %3460 = vmatpush1.bf16.msra.mxu0 %v3441
  %3461 = vmatprep.subr.bf16.mxu0 0
  %3462 = vmatpush1.bf16.msra.mxu0 %v3440
  %3463 = vmatprep.subr.bf16.mxu0 0
  %3464 = vmatpush1.bf16.msra.mxu0 %v3439
  %3465 = vmatprep.subr.bf16.mxu0 0
  %3466 = vmatpush1.bf16.msra.mxu0 %v3438
  %3467 = vmatprep.subr.bf16.mxu0 0
  %3468 = vmatpush1.bf16.msra.mxu0 %v3437
  %3469 = vmatprep.subr.bf16.mxu0 0
  %3470 = vmatpush2.bf16.msra.mxu0 0
  %3471 = vmatprep.subr.bf16.mxu0 0
  %3472 = vmatpush2.bf16.msra.mxu0 0
  %3473 = vmatprep.subr.bf16.mxu0 0
  %3474 = vmatpush2.bf16.msra.mxu0 0
  %3475 = vmatprep.subr.bf16.mxu0 0
  %3476 = vmatpush2.bf16.msra.mxu0 0
  %3477 = vmatprep.subr.bf16.mxu0 0
  %3478 = vmatpush2.bf16.msra.mxu0 0
  %3479 = vmatprep.subr.bf16.mxu0 0
  %3480 = vmatpush2.bf16.msra.mxu0 0
  %3481 = vmatprep.subr.bf16.mxu0 0
  %3482 = vmatpush2.bf16.msra.mxu0 0
  %3483 = vmatprep.subr.bf16.mxu0 0
  %3484 = vmatpush2.bf16.msra.mxu0 0
  %3485 = vmatprep.mubr.bf16.mxu0 0
  %3486 = vmatmul.mubr.bf16.gmra.mxu0 %v419
  %v3487 = vpop.f32.mrf.mxu0
  %v3488 = vadd.f32 0.0, %v3487
  %v3489 = vpop.f32.mrf.mxu0
  %v3490 = vpop.f32.mrf.mxu0
  %v3491 = vpop.f32.mrf.mxu0
  %3492 = vdwg.mxu0
  %3493 = vst.msk [vmem:[#allocation2 + $0xe0] sm:$0xff] %vm524, %v3488
  %s3494 = scalar_lea.vmem %s5, 1856
  %v3495 = vld [vmem:[%s3494] sm:$0xf]
  %v3496 = vld [vmem:[%s3494 + $0x4] sm:$0xf]
  %v3497 = vld [vmem:[%s3494 + $0x8] sm:$0xf]
  %v3498 = vld [vmem:[%s3494 + $0xc] sm:$0xf]
  %v3499 = vld [vmem:[%s3494 + $0x10] sm:$0xf]
  %v3500 = vld [vmem:[%s3494 + $0x14] sm:$0xf]
  %v3501 = vld [vmem:[%s3494 + $0x18] sm:$0xf]
  %v3502 = vld [vmem:[%s3494 + $0x1c] sm:$0xf]
  %v3503 = vld [vmem:[%s3494 + $0x20] sm:$0xf]
  %v3504 = vld [vmem:[%s3494 + $0x24] sm:$0xf]
  %v3505 = vld [vmem:[%s3494 + $0x28] sm:$0xf]
  %v3506 = vld [vmem:[%s3494 + $0x2c] sm:$0xf]
  %v3507 = vld [vmem:[%s3494 + $0x30] sm:$0xf]
  %v3508 = vld [vmem:[%s3494 + $0x34] sm:$0xf]
  %v3509 = vld [vmem:[%s3494 + $0x38] sm:$0xf]
  %v3510 = vld [vmem:[%s3494 + $0x3c] sm:$0xf]
  %v3527 = vunpack.c.l.b16 %v3495
  %v3528 = vunpack.c.l.b16 %v3496
  %v3529 = vunpack.c.l.b16 %v3497
  %v3530 = vunpack.c.l.b16 %v3498
  %v3531 = vunpack.c.l.b16 %v3499
  %v3532 = vunpack.c.l.b16 %v3500
  %v3533 = vunpack.c.l.b16 %v3501
  %v3534 = vunpack.c.l.b16 %v3502
  %v3535 = vunpack.c.l.b16 %v3503
  %v3536 = vunpack.c.l.b16 %v3504
  %v3537 = vunpack.c.l.b16 %v3505
  %v3538 = vunpack.c.l.b16 %v3506
  %v3539 = vunpack.c.l.b16 %v3507
  %v3540 = vunpack.c.l.b16 %v3508
  %v3541 = vunpack.c.l.b16 %v3509
  %v3542 = vunpack.c.l.b16 %v3510
  %v3543 = vpack.c.b16 %v3528, %v3527
  %v3544 = vpack.c.b16 %v3530, %v3529
  %v3545 = vpack.c.b16 %v3532, %v3531
  %v3546 = vpack.c.b16 %v3534, %v3533
  %v3547 = vpack.c.b16 %v3536, %v3535
  %v3548 = vpack.c.b16 %v3538, %v3537
  %v3549 = vpack.c.b16 %v3540, %v3539
  %v3550 = vpack.c.b16 %v3542, %v3541
  %3559 = vmatprep.subr.bf16.mxu0 0
  %3560 = vmatpush1.bf16.msra.mxu0 %v3550
  %3561 = vmatprep.subr.bf16.mxu0 0
  %3562 = vmatpush1.bf16.msra.mxu0 %v3549
  %3563 = vmatprep.subr.bf16.mxu0 0
  %3564 = vmatpush1.bf16.msra.mxu0 %v3548
  %3565 = vmatprep.subr.bf16.mxu0 0
  %3566 = vmatpush1.bf16.msra.mxu0 %v3547
  %3567 = vmatprep.subr.bf16.mxu0 0
  %3568 = vmatpush1.bf16.msra.mxu0 %v3546
  %3569 = vmatprep.subr.bf16.mxu0 0
  %3570 = vmatpush1.bf16.msra.mxu0 %v3545
  %3571 = vmatprep.subr.bf16.mxu0 0
  %3572 = vmatpush1.bf16.msra.mxu0 %v3544
  %3573 = vmatprep.subr.bf16.mxu0 0
  %3574 = vmatpush1.bf16.msra.mxu0 %v3543
  %3575 = vmatprep.subr.bf16.mxu0 0
  %3576 = vmatpush2.bf16.msra.mxu0 0
  %3577 = vmatprep.subr.bf16.mxu0 0
  %3578 = vmatpush2.bf16.msra.mxu0 0
  %3579 = vmatprep.subr.bf16.mxu0 0
  %3580 = vmatpush2.bf16.msra.mxu0 0
  %3581 = vmatprep.subr.bf16.mxu0 0
  %3582 = vmatpush2.bf16.msra.mxu0 0
  %3583 = vmatprep.subr.bf16.mxu0 0
  %3584 = vmatpush2.bf16.msra.mxu0 0
  %3585 = vmatprep.subr.bf16.mxu0 0
  %3586 = vmatpush2.bf16.msra.mxu0 0
  %3587 = vmatprep.subr.bf16.mxu0 0
  %3588 = vmatpush2.bf16.msra.mxu0 0
  %3589 = vmatprep.subr.bf16.mxu0 0
  %3590 = vmatpush2.bf16.msra.mxu0 0
  %3591 = vmatprep.mubr.bf16.mxu0 0
  %3592 = vmatmul.mubr.bf16.gmra.mxu0 %v419
  %v3593 = vpop.f32.mrf.mxu0
  %v3594 = vadd.f32 0.0, %v3593
  %v3595 = vpop.f32.mrf.mxu0
  %v3596 = vpop.f32.mrf.mxu0
  %v3597 = vpop.f32.mrf.mxu0
  %3598 = vdwg.mxu0
  %3599 = vst.msk [vmem:[#allocation2 + $0xe8] sm:$0xff] %vm524, %v3594
  %s3600 = scalar_lea.vmem %s5, 1920
  %v3601 = vld [vmem:[%s3600] sm:$0xf]
  %v3602 = vld [vmem:[%s3600 + $0x4] sm:$0xf]
  %v3603 = vld [vmem:[%s3600 + $0x8] sm:$0xf]
  %v3604 = vld [vmem:[%s3600 + $0xc] sm:$0xf]
  %v3605 = vld [vmem:[%s3600 + $0x10] sm:$0xf]
  %v3606 = vld [vmem:[%s3600 + $0x14] sm:$0xf]
  %v3607 = vld [vmem:[%s3600 + $0x18] sm:$0xf]
  %v3608 = vld [vmem:[%s3600 + $0x1c] sm:$0xf]
  %v3609 = vld [vmem:[%s3600 + $0x20] sm:$0xf]
  %v3610 = vld [vmem:[%s3600 + $0x24] sm:$0xf]
  %v3611 = vld [vmem:[%s3600 + $0x28] sm:$0xf]
  %v3612 = vld [vmem:[%s3600 + $0x2c] sm:$0xf]
  %v3613 = vld [vmem:[%s3600 + $0x30] sm:$0xf]
  %v3614 = vld [vmem:[%s3600 + $0x34] sm:$0xf]
  %v3615 = vld [vmem:[%s3600 + $0x38] sm:$0xf]
  %v3616 = vld [vmem:[%s3600 + $0x3c] sm:$0xf]
  %v3633 = vunpack.c.l.b16 %v3601
  %v3634 = vunpack.c.l.b16 %v3602
  %v3635 = vunpack.c.l.b16 %v3603
  %v3636 = vunpack.c.l.b16 %v3604
  %v3637 = vunpack.c.l.b16 %v3605
  %v3638 = vunpack.c.l.b16 %v3606
  %v3639 = vunpack.c.l.b16 %v3607
  %v3640 = vunpack.c.l.b16 %v3608
  %v3641 = vunpack.c.l.b16 %v3609
  %v3642 = vunpack.c.l.b16 %v3610
  %v3643 = vunpack.c.l.b16 %v3611
  %v3644 = vunpack.c.l.b16 %v3612
  %v3645 = vunpack.c.l.b16 %v3613
  %v3646 = vunpack.c.l.b16 %v3614
  %v3647 = vunpack.c.l.b16 %v3615
  %v3648 = vunpack.c.l.b16 %v3616
  %v3649 = vpack.c.b16 %v3634, %v3633
  %v3650 = vpack.c.b16 %v3636, %v3635
  %v3651 = vpack.c.b16 %v3638, %v3637
  %v3652 = vpack.c.b16 %v3640, %v3639
  %v3653 = vpack.c.b16 %v3642, %v3641
  %v3654 = vpack.c.b16 %v3644, %v3643
  %v3655 = vpack.c.b16 %v3646, %v3645
  %v3656 = vpack.c.b16 %v3648, %v3647
  %3665 = vmatprep.subr.bf16.mxu0 0
  %3666 = vmatpush1.bf16.msra.mxu0 %v3656
  %3667 = vmatprep.subr.bf16.mxu0 0
  %3668 = vmatpush1.bf16.msra.mxu0 %v3655
  %3669 = vmatprep.subr.bf16.mxu0 0
  %3670 = vmatpush1.bf16.msra.mxu0 %v3654
  %3671 = vmatprep.subr.bf16.mxu0 0
  %3672 = vmatpush1.bf16.msra.mxu0 %v3653
  %3673 = vmatprep.subr.bf16.mxu0 0
  %3674 = vmatpush1.bf16.msra.mxu0 %v3652
  %3675 = vmatprep.subr.bf16.mxu0 0
  %3676 = vmatpush1.bf16.msra.mxu0 %v3651
  %3677 = vmatprep.subr.bf16.mxu0 0
  %3678 = vmatpush1.bf16.msra.mxu0 %v3650
  %3679 = vmatprep.subr.bf16.mxu0 0
  %3680 = vmatpush1.bf16.msra.mxu0 %v3649
  %3681 = vmatprep.subr.bf16.mxu0 0
  %3682 = vmatpush2.bf16.msra.mxu0 0
  %3683 = vmatprep.subr.bf16.mxu0 0
  %3684 = vmatpush2.bf16.msra.mxu0 0
  %3685 = vmatprep.subr.bf16.mxu0 0
  %3686 = vmatpush2.bf16.msra.mxu0 0
  %3687 = vmatprep.subr.bf16.mxu0 0
  %3688 = vmatpush2.bf16.msra.mxu0 0
  %3689 = vmatprep.subr.bf16.mxu0 0
  %3690 = vmatpush2.bf16.msra.mxu0 0
  %3691 = vmatprep.subr.bf16.mxu0 0
  %3692 = vmatpush2.bf16.msra.mxu0 0
  %3693 = vmatprep.subr.bf16.mxu0 0
  %3694 = vmatpush2.bf16.msra.mxu0 0
  %3695 = vmatprep.subr.bf16.mxu0 0
  %3696 = vmatpush2.bf16.msra.mxu0 0
  %3697 = vmatprep.mubr.bf16.mxu0 0
  %3698 = vmatmul.mubr.bf16.gmra.mxu0 %v419
  %v3699 = vpop.f32.mrf.mxu0
  %v3700 = vadd.f32 0.0, %v3699
  %v3701 = vpop.f32.mrf.mxu0
  %v3702 = vpop.f32.mrf.mxu0
  %v3703 = vpop.f32.mrf.mxu0
  %3704 = vdwg.mxu0
  %3705 = vst.msk [vmem:[#allocation2 + $0xf0] sm:$0xff] %vm524, %v3700
  %s3706 = scalar_lea.vmem %s5, 1984
  %v3707 = vld [vmem:[%s3706] sm:$0xf]
  %v3708 = vld [vmem:[%s3706 + $0x4] sm:$0xf]
  %v3709 = vld [vmem:[%s3706 + $0x8] sm:$0xf]
  %v3710 = vld [vmem:[%s3706 + $0xc] sm:$0xf]
  %v3711 = vld [vmem:[%s3706 + $0x10] sm:$0xf]
  %v3712 = vld [vmem:[%s3706 + $0x14] sm:$0xf]
  %v3713 = vld [vmem:[%s3706 + $0x18] sm:$0xf]
  %v3714 = vld [vmem:[%s3706 + $0x1c] sm:$0xf]
  %v3715 = vld [vmem:[%s3706 + $0x20] sm:$0xf]
  %v3716 = vld [vmem:[%s3706 + $0x24] sm:$0xf]
  %v3717 = vld [vmem:[%s3706 + $0x28] sm:$0xf]
  %v3718 = vld [vmem:[%s3706 + $0x2c] sm:$0xf]
  %v3719 = vld [vmem:[%s3706 + $0x30] sm:$0xf]
  %v3720 = vld [vmem:[%s3706 + $0x34] sm:$0xf]
  %v3721 = vld [vmem:[%s3706 + $0x38] sm:$0xf]
  %v3722 = vld [vmem:[%s3706 + $0x3c] sm:$0xf]
  %v3739 = vunpack.c.l.b16 %v3707
  %v3740 = vunpack.c.l.b16 %v3708
  %v3741 = vunpack.c.l.b16 %v3709
  %v3742 = vunpack.c.l.b16 %v3710
  %v3743 = vunpack.c.l.b16 %v3711
  %v3744 = vunpack.c.l.b16 %v3712
  %v3745 = vunpack.c.l.b16 %v3713
  %v3746 = vunpack.c.l.b16 %v3714
  %v3747 = vunpack.c.l.b16 %v3715
  %v3748 = vunpack.c.l.b16 %v3716
  %v3749 = vunpack.c.l.b16 %v3717
  %v3750 = vunpack.c.l.b16 %v3718
  %v3751 = vunpack.c.l.b16 %v3719
  %v3752 = vunpack.c.l.b16 %v3720
  %v3753 = vunpack.c.l.b16 %v3721
  %v3754 = vunpack.c.l.b16 %v3722
  %v3755 = vpack.c.b16 %v3740, %v3739
  %v3756 = vpack.c.b16 %v3742, %v3741
  %v3757 = vpack.c.b16 %v3744, %v3743
  %v3758 = vpack.c.b16 %v3746, %v3745
  %v3759 = vpack.c.b16 %v3748, %v3747
  %v3760 = vpack.c.b16 %v3750, %v3749
  %v3761 = vpack.c.b16 %v3752, %v3751
  %v3762 = vpack.c.b16 %v3754, %v3753
  %3771 = vmatprep.subr.bf16.mxu0 0
  %3772 = vmatpush1.bf16.msra.mxu0 %v3762
  %3773 = vmatprep.subr.bf16.mxu0 0
  %3774 = vmatpush1.bf16.msra.mxu0 %v3761
  %3775 = vmatprep.subr.bf16.mxu0 0
  %3776 = vmatpush1.bf16.msra.mxu0 %v3760
  %3777 = vmatprep.subr.bf16.mxu0 0
  %3778 = vmatpush1.bf16.msra.mxu0 %v3759
  %3779 = vmatprep.subr.bf16.mxu0 0
  %3780 = vmatpush1.bf16.msra.mxu0 %v3758
  %3781 = vmatprep.subr.bf16.mxu0 0
  %3782 = vmatpush1.bf16.msra.mxu0 %v3757
  %3783 = vmatprep.subr.bf16.mxu0 0
  %3784 = vmatpush1.bf16.msra.mxu0 %v3756
  %3785 = vmatprep.subr.bf16.mxu0 0
  %3786 = vmatpush1.bf16.msra.mxu0 %v3755
  %3787 = vmatprep.subr.bf16.mxu0 0
  %3788 = vmatpush2.bf16.msra.mxu0 0
  %3789 = vmatprep.subr.bf16.mxu0 0
  %3790 = vmatpush2.bf16.msra.mxu0 0
  %3791 = vmatprep.subr.bf16.mxu0 0
  %3792 = vmatpush2.bf16.msra.mxu0 0
  %3793 = vmatprep.subr.bf16.mxu0 0
  %3794 = vmatpush2.bf16.msra.mxu0 0
  %3795 = vmatprep.subr.bf16.mxu0 0
  %3796 = vmatpush2.bf16.msra.mxu0 0
  %3797 = vmatprep.subr.bf16.mxu0 0
  %3798 = vmatpush2.bf16.msra.mxu0 0
  %3799 = vmatprep.subr.bf16.mxu0 0
  %3800 = vmatpush2.bf16.msra.mxu0 0
  %3801 = vmatprep.subr.bf16.mxu0 0
  %3802 = vmatpush2.bf16.msra.mxu0 0
  %3803 = vmatprep.mubr.bf16.mxu0 0
  %3804 = vmatmul.mubr.bf16.gmra.mxu0 %v419
  %v3805 = vpop.f32.mrf.mxu0
  %v3806 = vadd.f32 0.0, %v3805
  %v3807 = vpop.f32.mrf.mxu0
  %v3808 = vpop.f32.mrf.mxu0
  %v3809 = vpop.f32.mrf.mxu0
  %3810 = vdwg.mxu0
  %3811 = vst.msk [vmem:[#allocation2 + $0xf8] sm:$0xff] %vm524, %v3806
  %s3812 = scalar_lea.vmem %s5, 2048
  %v3813 = vld [vmem:[%s3812] sm:$0xf]
  %v3814 = vld [vmem:[%s3812 + $0x4] sm:$0xf]
  %v3815 = vld [vmem:[%s3812 + $0x8] sm:$0xf]
  %v3816 = vld [vmem:[%s3812 + $0xc] sm:$0xf]
  %v3817 = vld [vmem:[%s3812 + $0x10] sm:$0xf]
  %v3818 = vld [vmem:[%s3812 + $0x14] sm:$0xf]
  %v3819 = vld [vmem:[%s3812 + $0x18] sm:$0xf]
  %v3820 = vld [vmem:[%s3812 + $0x1c] sm:$0xf]
  %v3821 = vld [vmem:[%s3812 + $0x20] sm:$0xf]
  %v3822 = vld [vmem:[%s3812 + $0x24] sm:$0xf]
  %v3823 = vld [vmem:[%s3812 + $0x28] sm:$0xf]
  %v3824 = vld [vmem:[%s3812 + $0x2c] sm:$0xf]
  %v3825 = vld [vmem:[%s3812 + $0x30] sm:$0xf]
  %v3826 = vld [vmem:[%s3812 + $0x34] sm:$0xf]
  %v3827 = vld [vmem:[%s3812 + $0x38] sm:$0xf]
  %v3828 = vld [vmem:[%s3812 + $0x3c] sm:$0xf]
  %v3845 = vunpack.c.l.b16 %v3813
  %v3846 = vunpack.c.l.b16 %v3814
  %v3847 = vunpack.c.l.b16 %v3815
  %v3848 = vunpack.c.l.b16 %v3816
  %v3849 = vunpack.c.l.b16 %v3817
  %v3850 = vunpack.c.l.b16 %v3818
  %v3851 = vunpack.c.l.b16 %v3819
  %v3852 = vunpack.c.l.b16 %v3820
  %v3853 = vunpack.c.l.b16 %v3821
  %v3854 = vunpack.c.l.b16 %v3822
  %v3855 = vunpack.c.l.b16 %v3823
  %v3856 = vunpack.c.l.b16 %v3824
  %v3857 = vunpack.c.l.b16 %v3825
  %v3858 = vunpack.c.l.b16 %v3826
  %v3859 = vunpack.c.l.b16 %v3827
  %v3860 = vunpack.c.l.b16 %v3828
  %v3861 = vpack.c.b16 %v3846, %v3845
  %v3862 = vpack.c.b16 %v3848, %v3847
  %v3863 = vpack.c.b16 %v3850, %v3849
  %v3864 = vpack.c.b16 %v3852, %v3851
  %v3865 = vpack.c.b16 %v3854, %v3853
  %v3866 = vpack.c.b16 %v3856, %v3855
  %v3867 = vpack.c.b16 %v3858, %v3857
  %v3868 = vpack.c.b16 %v3860, %v3859
  %3877 = vmatprep.subr.bf16.mxu0 0
  %3878 = vmatpush1.bf16.msra.mxu0 %v3868
  %3879 = vmatprep.subr.bf16.mxu0 0
  %3880 = vmatpush1.bf16.msra.mxu0 %v3867
  %3881 = vmatprep.subr.bf16.mxu0 0
  %3882 = vmatpush1.bf16.msra.mxu0 %v3866
  %3883 = vmatprep.subr.bf16.mxu0 0
  %3884 = vmatpush1.bf16.msra.mxu0 %v3865
  %3885 = vmatprep.subr.bf16.mxu0 0
  %3886 = vmatpush1.bf16.msra.mxu0 %v3864
  %3887 = vmatprep.subr.bf16.mxu0 0
  %3888 = vmatpush1.bf16.msra.mxu0 %v3863
  %3889 = vmatprep.subr.bf16.mxu0 0
  %3890 = vmatpush1.bf16.msra.mxu0 %v3862
  %3891 = vmatprep.subr.bf16.mxu0 0
  %3892 = vmatpush1.bf16.msra.mxu0 %v3861
  %3893 = vmatprep.subr.bf16.mxu0 0
  %3894 = vmatpush2.bf16.msra.mxu0 0
  %3895 = vmatprep.subr.bf16.mxu0 0
  %3896 = vmatpush2.bf16.msra.mxu0 0
  %3897 = vmatprep.subr.bf16.mxu0 0
  %3898 = vmatpush2.bf16.msra.mxu0 0
  %3899 = vmatprep.subr.bf16.mxu0 0
  %3900 = vmatpush2.bf16.msra.mxu0 0
  %3901 = vmatprep.subr.bf16.mxu0 0
  %3902 = vmatpush2.bf16.msra.mxu0 0
  %3903 = vmatprep.subr.bf16.mxu0 0
  %3904 = vmatpush2.bf16.msra.mxu0 0
  %3905 = vmatprep.subr.bf16.mxu0 0
  %3906 = vmatpush2.bf16.msra.mxu0 0
  %3907 = vmatprep.subr.bf16.mxu0 0
  %3908 = vmatpush2.bf16.msra.mxu0 0
  %3909 = vmatprep.mubr.bf16.mxu0 0
  %3910 = vmatmul.mubr.bf16.gmra.mxu0 %v419
  %v3911 = vpop.f32.mrf.mxu0
  %v3912 = vadd.f32 0.0, %v3911
  %v3913 = vpop.f32.mrf.mxu0
  %v3914 = vpop.f32.mrf.mxu0
  %v3915 = vpop.f32.mrf.mxu0
  %3916 = vdwg.mxu0
  %3917 = vst.msk [vmem:[#allocation2 + $0x100] sm:$0xff] %vm524, %v3912
  %s3918 = scalar_lea.vmem %s5, 2112
  %v3919 = vld [vmem:[%s3918] sm:$0xf]
  %v3920 = vld [vmem:[%s3918 + $0x4] sm:$0xf]
  %v3921 = vld [vmem:[%s3918 + $0x8] sm:$0xf]
  %v3922 = vld [vmem:[%s3918 + $0xc] sm:$0xf]
  %v3923 = vld [vmem:[%s3918 + $0x10] sm:$0xf]
  %v3924 = vld [vmem:[%s3918 + $0x14] sm:$0xf]
  %v3925 = vld [vmem:[%s3918 + $0x18] sm:$0xf]
  %v3926 = vld [vmem:[%s3918 + $0x1c] sm:$0xf]
  %v3927 = vld [vmem:[%s3918 + $0x20] sm:$0xf]
  %v3928 = vld [vmem:[%s3918 + $0x24] sm:$0xf]
  %v3929 = vld [vmem:[%s3918 + $0x28] sm:$0xf]
  %v3930 = vld [vmem:[%s3918 + $0x2c] sm:$0xf]
  %v3931 = vld [vmem:[%s3918 + $0x30] sm:$0xf]
  %v3932 = vld [vmem:[%s3918 + $0x34] sm:$0xf]
  %v3933 = vld [vmem:[%s3918 + $0x38] sm:$0xf]
  %v3934 = vld [vmem:[%s3918 + $0x3c] sm:$0xf]
  %v3951 = vunpack.c.l.b16 %v3919
  %v3952 = vunpack.c.l.b16 %v3920
  %v3953 = vunpack.c.l.b16 %v3921
  %v3954 = vunpack.c.l.b16 %v3922
  %v3955 = vunpack.c.l.b16 %v3923
  %v3956 = vunpack.c.l.b16 %v3924
  %v3957 = vunpack.c.l.b16 %v3925
  %v3958 = vunpack.c.l.b16 %v3926
  %v3959 = vunpack.c.l.b16 %v3927
  %v3960 = vunpack.c.l.b16 %v3928
  %v3961 = vunpack.c.l.b16 %v3929
  %v3962 = vunpack.c.l.b16 %v3930
  %v3963 = vunpack.c.l.b16 %v3931
  %v3964 = vunpack.c.l.b16 %v3932
  %v3965 = vunpack.c.l.b16 %v3933
  %v3966 = vunpack.c.l.b16 %v3934
  %v3967 = vpack.c.b16 %v3952, %v3951
  %v3968 = vpack.c.b16 %v3954, %v3953
  %v3969 = vpack.c.b16 %v3956, %v3955
  %v3970 = vpack.c.b16 %v3958, %v3957
  %v3971 = vpack.c.b16 %v3960, %v3959
  %v3972 = vpack.c.b16 %v3962, %v3961
  %v3973 = vpack.c.b16 %v3964, %v3963
  %v3974 = vpack.c.b16 %v3966, %v3965
  %3983 = vmatprep.subr.bf16.mxu0 0
  %3984 = vmatpush1.bf16.msra.mxu0 %v3974
  %3985 = vmatprep.subr.bf16.mxu0 0
  %3986 = vmatpush1.bf16.msra.mxu0 %v3973
  %3987 = vmatprep.subr.bf16.mxu0 0
  %3988 = vmatpush1.bf16.msra.mxu0 %v3972
  %3989 = vmatprep.subr.bf16.mxu0 0
  %3990 = vmatpush1.bf16.msra.mxu0 %v3971
  %3991 = vmatprep.subr.bf16.mxu0 0
  %3992 = vmatpush1.bf16.msra.mxu0 %v3970
  %3993 = vmatprep.subr.bf16.mxu0 0
  %3994 = vmatpush1.bf16.msra.mxu0 %v3969
  %3995 = vmatprep.subr.bf16.mxu0 0
  %3996 = vmatpush1.bf16.msra.mxu0 %v3968
  %3997 = vmatprep.subr.bf16.mxu0 0
  %3998 = vmatpush1.bf16.msra.mxu0 %v3967
  %3999 = vmatprep.subr.bf16.mxu0 0
  %4000 = vmatpush2.bf16.msra.mxu0 0
  %4001 = vmatprep.subr.bf16.mxu0 0
  %4002 = vmatpush2.bf16.msra.mxu0 0
  %4003 = vmatprep.subr.bf16.mxu0 0
  %4004 = vmatpush2.bf16.msra.mxu0 0
  %4005 = vmatprep.subr.bf16.mxu0 0
  %4006 = vmatpush2.bf16.msra.mxu0 0
  %4007 = vmatprep.subr.bf16.mxu0 0
  %4008 = vmatpush2.bf16.msra.mxu0 0
  %4009 = vmatprep.subr.bf16.mxu0 0
  %4010 = vmatpush2.bf16.msra.mxu0 0
  %4011 = vmatprep.subr.bf16.mxu0 0
  %4012 = vmatpush2.bf16.msra.mxu0 0
  %4013 = vmatprep.subr.bf16.mxu0 0
  %4014 = vmatpush2.bf16.msra.mxu0 0
  %4015 = vmatprep.mubr.bf16.mxu0 0
  %4016 = vmatmul.mubr.bf16.gmra.mxu0 %v419
  %v4017 = vpop.f32.mrf.mxu0
  %v4018 = vadd.f32 0.0, %v4017
  %v4019 = vpop.f32.mrf.mxu0
  %v4020 = vpop.f32.mrf.mxu0
  %v4021 = vpop.f32.mrf.mxu0
  %4022 = vdwg.mxu0
  %4023 = vst.msk [vmem:[#allocation2 + $0x108] sm:$0xff] %vm524, %v4018
  %s4024 = scalar_lea.vmem %s5, 2176
  %v4025 = vld [vmem:[%s4024] sm:$0xf]
  %v4026 = vld [vmem:[%s4024 + $0x4] sm:$0xf]
  %v4027 = vld [vmem:[%s4024 + $0x8] sm:$0xf]
  %v4028 = vld [vmem:[%s4024 + $0xc] sm:$0xf]
  %v4029 = vld [vmem:[%s4024 + $0x10] sm:$0xf]
  %v4030 = vld [vmem:[%s4024 + $0x14] sm:$0xf]
  %v4031 = vld [vmem:[%s4024 + $0x18] sm:$0xf]
  %v4032 = vld [vmem:[%s4024 + $0x1c] sm:$0xf]
  %v4033 = vld [vmem:[%s4024 + $0x20] sm:$0xf]
  %v4034 = vld [vmem:[%s4024 + $0x24] sm:$0xf]
  %v4035 = vld [vmem:[%s4024 + $0x28] sm:$0xf]
  %v4036 = vld [vmem:[%s4024 + $0x2c] sm:$0xf]
  %v4037 = vld [vmem:[%s4024 + $0x30] sm:$0xf]
  %v4038 = vld [vmem:[%s4024 + $0x34] sm:$0xf]
  %v4039 = vld [vmem:[%s4024 + $0x38] sm:$0xf]
  %v4040 = vld [vmem:[%s4024 + $0x3c] sm:$0xf]
  %v4057 = vunpack.c.l.b16 %v4025
  %v4058 = vunpack.c.l.b16 %v4026
  %v4059 = vunpack.c.l.b16 %v4027
  %v4060 = vunpack.c.l.b16 %v4028
  %v4061 = vunpack.c.l.b16 %v4029
  %v4062 = vunpack.c.l.b16 %v4030
  %v4063 = vunpack.c.l.b16 %v4031
  %v4064 = vunpack.c.l.b16 %v4032
  %v4065 = vunpack.c.l.b16 %v4033
  %v4066 = vunpack.c.l.b16 %v4034
  %v4067 = vunpack.c.l.b16 %v4035
  %v4068 = vunpack.c.l.b16 %v4036
  %v4069 = vunpack.c.l.b16 %v4037
  %v4070 = vunpack.c.l.b16 %v4038
  %v4071 = vunpack.c.l.b16 %v4039
  %v4072 = vunpack.c.l.b16 %v4040
  %v4073 = vpack.c.b16 %v4058, %v4057
  %v4074 = vpack.c.b16 %v4060, %v4059
  %v4075 = vpack.c.b16 %v4062, %v4061
  %v4076 = vpack.c.b16 %v4064, %v4063
  %v4077 = vpack.c.b16 %v4066, %v4065
  %v4078 = vpack.c.b16 %v4068, %v4067
  %v4079 = vpack.c.b16 %v4070, %v4069
  %v4080 = vpack.c.b16 %v4072, %v4071
  %4089 = vmatprep.subr.bf16.mxu0 0
  %4090 = vmatpush1.bf16.msra.mxu0 %v4080
  %4091 = vmatprep.subr.bf16.mxu0 0
  %4092 = vmatpush1.bf16.msra.mxu0 %v4079
  %4093 = vmatprep.subr.bf16.mxu0 0
  %4094 = vmatpush1.bf16.msra.mxu0 %v4078
  %4095 = vmatprep.subr.bf16.mxu0 0
  %4096 = vmatpush1.bf16.msra.mxu0 %v4077
  %4097 = vmatprep.subr.bf16.mxu0 0
  %4098 = vmatpush1.bf16.msra.mxu0 %v4076
  %4099 = vmatprep.subr.bf16.mxu0 0
  %4100 = vmatpush1.bf16.msra.mxu0 %v4075
  %4101 = vmatprep.subr.bf16.mxu0 0
  %4102 = vmatpush1.bf16.msra.mxu0 %v4074
  %4103 = vmatprep.subr.bf16.mxu0 0
  %4104 = vmatpush1.bf16.msra.mxu0 %v4073
  %4105 = vmatprep.subr.bf16.mxu0 0
  %4106 = vmatpush2.bf16.msra.mxu0 0
  %4107 = vmatprep.subr.bf16.mxu0 0
  %4108 = vmatpush2.bf16.msra.mxu0 0
  %4109 = vmatprep.subr.bf16.mxu0 0
  %4110 = vmatpush2.bf16.msra.mxu0 0
  %4111 = vmatprep.subr.bf16.mxu0 0
  %4112 = vmatpush2.bf16.msra.mxu0 0
  %4113 = vmatprep.subr.bf16.mxu0 0
  %4114 = vmatpush2.bf16.msra.mxu0 0
  %4115 = vmatprep.subr.bf16.mxu0 0
  %4116 = vmatpush2.bf16.msra.mxu0 0
  %4117 = vmatprep.subr.bf16.mxu0 0
  %4118 = vmatpush2.bf16.msra.mxu0 0
  %4119 = vmatprep.subr.bf16.mxu0 0
  %4120 = vmatpush2.bf16.msra.mxu0 0
  %4121 = vmatprep.mubr.bf16.mxu0 0
  %4122 = vmatmul.mubr.bf16.gmra.mxu0 %v419
  %v4123 = vpop.f32.mrf.mxu0
  %v4124 = vadd.f32 0.0, %v4123
  %v4125 = vpop.f32.mrf.mxu0
  %v4126 = vpop.f32.mrf.mxu0
  %v4127 = vpop.f32.mrf.mxu0
  %4128 = vdwg.mxu0
  %4129 = vst.msk [vmem:[#allocation2 + $0x110] sm:$0xff] %vm524, %v4124
  %s4130 = scalar_lea.vmem %s5, 2240
  %v4131 = vld [vmem:[%s4130] sm:$0xf]
  %v4132 = vld [vmem:[%s4130 + $0x4] sm:$0xf]
  %v4133 = vld [vmem:[%s4130 + $0x8] sm:$0xf]
  %v4134 = vld [vmem:[%s4130 + $0xc] sm:$0xf]
  %v4135 = vld [vmem:[%s4130 + $0x10] sm:$0xf]
  %v4136 = vld [vmem:[%s4130 + $0x14] sm:$0xf]
  %v4137 = vld [vmem:[%s4130 + $0x18] sm:$0xf]
  %v4138 = vld [vmem:[%s4130 + $0x1c] sm:$0xf]
  %v4139 = vld [vmem:[%s4130 + $0x20] sm:$0xf]
  %v4140 = vld [vmem:[%s4130 + $0x24] sm:$0xf]
  %v4141 = vld [vmem:[%s4130 + $0x28] sm:$0xf]
  %v4142 = vld [vmem:[%s4130 + $0x2c] sm:$0xf]
  %v4143 = vld [vmem:[%s4130 + $0x30] sm:$0xf]
  %v4144 = vld [vmem:[%s4130 + $0x34] sm:$0xf]
  %v4145 = vld [vmem:[%s4130 + $0x38] sm:$0xf]
  %v4146 = vld [vmem:[%s4130 + $0x3c] sm:$0xf]
  %v4163 = vunpack.c.l.b16 %v4131
  %v4164 = vunpack.c.l.b16 %v4132
  %v4165 = vunpack.c.l.b16 %v4133
  %v4166 = vunpack.c.l.b16 %v4134
  %v4167 = vunpack.c.l.b16 %v4135
  %v4168 = vunpack.c.l.b16 %v4136
  %v4169 = vunpack.c.l.b16 %v4137
  %v4170 = vunpack.c.l.b16 %v4138
  %v4171 = vunpack.c.l.b16 %v4139
  %v4172 = vunpack.c.l.b16 %v4140
  %v4173 = vunpack.c.l.b16 %v4141
  %v4174 = vunpack.c.l.b16 %v4142
  %v4175 = vunpack.c.l.b16 %v4143
  %v4176 = vunpack.c.l.b16 %v4144
  %v4177 = vunpack.c.l.b16 %v4145
  %v4178 = vunpack.c.l.b16 %v4146
  %v4179 = vpack.c.b16 %v4164, %v4163
  %v4180 = vpack.c.b16 %v4166, %v4165
  %v4181 = vpack.c.b16 %v4168, %v4167
  %v4182 = vpack.c.b16 %v4170, %v4169
  %v4183 = vpack.c.b16 %v4172, %v4171
  %v4184 = vpack.c.b16 %v4174, %v4173
  %v4185 = vpack.c.b16 %v4176, %v4175
  %v4186 = vpack.c.b16 %v4178, %v4177
  %4195 = vmatprep.subr.bf16.mxu0 0
  %4196 = vmatpush1.bf16.msra.mxu0 %v4186
  %4197 = vmatprep.subr.bf16.mxu0 0
  %4198 = vmatpush1.bf16.msra.mxu0 %v4185
  %4199 = vmatprep.subr.bf16.mxu0 0
  %4200 = vmatpush1.bf16.msra.mxu0 %v4184
  %4201 = vmatprep.subr.bf16.mxu0 0
  %4202 = vmatpush1.bf16.msra.mxu0 %v4183
  %4203 = vmatprep.subr.bf16.mxu0 0
  %4204 = vmatpush1.bf16.msra.mxu0 %v4182
  %4205 = vmatprep.subr.bf16.mxu0 0
  %4206 = vmatpush1.bf16.msra.mxu0 %v4181
  %4207 = vmatprep.subr.bf16.mxu0 0
  %4208 = vmatpush1.bf16.msra.mxu0 %v4180
  %4209 = vmatprep.subr.bf16.mxu0 0
  %4210 = vmatpush1.bf16.msra.mxu0 %v4179
  %4211 = vmatprep.subr.bf16.mxu0 0
  %4212 = vmatpush2.bf16.msra.mxu0 0
  %4213 = vmatprep.subr.bf16.mxu0 0
  %4214 = vmatpush2.bf16.msra.mxu0 0
  %4215 = vmatprep.subr.bf16.mxu0 0
  %4216 = vmatpush2.bf16.msra.mxu0 0
  %4217 = vmatprep.subr.bf16.mxu0 0
  %4218 = vmatpush2.bf16.msra.mxu0 0
  %4219 = vmatprep.subr.bf16.mxu0 0
  %4220 = vmatpush2.bf16.msra.mxu0 0
  %4221 = vmatprep.subr.bf16.mxu0 0
  %4222 = vmatpush2.bf16.msra.mxu0 0
  %4223 = vmatprep.subr.bf16.mxu0 0
  %4224 = vmatpush2.bf16.msra.mxu0 0
  %4225 = vmatprep.subr.bf16.mxu0 0
  %4226 = vmatpush2.bf16.msra.mxu0 0
  %4227 = vmatprep.mubr.bf16.mxu0 0
  %4228 = vmatmul.mubr.bf16.gmra.mxu0 %v419
  %v4229 = vpop.f32.mrf.mxu0
  %v4230 = vadd.f32 0.0, %v4229
  %v4231 = vpop.f32.mrf.mxu0
  %v4232 = vpop.f32.mrf.mxu0
  %v4233 = vpop.f32.mrf.mxu0
  %4234 = vdwg.mxu0
  %4235 = vst.msk [vmem:[#allocation2 + $0x118] sm:$0xff] %vm524, %v4230
  %s4236 = scalar_lea.vmem %s5, 2304
  %v4237 = vld [vmem:[%s4236] sm:$0xf]
  %v4238 = vld [vmem:[%s4236 + $0x4] sm:$0xf]
  %v4239 = vld [vmem:[%s4236 + $0x8] sm:$0xf]
  %v4240 = vld [vmem:[%s4236 + $0xc] sm:$0xf]
  %v4241 = vld [vmem:[%s4236 + $0x10] sm:$0xf]
  %v4242 = vld [vmem:[%s4236 + $0x14] sm:$0xf]
  %v4243 = vld [vmem:[%s4236 + $0x18] sm:$0xf]
  %v4244 = vld [vmem:[%s4236 + $0x1c] sm:$0xf]
  %v4245 = vld [vmem:[%s4236 + $0x20] sm:$0xf]
  %v4246 = vld [vmem:[%s4236 + $0x24] sm:$0xf]
  %v4247 = vld [vmem:[%s4236 + $0x28] sm:$0xf]
  %v4248 = vld [vmem:[%s4236 + $0x2c] sm:$0xf]
  %v4249 = vld [vmem:[%s4236 + $0x30] sm:$0xf]
  %v4250 = vld [vmem:[%s4236 + $0x34] sm:$0xf]
  %v4251 = vld [vmem:[%s4236 + $0x38] sm:$0xf]
  %v4252 = vld [vmem:[%s4236 + $0x3c] sm:$0xf]
  %v4269 = vunpack.c.l.b16 %v4237
  %v4270 = vunpack.c.l.b16 %v4238
  %v4271 = vunpack.c.l.b16 %v4239
  %v4272 = vunpack.c.l.b16 %v4240
  %v4273 = vunpack.c.l.b16 %v4241
  %v4274 = vunpack.c.l.b16 %v4242
  %v4275 = vunpack.c.l.b16 %v4243
  %v4276 = vunpack.c.l.b16 %v4244
  %v4277 = vunpack.c.l.b16 %v4245
  %v4278 = vunpack.c.l.b16 %v4246
  %v4279 = vunpack.c.l.b16 %v4247
  %v4280 = vunpack.c.l.b16 %v4248
  %v4281 = vunpack.c.l.b16 %v4249
  %v4282 = vunpack.c.l.b16 %v4250
  %v4283 = vunpack.c.l.b16 %v4251
  %v4284 = vunpack.c.l.b16 %v4252
  %v4285 = vpack.c.b16 %v4270, %v4269
  %v4286 = vpack.c.b16 %v4272, %v4271
  %v4287 = vpack.c.b16 %v4274, %v4273
  %v4288 = vpack.c.b16 %v4276, %v4275
  %v4289 = vpack.c.b16 %v4278, %v4277
  %v4290 = vpack.c.b16 %v4280, %v4279
  %v4291 = vpack.c.b16 %v4282, %v4281
  %v4292 = vpack.c.b16 %v4284, %v4283
  %4301 = vmatprep.subr.bf16.mxu0 0
  %4302 = vmatpush1.bf16.msra.mxu0 %v4292
  %4303 = vmatprep.subr.bf16.mxu0 0
  %4304 = vmatpush1.bf16.msra.mxu0 %v4291
  %4305 = vmatprep.subr.bf16.mxu0 0
  %4306 = vmatpush1.bf16.msra.mxu0 %v4290
  %4307 = vmatprep.subr.bf16.mxu0 0
  %4308 = vmatpush1.bf16.msra.mxu0 %v4289
  %4309 = vmatprep.subr.bf16.mxu0 0
  %4310 = vmatpush1.bf16.msra.mxu0 %v4288
  %4311 = vmatprep.subr.bf16.mxu0 0
  %4312 = vmatpush1.bf16.msra.mxu0 %v4287
  %4313 = vmatprep.subr.bf16.mxu0 0
  %4314 = vmatpush1.bf16.msra.mxu0 %v4286
  %4315 = vmatprep.subr.bf16.mxu0 0
  %4316 = vmatpush1.bf16.msra.mxu0 %v4285
  %4317 = vmatprep.subr.bf16.mxu0 0
  %4318 = vmatpush2.bf16.msra.mxu0 0
  %4319 = vmatprep.subr.bf16.mxu0 0
  %4320 = vmatpush2.bf16.msra.mxu0 0
  %4321 = vmatprep.subr.bf16.mxu0 0
  %4322 = vmatpush2.bf16.msra.mxu0 0
  %4323 = vmatprep.subr.bf16.mxu0 0
  %4324 = vmatpush2.bf16.msra.mxu0 0
  %4325 = vmatprep.subr.bf16.mxu0 0
  %4326 = vmatpush2.bf16.msra.mxu0 0
  %4327 = vmatprep.subr.bf16.mxu0 0
  %4328 = vmatpush2.bf16.msra.mxu0 0
  %4329 = vmatprep.subr.bf16.mxu0 0
  %4330 = vmatpush2.bf16.msra.mxu0 0
  %4331 = vmatprep.subr.bf16.mxu0 0
  %4332 = vmatpush2.bf16.msra.mxu0 0
  %4333 = vmatprep.mubr.bf16.mxu0 0
  %4334 = vmatmul.mubr.bf16.gmra.mxu0 %v419
  %v4335 = vpop.f32.mrf.mxu0
  %v4336 = vadd.f32 0.0, %v4335
  %v4337 = vpop.f32.mrf.mxu0
  %v4338 = vpop.f32.mrf.mxu0
  %v4339 = vpop.f32.mrf.mxu0
  %4340 = vdwg.mxu0
  %4341 = vst.msk [vmem:[#allocation2 + $0x120] sm:$0xff] %vm524, %v4336
  %s4342 = scalar_lea.vmem %s5, 2368
  %v4343 = vld [vmem:[%s4342] sm:$0xf]
  %v4344 = vld [vmem:[%s4342 + $0x4] sm:$0xf]
  %v4345 = vld [vmem:[%s4342 + $0x8] sm:$0xf]
  %v4346 = vld [vmem:[%s4342 + $0xc] sm:$0xf]
  %v4347 = vld [vmem:[%s4342 + $0x10] sm:$0xf]
  %v4348 = vld [vmem:[%s4342 + $0x14] sm:$0xf]
  %v4349 = vld [vmem:[%s4342 + $0x18] sm:$0xf]
  %v4350 = vld [vmem:[%s4342 + $0x1c] sm:$0xf]
  %v4351 = vld [vmem:[%s4342 + $0x20] sm:$0xf]
  %v4352 = vld [vmem:[%s4342 + $0x24] sm:$0xf]
  %v4353 = vld [vmem:[%s4342 + $0x28] sm:$0xf]
  %v4354 = vld [vmem:[%s4342 + $0x2c] sm:$0xf]
  %v4355 = vld [vmem:[%s4342 + $0x30] sm:$0xf]
  %v4356 = vld [vmem:[%s4342 + $0x34] sm:$0xf]
  %v4357 = vld [vmem:[%s4342 + $0x38] sm:$0xf]
  %v4358 = vld [vmem:[%s4342 + $0x3c] sm:$0xf]
  %v4375 = vunpack.c.l.b16 %v4343
  %v4376 = vunpack.c.l.b16 %v4344
  %v4377 = vunpack.c.l.b16 %v4345
  %v4378 = vunpack.c.l.b16 %v4346
  %v4379 = vunpack.c.l.b16 %v4347
  %v4380 = vunpack.c.l.b16 %v4348
  %v4381 = vunpack.c.l.b16 %v4349
  %v4382 = vunpack.c.l.b16 %v4350
  %v4383 = vunpack.c.l.b16 %v4351
  %v4384 = vunpack.c.l.b16 %v4352
  %v4385 = vunpack.c.l.b16 %v4353
  %v4386 = vunpack.c.l.b16 %v4354
  %v4387 = vunpack.c.l.b16 %v4355
  %v4388 = vunpack.c.l.b16 %v4356
  %v4389 = vunpack.c.l.b16 %v4357
  %v4390 = vunpack.c.l.b16 %v4358
  %v4391 = vpack.c.b16 %v4376, %v4375
  %v4392 = vpack.c.b16 %v4378, %v4377
  %v4393 = vpack.c.b16 %v4380, %v4379
  %v4394 = vpack.c.b16 %v4382, %v4381
  %v4395 = vpack.c.b16 %v4384, %v4383
  %v4396 = vpack.c.b16 %v4386, %v4385
  %v4397 = vpack.c.b16 %v4388, %v4387
  %v4398 = vpack.c.b16 %v4390, %v4389
  %4407 = vmatprep.subr.bf16.mxu0 0
  %4408 = vmatpush1.bf16.msra.mxu0 %v4398
  %4409 = vmatprep.subr.bf16.mxu0 0
  %4410 = vmatpush1.bf16.msra.mxu0 %v4397
  %4411 = vmatprep.subr.bf16.mxu0 0
  %4412 = vmatpush1.bf16.msra.mxu0 %v4396
  %4413 = vmatprep.subr.bf16.mxu0 0
  %4414 = vmatpush1.bf16.msra.mxu0 %v4395
  %4415 = vmatprep.subr.bf16.mxu0 0
  %4416 = vmatpush1.bf16.msra.mxu0 %v4394
  %4417 = vmatprep.subr.bf16.mxu0 0
  %4418 = vmatpush1.bf16.msra.mxu0 %v4393
  %4419 = vmatprep.subr.bf16.mxu0 0
  %4420 = vmatpush1.bf16.msra.mxu0 %v4392
  %4421 = vmatprep.subr.bf16.mxu0 0
  %4422 = vmatpush1.bf16.msra.mxu0 %v4391
  %4423 = vmatprep.subr.bf16.mxu0 0
  %4424 = vmatpush2.bf16.msra.mxu0 0
  %4425 = vmatprep.subr.bf16.mxu0 0
  %4426 = vmatpush2.bf16.msra.mxu0 0
  %4427 = vmatprep.subr.bf16.mxu0 0
  %4428 = vmatpush2.bf16.msra.mxu0 0
  %4429 = vmatprep.subr.bf16.mxu0 0
  %4430 = vmatpush2.bf16.msra.mxu0 0
  %4431 = vmatprep.subr.bf16.mxu0 0
  %4432 = vmatpush2.bf16.msra.mxu0 0
  %4433 = vmatprep.subr.bf16.mxu0 0
  %4434 = vmatpush2.bf16.msra.mxu0 0
  %4435 = vmatprep.subr.bf16.mxu0 0
  %4436 = vmatpush2.bf16.msra.mxu0 0
  %4437 = vmatprep.subr.bf16.mxu0 0
  %4438 = vmatpush2.bf16.msra.mxu0 0
  %4439 = vmatprep.mubr.bf16.mxu0 0
  %4440 = vmatmul.mubr.bf16.gmra.mxu0 %v419
  %v4441 = vpop.f32.mrf.mxu0
  %v4442 = vadd.f32 0.0, %v4441
  %v4443 = vpop.f32.mrf.mxu0
  %v4444 = vpop.f32.mrf.mxu0
  %v4445 = vpop.f32.mrf.mxu0
  %4446 = vdwg.mxu0
  %4447 = vst.msk [vmem:[#allocation2 + $0x128] sm:$0xff] %vm524, %v4442
  %s4448 = scalar_lea.vmem %s5, 2432
  %v4449 = vld [vmem:[%s4448] sm:$0xf]
  %v4450 = vld [vmem:[%s4448 + $0x4] sm:$0xf]
  %v4451 = vld [vmem:[%s4448 + $0x8] sm:$0xf]
  %v4452 = vld [vmem:[%s4448 + $0xc] sm:$0xf]
  %v4453 = vld [vmem:[%s4448 + $0x10] sm:$0xf]
  %v4454 = vld [vmem:[%s4448 + $0x14] sm:$0xf]
  %v4455 = vld [vmem:[%s4448 + $0x18] sm:$0xf]
  %v4456 = vld [vmem:[%s4448 + $0x1c] sm:$0xf]
  %v4457 = vld [vmem:[%s4448 + $0x20] sm:$0xf]
  %v4458 = vld [vmem:[%s4448 + $0x24] sm:$0xf]
  %v4459 = vld [vmem:[%s4448 + $0x28] sm:$0xf]
  %v4460 = vld [vmem:[%s4448 + $0x2c] sm:$0xf]
  %v4461 = vld [vmem:[%s4448 + $0x30] sm:$0xf]
  %v4462 = vld [vmem:[%s4448 + $0x34] sm:$0xf]
  %v4463 = vld [vmem:[%s4448 + $0x38] sm:$0xf]
  %v4464 = vld [vmem:[%s4448 + $0x3c] sm:$0xf]
  %v4481 = vunpack.c.l.b16 %v4449
  %v4482 = vunpack.c.l.b16 %v4450
  %v4483 = vunpack.c.l.b16 %v4451
  %v4484 = vunpack.c.l.b16 %v4452
  %v4485 = vunpack.c.l.b16 %v4453
  %v4486 = vunpack.c.l.b16 %v4454
  %v4487 = vunpack.c.l.b16 %v4455
  %v4488 = vunpack.c.l.b16 %v4456
  %v4489 = vunpack.c.l.b16 %v4457
  %v4490 = vunpack.c.l.b16 %v4458
  %v4491 = vunpack.c.l.b16 %v4459
  %v4492 = vunpack.c.l.b16 %v4460
  %v4493 = vunpack.c.l.b16 %v4461
  %v4494 = vunpack.c.l.b16 %v4462
  %v4495 = vunpack.c.l.b16 %v4463
  %v4496 = vunpack.c.l.b16 %v4464
  %v4497 = vpack.c.b16 %v4482, %v4481
  %v4498 = vpack.c.b16 %v4484, %v4483
  %v4499 = vpack.c.b16 %v4486, %v4485
  %v4500 = vpack.c.b16 %v4488, %v4487
  %v4501 = vpack.c.b16 %v4490, %v4489
  %v4502 = vpack.c.b16 %v4492, %v4491
  %v4503 = vpack.c.b16 %v4494, %v4493
  %v4504 = vpack.c.b16 %v4496, %v4495
  %4513 = vmatprep.subr.bf16.mxu0 0
  %4514 = vmatpush1.bf16.msra.mxu0 %v4504
  %4515 = vmatprep.subr.bf16.mxu0 0
  %4516 = vmatpush1.bf16.msra.mxu0 %v4503
  %4517 = vmatprep.subr.bf16.mxu0 0
  %4518 = vmatpush1.bf16.msra.mxu0 %v4502
  %4519 = vmatprep.subr.bf16.mxu0 0
  %4520 = vmatpush1.bf16.msra.mxu0 %v4501
  %4521 = vmatprep.subr.bf16.mxu0 0
  %4522 = vmatpush1.bf16.msra.mxu0 %v4500
  %4523 = vmatprep.subr.bf16.mxu0 0
  %4524 = vmatpush1.bf16.msra.mxu0 %v4499
  %4525 = vmatprep.subr.bf16.mxu0 0
  %4526 = vmatpush1.bf16.msra.mxu0 %v4498
  %4527 = vmatprep.subr.bf16.mxu0 0
  %4528 = vmatpush1.bf16.msra.mxu0 %v4497
  %4529 = vmatprep.subr.bf16.mxu0 0
  %4530 = vmatpush2.bf16.msra.mxu0 0
  %4531 = vmatprep.subr.bf16.mxu0 0
  %4532 = vmatpush2.bf16.msra.mxu0 0
  %4533 = vmatprep.subr.bf16.mxu0 0
  %4534 = vmatpush2.bf16.msra.mxu0 0
  %4535 = vmatprep.subr.bf16.mxu0 0
  %4536 = vmatpush2.bf16.msra.mxu0 0
  %4537 = vmatprep.subr.bf16.mxu0 0
  %4538 = vmatpush2.bf16.msra.mxu0 0
  %4539 = vmatprep.subr.bf16.mxu0 0
  %4540 = vmatpush2.bf16.msra.mxu0 0
  %4541 = vmatprep.subr.bf16.mxu0 0
  %4542 = vmatpush2.bf16.msra.mxu0 0
  %4543 = vmatprep.subr.bf16.mxu0 0
  %4544 = vmatpush2.bf16.msra.mxu0 0
  %4545 = vmatprep.mubr.bf16.mxu0 0
  %4546 = vmatmul.mubr.bf16.gmra.mxu0 %v419
  %v4547 = vpop.f32.mrf.mxu0
  %v4548 = vadd.f32 0.0, %v4547
  %v4549 = vpop.f32.mrf.mxu0
  %v4550 = vpop.f32.mrf.mxu0
  %v4551 = vpop.f32.mrf.mxu0
  %4552 = vdwg.mxu0
  %4553 = vst.msk [vmem:[#allocation2 + $0x130] sm:$0xff] %vm524, %v4548
  %s4554 = scalar_lea.vmem %s5, 2496
  %v4555 = vld [vmem:[%s4554] sm:$0xf]
  %v4556 = vld [vmem:[%s4554 + $0x4] sm:$0xf]
  %v4557 = vld [vmem:[%s4554 + $0x8] sm:$0xf]
  %v4558 = vld [vmem:[%s4554 + $0xc] sm:$0xf]
  %v4559 = vld [vmem:[%s4554 + $0x10] sm:$0xf]
  %v4560 = vld [vmem:[%s4554 + $0x14] sm:$0xf]
  %v4561 = vld [vmem:[%s4554 + $0x18] sm:$0xf]
  %v4562 = vld [vmem:[%s4554 + $0x1c] sm:$0xf]
  %v4563 = vld [vmem:[%s4554 + $0x20] sm:$0xf]
  %v4564 = vld [vmem:[%s4554 + $0x24] sm:$0xf]
  %v4565 = vld [vmem:[%s4554 + $0x28] sm:$0xf]
  %v4566 = vld [vmem:[%s4554 + $0x2c] sm:$0xf]
  %v4567 = vld [vmem:[%s4554 + $0x30] sm:$0xf]
  %v4568 = vld [vmem:[%s4554 + $0x34] sm:$0xf]
  %v4569 = vld [vmem:[%s4554 + $0x38] sm:$0xf]
  %v4570 = vld [vmem:[%s4554 + $0x3c] sm:$0xf]
  %v4587 = vunpack.c.l.b16 %v4555
  %v4588 = vunpack.c.l.b16 %v4556
  %v4589 = vunpack.c.l.b16 %v4557
  %v4590 = vunpack.c.l.b16 %v4558
  %v4591 = vunpack.c.l.b16 %v4559
  %v4592 = vunpack.c.l.b16 %v4560
  %v4593 = vunpack.c.l.b16 %v4561
  %v4594 = vunpack.c.l.b16 %v4562
  %v4595 = vunpack.c.l.b16 %v4563
  %v4596 = vunpack.c.l.b16 %v4564
  %v4597 = vunpack.c.l.b16 %v4565
  %v4598 = vunpack.c.l.b16 %v4566
  %v4599 = vunpack.c.l.b16 %v4567
  %v4600 = vunpack.c.l.b16 %v4568
  %v4601 = vunpack.c.l.b16 %v4569
  %v4602 = vunpack.c.l.b16 %v4570
  %v4603 = vpack.c.b16 %v4588, %v4587
  %v4604 = vpack.c.b16 %v4590, %v4589
  %v4605 = vpack.c.b16 %v4592, %v4591
  %v4606 = vpack.c.b16 %v4594, %v4593
  %v4607 = vpack.c.b16 %v4596, %v4595
  %v4608 = vpack.c.b16 %v4598, %v4597
  %v4609 = vpack.c.b16 %v4600, %v4599
  %v4610 = vpack.c.b16 %v4602, %v4601
  %4619 = vmatprep.subr.bf16.mxu0 0
  %4620 = vmatpush1.bf16.msra.mxu0 %v4610
  %4621 = vmatprep.subr.bf16.mxu0 0
  %4622 = vmatpush1.bf16.msra.mxu0 %v4609
  %4623 = vmatprep.subr.bf16.mxu0 0
  %4624 = vmatpush1.bf16.msra.mxu0 %v4608
  %4625 = vmatprep.subr.bf16.mxu0 0
  %4626 = vmatpush1.bf16.msra.mxu0 %v4607
  %4627 = vmatprep.subr.bf16.mxu0 0
  %4628 = vmatpush1.bf16.msra.mxu0 %v4606
  %4629 = vmatprep.subr.bf16.mxu0 0
  %4630 = vmatpush1.bf16.msra.mxu0 %v4605
  %4631 = vmatprep.subr.bf16.mxu0 0
  %4632 = vmatpush1.bf16.msra.mxu0 %v4604
  %4633 = vmatprep.subr.bf16.mxu0 0
  %4634 = vmatpush1.bf16.msra.mxu0 %v4603
  %4635 = vmatprep.subr.bf16.mxu0 0
  %4636 = vmatpush2.bf16.msra.mxu0 0
  %4637 = vmatprep.subr.bf16.mxu0 0
  %4638 = vmatpush2.bf16.msra.mxu0 0
  %4639 = vmatprep.subr.bf16.mxu0 0
  %4640 = vmatpush2.bf16.msra.mxu0 0
  %4641 = vmatprep.subr.bf16.mxu0 0
  %4642 = vmatpush2.bf16.msra.mxu0 0
  %4643 = vmatprep.subr.bf16.mxu0 0
  %4644 = vmatpush2.bf16.msra.mxu0 0
  %4645 = vmatprep.subr.bf16.mxu0 0
  %4646 = vmatpush2.bf16.msra.mxu0 0
  %4647 = vmatprep.subr.bf16.mxu0 0
  %4648 = vmatpush2.bf16.msra.mxu0 0
  %4649 = vmatprep.subr.bf16.mxu0 0
  %4650 = vmatpush2.bf16.msra.mxu0 0
  %4651 = vmatprep.mubr.bf16.mxu0 0
  %4652 = vmatmul.mubr.bf16.gmra.mxu0 %v419
  %v4653 = vpop.f32.mrf.mxu0
  %v4654 = vadd.f32 0.0, %v4653
  %v4655 = vpop.f32.mrf.mxu0
  %v4656 = vpop.f32.mrf.mxu0
  %v4657 = vpop.f32.mrf.mxu0
  %4658 = vdwg.mxu0
  %4659 = vst.msk [vmem:[#allocation2 + $0x138] sm:$0xff] %vm524, %v4654
  %s4660 = scalar_lea.vmem %s5, 2560
  %v4661 = vld [vmem:[%s4660] sm:$0xf]
  %v4662 = vld [vmem:[%s4660 + $0x4] sm:$0xf]
  %v4663 = vld [vmem:[%s4660 + $0x8] sm:$0xf]
  %v4664 = vld [vmem:[%s4660 + $0xc] sm:$0xf]
  %v4665 = vld [vmem:[%s4660 + $0x10] sm:$0xf]
  %v4666 = vld [vmem:[%s4660 + $0x14] sm:$0xf]
  %v4667 = vld [vmem:[%s4660 + $0x18] sm:$0xf]
  %v4668 = vld [vmem:[%s4660 + $0x1c] sm:$0xf]
  %v4669 = vld [vmem:[%s4660 + $0x20] sm:$0xf]
  %v4670 = vld [vmem:[%s4660 + $0x24] sm:$0xf]
  %v4671 = vld [vmem:[%s4660 + $0x28] sm:$0xf]
  %v4672 = vld [vmem:[%s4660 + $0x2c] sm:$0xf]
  %v4673 = vld [vmem:[%s4660 + $0x30] sm:$0xf]
  %v4674 = vld [vmem:[%s4660 + $0x34] sm:$0xf]
  %v4675 = vld [vmem:[%s4660 + $0x38] sm:$0xf]
  %v4676 = vld [vmem:[%s4660 + $0x3c] sm:$0xf]
  %v4693 = vunpack.c.l.b16 %v4661
  %v4694 = vunpack.c.l.b16 %v4662
  %v4695 = vunpack.c.l.b16 %v4663
  %v4696 = vunpack.c.l.b16 %v4664
  %v4697 = vunpack.c.l.b16 %v4665
  %v4698 = vunpack.c.l.b16 %v4666
  %v4699 = vunpack.c.l.b16 %v4667
  %v4700 = vunpack.c.l.b16 %v4668
  %v4701 = vunpack.c.l.b16 %v4669
  %v4702 = vunpack.c.l.b16 %v4670
  %v4703 = vunpack.c.l.b16 %v4671
  %v4704 = vunpack.c.l.b16 %v4672
  %v4705 = vunpack.c.l.b16 %v4673
  %v4706 = vunpack.c.l.b16 %v4674
  %v4707 = vunpack.c.l.b16 %v4675
  %v4708 = vunpack.c.l.b16 %v4676
  %v4709 = vpack.c.b16 %v4694, %v4693
  %v4710 = vpack.c.b16 %v4696, %v4695
  %v4711 = vpack.c.b16 %v4698, %v4697
  %v4712 = vpack.c.b16 %v4700, %v4699
  %v4713 = vpack.c.b16 %v4702, %v4701
  %v4714 = vpack.c.b16 %v4704, %v4703
  %v4715 = vpack.c.b16 %v4706, %v4705
  %v4716 = vpack.c.b16 %v4708, %v4707
  %4725 = vmatprep.subr.bf16.mxu0 0
  %4726 = vmatpush1.bf16.msra.mxu0 %v4716
  %4727 = vmatprep.subr.bf16.mxu0 0
  %4728 = vmatpush1.bf16.msra.mxu0 %v4715
  %4729 = vmatprep.subr.bf16.mxu0 0
  %4730 = vmatpush1.bf16.msra.mxu0 %v4714
  %4731 = vmatprep.subr.bf16.mxu0 0
  %4732 = vmatpush1.bf16.msra.mxu0 %v4713
  %4733 = vmatprep.subr.bf16.mxu0 0
  %4734 = vmatpush1.bf16.msra.mxu0 %v4712
  %4735 = vmatprep.subr.bf16.mxu0 0
  %4736 = vmatpush1.bf16.msra.mxu0 %v4711
  %4737 = vmatprep.subr.bf16.mxu0 0
  %4738 = vmatpush1.bf16.msra.mxu0 %v4710
  %4739 = vmatprep.subr.bf16.mxu0 0
  %4740 = vmatpush1.bf16.msra.mxu0 %v4709
  %4741 = vmatprep.subr.bf16.mxu0 0
  %4742 = vmatpush2.bf16.msra.mxu0 0
  %4743 = vmatprep.subr.bf16.mxu0 0
  %4744 = vmatpush2.bf16.msra.mxu0 0
  %4745 = vmatprep.subr.bf16.mxu0 0
  %4746 = vmatpush2.bf16.msra.mxu0 0
  %4747 = vmatprep.subr.bf16.mxu0 0
  %4748 = vmatpush2.bf16.msra.mxu0 0
  %4749 = vmatprep.subr.bf16.mxu0 0
  %4750 = vmatpush2.bf16.msra.mxu0 0
  %4751 = vmatprep.subr.bf16.mxu0 0
  %4752 = vmatpush2.bf16.msra.mxu0 0
  %4753 = vmatprep.subr.bf16.mxu0 0
  %4754 = vmatpush2.bf16.msra.mxu0 0
  %4755 = vmatprep.subr.bf16.mxu0 0
  %4756 = vmatpush2.bf16.msra.mxu0 0
  %4757 = vmatprep.mubr.bf16.mxu0 0
  %4758 = vmatmul.mubr.bf16.gmra.mxu0 %v419
  %v4759 = vpop.f32.mrf.mxu0
  %v4760 = vadd.f32 0.0, %v4759
  %v4761 = vpop.f32.mrf.mxu0
  %v4762 = vpop.f32.mrf.mxu0
  %v4763 = vpop.f32.mrf.mxu0
  %4764 = vdwg.mxu0
  %4765 = vst.msk [vmem:[#allocation2 + $0x140] sm:$0xff] %vm524, %v4760
  %s4766 = scalar_lea.vmem %s5, 2624
  %v4767 = vld [vmem:[%s4766] sm:$0xf]
  %v4768 = vld [vmem:[%s4766 + $0x4] sm:$0xf]
  %v4769 = vld [vmem:[%s4766 + $0x8] sm:$0xf]
  %v4770 = vld [vmem:[%s4766 + $0xc] sm:$0xf]
  %v4771 = vld [vmem:[%s4766 + $0x10] sm:$0xf]
  %v4772 = vld [vmem:[%s4766 + $0x14] sm:$0xf]
  %v4773 = vld [vmem:[%s4766 + $0x18] sm:$0xf]
  %v4774 = vld [vmem:[%s4766 + $0x1c] sm:$0xf]
  %v4775 = vld [vmem:[%s4766 + $0x20] sm:$0xf]
  %v4776 = vld [vmem:[%s4766 + $0x24] sm:$0xf]
  %v4777 = vld [vmem:[%s4766 + $0x28] sm:$0xf]
  %v4778 = vld [vmem:[%s4766 + $0x2c] sm:$0xf]
  %v4779 = vld [vmem:[%s4766 + $0x30] sm:$0xf]
  %v4780 = vld [vmem:[%s4766 + $0x34] sm:$0xf]
  %v4781 = vld [vmem:[%s4766 + $0x38] sm:$0xf]
  %v4782 = vld [vmem:[%s4766 + $0x3c] sm:$0xf]
  %v4799 = vunpack.c.l.b16 %v4767
  %v4800 = vunpack.c.l.b16 %v4768
  %v4801 = vunpack.c.l.b16 %v4769
  %v4802 = vunpack.c.l.b16 %v4770
  %v4803 = vunpack.c.l.b16 %v4771
  %v4804 = vunpack.c.l.b16 %v4772
  %v4805 = vunpack.c.l.b16 %v4773
  %v4806 = vunpack.c.l.b16 %v4774
  %v4807 = vunpack.c.l.b16 %v4775
  %v4808 = vunpack.c.l.b16 %v4776
  %v4809 = vunpack.c.l.b16 %v4777
  %v4810 = vunpack.c.l.b16 %v4778
  %v4811 = vunpack.c.l.b16 %v4779
  %v4812 = vunpack.c.l.b16 %v4780
  %v4813 = vunpack.c.l.b16 %v4781
  %v4814 = vunpack.c.l.b16 %v4782
  %v4815 = vpack.c.b16 %v4800, %v4799
  %v4816 = vpack.c.b16 %v4802, %v4801
  %v4817 = vpack.c.b16 %v4804, %v4803
  %v4818 = vpack.c.b16 %v4806, %v4805
  %v4819 = vpack.c.b16 %v4808, %v4807
  %v4820 = vpack.c.b16 %v4810, %v4809
  %v4821 = vpack.c.b16 %v4812, %v4811
  %v4822 = vpack.c.b16 %v4814, %v4813
  %4831 = vmatprep.subr.bf16.mxu0 0
  %4832 = vmatpush1.bf16.msra.mxu0 %v4822
  %4833 = vmatprep.subr.bf16.mxu0 0
  %4834 = vmatpush1.bf16.msra.mxu0 %v4821
  %4835 = vmatprep.subr.bf16.mxu0 0
  %4836 = vmatpush1.bf16.msra.mxu0 %v4820
  %4837 = vmatprep.subr.bf16.mxu0 0
  %4838 = vmatpush1.bf16.msra.mxu0 %v4819
  %4839 = vmatprep.subr.bf16.mxu0 0
  %4840 = vmatpush1.bf16.msra.mxu0 %v4818
  %4841 = vmatprep.subr.bf16.mxu0 0
  %4842 = vmatpush1.bf16.msra.mxu0 %v4817
  %4843 = vmatprep.subr.bf16.mxu0 0
  %4844 = vmatpush1.bf16.msra.mxu0 %v4816
  %4845 = vmatprep.subr.bf16.mxu0 0
  %4846 = vmatpush1.bf16.msra.mxu0 %v4815
  %4847 = vmatprep.subr.bf16.mxu0 0
  %4848 = vmatpush2.bf16.msra.mxu0 0
  %4849 = vmatprep.subr.bf16.mxu0 0
  %4850 = vmatpush2.bf16.msra.mxu0 0
  %4851 = vmatprep.subr.bf16.mxu0 0
  %4852 = vmatpush2.bf16.msra.mxu0 0
  %4853 = vmatprep.subr.bf16.mxu0 0
  %4854 = vmatpush2.bf16.msra.mxu0 0
  %4855 = vmatprep.subr.bf16.mxu0 0
  %4856 = vmatpush2.bf16.msra.mxu0 0
  %4857 = vmatprep.subr.bf16.mxu0 0
  %4858 = vmatpush2.bf16.msra.mxu0 0
  %4859 = vmatprep.subr.bf16.mxu0 0
  %4860 = vmatpush2.bf16.msra.mxu0 0
  %4861 = vmatprep.subr.bf16.mxu0 0
  %4862 = vmatpush2.bf16.msra.mxu0 0
  %4863 = vmatprep.mubr.bf16.mxu0 0
  %4864 = vmatmul.mubr.bf16.gmra.mxu0 %v419
  %v4865 = vpop.f32.mrf.mxu0
  %v4866 = vadd.f32 0.0, %v4865
  %v4867 = vpop.f32.mrf.mxu0
  %v4868 = vpop.f32.mrf.mxu0
  %v4869 = vpop.f32.mrf.mxu0
  %4870 = vdwg.mxu0
  %4871 = vst.msk [vmem:[#allocation2 + $0x148] sm:$0xff] %vm524, %v4866
  %s4872 = scalar_lea.vmem %s5, 2688
  %v4873 = vld [vmem:[%s4872] sm:$0xf]
  %v4874 = vld [vmem:[%s4872 + $0x4] sm:$0xf]
  %v4875 = vld [vmem:[%s4872 + $0x8] sm:$0xf]
  %v4876 = vld [vmem:[%s4872 + $0xc] sm:$0xf]
  %v4877 = vld [vmem:[%s4872 + $0x10] sm:$0xf]
  %v4878 = vld [vmem:[%s4872 + $0x14] sm:$0xf]
  %v4879 = vld [vmem:[%s4872 + $0x18] sm:$0xf]
  %v4880 = vld [vmem:[%s4872 + $0x1c] sm:$0xf]
  %v4881 = vld [vmem:[%s4872 + $0x20] sm:$0xf]
  %v4882 = vld [vmem:[%s4872 + $0x24] sm:$0xf]
  %v4883 = vld [vmem:[%s4872 + $0x28] sm:$0xf]
  %v4884 = vld [vmem:[%s4872 + $0x2c] sm:$0xf]
  %v4885 = vld [vmem:[%s4872 + $0x30] sm:$0xf]
  %v4886 = vld [vmem:[%s4872 + $0x34] sm:$0xf]
  %v4887 = vld [vmem:[%s4872 + $0x38] sm:$0xf]
  %v4888 = vld [vmem:[%s4872 + $0x3c] sm:$0xf]
  %v4905 = vunpack.c.l.b16 %v4873
  %v4906 = vunpack.c.l.b16 %v4874
  %v4907 = vunpack.c.l.b16 %v4875
  %v4908 = vunpack.c.l.b16 %v4876
  %v4909 = vunpack.c.l.b16 %v4877
  %v4910 = vunpack.c.l.b16 %v4878
  %v4911 = vunpack.c.l.b16 %v4879
  %v4912 = vunpack.c.l.b16 %v4880
  %v4913 = vunpack.c.l.b16 %v4881
  %v4914 = vunpack.c.l.b16 %v4882
  %v4915 = vunpack.c.l.b16 %v4883
  %v4916 = vunpack.c.l.b16 %v4884
  %v4917 = vunpack.c.l.b16 %v4885
  %v4918 = vunpack.c.l.b16 %v4886
  %v4919 = vunpack.c.l.b16 %v4887
  %v4920 = vunpack.c.l.b16 %v4888
  %v4921 = vpack.c.b16 %v4906, %v4905
  %v4922 = vpack.c.b16 %v4908, %v4907
  %v4923 = vpack.c.b16 %v4910, %v4909
  %v4924 = vpack.c.b16 %v4912, %v4911
  %v4925 = vpack.c.b16 %v4914, %v4913
  %v4926 = vpack.c.b16 %v4916, %v4915
  %v4927 = vpack.c.b16 %v4918, %v4917
  %v4928 = vpack.c.b16 %v4920, %v4919
  %4937 = vmatprep.subr.bf16.mxu0 0
  %4938 = vmatpush1.bf16.msra.mxu0 %v4928
  %4939 = vmatprep.subr.bf16.mxu0 0
  %4940 = vmatpush1.bf16.msra.mxu0 %v4927
  %4941 = vmatprep.subr.bf16.mxu0 0
  %4942 = vmatpush1.bf16.msra.mxu0 %v4926
  %4943 = vmatprep.subr.bf16.mxu0 0
  %4944 = vmatpush1.bf16.msra.mxu0 %v4925
  %4945 = vmatprep.subr.bf16.mxu0 0
  %4946 = vmatpush1.bf16.msra.mxu0 %v4924
  %4947 = vmatprep.subr.bf16.mxu0 0
  %4948 = vmatpush1.bf16.msra.mxu0 %v4923
  %4949 = vmatprep.subr.bf16.mxu0 0
  %4950 = vmatpush1.bf16.msra.mxu0 %v4922
  %4951 = vmatprep.subr.bf16.mxu0 0
  %4952 = vmatpush1.bf16.msra.mxu0 %v4921
  %4953 = vmatprep.subr.bf16.mxu0 0
  %4954 = vmatpush2.bf16.msra.mxu0 0
  %4955 = vmatprep.subr.bf16.mxu0 0
  %4956 = vmatpush2.bf16.msra.mxu0 0
  %4957 = vmatprep.subr.bf16.mxu0 0
  %4958 = vmatpush2.bf16.msra.mxu0 0
  %4959 = vmatprep.subr.bf16.mxu0 0
  %4960 = vmatpush2.bf16.msra.mxu0 0
  %4961 = vmatprep.subr.bf16.mxu0 0
  %4962 = vmatpush2.bf16.msra.mxu0 0
  %4963 = vmatprep.subr.bf16.mxu0 0
  %4964 = vmatpush2.bf16.msra.mxu0 0
  %4965 = vmatprep.subr.bf16.mxu0 0
  %4966 = vmatpush2.bf16.msra.mxu0 0
  %4967 = vmatprep.subr.bf16.mxu0 0
  %4968 = vmatpush2.bf16.msra.mxu0 0
  %4969 = vmatprep.mubr.bf16.mxu0 0
  %4970 = vmatmul.mubr.bf16.gmra.mxu0 %v419
  %v4971 = vpop.f32.mrf.mxu0
  %v4972 = vadd.f32 0.0, %v4971
  %v4973 = vpop.f32.mrf.mxu0
  %v4974 = vpop.f32.mrf.mxu0
  %v4975 = vpop.f32.mrf.mxu0
  %4976 = vdwg.mxu0
  %4977 = vst.msk [vmem:[#allocation2 + $0x150] sm:$0xff] %vm524, %v4972
  %s4978 = scalar_lea.vmem %s5, 2752
  %v4979 = vld [vmem:[%s4978] sm:$0xf]
  %v4980 = vld [vmem:[%s4978 + $0x4] sm:$0xf]
  %v4981 = vld [vmem:[%s4978 + $0x8] sm:$0xf]
  %v4982 = vld [vmem:[%s4978 + $0xc] sm:$0xf]
  %v4983 = vld [vmem:[%s4978 + $0x10] sm:$0xf]
  %v4984 = vld [vmem:[%s4978 + $0x14] sm:$0xf]
  %v4985 = vld [vmem:[%s4978 + $0x18] sm:$0xf]
  %v4986 = vld [vmem:[%s4978 + $0x1c] sm:$0xf]
  %v4987 = vld [vmem:[%s4978 + $0x20] sm:$0xf]
  %v4988 = vld [vmem:[%s4978 + $0x24] sm:$0xf]
  %v4989 = vld [vmem:[%s4978 + $0x28] sm:$0xf]
  %v4990 = vld [vmem:[%s4978 + $0x2c] sm:$0xf]
  %v4991 = vld [vmem:[%s4978 + $0x30] sm:$0xf]
  %v4992 = vld [vmem:[%s4978 + $0x34] sm:$0xf]
  %v4993 = vld [vmem:[%s4978 + $0x38] sm:$0xf]
  %v4994 = vld [vmem:[%s4978 + $0x3c] sm:$0xf]
  %v5011 = vunpack.c.l.b16 %v4979
  %v5012 = vunpack.c.l.b16 %v4980
  %v5013 = vunpack.c.l.b16 %v4981
  %v5014 = vunpack.c.l.b16 %v4982
  %v5015 = vunpack.c.l.b16 %v4983
  %v5016 = vunpack.c.l.b16 %v4984
  %v5017 = vunpack.c.l.b16 %v4985
  %v5018 = vunpack.c.l.b16 %v4986
  %v5019 = vunpack.c.l.b16 %v4987
  %v5020 = vunpack.c.l.b16 %v4988
  %v5021 = vunpack.c.l.b16 %v4989
  %v5022 = vunpack.c.l.b16 %v4990
  %v5023 = vunpack.c.l.b16 %v4991
  %v5024 = vunpack.c.l.b16 %v4992
  %v5025 = vunpack.c.l.b16 %v4993
  %v5026 = vunpack.c.l.b16 %v4994
  %v5027 = vpack.c.b16 %v5012, %v5011
  %v5028 = vpack.c.b16 %v5014, %v5013
  %v5029 = vpack.c.b16 %v5016, %v5015
  %v5030 = vpack.c.b16 %v5018, %v5017
  %v5031 = vpack.c.b16 %v5020, %v5019
  %v5032 = vpack.c.b16 %v5022, %v5021
  %v5033 = vpack.c.b16 %v5024, %v5023
  %v5034 = vpack.c.b16 %v5026, %v5025
  %5043 = vmatprep.subr.bf16.mxu0 0
  %5044 = vmatpush1.bf16.msra.mxu0 %v5034
  %5045 = vmatprep.subr.bf16.mxu0 0
  %5046 = vmatpush1.bf16.msra.mxu0 %v5033
  %5047 = vmatprep.subr.bf16.mxu0 0
  %5048 = vmatpush1.bf16.msra.mxu0 %v5032
  %5049 = vmatprep.subr.bf16.mxu0 0
  %5050 = vmatpush1.bf16.msra.mxu0 %v5031
  %5051 = vmatprep.subr.bf16.mxu0 0
  %5052 = vmatpush1.bf16.msra.mxu0 %v5030
  %5053 = vmatprep.subr.bf16.mxu0 0
  %5054 = vmatpush1.bf16.msra.mxu0 %v5029
  %5055 = vmatprep.subr.bf16.mxu0 0
  %5056 = vmatpush1.bf16.msra.mxu0 %v5028
  %5057 = vmatprep.subr.bf16.mxu0 0
  %5058 = vmatpush1.bf16.msra.mxu0 %v5027
  %5059 = vmatprep.subr.bf16.mxu0 0
  %5060 = vmatpush2.bf16.msra.mxu0 0
  %5061 = vmatprep.subr.bf16.mxu0 0
  %5062 = vmatpush2.bf16.msra.mxu0 0
  %5063 = vmatprep.subr.bf16.mxu0 0
  %5064 = vmatpush2.bf16.msra.mxu0 0
  %5065 = vmatprep.subr.bf16.mxu0 0
  %5066 = vmatpush2.bf16.msra.mxu0 0
  %5067 = vmatprep.subr.bf16.mxu0 0
  %5068 = vmatpush2.bf16.msra.mxu0 0
  %5069 = vmatprep.subr.bf16.mxu0 0
  %5070 = vmatpush2.bf16.msra.mxu0 0
  %5071 = vmatprep.subr.bf16.mxu0 0
  %5072 = vmatpush2.bf16.msra.mxu0 0
  %5073 = vmatprep.subr.bf16.mxu0 0
  %5074 = vmatpush2.bf16.msra.mxu0 0
  %5075 = vmatprep.mubr.bf16.mxu0 0
  %5076 = vmatmul.mubr.bf16.gmra.mxu0 %v419
  %v5077 = vpop.f32.mrf.mxu0
  %v5078 = vadd.f32 0.0, %v5077
  %v5079 = vpop.f32.mrf.mxu0
  %v5080 = vpop.f32.mrf.mxu0
  %v5081 = vpop.f32.mrf.mxu0
  %5082 = vdwg.mxu0
  %5083 = vst.msk [vmem:[#allocation2 + $0x158] sm:$0xff] %vm524, %v5078
  %s5084 = scalar_lea.vmem %s5, 2816
  %v5085 = vld [vmem:[%s5084] sm:$0xf]
  %v5086 = vld [vmem:[%s5084 + $0x4] sm:$0xf]
  %v5087 = vld [vmem:[%s5084 + $0x8] sm:$0xf]
  %v5088 = vld [vmem:[%s5084 + $0xc] sm:$0xf]
  %v5089 = vld [vmem:[%s5084 + $0x10] sm:$0xf]
  %v5090 = vld [vmem:[%s5084 + $0x14] sm:$0xf]
  %v5091 = vld [vmem:[%s5084 + $0x18] sm:$0xf]
  %v5092 = vld [vmem:[%s5084 + $0x1c] sm:$0xf]
  %v5093 = vld [vmem:[%s5084 + $0x20] sm:$0xf]
  %v5094 = vld [vmem:[%s5084 + $0x24] sm:$0xf]
  %v5095 = vld [vmem:[%s5084 + $0x28] sm:$0xf]
  %v5096 = vld [vmem:[%s5084 + $0x2c] sm:$0xf]
  %v5097 = vld [vmem:[%s5084 + $0x30] sm:$0xf]
  %v5098 = vld [vmem:[%s5084 + $0x34] sm:$0xf]
  %v5099 = vld [vmem:[%s5084 + $0x38] sm:$0xf]
  %v5100 = vld [vmem:[%s5084 + $0x3c] sm:$0xf]
  %v5117 = vunpack.c.l.b16 %v5085
  %v5118 = vunpack.c.l.b16 %v5086
  %v5119 = vunpack.c.l.b16 %v5087
  %v5120 = vunpack.c.l.b16 %v5088
  %v5121 = vunpack.c.l.b16 %v5089
  %v5122 = vunpack.c.l.b16 %v5090
  %v5123 = vunpack.c.l.b16 %v5091
  %v5124 = vunpack.c.l.b16 %v5092
  %v5125 = vunpack.c.l.b16 %v5093
  %v5126 = vunpack.c.l.b16 %v5094
  %v5127 = vunpack.c.l.b16 %v5095
  %v5128 = vunpack.c.l.b16 %v5096
  %v5129 = vunpack.c.l.b16 %v5097
  %v5130 = vunpack.c.l.b16 %v5098
  %v5131 = vunpack.c.l.b16 %v5099
  %v5132 = vunpack.c.l.b16 %v5100
  %v5133 = vpack.c.b16 %v5118, %v5117
  %v5134 = vpack.c.b16 %v5120, %v5119
  %v5135 = vpack.c.b16 %v5122, %v5121
  %v5136 = vpack.c.b16 %v5124, %v5123
  %v5137 = vpack.c.b16 %v5126, %v5125
  %v5138 = vpack.c.b16 %v5128, %v5127
  %v5139 = vpack.c.b16 %v5130, %v5129
  %v5140 = vpack.c.b16 %v5132, %v5131
  %5149 = vmatprep.subr.bf16.mxu0 0
  %5150 = vmatpush1.bf16.msra.mxu0 %v5140
  %5151 = vmatprep.subr.bf16.mxu0 0
  %5152 = vmatpush1.bf16.msra.mxu0 %v5139
  %5153 = vmatprep.subr.bf16.mxu0 0
  %5154 = vmatpush1.bf16.msra.mxu0 %v5138
  %5155 = vmatprep.subr.bf16.mxu0 0
  %5156 = vmatpush1.bf16.msra.mxu0 %v5137
  %5157 = vmatprep.subr.bf16.mxu0 0
  %5158 = vmatpush1.bf16.msra.mxu0 %v5136
  %5159 = vmatprep.subr.bf16.mxu0 0
  %5160 = vmatpush1.bf16.msra.mxu0 %v5135
  %5161 = vmatprep.subr.bf16.mxu0 0
  %5162 = vmatpush1.bf16.msra.mxu0 %v5134
  %5163 = vmatprep.subr.bf16.mxu0 0
  %5164 = vmatpush1.bf16.msra.mxu0 %v5133
  %5165 = vmatprep.subr.bf16.mxu0 0
  %5166 = vmatpush2.bf16.msra.mxu0 0
  %5167 = vmatprep.subr.bf16.mxu0 0
  %5168 = vmatpush2.bf16.msra.mxu0 0
  %5169 = vmatprep.subr.bf16.mxu0 0
  %5170 = vmatpush2.bf16.msra.mxu0 0
  %5171 = vmatprep.subr.bf16.mxu0 0
  %5172 = vmatpush2.bf16.msra.mxu0 0
  %5173 = vmatprep.subr.bf16.mxu0 0
  %5174 = vmatpush2.bf16.msra.mxu0 0
  %5175 = vmatprep.subr.bf16.mxu0 0
  %5176 = vmatpush2.bf16.msra.mxu0 0
  %5177 = vmatprep.subr.bf16.mxu0 0
  %5178 = vmatpush2.bf16.msra.mxu0 0
  %5179 = vmatprep.subr.bf16.mxu0 0
  %5180 = vmatpush2.bf16.msra.mxu0 0
  %5181 = vmatprep.mubr.bf16.mxu0 0
  %5182 = vmatmul.mubr.bf16.gmra.mxu0 %v419
  %v5183 = vpop.f32.mrf.mxu0
  %v5184 = vadd.f32 0.0, %v5183
  %v5185 = vpop.f32.mrf.mxu0
  %v5186 = vpop.f32.mrf.mxu0
  %v5187 = vpop.f32.mrf.mxu0
  %5188 = vdwg.mxu0
  %5189 = vst.msk [vmem:[#allocation2 + $0x160] sm:$0xff] %vm524, %v5184
  %s5190 = scalar_lea.vmem %s5, 2880
  %v5191 = vld [vmem:[%s5190] sm:$0xf]
  %v5192 = vld [vmem:[%s5190 + $0x4] sm:$0xf]
  %v5193 = vld [vmem:[%s5190 + $0x8] sm:$0xf]
  %v5194 = vld [vmem:[%s5190 + $0xc] sm:$0xf]
  %v5195 = vld [vmem:[%s5190 + $0x10] sm:$0xf]
  %v5196 = vld [vmem:[%s5190 + $0x14] sm:$0xf]
  %v5197 = vld [vmem:[%s5190 + $0x18] sm:$0xf]
  %v5198 = vld [vmem:[%s5190 + $0x1c] sm:$0xf]
  %v5199 = vld [vmem:[%s5190 + $0x20] sm:$0xf]
  %v5200 = vld [vmem:[%s5190 + $0x24] sm:$0xf]
  %v5201 = vld [vmem:[%s5190 + $0x28] sm:$0xf]
  %v5202 = vld [vmem:[%s5190 + $0x2c] sm:$0xf]
  %v5203 = vld [vmem:[%s5190 + $0x30] sm:$0xf]
  %v5204 = vld [vmem:[%s5190 + $0x34] sm:$0xf]
  %v5205 = vld [vmem:[%s5190 + $0x38] sm:$0xf]
  %v5206 = vld [vmem:[%s5190 + $0x3c] sm:$0xf]
  %v5223 = vunpack.c.l.b16 %v5191
  %v5224 = vunpack.c.l.b16 %v5192
  %v5225 = vunpack.c.l.b16 %v5193
  %v5226 = vunpack.c.l.b16 %v5194
  %v5227 = vunpack.c.l.b16 %v5195
  %v5228 = vunpack.c.l.b16 %v5196
  %v5229 = vunpack.c.l.b16 %v5197
  %v5230 = vunpack.c.l.b16 %v5198
  %v5231 = vunpack.c.l.b16 %v5199
  %v5232 = vunpack.c.l.b16 %v5200
  %v5233 = vunpack.c.l.b16 %v5201
  %v5234 = vunpack.c.l.b16 %v5202
  %v5235 = vunpack.c.l.b16 %v5203
  %v5236 = vunpack.c.l.b16 %v5204
  %v5237 = vunpack.c.l.b16 %v5205
  %v5238 = vunpack.c.l.b16 %v5206
  %v5239 = vpack.c.b16 %v5224, %v5223
  %v5240 = vpack.c.b16 %v5226, %v5225
  %v5241 = vpack.c.b16 %v5228, %v5227
  %v5242 = vpack.c.b16 %v5230, %v5229
  %v5243 = vpack.c.b16 %v5232, %v5231
  %v5244 = vpack.c.b16 %v5234, %v5233
  %v5245 = vpack.c.b16 %v5236, %v5235
  %v5246 = vpack.c.b16 %v5238, %v5237
  %5255 = vmatprep.subr.bf16.mxu0 0
  %5256 = vmatpush1.bf16.msra.mxu0 %v5246
  %5257 = vmatprep.subr.bf16.mxu0 0
  %5258 = vmatpush1.bf16.msra.mxu0 %v5245
  %5259 = vmatprep.subr.bf16.mxu0 0
  %5260 = vmatpush1.bf16.msra.mxu0 %v5244
  %5261 = vmatprep.subr.bf16.mxu0 0
  %5262 = vmatpush1.bf16.msra.mxu0 %v5243
  %5263 = vmatprep.subr.bf16.mxu0 0
  %5264 = vmatpush1.bf16.msra.mxu0 %v5242
  %5265 = vmatprep.subr.bf16.mxu0 0
  %5266 = vmatpush1.bf16.msra.mxu0 %v5241
  %5267 = vmatprep.subr.bf16.mxu0 0
  %5268 = vmatpush1.bf16.msra.mxu0 %v5240
  %5269 = vmatprep.subr.bf16.mxu0 0
  %5270 = vmatpush1.bf16.msra.mxu0 %v5239
  %5271 = vmatprep.subr.bf16.mxu0 0
  %5272 = vmatpush2.bf16.msra.mxu0 0
  %5273 = vmatprep.subr.bf16.mxu0 0
  %5274 = vmatpush2.bf16.msra.mxu0 0
  %5275 = vmatprep.subr.bf16.mxu0 0
  %5276 = vmatpush2.bf16.msra.mxu0 0
  %5277 = vmatprep.subr.bf16.mxu0 0
  %5278 = vmatpush2.bf16.msra.mxu0 0
  %5279 = vmatprep.subr.bf16.mxu0 0
  %5280 = vmatpush2.bf16.msra.mxu0 0
  %5281 = vmatprep.subr.bf16.mxu0 0
  %5282 = vmatpush2.bf16.msra.mxu0 0
  %5283 = vmatprep.subr.bf16.mxu0 0
  %5284 = vmatpush2.bf16.msra.mxu0 0
  %5285 = vmatprep.subr.bf16.mxu0 0
  %5286 = vmatpush2.bf16.msra.mxu0 0
  %5287 = vmatprep.mubr.bf16.mxu0 0
  %5288 = vmatmul.mubr.bf16.gmra.mxu0 %v419
  %v5289 = vpop.f32.mrf.mxu0
  %v5290 = vadd.f32 0.0, %v5289
  %v5291 = vpop.f32.mrf.mxu0
  %v5292 = vpop.f32.mrf.mxu0
  %v5293 = vpop.f32.mrf.mxu0
  %5294 = vdwg.mxu0
  %5295 = vst.msk [vmem:[#allocation2 + $0x168] sm:$0xff] %vm524, %v5290
  %s5296 = scalar_lea.vmem %s5, 2944
  %v5297 = vld [vmem:[%s5296] sm:$0xf]
  %v5298 = vld [vmem:[%s5296 + $0x4] sm:$0xf]
  %v5299 = vld [vmem:[%s5296 + $0x8] sm:$0xf]
  %v5300 = vld [vmem:[%s5296 + $0xc] sm:$0xf]
  %v5301 = vld [vmem:[%s5296 + $0x10] sm:$0xf]
  %v5302 = vld [vmem:[%s5296 + $0x14] sm:$0xf]
  %v5303 = vld [vmem:[%s5296 + $0x18] sm:$0xf]
  %v5304 = vld [vmem:[%s5296 + $0x1c] sm:$0xf]
  %v5305 = vld [vmem:[%s5296 + $0x20] sm:$0xf]
  %v5306 = vld [vmem:[%s5296 + $0x24] sm:$0xf]
  %v5307 = vld [vmem:[%s5296 + $0x28] sm:$0xf]
  %v5308 = vld [vmem:[%s5296 + $0x2c] sm:$0xf]
  %v5309 = vld [vmem:[%s5296 + $0x30] sm:$0xf]
  %v5310 = vld [vmem:[%s5296 + $0x34] sm:$0xf]
  %v5311 = vld [vmem:[%s5296 + $0x38] sm:$0xf]
  %v5312 = vld [vmem:[%s5296 + $0x3c] sm:$0xf]
  %v5329 = vunpack.c.l.b16 %v5297
  %v5330 = vunpack.c.l.b16 %v5298
  %v5331 = vunpack.c.l.b16 %v5299
  %v5332 = vunpack.c.l.b16 %v5300
  %v5333 = vunpack.c.l.b16 %v5301
  %v5334 = vunpack.c.l.b16 %v5302
  %v5335 = vunpack.c.l.b16 %v5303
  %v5336 = vunpack.c.l.b16 %v5304
  %v5337 = vunpack.c.l.b16 %v5305
  %v5338 = vunpack.c.l.b16 %v5306
  %v5339 = vunpack.c.l.b16 %v5307
  %v5340 = vunpack.c.l.b16 %v5308
  %v5341 = vunpack.c.l.b16 %v5309
  %v5342 = vunpack.c.l.b16 %v5310
  %v5343 = vunpack.c.l.b16 %v5311
  %v5344 = vunpack.c.l.b16 %v5312
  %v5345 = vpack.c.b16 %v5330, %v5329
  %v5346 = vpack.c.b16 %v5332, %v5331
  %v5347 = vpack.c.b16 %v5334, %v5333
  %v5348 = vpack.c.b16 %v5336, %v5335
  %v5349 = vpack.c.b16 %v5338, %v5337
  %v5350 = vpack.c.b16 %v5340, %v5339
  %v5351 = vpack.c.b16 %v5342, %v5341
  %v5352 = vpack.c.b16 %v5344, %v5343
  %5361 = vmatprep.subr.bf16.mxu0 0
  %5362 = vmatpush1.bf16.msra.mxu0 %v5352
  %5363 = vmatprep.subr.bf16.mxu0 0
  %5364 = vmatpush1.bf16.msra.mxu0 %v5351
  %5365 = vmatprep.subr.bf16.mxu0 0
  %5366 = vmatpush1.bf16.msra.mxu0 %v5350
  %5367 = vmatprep.subr.bf16.mxu0 0
  %5368 = vmatpush1.bf16.msra.mxu0 %v5349
  %5369 = vmatprep.subr.bf16.mxu0 0
  %5370 = vmatpush1.bf16.msra.mxu0 %v5348
  %5371 = vmatprep.subr.bf16.mxu0 0
  %5372 = vmatpush1.bf16.msra.mxu0 %v5347
  %5373 = vmatprep.subr.bf16.mxu0 0
  %5374 = vmatpush1.bf16.msra.mxu0 %v5346
  %5375 = vmatprep.subr.bf16.mxu0 0
  %5376 = vmatpush1.bf16.msra.mxu0 %v5345
  %5377 = vmatprep.subr.bf16.mxu0 0
  %5378 = vmatpush2.bf16.msra.mxu0 0
  %5379 = vmatprep.subr.bf16.mxu0 0
  %5380 = vmatpush2.bf16.msra.mxu0 0
  %5381 = vmatprep.subr.bf16.mxu0 0
  %5382 = vmatpush2.bf16.msra.mxu0 0
  %5383 = vmatprep.subr.bf16.mxu0 0
  %5384 = vmatpush2.bf16.msra.mxu0 0
  %5385 = vmatprep.subr.bf16.mxu0 0
  %5386 = vmatpush2.bf16.msra.mxu0 0
  %5387 = vmatprep.subr.bf16.mxu0 0
  %5388 = vmatpush2.bf16.msra.mxu0 0
  %5389 = vmatprep.subr.bf16.mxu0 0
  %5390 = vmatpush2.bf16.msra.mxu0 0
  %5391 = vmatprep.subr.bf16.mxu0 0
  %5392 = vmatpush2.bf16.msra.mxu0 0
  %5393 = vmatprep.mubr.bf16.mxu0 0
  %5394 = vmatmul.mubr.bf16.gmra.mxu0 %v419
  %v5395 = vpop.f32.mrf.mxu0
  %v5396 = vadd.f32 0.0, %v5395
  %v5397 = vpop.f32.mrf.mxu0
  %v5398 = vpop.f32.mrf.mxu0
  %v5399 = vpop.f32.mrf.mxu0
  %5400 = vdwg.mxu0
  %5401 = vst.msk [vmem:[#allocation2 + $0x170] sm:$0xff] %vm524, %v5396
  %s5402 = scalar_lea.vmem %s5, 3008
  %v5403 = vld [vmem:[%s5402] sm:$0xf]
  %v5404 = vld [vmem:[%s5402 + $0x4] sm:$0xf]
  %v5405 = vld [vmem:[%s5402 + $0x8] sm:$0xf]
  %v5406 = vld [vmem:[%s5402 + $0xc] sm:$0xf]
  %v5407 = vld [vmem:[%s5402 + $0x10] sm:$0xf]
  %v5408 = vld [vmem:[%s5402 + $0x14] sm:$0xf]
  %v5409 = vld [vmem:[%s5402 + $0x18] sm:$0xf]
  %v5410 = vld [vmem:[%s5402 + $0x1c] sm:$0xf]
  %v5411 = vld [vmem:[%s5402 + $0x20] sm:$0xf]
  %v5412 = vld [vmem:[%s5402 + $0x24] sm:$0xf]
  %v5413 = vld [vmem:[%s5402 + $0x28] sm:$0xf]
  %v5414 = vld [vmem:[%s5402 + $0x2c] sm:$0xf]
  %v5415 = vld [vmem:[%s5402 + $0x30] sm:$0xf]
  %v5416 = vld [vmem:[%s5402 + $0x34] sm:$0xf]
  %v5417 = vld [vmem:[%s5402 + $0x38] sm:$0xf]
  %v5418 = vld [vmem:[%s5402 + $0x3c] sm:$0xf]
  %v5435 = vunpack.c.l.b16 %v5403
  %v5436 = vunpack.c.l.b16 %v5404
  %v5437 = vunpack.c.l.b16 %v5405
  %v5438 = vunpack.c.l.b16 %v5406
  %v5439 = vunpack.c.l.b16 %v5407
  %v5440 = vunpack.c.l.b16 %v5408
  %v5441 = vunpack.c.l.b16 %v5409
  %v5442 = vunpack.c.l.b16 %v5410
  %v5443 = vunpack.c.l.b16 %v5411
  %v5444 = vunpack.c.l.b16 %v5412
  %v5445 = vunpack.c.l.b16 %v5413
  %v5446 = vunpack.c.l.b16 %v5414
  %v5447 = vunpack.c.l.b16 %v5415
  %v5448 = vunpack.c.l.b16 %v5416
  %v5449 = vunpack.c.l.b16 %v5417
  %v5450 = vunpack.c.l.b16 %v5418
  %v5451 = vpack.c.b16 %v5436, %v5435
  %v5452 = vpack.c.b16 %v5438, %v5437
  %v5453 = vpack.c.b16 %v5440, %v5439
  %v5454 = vpack.c.b16 %v5442, %v5441
  %v5455 = vpack.c.b16 %v5444, %v5443
  %v5456 = vpack.c.b16 %v5446, %v5445
  %v5457 = vpack.c.b16 %v5448, %v5447
  %v5458 = vpack.c.b16 %v5450, %v5449
  %5467 = vmatprep.subr.bf16.mxu0 0
  %5468 = vmatpush1.bf16.msra.mxu0 %v5458
  %5469 = vmatprep.subr.bf16.mxu0 0
  %5470 = vmatpush1.bf16.msra.mxu0 %v5457
  %5471 = vmatprep.subr.bf16.mxu0 0
  %5472 = vmatpush1.bf16.msra.mxu0 %v5456
  %5473 = vmatprep.subr.bf16.mxu0 0
  %5474 = vmatpush1.bf16.msra.mxu0 %v5455
  %5475 = vmatprep.subr.bf16.mxu0 0
  %5476 = vmatpush1.bf16.msra.mxu0 %v5454
  %5477 = vmatprep.subr.bf16.mxu0 0
  %5478 = vmatpush1.bf16.msra.mxu0 %v5453
  %5479 = vmatprep.subr.bf16.mxu0 0
  %5480 = vmatpush1.bf16.msra.mxu0 %v5452
  %5481 = vmatprep.subr.bf16.mxu0 0
  %5482 = vmatpush1.bf16.msra.mxu0 %v5451
  %5483 = vmatprep.subr.bf16.mxu0 0
  %5484 = vmatpush2.bf16.msra.mxu0 0
  %5485 = vmatprep.subr.bf16.mxu0 0
  %5486 = vmatpush2.bf16.msra.mxu0 0
  %5487 = vmatprep.subr.bf16.mxu0 0
  %5488 = vmatpush2.bf16.msra.mxu0 0
  %5489 = vmatprep.subr.bf16.mxu0 0
  %5490 = vmatpush2.bf16.msra.mxu0 0
  %5491 = vmatprep.subr.bf16.mxu0 0
  %5492 = vmatpush2.bf16.msra.mxu0 0
  %5493 = vmatprep.subr.bf16.mxu0 0
  %5494 = vmatpush2.bf16.msra.mxu0 0
  %5495 = vmatprep.subr.bf16.mxu0 0
  %5496 = vmatpush2.bf16.msra.mxu0 0
  %5497 = vmatprep.subr.bf16.mxu0 0
  %5498 = vmatpush2.bf16.msra.mxu0 0
  %5499 = vmatprep.mubr.bf16.mxu0 0
  %5500 = vmatmul.mubr.bf16.gmra.mxu0 %v419
  %v5501 = vpop.f32.mrf.mxu0
  %v5502 = vadd.f32 0.0, %v5501
  %v5503 = vpop.f32.mrf.mxu0
  %v5504 = vpop.f32.mrf.mxu0
  %v5505 = vpop.f32.mrf.mxu0
  %5506 = vdwg.mxu0
  %5507 = vst.msk [vmem:[#allocation2 + $0x178] sm:$0xff] %vm524, %v5502
  %s5508 = scalar_lea.vmem %s5, 3072
  %v5509 = vld [vmem:[%s5508] sm:$0xf]
  %v5510 = vld [vmem:[%s5508 + $0x4] sm:$0xf]
  %v5511 = vld [vmem:[%s5508 + $0x8] sm:$0xf]
  %v5512 = vld [vmem:[%s5508 + $0xc] sm:$0xf]
  %v5513 = vld [vmem:[%s5508 + $0x10] sm:$0xf]
  %v5514 = vld [vmem:[%s5508 + $0x14] sm:$0xf]
  %v5515 = vld [vmem:[%s5508 + $0x18] sm:$0xf]
  %v5516 = vld [vmem:[%s5508 + $0x1c] sm:$0xf]
  %v5517 = vld [vmem:[%s5508 + $0x20] sm:$0xf]
  %v5518 = vld [vmem:[%s5508 + $0x24] sm:$0xf]
  %v5519 = vld [vmem:[%s5508 + $0x28] sm:$0xf]
  %v5520 = vld [vmem:[%s5508 + $0x2c] sm:$0xf]
  %v5521 = vld [vmem:[%s5508 + $0x30] sm:$0xf]
  %v5522 = vld [vmem:[%s5508 + $0x34] sm:$0xf]
  %v5523 = vld [vmem:[%s5508 + $0x38] sm:$0xf]
  %v5524 = vld [vmem:[%s5508 + $0x3c] sm:$0xf]
  %v5541 = vunpack.c.l.b16 %v5509
  %v5542 = vunpack.c.l.b16 %v5510
  %v5543 = vunpack.c.l.b16 %v5511
  %v5544 = vunpack.c.l.b16 %v5512
  %v5545 = vunpack.c.l.b16 %v5513
  %v5546 = vunpack.c.l.b16 %v5514
  %v5547 = vunpack.c.l.b16 %v5515
  %v5548 = vunpack.c.l.b16 %v5516
  %v5549 = vunpack.c.l.b16 %v5517
  %v5550 = vunpack.c.l.b16 %v5518
  %v5551 = vunpack.c.l.b16 %v5519
  %v5552 = vunpack.c.l.b16 %v5520
  %v5553 = vunpack.c.l.b16 %v5521
  %v5554 = vunpack.c.l.b16 %v5522
  %v5555 = vunpack.c.l.b16 %v5523
  %v5556 = vunpack.c.l.b16 %v5524
  %v5557 = vpack.c.b16 %v5542, %v5541
  %v5558 = vpack.c.b16 %v5544, %v5543
  %v5559 = vpack.c.b16 %v5546, %v5545
  %v5560 = vpack.c.b16 %v5548, %v5547
  %v5561 = vpack.c.b16 %v5550, %v5549
  %v5562 = vpack.c.b16 %v5552, %v5551
  %v5563 = vpack.c.b16 %v5554, %v5553
  %v5564 = vpack.c.b16 %v5556, %v5555
  %5573 = vmatprep.subr.bf16.mxu0 0
  %5574 = vmatpush1.bf16.msra.mxu0 %v5564
  %5575 = vmatprep.subr.bf16.mxu0 0
  %5576 = vmatpush1.bf16.msra.mxu0 %v5563
  %5577 = vmatprep.subr.bf16.mxu0 0
  %5578 = vmatpush1.bf16.msra.mxu0 %v5562
  %5579 = vmatprep.subr.bf16.mxu0 0
  %5580 = vmatpush1.bf16.msra.mxu0 %v5561
  %5581 = vmatprep.subr.bf16.mxu0 0
  %5582 = vmatpush1.bf16.msra.mxu0 %v5560
  %5583 = vmatprep.subr.bf16.mxu0 0
  %5584 = vmatpush1.bf16.msra.mxu0 %v5559
  %5585 = vmatprep.subr.bf16.mxu0 0
  %5586 = vmatpush1.bf16.msra.mxu0 %v5558
  %5587 = vmatprep.subr.bf16.mxu0 0
  %5588 = vmatpush1.bf16.msra.mxu0 %v5557
  %5589 = vmatprep.subr.bf16.mxu0 0
  %5590 = vmatpush2.bf16.msra.mxu0 0
  %5591 = vmatprep.subr.bf16.mxu0 0
  %5592 = vmatpush2.bf16.msra.mxu0 0
  %5593 = vmatprep.subr.bf16.mxu0 0
  %5594 = vmatpush2.bf16.msra.mxu0 0
  %5595 = vmatprep.subr.bf16.mxu0 0
  %5596 = vmatpush2.bf16.msra.mxu0 0
  %5597 = vmatprep.subr.bf16.mxu0 0
  %5598 = vmatpush2.bf16.msra.mxu0 0
  %5599 = vmatprep.subr.bf16.mxu0 0
  %5600 = vmatpush2.bf16.msra.mxu0 0
  %5601 = vmatprep.subr.bf16.mxu0 0
  %5602 = vmatpush2.bf16.msra.mxu0 0
  %5603 = vmatprep.subr.bf16.mxu0 0
  %5604 = vmatpush2.bf16.msra.mxu0 0
  %5605 = vmatprep.mubr.bf16.mxu0 0
  %5606 = vmatmul.mubr.bf16.gmra.mxu0 %v419
  %v5607 = vpop.f32.mrf.mxu0
  %v5608 = vadd.f32 0.0, %v5607
  %v5609 = vpop.f32.mrf.mxu0
  %v5610 = vpop.f32.mrf.mxu0
  %v5611 = vpop.f32.mrf.mxu0
  %5612 = vdwg.mxu0
  %5613 = vst.msk [vmem:[#allocation2 + $0x180] sm:$0xff] %vm524, %v5608
  %s5614 = scalar_lea.vmem %s5, 3136
  %v5615 = vld [vmem:[%s5614] sm:$0xf]
  %v5616 = vld [vmem:[%s5614 + $0x4] sm:$0xf]
  %v5617 = vld [vmem:[%s5614 + $0x8] sm:$0xf]
  %v5618 = vld [vmem:[%s5614 + $0xc] sm:$0xf]
  %v5619 = vld [vmem:[%s5614 + $0x10] sm:$0xf]
  %v5620 = vld [vmem:[%s5614 + $0x14] sm:$0xf]
  %v5621 = vld [vmem:[%s5614 + $0x18] sm:$0xf]
  %v5622 = vld [vmem:[%s5614 + $0x1c] sm:$0xf]
  %v5623 = vld [vmem:[%s5614 + $0x20] sm:$0xf]
  %v5624 = vld [vmem:[%s5614 + $0x24] sm:$0xf]
  %v5625 = vld [vmem:[%s5614 + $0x28] sm:$0xf]
  %v5626 = vld [vmem:[%s5614 + $0x2c] sm:$0xf]
  %v5627 = vld [vmem:[%s5614 + $0x30] sm:$0xf]
  %v5628 = vld [vmem:[%s5614 + $0x34] sm:$0xf]
  %v5629 = vld [vmem:[%s5614 + $0x38] sm:$0xf]
  %v5630 = vld [vmem:[%s5614 + $0x3c] sm:$0xf]
  %v5647 = vunpack.c.l.b16 %v5615
  %v5648 = vunpack.c.l.b16 %v5616
  %v5649 = vunpack.c.l.b16 %v5617
  %v5650 = vunpack.c.l.b16 %v5618
  %v5651 = vunpack.c.l.b16 %v5619
  %v5652 = vunpack.c.l.b16 %v5620
  %v5653 = vunpack.c.l.b16 %v5621
  %v5654 = vunpack.c.l.b16 %v5622
  %v5655 = vunpack.c.l.b16 %v5623
  %v5656 = vunpack.c.l.b16 %v5624
  %v5657 = vunpack.c.l.b16 %v5625
  %v5658 = vunpack.c.l.b16 %v5626
  %v5659 = vunpack.c.l.b16 %v5627
  %v5660 = vunpack.c.l.b16 %v5628
  %v5661 = vunpack.c.l.b16 %v5629
  %v5662 = vunpack.c.l.b16 %v5630
  %v5663 = vpack.c.b16 %v5648, %v5647
  %v5664 = vpack.c.b16 %v5650, %v5649
  %v5665 = vpack.c.b16 %v5652, %v5651
  %v5666 = vpack.c.b16 %v5654, %v5653
  %v5667 = vpack.c.b16 %v5656, %v5655
  %v5668 = vpack.c.b16 %v5658, %v5657
  %v5669 = vpack.c.b16 %v5660, %v5659
  %v5670 = vpack.c.b16 %v5662, %v5661
  %5679 = vmatprep.subr.bf16.mxu0 0
  %5680 = vmatpush1.bf16.msra.mxu0 %v5670
  %5681 = vmatprep.subr.bf16.mxu0 0
  %5682 = vmatpush1.bf16.msra.mxu0 %v5669
  %5683 = vmatprep.subr.bf16.mxu0 0
  %5684 = vmatpush1.bf16.msra.mxu0 %v5668
  %5685 = vmatprep.subr.bf16.mxu0 0
  %5686 = vmatpush1.bf16.msra.mxu0 %v5667
  %5687 = vmatprep.subr.bf16.mxu0 0
  %5688 = vmatpush1.bf16.msra.mxu0 %v5666
  %5689 = vmatprep.subr.bf16.mxu0 0
  %5690 = vmatpush1.bf16.msra.mxu0 %v5665
  %5691 = vmatprep.subr.bf16.mxu0 0
  %5692 = vmatpush1.bf16.msra.mxu0 %v5664
  %5693 = vmatprep.subr.bf16.mxu0 0
  %5694 = vmatpush1.bf16.msra.mxu0 %v5663
  %5695 = vmatprep.subr.bf16.mxu0 0
  %5696 = vmatpush2.bf16.msra.mxu0 0
  %5697 = vmatprep.subr.bf16.mxu0 0
  %5698 = vmatpush2.bf16.msra.mxu0 0
  %5699 = vmatprep.subr.bf16.mxu0 0
  %5700 = vmatpush2.bf16.msra.mxu0 0
  %5701 = vmatprep.subr.bf16.mxu0 0
  %5702 = vmatpush2.bf16.msra.mxu0 0
  %5703 = vmatprep.subr.bf16.mxu0 0
  %5704 = vmatpush2.bf16.msra.mxu0 0
  %5705 = vmatprep.subr.bf16.mxu0 0
  %5706 = vmatpush2.bf16.msra.mxu0 0
  %5707 = vmatprep.subr.bf16.mxu0 0
  %5708 = vmatpush2.bf16.msra.mxu0 0
  %5709 = vmatprep.subr.bf16.mxu0 0
  %5710 = vmatpush2.bf16.msra.mxu0 0
  %5711 = vmatprep.mubr.bf16.mxu0 0
  %5712 = vmatmul.mubr.bf16.gmra.mxu0 %v419
  %v5713 = vpop.f32.mrf.mxu0
  %v5714 = vadd.f32 0.0, %v5713
  %v5715 = vpop.f32.mrf.mxu0
  %v5716 = vpop.f32.mrf.mxu0
  %v5717 = vpop.f32.mrf.mxu0
  %5718 = vdwg.mxu0
  %5719 = vst.msk [vmem:[#allocation2 + $0x188] sm:$0xff] %vm524, %v5714
  %s5720 = scalar_lea.vmem %s5, 3200
  %v5721 = vld [vmem:[%s5720] sm:$0xf]
  %v5722 = vld [vmem:[%s5720 + $0x4] sm:$0xf]
  %v5723 = vld [vmem:[%s5720 + $0x8] sm:$0xf]
  %v5724 = vld [vmem:[%s5720 + $0xc] sm:$0xf]
  %v5725 = vld [vmem:[%s5720 + $0x10] sm:$0xf]
  %v5726 = vld [vmem:[%s5720 + $0x14] sm:$0xf]
  %v5727 = vld [vmem:[%s5720 + $0x18] sm:$0xf]
  %v5728 = vld [vmem:[%s5720 + $0x1c] sm:$0xf]
  %v5729 = vld [vmem:[%s5720 + $0x20] sm:$0xf]
  %v5730 = vld [vmem:[%s5720 + $0x24] sm:$0xf]
  %v5731 = vld [vmem:[%s5720 + $0x28] sm:$0xf]
  %v5732 = vld [vmem:[%s5720 + $0x2c] sm:$0xf]
  %v5733 = vld [vmem:[%s5720 + $0x30] sm:$0xf]
  %v5734 = vld [vmem:[%s5720 + $0x34] sm:$0xf]
  %v5735 = vld [vmem:[%s5720 + $0x38] sm:$0xf]
  %v5736 = vld [vmem:[%s5720 + $0x3c] sm:$0xf]
  %v5753 = vunpack.c.l.b16 %v5721
  %v5754 = vunpack.c.l.b16 %v5722
  %v5755 = vunpack.c.l.b16 %v5723
  %v5756 = vunpack.c.l.b16 %v5724
  %v5757 = vunpack.c.l.b16 %v5725
  %v5758 = vunpack.c.l.b16 %v5726
  %v5759 = vunpack.c.l.b16 %v5727
  %v5760 = vunpack.c.l.b16 %v5728
  %v5761 = vunpack.c.l.b16 %v5729
  %v5762 = vunpack.c.l.b16 %v5730
  %v5763 = vunpack.c.l.b16 %v5731
  %v5764 = vunpack.c.l.b16 %v5732
  %v5765 = vunpack.c.l.b16 %v5733
  %v5766 = vunpack.c.l.b16 %v5734
  %v5767 = vunpack.c.l.b16 %v5735
  %v5768 = vunpack.c.l.b16 %v5736
  %v5769 = vpack.c.b16 %v5754, %v5753
  %v5770 = vpack.c.b16 %v5756, %v5755
  %v5771 = vpack.c.b16 %v5758, %v5757
  %v5772 = vpack.c.b16 %v5760, %v5759
  %v5773 = vpack.c.b16 %v5762, %v5761
  %v5774 = vpack.c.b16 %v5764, %v5763
  %v5775 = vpack.c.b16 %v5766, %v5765
  %v5776 = vpack.c.b16 %v5768, %v5767
  %5785 = vmatprep.subr.bf16.mxu0 0
  %5786 = vmatpush1.bf16.msra.mxu0 %v5776
  %5787 = vmatprep.subr.bf16.mxu0 0
  %5788 = vmatpush1.bf16.msra.mxu0 %v5775
  %5789 = vmatprep.subr.bf16.mxu0 0
  %5790 = vmatpush1.bf16.msra.mxu0 %v5774
  %5791 = vmatprep.subr.bf16.mxu0 0
  %5792 = vmatpush1.bf16.msra.mxu0 %v5773
  %5793 = vmatprep.subr.bf16.mxu0 0
  %5794 = vmatpush1.bf16.msra.mxu0 %v5772
  %5795 = vmatprep.subr.bf16.mxu0 0
  %5796 = vmatpush1.bf16.msra.mxu0 %v5771
  %5797 = vmatprep.subr.bf16.mxu0 0
  %5798 = vmatpush1.bf16.msra.mxu0 %v5770
  %5799 = vmatprep.subr.bf16.mxu0 0
  %5800 = vmatpush1.bf16.msra.mxu0 %v5769
  %5801 = vmatprep.subr.bf16.mxu0 0
  %5802 = vmatpush2.bf16.msra.mxu0 0
  %5803 = vmatprep.subr.bf16.mxu0 0
  %5804 = vmatpush2.bf16.msra.mxu0 0
  %5805 = vmatprep.subr.bf16.mxu0 0
  %5806 = vmatpush2.bf16.msra.mxu0 0
  %5807 = vmatprep.subr.bf16.mxu0 0
  %5808 = vmatpush2.bf16.msra.mxu0 0
  %5809 = vmatprep.subr.bf16.mxu0 0
  %5810 = vmatpush2.bf16.msra.mxu0 0
  %5811 = vmatprep.subr.bf16.mxu0 0
  %5812 = vmatpush2.bf16.msra.mxu0 0
  %5813 = vmatprep.subr.bf16.mxu0 0
  %5814 = vmatpush2.bf16.msra.mxu0 0
  %5815 = vmatprep.subr.bf16.mxu0 0
  %5816 = vmatpush2.bf16.msra.mxu0 0
  %5817 = vmatprep.mubr.bf16.mxu0 0
  %5818 = vmatmul.mubr.bf16.gmra.mxu0 %v419
  %v5819 = vpop.f32.mrf.mxu0
  %v5820 = vadd.f32 0.0, %v5819
  %v5821 = vpop.f32.mrf.mxu0
  %v5822 = vpop.f32.mrf.mxu0
  %v5823 = vpop.f32.mrf.mxu0
  %5824 = vdwg.mxu0
  %5825 = vst.msk [vmem:[#allocation2 + $0x190] sm:$0xff] %vm524, %v5820
  %s5826 = scalar_lea.vmem %s5, 3264
  %v5827 = vld [vmem:[%s5826] sm:$0xf]
  %v5828 = vld [vmem:[%s5826 + $0x4] sm:$0xf]
  %v5829 = vld [vmem:[%s5826 + $0x8] sm:$0xf]
  %v5830 = vld [vmem:[%s5826 + $0xc] sm:$0xf]
  %v5831 = vld [vmem:[%s5826 + $0x10] sm:$0xf]
  %v5832 = vld [vmem:[%s5826 + $0x14] sm:$0xf]
  %v5833 = vld [vmem:[%s5826 + $0x18] sm:$0xf]
  %v5834 = vld [vmem:[%s5826 + $0x1c] sm:$0xf]
  %v5835 = vld [vmem:[%s5826 + $0x20] sm:$0xf]
  %v5836 = vld [vmem:[%s5826 + $0x24] sm:$0xf]
  %v5837 = vld [vmem:[%s5826 + $0x28] sm:$0xf]
  %v5838 = vld [vmem:[%s5826 + $0x2c] sm:$0xf]
  %v5839 = vld [vmem:[%s5826 + $0x30] sm:$0xf]
  %v5840 = vld [vmem:[%s5826 + $0x34] sm:$0xf]
  %v5841 = vld [vmem:[%s5826 + $0x38] sm:$0xf]
  %v5842 = vld [vmem:[%s5826 + $0x3c] sm:$0xf]
  %v5859 = vunpack.c.l.b16 %v5827
  %v5860 = vunpack.c.l.b16 %v5828
  %v5861 = vunpack.c.l.b16 %v5829
  %v5862 = vunpack.c.l.b16 %v5830
  %v5863 = vunpack.c.l.b16 %v5831
  %v5864 = vunpack.c.l.b16 %v5832
  %v5865 = vunpack.c.l.b16 %v5833
  %v5866 = vunpack.c.l.b16 %v5834
  %v5867 = vunpack.c.l.b16 %v5835
  %v5868 = vunpack.c.l.b16 %v5836
  %v5869 = vunpack.c.l.b16 %v5837
  %v5870 = vunpack.c.l.b16 %v5838
  %v5871 = vunpack.c.l.b16 %v5839
  %v5872 = vunpack.c.l.b16 %v5840
  %v5873 = vunpack.c.l.b16 %v5841
  %v5874 = vunpack.c.l.b16 %v5842
  %v5875 = vpack.c.b16 %v5860, %v5859
  %v5876 = vpack.c.b16 %v5862, %v5861
  %v5877 = vpack.c.b16 %v5864, %v5863
  %v5878 = vpack.c.b16 %v5866, %v5865
  %v5879 = vpack.c.b16 %v5868, %v5867
  %v5880 = vpack.c.b16 %v5870, %v5869
  %v5881 = vpack.c.b16 %v5872, %v5871
  %v5882 = vpack.c.b16 %v5874, %v5873
  %5891 = vmatprep.subr.bf16.mxu0 0
  %5892 = vmatpush1.bf16.msra.mxu0 %v5882
  %5893 = vmatprep.subr.bf16.mxu0 0
  %5894 = vmatpush1.bf16.msra.mxu0 %v5881
  %5895 = vmatprep.subr.bf16.mxu0 0
  %5896 = vmatpush1.bf16.msra.mxu0 %v5880
  %5897 = vmatprep.subr.bf16.mxu0 0
  %5898 = vmatpush1.bf16.msra.mxu0 %v5879
  %5899 = vmatprep.subr.bf16.mxu0 0
  %5900 = vmatpush1.bf16.msra.mxu0 %v5878
  %5901 = vmatprep.subr.bf16.mxu0 0
  %5902 = vmatpush1.bf16.msra.mxu0 %v5877
  %5903 = vmatprep.subr.bf16.mxu0 0
  %5904 = vmatpush1.bf16.msra.mxu0 %v5876
  %5905 = vmatprep.subr.bf16.mxu0 0
  %5906 = vmatpush1.bf16.msra.mxu0 %v5875
  %5907 = vmatprep.subr.bf16.mxu0 0
  %5908 = vmatpush2.bf16.msra.mxu0 0
  %5909 = vmatprep.subr.bf16.mxu0 0
  %5910 = vmatpush2.bf16.msra.mxu0 0
  %5911 = vmatprep.subr.bf16.mxu0 0
  %5912 = vmatpush2.bf16.msra.mxu0 0
  %5913 = vmatprep.subr.bf16.mxu0 0
  %5914 = vmatpush2.bf16.msra.mxu0 0
  %5915 = vmatprep.subr.bf16.mxu0 0
  %5916 = vmatpush2.bf16.msra.mxu0 0
  %5917 = vmatprep.subr.bf16.mxu0 0
  %5918 = vmatpush2.bf16.msra.mxu0 0
  %5919 = vmatprep.subr.bf16.mxu0 0
  %5920 = vmatpush2.bf16.msra.mxu0 0
  %5921 = vmatprep.subr.bf16.mxu0 0
  %5922 = vmatpush2.bf16.msra.mxu0 0
  %5923 = vmatprep.mubr.bf16.mxu0 0
  %5924 = vmatmul.mubr.bf16.gmra.mxu0 %v419
  %v5925 = vpop.f32.mrf.mxu0
  %v5926 = vadd.f32 0.0, %v5925
  %v5927 = vpop.f32.mrf.mxu0
  %v5928 = vpop.f32.mrf.mxu0
  %v5929 = vpop.f32.mrf.mxu0
  %5930 = vdwg.mxu0
  %5931 = vst.msk [vmem:[#allocation2 + $0x198] sm:$0xff] %vm524, %v5926
  %s5932 = scalar_lea.vmem %s5, 3328
  %v5933 = vld [vmem:[%s5932] sm:$0xf]
  %v5934 = vld [vmem:[%s5932 + $0x4] sm:$0xf]
  %v5935 = vld [vmem:[%s5932 + $0x8] sm:$0xf]
  %v5936 = vld [vmem:[%s5932 + $0xc] sm:$0xf]
  %v5937 = vld [vmem:[%s5932 + $0x10] sm:$0xf]
  %v5938 = vld [vmem:[%s5932 + $0x14] sm:$0xf]
  %v5939 = vld [vmem:[%s5932 + $0x18] sm:$0xf]
  %v5940 = vld [vmem:[%s5932 + $0x1c] sm:$0xf]
  %v5941 = vld [vmem:[%s5932 + $0x20] sm:$0xf]
  %v5942 = vld [vmem:[%s5932 + $0x24] sm:$0xf]
  %v5943 = vld [vmem:[%s5932 + $0x28] sm:$0xf]
  %v5944 = vld [vmem:[%s5932 + $0x2c] sm:$0xf]
  %v5945 = vld [vmem:[%s5932 + $0x30] sm:$0xf]
  %v5946 = vld [vmem:[%s5932 + $0x34] sm:$0xf]
  %v5947 = vld [vmem:[%s5932 + $0x38] sm:$0xf]
  %v5948 = vld [vmem:[%s5932 + $0x3c] sm:$0xf]
  %v5965 = vunpack.c.l.b16 %v5933
  %v5966 = vunpack.c.l.b16 %v5934
  %v5967 = vunpack.c.l.b16 %v5935
  %v5968 = vunpack.c.l.b16 %v5936
  %v5969 = vunpack.c.l.b16 %v5937
  %v5970 = vunpack.c.l.b16 %v5938
  %v5971 = vunpack.c.l.b16 %v5939
  %v5972 = vunpack.c.l.b16 %v5940
  %v5973 = vunpack.c.l.b16 %v5941
  %v5974 = vunpack.c.l.b16 %v5942
  %v5975 = vunpack.c.l.b16 %v5943
  %v5976 = vunpack.c.l.b16 %v5944
  %v5977 = vunpack.c.l.b16 %v5945
  %v5978 = vunpack.c.l.b16 %v5946
  %v5979 = vunpack.c.l.b16 %v5947
  %v5980 = vunpack.c.l.b16 %v5948
  %v5981 = vpack.c.b16 %v5966, %v5965
  %v5982 = vpack.c.b16 %v5968, %v5967
  %v5983 = vpack.c.b16 %v5970, %v5969
  %v5984 = vpack.c.b16 %v5972, %v5971
  %v5985 = vpack.c.b16 %v5974, %v5973
  %v5986 = vpack.c.b16 %v5976, %v5975
  %v5987 = vpack.c.b16 %v5978, %v5977
  %v5988 = vpack.c.b16 %v5980, %v5979
  %5997 = vmatprep.subr.bf16.mxu0 0
  %5998 = vmatpush1.bf16.msra.mxu0 %v5988
  %5999 = vmatprep.subr.bf16.mxu0 0
  %6000 = vmatpush1.bf16.msra.mxu0 %v5987
  %6001 = vmatprep.subr.bf16.mxu0 0
  %6002 = vmatpush1.bf16.msra.mxu0 %v5986
  %6003 = vmatprep.subr.bf16.mxu0 0
  %6004 = vmatpush1.bf16.msra.mxu0 %v5985
  %6005 = vmatprep.subr.bf16.mxu0 0
  %6006 = vmatpush1.bf16.msra.mxu0 %v5984
  %6007 = vmatprep.subr.bf16.mxu0 0
  %6008 = vmatpush1.bf16.msra.mxu0 %v5983
  %6009 = vmatprep.subr.bf16.mxu0 0
  %6010 = vmatpush1.bf16.msra.mxu0 %v5982
  %6011 = vmatprep.subr.bf16.mxu0 0
  %6012 = vmatpush1.bf16.msra.mxu0 %v5981
  %6013 = vmatprep.subr.bf16.mxu0 0
  %6014 = vmatpush2.bf16.msra.mxu0 0
  %6015 = vmatprep.subr.bf16.mxu0 0
  %6016 = vmatpush2.bf16.msra.mxu0 0
  %6017 = vmatprep.subr.bf16.mxu0 0
  %6018 = vmatpush2.bf16.msra.mxu0 0
  %6019 = vmatprep.subr.bf16.mxu0 0
  %6020 = vmatpush2.bf16.msra.mxu0 0
  %6021 = vmatprep.subr.bf16.mxu0 0
  %6022 = vmatpush2.bf16.msra.mxu0 0
  %6023 = vmatprep.subr.bf16.mxu0 0
  %6024 = vmatpush2.bf16.msra.mxu0 0
  %6025 = vmatprep.subr.bf16.mxu0 0
  %6026 = vmatpush2.bf16.msra.mxu0 0
  %6027 = vmatprep.subr.bf16.mxu0 0
  %6028 = vmatpush2.bf16.msra.mxu0 0
  %6029 = vmatprep.mubr.bf16.mxu0 0
  %6030 = vmatmul.mubr.bf16.gmra.mxu0 %v419
  %v6031 = vpop.f32.mrf.mxu0
  %v6032 = vadd.f32 0.0, %v6031
  %v6033 = vpop.f32.mrf.mxu0
  %v6034 = vpop.f32.mrf.mxu0
  %v6035 = vpop.f32.mrf.mxu0
  %6036 = vdwg.mxu0
  %6037 = vst.msk [vmem:[#allocation2 + $0x1a0] sm:$0xff] %vm524, %v6032
  %s6038 = scalar_lea.vmem %s5, 3392
  %v6039 = vld [vmem:[%s6038] sm:$0xf]
  %v6040 = vld [vmem:[%s6038 + $0x4] sm:$0xf]
  %v6041 = vld [vmem:[%s6038 + $0x8] sm:$0xf]
  %v6042 = vld [vmem:[%s6038 + $0xc] sm:$0xf]
  %v6043 = vld [vmem:[%s6038 + $0x10] sm:$0xf]
  %v6044 = vld [vmem:[%s6038 + $0x14] sm:$0xf]
  %v6045 = vld [vmem:[%s6038 + $0x18] sm:$0xf]
  %v6046 = vld [vmem:[%s6038 + $0x1c] sm:$0xf]
  %v6047 = vld [vmem:[%s6038 + $0x20] sm:$0xf]
  %v6048 = vld [vmem:[%s6038 + $0x24] sm:$0xf]
  %v6049 = vld [vmem:[%s6038 + $0x28] sm:$0xf]
  %v6050 = vld [vmem:[%s6038 + $0x2c] sm:$0xf]
  %v6051 = vld [vmem:[%s6038 + $0x30] sm:$0xf]
  %v6052 = vld [vmem:[%s6038 + $0x34] sm:$0xf]
  %v6053 = vld [vmem:[%s6038 + $0x38] sm:$0xf]
  %v6054 = vld [vmem:[%s6038 + $0x3c] sm:$0xf]
  %v6071 = vunpack.c.l.b16 %v6039
  %v6072 = vunpack.c.l.b16 %v6040
  %v6073 = vunpack.c.l.b16 %v6041
  %v6074 = vunpack.c.l.b16 %v6042
  %v6075 = vunpack.c.l.b16 %v6043
  %v6076 = vunpack.c.l.b16 %v6044
  %v6077 = vunpack.c.l.b16 %v6045
  %v6078 = vunpack.c.l.b16 %v6046
  %v6079 = vunpack.c.l.b16 %v6047
  %v6080 = vunpack.c.l.b16 %v6048
  %v6081 = vunpack.c.l.b16 %v6049
  %v6082 = vunpack.c.l.b16 %v6050
  %v6083 = vunpack.c.l.b16 %v6051
  %v6084 = vunpack.c.l.b16 %v6052
  %v6085 = vunpack.c.l.b16 %v6053
  %v6086 = vunpack.c.l.b16 %v6054
  %v6087 = vpack.c.b16 %v6072, %v6071
  %v6088 = vpack.c.b16 %v6074, %v6073
  %v6089 = vpack.c.b16 %v6076, %v6075
  %v6090 = vpack.c.b16 %v6078, %v6077
  %v6091 = vpack.c.b16 %v6080, %v6079
  %v6092 = vpack.c.b16 %v6082, %v6081
  %v6093 = vpack.c.b16 %v6084, %v6083
  %v6094 = vpack.c.b16 %v6086, %v6085
  %6103 = vmatprep.subr.bf16.mxu0 0
  %6104 = vmatpush1.bf16.msra.mxu0 %v6094
  %6105 = vmatprep.subr.bf16.mxu0 0
  %6106 = vmatpush1.bf16.msra.mxu0 %v6093
  %6107 = vmatprep.subr.bf16.mxu0 0
  %6108 = vmatpush1.bf16.msra.mxu0 %v6092
  %6109 = vmatprep.subr.bf16.mxu0 0
  %6110 = vmatpush1.bf16.msra.mxu0 %v6091
  %6111 = vmatprep.subr.bf16.mxu0 0
  %6112 = vmatpush1.bf16.msra.mxu0 %v6090
  %6113 = vmatprep.subr.bf16.mxu0 0
  %6114 = vmatpush1.bf16.msra.mxu0 %v6089
  %6115 = vmatprep.subr.bf16.mxu0 0
  %6116 = vmatpush1.bf16.msra.mxu0 %v6088
  %6117 = vmatprep.subr.bf16.mxu0 0
  %6118 = vmatpush1.bf16.msra.mxu0 %v6087
  %6119 = vmatprep.subr.bf16.mxu0 0
  %6120 = vmatpush2.bf16.msra.mxu0 0
  %6121 = vmatprep.subr.bf16.mxu0 0
  %6122 = vmatpush2.bf16.msra.mxu0 0
  %6123 = vmatprep.subr.bf16.mxu0 0
  %6124 = vmatpush2.bf16.msra.mxu0 0
  %6125 = vmatprep.subr.bf16.mxu0 0
  %6126 = vmatpush2.bf16.msra.mxu0 0
  %6127 = vmatprep.subr.bf16.mxu0 0
  %6128 = vmatpush2.bf16.msra.mxu0 0
  %6129 = vmatprep.subr.bf16.mxu0 0
  %6130 = vmatpush2.bf16.msra.mxu0 0
  %6131 = vmatprep.subr.bf16.mxu0 0
  %6132 = vmatpush2.bf16.msra.mxu0 0
  %6133 = vmatprep.subr.bf16.mxu0 0
  %6134 = vmatpush2.bf16.msra.mxu0 0
  %6135 = vmatprep.mubr.bf16.mxu0 0
  %6136 = vmatmul.mubr.bf16.gmra.mxu0 %v419
  %v6137 = vpop.f32.mrf.mxu0
  %v6138 = vadd.f32 0.0, %v6137
  %v6139 = vpop.f32.mrf.mxu0
  %v6140 = vpop.f32.mrf.mxu0
  %v6141 = vpop.f32.mrf.mxu0
  %6142 = vdwg.mxu0
  %6143 = vst.msk [vmem:[#allocation2 + $0x1a8] sm:$0xff] %vm524, %v6138
  %s6144 = scalar_lea.vmem %s5, 3456
  %v6145 = vld [vmem:[%s6144] sm:$0xf]
  %v6146 = vld [vmem:[%s6144 + $0x4] sm:$0xf]
  %v6147 = vld [vmem:[%s6144 + $0x8] sm:$0xf]
  %v6148 = vld [vmem:[%s6144 + $0xc] sm:$0xf]
  %v6149 = vld [vmem:[%s6144 + $0x10] sm:$0xf]
  %v6150 = vld [vmem:[%s6144 + $0x14] sm:$0xf]
  %v6151 = vld [vmem:[%s6144 + $0x18] sm:$0xf]
  %v6152 = vld [vmem:[%s6144 + $0x1c] sm:$0xf]
  %v6153 = vld [vmem:[%s6144 + $0x20] sm:$0xf]
  %v6154 = vld [vmem:[%s6144 + $0x24] sm:$0xf]
  %v6155 = vld [vmem:[%s6144 + $0x28] sm:$0xf]
  %v6156 = vld [vmem:[%s6144 + $0x2c] sm:$0xf]
  %v6157 = vld [vmem:[%s6144 + $0x30] sm:$0xf]
  %v6158 = vld [vmem:[%s6144 + $0x34] sm:$0xf]
  %v6159 = vld [vmem:[%s6144 + $0x38] sm:$0xf]
  %v6160 = vld [vmem:[%s6144 + $0x3c] sm:$0xf]
  %v6177 = vunpack.c.l.b16 %v6145
  %v6178 = vunpack.c.l.b16 %v6146
  %v6179 = vunpack.c.l.b16 %v6147
  %v6180 = vunpack.c.l.b16 %v6148
  %v6181 = vunpack.c.l.b16 %v6149
  %v6182 = vunpack.c.l.b16 %v6150
  %v6183 = vunpack.c.l.b16 %v6151
  %v6184 = vunpack.c.l.b16 %v6152
  %v6185 = vunpack.c.l.b16 %v6153
  %v6186 = vunpack.c.l.b16 %v6154
  %v6187 = vunpack.c.l.b16 %v6155
  %v6188 = vunpack.c.l.b16 %v6156
  %v6189 = vunpack.c.l.b16 %v6157
  %v6190 = vunpack.c.l.b16 %v6158
  %v6191 = vunpack.c.l.b16 %v6159
  %v6192 = vunpack.c.l.b16 %v6160
  %v6193 = vpack.c.b16 %v6178, %v6177
  %v6194 = vpack.c.b16 %v6180, %v6179
  %v6195 = vpack.c.b16 %v6182, %v6181
  %v6196 = vpack.c.b16 %v6184, %v6183
  %v6197 = vpack.c.b16 %v6186, %v6185
  %v6198 = vpack.c.b16 %v6188, %v6187
  %v6199 = vpack.c.b16 %v6190, %v6189
  %v6200 = vpack.c.b16 %v6192, %v6191
  %6209 = vmatprep.subr.bf16.mxu0 0
  %6210 = vmatpush1.bf16.msra.mxu0 %v6200
  %6211 = vmatprep.subr.bf16.mxu0 0
  %6212 = vmatpush1.bf16.msra.mxu0 %v6199
  %6213 = vmatprep.subr.bf16.mxu0 0
  %6214 = vmatpush1.bf16.msra.mxu0 %v6198
  %6215 = vmatprep.subr.bf16.mxu0 0
  %6216 = vmatpush1.bf16.msra.mxu0 %v6197
  %6217 = vmatprep.subr.bf16.mxu0 0
  %6218 = vmatpush1.bf16.msra.mxu0 %v6196
  %6219 = vmatprep.subr.bf16.mxu0 0
  %6220 = vmatpush1.bf16.msra.mxu0 %v6195
  %6221 = vmatprep.subr.bf16.mxu0 0
  %6222 = vmatpush1.bf16.msra.mxu0 %v6194
  %6223 = vmatprep.subr.bf16.mxu0 0
  %6224 = vmatpush1.bf16.msra.mxu0 %v6193
  %6225 = vmatprep.subr.bf16.mxu0 0
  %6226 = vmatpush2.bf16.msra.mxu0 0
  %6227 = vmatprep.subr.bf16.mxu0 0
  %6228 = vmatpush2.bf16.msra.mxu0 0
  %6229 = vmatprep.subr.bf16.mxu0 0
  %6230 = vmatpush2.bf16.msra.mxu0 0
  %6231 = vmatprep.subr.bf16.mxu0 0
  %6232 = vmatpush2.bf16.msra.mxu0 0
  %6233 = vmatprep.subr.bf16.mxu0 0
  %6234 = vmatpush2.bf16.msra.mxu0 0
  %6235 = vmatprep.subr.bf16.mxu0 0
  %6236 = vmatpush2.bf16.msra.mxu0 0
  %6237 = vmatprep.subr.bf16.mxu0 0
  %6238 = vmatpush2.bf16.msra.mxu0 0
  %6239 = vmatprep.subr.bf16.mxu0 0
  %6240 = vmatpush2.bf16.msra.mxu0 0
  %6241 = vmatprep.mubr.bf16.mxu0 0
  %6242 = vmatmul.mubr.bf16.gmra.mxu0 %v419
  %v6243 = vpop.f32.mrf.mxu0
  %v6244 = vadd.f32 0.0, %v6243
  %v6245 = vpop.f32.mrf.mxu0
  %v6246 = vpop.f32.mrf.mxu0
  %v6247 = vpop.f32.mrf.mxu0
  %6248 = vdwg.mxu0
  %6249 = vst.msk [vmem:[#allocation2 + $0x1b0] sm:$0xff] %vm524, %v6244
  %s6250 = scalar_lea.vmem %s5, 3520
  %v6251 = vld [vmem:[%s6250] sm:$0xf]
  %v6252 = vld [vmem:[%s6250 + $0x4] sm:$0xf]
  %v6253 = vld [vmem:[%s6250 + $0x8] sm:$0xf]
  %v6254 = vld [vmem:[%s6250 + $0xc] sm:$0xf]
  %v6255 = vld [vmem:[%s6250 + $0x10] sm:$0xf]
  %v6256 = vld [vmem:[%s6250 + $0x14] sm:$0xf]
  %v6257 = vld [vmem:[%s6250 + $0x18] sm:$0xf]
  %v6258 = vld [vmem:[%s6250 + $0x1c] sm:$0xf]
  %v6259 = vld [vmem:[%s6250 + $0x20] sm:$0xf]
  %v6260 = vld [vmem:[%s6250 + $0x24] sm:$0xf]
  %v6261 = vld [vmem:[%s6250 + $0x28] sm:$0xf]
  %v6262 = vld [vmem:[%s6250 + $0x2c] sm:$0xf]
  %v6263 = vld [vmem:[%s6250 + $0x30] sm:$0xf]
  %v6264 = vld [vmem:[%s6250 + $0x34] sm:$0xf]
  %v6265 = vld [vmem:[%s6250 + $0x38] sm:$0xf]
  %v6266 = vld [vmem:[%s6250 + $0x3c] sm:$0xf]
  %v6283 = vunpack.c.l.b16 %v6251
  %v6284 = vunpack.c.l.b16 %v6252
  %v6285 = vunpack.c.l.b16 %v6253
  %v6286 = vunpack.c.l.b16 %v6254
  %v6287 = vunpack.c.l.b16 %v6255
  %v6288 = vunpack.c.l.b16 %v6256
  %v6289 = vunpack.c.l.b16 %v6257
  %v6290 = vunpack.c.l.b16 %v6258
  %v6291 = vunpack.c.l.b16 %v6259
  %v6292 = vunpack.c.l.b16 %v6260
  %v6293 = vunpack.c.l.b16 %v6261
  %v6294 = vunpack.c.l.b16 %v6262
  %v6295 = vunpack.c.l.b16 %v6263
  %v6296 = vunpack.c.l.b16 %v6264
  %v6297 = vunpack.c.l.b16 %v6265
  %v6298 = vunpack.c.l.b16 %v6266
  %v6299 = vpack.c.b16 %v6284, %v6283
  %v6300 = vpack.c.b16 %v6286, %v6285
  %v6301 = vpack.c.b16 %v6288, %v6287
  %v6302 = vpack.c.b16 %v6290, %v6289
  %v6303 = vpack.c.b16 %v6292, %v6291
  %v6304 = vpack.c.b16 %v6294, %v6293
  %v6305 = vpack.c.b16 %v6296, %v6295
  %v6306 = vpack.c.b16 %v6298, %v6297
  %6315 = vmatprep.subr.bf16.mxu0 0
  %6316 = vmatpush1.bf16.msra.mxu0 %v6306
  %6317 = vmatprep.subr.bf16.mxu0 0
  %6318 = vmatpush1.bf16.msra.mxu0 %v6305
  %6319 = vmatprep.subr.bf16.mxu0 0
  %6320 = vmatpush1.bf16.msra.mxu0 %v6304
  %6321 = vmatprep.subr.bf16.mxu0 0
  %6322 = vmatpush1.bf16.msra.mxu0 %v6303
  %6323 = vmatprep.subr.bf16.mxu0 0
  %6324 = vmatpush1.bf16.msra.mxu0 %v6302
  %6325 = vmatprep.subr.bf16.mxu0 0
  %6326 = vmatpush1.bf16.msra.mxu0 %v6301
  %6327 = vmatprep.subr.bf16.mxu0 0
  %6328 = vmatpush1.bf16.msra.mxu0 %v6300
  %6329 = vmatprep.subr.bf16.mxu0 0
  %6330 = vmatpush1.bf16.msra.mxu0 %v6299
  %6331 = vmatprep.subr.bf16.mxu0 0
  %6332 = vmatpush2.bf16.msra.mxu0 0
  %6333 = vmatprep.subr.bf16.mxu0 0
  %6334 = vmatpush2.bf16.msra.mxu0 0
  %6335 = vmatprep.subr.bf16.mxu0 0
  %6336 = vmatpush2.bf16.msra.mxu0 0
  %6337 = vmatprep.subr.bf16.mxu0 0
  %6338 = vmatpush2.bf16.msra.mxu0 0
  %6339 = vmatprep.subr.bf16.mxu0 0
  %6340 = vmatpush2.bf16.msra.mxu0 0
  %6341 = vmatprep.subr.bf16.mxu0 0
  %6342 = vmatpush2.bf16.msra.mxu0 0
  %6343 = vmatprep.subr.bf16.mxu0 0
  %6344 = vmatpush2.bf16.msra.mxu0 0
  %6345 = vmatprep.subr.bf16.mxu0 0
  %6346 = vmatpush2.bf16.msra.mxu0 0
  %6347 = vmatprep.mubr.bf16.mxu0 0
  %6348 = vmatmul.mubr.bf16.gmra.mxu0 %v419
  %v6349 = vpop.f32.mrf.mxu0
  %v6350 = vadd.f32 0.0, %v6349
  %v6351 = vpop.f32.mrf.mxu0
  %v6352 = vpop.f32.mrf.mxu0
  %v6353 = vpop.f32.mrf.mxu0
  %6354 = vdwg.mxu0
  %6355 = vst.msk [vmem:[#allocation2 + $0x1b8] sm:$0xff] %vm524, %v6350
  %s6356 = scalar_lea.vmem %s5, 3584
  %v6357 = vld [vmem:[%s6356] sm:$0xf]
  %v6358 = vld [vmem:[%s6356 + $0x4] sm:$0xf]
  %v6359 = vld [vmem:[%s6356 + $0x8] sm:$0xf]
  %v6360 = vld [vmem:[%s6356 + $0xc] sm:$0xf]
  %v6361 = vld [vmem:[%s6356 + $0x10] sm:$0xf]
  %v6362 = vld [vmem:[%s6356 + $0x14] sm:$0xf]
  %v6363 = vld [vmem:[%s6356 + $0x18] sm:$0xf]
  %v6364 = vld [vmem:[%s6356 + $0x1c] sm:$0xf]
  %v6365 = vld [vmem:[%s6356 + $0x20] sm:$0xf]
  %v6366 = vld [vmem:[%s6356 + $0x24] sm:$0xf]
  %v6367 = vld [vmem:[%s6356 + $0x28] sm:$0xf]
  %v6368 = vld [vmem:[%s6356 + $0x2c] sm:$0xf]
  %v6369 = vld [vmem:[%s6356 + $0x30] sm:$0xf]
  %v6370 = vld [vmem:[%s6356 + $0x34] sm:$0xf]
  %v6371 = vld [vmem:[%s6356 + $0x38] sm:$0xf]
  %v6372 = vld [vmem:[%s6356 + $0x3c] sm:$0xf]
  %v6389 = vunpack.c.l.b16 %v6357
  %v6390 = vunpack.c.l.b16 %v6358
  %v6391 = vunpack.c.l.b16 %v6359
  %v6392 = vunpack.c.l.b16 %v6360
  %v6393 = vunpack.c.l.b16 %v6361
  %v6394 = vunpack.c.l.b16 %v6362
  %v6395 = vunpack.c.l.b16 %v6363
  %v6396 = vunpack.c.l.b16 %v6364
  %v6397 = vunpack.c.l.b16 %v6365
  %v6398 = vunpack.c.l.b16 %v6366
  %v6399 = vunpack.c.l.b16 %v6367
  %v6400 = vunpack.c.l.b16 %v6368
  %v6401 = vunpack.c.l.b16 %v6369
  %v6402 = vunpack.c.l.b16 %v6370
  %v6403 = vunpack.c.l.b16 %v6371
  %v6404 = vunpack.c.l.b16 %v6372
  %v6405 = vpack.c.b16 %v6390, %v6389
  %v6406 = vpack.c.b16 %v6392, %v6391
  %v6407 = vpack.c.b16 %v6394, %v6393
  %v6408 = vpack.c.b16 %v6396, %v6395
  %v6409 = vpack.c.b16 %v6398, %v6397
  %v6410 = vpack.c.b16 %v6400, %v6399
  %v6411 = vpack.c.b16 %v6402, %v6401
  %v6412 = vpack.c.b16 %v6404, %v6403
  %6421 = vmatprep.subr.bf16.mxu0 0
  %6422 = vmatpush1.bf16.msra.mxu0 %v6412
  %6423 = vmatprep.subr.bf16.mxu0 0
  %6424 = vmatpush1.bf16.msra.mxu0 %v6411
  %6425 = vmatprep.subr.bf16.mxu0 0
  %6426 = vmatpush1.bf16.msra.mxu0 %v6410
  %6427 = vmatprep.subr.bf16.mxu0 0
  %6428 = vmatpush1.bf16.msra.mxu0 %v6409
  %6429 = vmatprep.subr.bf16.mxu0 0
  %6430 = vmatpush1.bf16.msra.mxu0 %v6408
  %6431 = vmatprep.subr.bf16.mxu0 0
  %6432 = vmatpush1.bf16.msra.mxu0 %v6407
  %6433 = vmatprep.subr.bf16.mxu0 0
  %6434 = vmatpush1.bf16.msra.mxu0 %v6406
  %6435 = vmatprep.subr.bf16.mxu0 0
  %6436 = vmatpush1.bf16.msra.mxu0 %v6405
  %6437 = vmatprep.subr.bf16.mxu0 0
  %6438 = vmatpush2.bf16.msra.mxu0 0
  %6439 = vmatprep.subr.bf16.mxu0 0
  %6440 = vmatpush2.bf16.msra.mxu0 0
  %6441 = vmatprep.subr.bf16.mxu0 0
  %6442 = vmatpush2.bf16.msra.mxu0 0
  %6443 = vmatprep.subr.bf16.mxu0 0
  %6444 = vmatpush2.bf16.msra.mxu0 0
  %6445 = vmatprep.subr.bf16.mxu0 0
  %6446 = vmatpush2.bf16.msra.mxu0 0
  %6447 = vmatprep.subr.bf16.mxu0 0
  %6448 = vmatpush2.bf16.msra.mxu0 0
  %6449 = vmatprep.subr.bf16.mxu0 0
  %6450 = vmatpush2.bf16.msra.mxu0 0
  %6451 = vmatprep.subr.bf16.mxu0 0
  %6452 = vmatpush2.bf16.msra.mxu0 0
  %6453 = vmatprep.mubr.bf16.mxu0 0
  %6454 = vmatmul.mubr.bf16.gmra.mxu0 %v419
  %v6455 = vpop.f32.mrf.mxu0
  %v6456 = vadd.f32 0.0, %v6455
  %v6457 = vpop.f32.mrf.mxu0
  %v6458 = vpop.f32.mrf.mxu0
  %v6459 = vpop.f32.mrf.mxu0
  %6460 = vdwg.mxu0
  %6461 = vst.msk [vmem:[#allocation2 + $0x1c0] sm:$0xff] %vm524, %v6456
  %s6462 = scalar_lea.vmem %s5, 3648
  %v6463 = vld [vmem:[%s6462] sm:$0xf]
  %v6464 = vld [vmem:[%s6462 + $0x4] sm:$0xf]
  %v6465 = vld [vmem:[%s6462 + $0x8] sm:$0xf]
  %v6466 = vld [vmem:[%s6462 + $0xc] sm:$0xf]
  %v6467 = vld [vmem:[%s6462 + $0x10] sm:$0xf]
  %v6468 = vld [vmem:[%s6462 + $0x14] sm:$0xf]
  %v6469 = vld [vmem:[%s6462 + $0x18] sm:$0xf]
  %v6470 = vld [vmem:[%s6462 + $0x1c] sm:$0xf]
  %v6471 = vld [vmem:[%s6462 + $0x20] sm:$0xf]
  %v6472 = vld [vmem:[%s6462 + $0x24] sm:$0xf]
  %v6473 = vld [vmem:[%s6462 + $0x28] sm:$0xf]
  %v6474 = vld [vmem:[%s6462 + $0x2c] sm:$0xf]
  %v6475 = vld [vmem:[%s6462 + $0x30] sm:$0xf]
  %v6476 = vld [vmem:[%s6462 + $0x34] sm:$0xf]
  %v6477 = vld [vmem:[%s6462 + $0x38] sm:$0xf]
  %v6478 = vld [vmem:[%s6462 + $0x3c] sm:$0xf]
  %v6495 = vunpack.c.l.b16 %v6463
  %v6496 = vunpack.c.l.b16 %v6464
  %v6497 = vunpack.c.l.b16 %v6465
  %v6498 = vunpack.c.l.b16 %v6466
  %v6499 = vunpack.c.l.b16 %v6467
  %v6500 = vunpack.c.l.b16 %v6468
  %v6501 = vunpack.c.l.b16 %v6469
  %v6502 = vunpack.c.l.b16 %v6470
  %v6503 = vunpack.c.l.b16 %v6471
  %v6504 = vunpack.c.l.b16 %v6472
  %v6505 = vunpack.c.l.b16 %v6473
  %v6506 = vunpack.c.l.b16 %v6474
  %v6507 = vunpack.c.l.b16 %v6475
  %v6508 = vunpack.c.l.b16 %v6476
  %v6509 = vunpack.c.l.b16 %v6477
  %v6510 = vunpack.c.l.b16 %v6478
  %v6511 = vpack.c.b16 %v6496, %v6495
  %v6512 = vpack.c.b16 %v6498, %v6497
  %v6513 = vpack.c.b16 %v6500, %v6499
  %v6514 = vpack.c.b16 %v6502, %v6501
  %v6515 = vpack.c.b16 %v6504, %v6503
  %v6516 = vpack.c.b16 %v6506, %v6505
  %v6517 = vpack.c.b16 %v6508, %v6507
  %v6518 = vpack.c.b16 %v6510, %v6509
  %6527 = vmatprep.subr.bf16.mxu0 0
  %6528 = vmatpush1.bf16.msra.mxu0 %v6518
  %6529 = vmatprep.subr.bf16.mxu0 0
  %6530 = vmatpush1.bf16.msra.mxu0 %v6517
  %6531 = vmatprep.subr.bf16.mxu0 0
  %6532 = vmatpush1.bf16.msra.mxu0 %v6516
  %6533 = vmatprep.subr.bf16.mxu0 0
  %6534 = vmatpush1.bf16.msra.mxu0 %v6515
  %6535 = vmatprep.subr.bf16.mxu0 0
  %6536 = vmatpush1.bf16.msra.mxu0 %v6514
  %6537 = vmatprep.subr.bf16.mxu0 0
  %6538 = vmatpush1.bf16.msra.mxu0 %v6513
  %6539 = vmatprep.subr.bf16.mxu0 0
  %6540 = vmatpush1.bf16.msra.mxu0 %v6512
  %6541 = vmatprep.subr.bf16.mxu0 0
  %6542 = vmatpush1.bf16.msra.mxu0 %v6511
  %6543 = vmatprep.subr.bf16.mxu0 0
  %6544 = vmatpush2.bf16.msra.mxu0 0
  %6545 = vmatprep.subr.bf16.mxu0 0
  %6546 = vmatpush2.bf16.msra.mxu0 0
  %6547 = vmatprep.subr.bf16.mxu0 0
  %6548 = vmatpush2.bf16.msra.mxu0 0
  %6549 = vmatprep.subr.bf16.mxu0 0
  %6550 = vmatpush2.bf16.msra.mxu0 0
  %6551 = vmatprep.subr.bf16.mxu0 0
  %6552 = vmatpush2.bf16.msra.mxu0 0
  %6553 = vmatprep.subr.bf16.mxu0 0
  %6554 = vmatpush2.bf16.msra.mxu0 0
  %6555 = vmatprep.subr.bf16.mxu0 0
  %6556 = vmatpush2.bf16.msra.mxu0 0
  %6557 = vmatprep.subr.bf16.mxu0 0
  %6558 = vmatpush2.bf16.msra.mxu0 0
  %6559 = vmatprep.mubr.bf16.mxu0 0
  %6560 = vmatmul.mubr.bf16.gmra.mxu0 %v419
  %v6561 = vpop.f32.mrf.mxu0
  %v6562 = vadd.f32 0.0, %v6561
  %v6563 = vpop.f32.mrf.mxu0
  %v6564 = vpop.f32.mrf.mxu0
  %v6565 = vpop.f32.mrf.mxu0
  %6566 = vdwg.mxu0
  %6567 = vst.msk [vmem:[#allocation2 + $0x1c8] sm:$0xff] %vm524, %v6562
  %s6568 = scalar_lea.vmem %s5, 3712
  %v6569 = vld [vmem:[%s6568] sm:$0xf]
  %v6570 = vld [vmem:[%s6568 + $0x4] sm:$0xf]
  %v6571 = vld [vmem:[%s6568 + $0x8] sm:$0xf]
  %v6572 = vld [vmem:[%s6568 + $0xc] sm:$0xf]
  %v6573 = vld [vmem:[%s6568 + $0x10] sm:$0xf]
  %v6574 = vld [vmem:[%s6568 + $0x14] sm:$0xf]
  %v6575 = vld [vmem:[%s6568 + $0x18] sm:$0xf]
  %v6576 = vld [vmem:[%s6568 + $0x1c] sm:$0xf]
  %v6577 = vld [vmem:[%s6568 + $0x20] sm:$0xf]
  %v6578 = vld [vmem:[%s6568 + $0x24] sm:$0xf]
  %v6579 = vld [vmem:[%s6568 + $0x28] sm:$0xf]
  %v6580 = vld [vmem:[%s6568 + $0x2c] sm:$0xf]
  %v6581 = vld [vmem:[%s6568 + $0x30] sm:$0xf]
  %v6582 = vld [vmem:[%s6568 + $0x34] sm:$0xf]
  %v6583 = vld [vmem:[%s6568 + $0x38] sm:$0xf]
  %v6584 = vld [vmem:[%s6568 + $0x3c] sm:$0xf]
  %v6601 = vunpack.c.l.b16 %v6569
  %v6602 = vunpack.c.l.b16 %v6570
  %v6603 = vunpack.c.l.b16 %v6571
  %v6604 = vunpack.c.l.b16 %v6572
  %v6605 = vunpack.c.l.b16 %v6573
  %v6606 = vunpack.c.l.b16 %v6574
  %v6607 = vunpack.c.l.b16 %v6575
  %v6608 = vunpack.c.l.b16 %v6576
  %v6609 = vunpack.c.l.b16 %v6577
  %v6610 = vunpack.c.l.b16 %v6578
  %v6611 = vunpack.c.l.b16 %v6579
  %v6612 = vunpack.c.l.b16 %v6580
  %v6613 = vunpack.c.l.b16 %v6581
  %v6614 = vunpack.c.l.b16 %v6582
  %v6615 = vunpack.c.l.b16 %v6583
  %v6616 = vunpack.c.l.b16 %v6584
  %v6617 = vpack.c.b16 %v6602, %v6601
  %v6618 = vpack.c.b16 %v6604, %v6603
  %v6619 = vpack.c.b16 %v6606, %v6605
  %v6620 = vpack.c.b16 %v6608, %v6607
  %v6621 = vpack.c.b16 %v6610, %v6609
  %v6622 = vpack.c.b16 %v6612, %v6611
  %v6623 = vpack.c.b16 %v6614, %v6613
  %v6624 = vpack.c.b16 %v6616, %v6615
  %6633 = vmatprep.subr.bf16.mxu0 0
  %6634 = vmatpush1.bf16.msra.mxu0 %v6624
  %6635 = vmatprep.subr.bf16.mxu0 0
  %6636 = vmatpush1.bf16.msra.mxu0 %v6623
  %6637 = vmatprep.subr.bf16.mxu0 0
  %6638 = vmatpush1.bf16.msra.mxu0 %v6622
  %6639 = vmatprep.subr.bf16.mxu0 0
  %6640 = vmatpush1.bf16.msra.mxu0 %v6621
  %6641 = vmatprep.subr.bf16.mxu0 0
  %6642 = vmatpush1.bf16.msra.mxu0 %v6620
  %6643 = vmatprep.subr.bf16.mxu0 0
  %6644 = vmatpush1.bf16.msra.mxu0 %v6619
  %6645 = vmatprep.subr.bf16.mxu0 0
  %6646 = vmatpush1.bf16.msra.mxu0 %v6618
  %6647 = vmatprep.subr.bf16.mxu0 0
  %6648 = vmatpush1.bf16.msra.mxu0 %v6617
  %6649 = vmatprep.subr.bf16.mxu0 0
  %6650 = vmatpush2.bf16.msra.mxu0 0
  %6651 = vmatprep.subr.bf16.mxu0 0
  %6652 = vmatpush2.bf16.msra.mxu0 0
  %6653 = vmatprep.subr.bf16.mxu0 0
  %6654 = vmatpush2.bf16.msra.mxu0 0
  %6655 = vmatprep.subr.bf16.mxu0 0
  %6656 = vmatpush2.bf16.msra.mxu0 0
  %6657 = vmatprep.subr.bf16.mxu0 0
  %6658 = vmatpush2.bf16.msra.mxu0 0
  %6659 = vmatprep.subr.bf16.mxu0 0
  %6660 = vmatpush2.bf16.msra.mxu0 0
  %6661 = vmatprep.subr.bf16.mxu0 0
  %6662 = vmatpush2.bf16.msra.mxu0 0
  %6663 = vmatprep.subr.bf16.mxu0 0
  %6664 = vmatpush2.bf16.msra.mxu0 0
  %6665 = vmatprep.mubr.bf16.mxu0 0
  %6666 = vmatmul.mubr.bf16.gmra.mxu0 %v419
  %v6667 = vpop.f32.mrf.mxu0
  %v6668 = vadd.f32 0.0, %v6667
  %v6669 = vpop.f32.mrf.mxu0
  %v6670 = vpop.f32.mrf.mxu0
  %v6671 = vpop.f32.mrf.mxu0
  %6672 = vdwg.mxu0
  %6673 = vst.msk [vmem:[#allocation2 + $0x1d0] sm:$0xff] %vm524, %v6668
  %s6674 = scalar_lea.vmem %s5, 3776
  %v6675 = vld [vmem:[%s6674] sm:$0xf]
  %v6676 = vld [vmem:[%s6674 + $0x4] sm:$0xf]
  %v6677 = vld [vmem:[%s6674 + $0x8] sm:$0xf]
  %v6678 = vld [vmem:[%s6674 + $0xc] sm:$0xf]
  %v6679 = vld [vmem:[%s6674 + $0x10] sm:$0xf]
  %v6680 = vld [vmem:[%s6674 + $0x14] sm:$0xf]
  %v6681 = vld [vmem:[%s6674 + $0x18] sm:$0xf]
  %v6682 = vld [vmem:[%s6674 + $0x1c] sm:$0xf]
  %v6683 = vld [vmem:[%s6674 + $0x20] sm:$0xf]
  %v6684 = vld [vmem:[%s6674 + $0x24] sm:$0xf]
  %v6685 = vld [vmem:[%s6674 + $0x28] sm:$0xf]
  %v6686 = vld [vmem:[%s6674 + $0x2c] sm:$0xf]
  %v6687 = vld [vmem:[%s6674 + $0x30] sm:$0xf]
  %v6688 = vld [vmem:[%s6674 + $0x34] sm:$0xf]
  %v6689 = vld [vmem:[%s6674 + $0x38] sm:$0xf]
  %v6690 = vld [vmem:[%s6674 + $0x3c] sm:$0xf]
  %v6707 = vunpack.c.l.b16 %v6675
  %v6708 = vunpack.c.l.b16 %v6676
  %v6709 = vunpack.c.l.b16 %v6677
  %v6710 = vunpack.c.l.b16 %v6678
  %v6711 = vunpack.c.l.b16 %v6679
  %v6712 = vunpack.c.l.b16 %v6680
  %v6713 = vunpack.c.l.b16 %v6681
  %v6714 = vunpack.c.l.b16 %v6682
  %v6715 = vunpack.c.l.b16 %v6683
  %v6716 = vunpack.c.l.b16 %v6684
  %v6717 = vunpack.c.l.b16 %v6685
  %v6718 = vunpack.c.l.b16 %v6686
  %v6719 = vunpack.c.l.b16 %v6687
  %v6720 = vunpack.c.l.b16 %v6688
  %v6721 = vunpack.c.l.b16 %v6689
  %v6722 = vunpack.c.l.b16 %v6690
  %v6723 = vpack.c.b16 %v6708, %v6707
  %v6724 = vpack.c.b16 %v6710, %v6709
  %v6725 = vpack.c.b16 %v6712, %v6711
  %v6726 = vpack.c.b16 %v6714, %v6713
  %v6727 = vpack.c.b16 %v6716, %v6715
  %v6728 = vpack.c.b16 %v6718, %v6717
  %v6729 = vpack.c.b16 %v6720, %v6719
  %v6730 = vpack.c.b16 %v6722, %v6721
  %6739 = vmatprep.subr.bf16.mxu0 0
  %6740 = vmatpush1.bf16.msra.mxu0 %v6730
  %6741 = vmatprep.subr.bf16.mxu0 0
  %6742 = vmatpush1.bf16.msra.mxu0 %v6729
  %6743 = vmatprep.subr.bf16.mxu0 0
  %6744 = vmatpush1.bf16.msra.mxu0 %v6728
  %6745 = vmatprep.subr.bf16.mxu0 0
  %6746 = vmatpush1.bf16.msra.mxu0 %v6727
  %6747 = vmatprep.subr.bf16.mxu0 0
  %6748 = vmatpush1.bf16.msra.mxu0 %v6726
  %6749 = vmatprep.subr.bf16.mxu0 0
  %6750 = vmatpush1.bf16.msra.mxu0 %v6725
  %6751 = vmatprep.subr.bf16.mxu0 0
  %6752 = vmatpush1.bf16.msra.mxu0 %v6724
  %6753 = vmatprep.subr.bf16.mxu0 0
  %6754 = vmatpush1.bf16.msra.mxu0 %v6723
  %6755 = vmatprep.subr.bf16.mxu0 0
  %6756 = vmatpush2.bf16.msra.mxu0 0
  %6757 = vmatprep.subr.bf16.mxu0 0
  %6758 = vmatpush2.bf16.msra.mxu0 0
  %6759 = vmatprep.subr.bf16.mxu0 0
  %6760 = vmatpush2.bf16.msra.mxu0 0
  %6761 = vmatprep.subr.bf16.mxu0 0
  %6762 = vmatpush2.bf16.msra.mxu0 0
  %6763 = vmatprep.subr.bf16.mxu0 0
  %6764 = vmatpush2.bf16.msra.mxu0 0
  %6765 = vmatprep.subr.bf16.mxu0 0
  %6766 = vmatpush2.bf16.msra.mxu0 0
  %6767 = vmatprep.subr.bf16.mxu0 0
  %6768 = vmatpush2.bf16.msra.mxu0 0
  %6769 = vmatprep.subr.bf16.mxu0 0
  %6770 = vmatpush2.bf16.msra.mxu0 0
  %6771 = vmatprep.mubr.bf16.mxu0 0
  %6772 = vmatmul.mubr.bf16.gmra.mxu0 %v419
  %v6773 = vpop.f32.mrf.mxu0
  %v6774 = vadd.f32 0.0, %v6773
  %v6775 = vpop.f32.mrf.mxu0
  %v6776 = vpop.f32.mrf.mxu0
  %v6777 = vpop.f32.mrf.mxu0
  %6778 = vdwg.mxu0
  %6779 = vst.msk [vmem:[#allocation2 + $0x1d8] sm:$0xff] %vm524, %v6774
  %s6780 = scalar_lea.vmem %s5, 3840
  %v6781 = vld [vmem:[%s6780] sm:$0xf]
  %v6782 = vld [vmem:[%s6780 + $0x4] sm:$0xf]
  %v6783 = vld [vmem:[%s6780 + $0x8] sm:$0xf]
  %v6784 = vld [vmem:[%s6780 + $0xc] sm:$0xf]
  %v6785 = vld [vmem:[%s6780 + $0x10] sm:$0xf]
  %v6786 = vld [vmem:[%s6780 + $0x14] sm:$0xf]
  %v6787 = vld [vmem:[%s6780 + $0x18] sm:$0xf]
  %v6788 = vld [vmem:[%s6780 + $0x1c] sm:$0xf]
  %v6789 = vld [vmem:[%s6780 + $0x20] sm:$0xf]
  %v6790 = vld [vmem:[%s6780 + $0x24] sm:$0xf]
  %v6791 = vld [vmem:[%s6780 + $0x28] sm:$0xf]
  %v6792 = vld [vmem:[%s6780 + $0x2c] sm:$0xf]
  %v6793 = vld [vmem:[%s6780 + $0x30] sm:$0xf]
  %v6794 = vld [vmem:[%s6780 + $0x34] sm:$0xf]
  %v6795 = vld [vmem:[%s6780 + $0x38] sm:$0xf]
  %v6796 = vld [vmem:[%s6780 + $0x3c] sm:$0xf]
  %v6813 = vunpack.c.l.b16 %v6781
  %v6814 = vunpack.c.l.b16 %v6782
  %v6815 = vunpack.c.l.b16 %v6783
  %v6816 = vunpack.c.l.b16 %v6784
  %v6817 = vunpack.c.l.b16 %v6785
  %v6818 = vunpack.c.l.b16 %v6786
  %v6819 = vunpack.c.l.b16 %v6787
  %v6820 = vunpack.c.l.b16 %v6788
  %v6821 = vunpack.c.l.b16 %v6789
  %v6822 = vunpack.c.l.b16 %v6790
  %v6823 = vunpack.c.l.b16 %v6791
  %v6824 = vunpack.c.l.b16 %v6792
  %v6825 = vunpack.c.l.b16 %v6793
  %v6826 = vunpack.c.l.b16 %v6794
  %v6827 = vunpack.c.l.b16 %v6795
  %v6828 = vunpack.c.l.b16 %v6796
  %v6829 = vpack.c.b16 %v6814, %v6813
  %v6830 = vpack.c.b16 %v6816, %v6815
  %v6831 = vpack.c.b16 %v6818, %v6817
  %v6832 = vpack.c.b16 %v6820, %v6819
  %v6833 = vpack.c.b16 %v6822, %v6821
  %v6834 = vpack.c.b16 %v6824, %v6823
  %v6835 = vpack.c.b16 %v6826, %v6825
  %v6836 = vpack.c.b16 %v6828, %v6827
  %6845 = vmatprep.subr.bf16.mxu0 0
  %6846 = vmatpush1.bf16.msra.mxu0 %v6836
  %6847 = vmatprep.subr.bf16.mxu0 0
  %6848 = vmatpush1.bf16.msra.mxu0 %v6835
  %6849 = vmatprep.subr.bf16.mxu0 0
  %6850 = vmatpush1.bf16.msra.mxu0 %v6834
  %6851 = vmatprep.subr.bf16.mxu0 0
  %6852 = vmatpush1.bf16.msra.mxu0 %v6833
  %6853 = vmatprep.subr.bf16.mxu0 0
  %6854 = vmatpush1.bf16.msra.mxu0 %v6832
  %6855 = vmatprep.subr.bf16.mxu0 0
  %6856 = vmatpush1.bf16.msra.mxu0 %v6831
  %6857 = vmatprep.subr.bf16.mxu0 0
  %6858 = vmatpush1.bf16.msra.mxu0 %v6830
  %6859 = vmatprep.subr.bf16.mxu0 0
  %6860 = vmatpush1.bf16.msra.mxu0 %v6829
  %6861 = vmatprep.subr.bf16.mxu0 0
  %6862 = vmatpush2.bf16.msra.mxu0 0
  %6863 = vmatprep.subr.bf16.mxu0 0
  %6864 = vmatpush2.bf16.msra.mxu0 0
  %6865 = vmatprep.subr.bf16.mxu0 0
  %6866 = vmatpush2.bf16.msra.mxu0 0
  %6867 = vmatprep.subr.bf16.mxu0 0
  %6868 = vmatpush2.bf16.msra.mxu0 0
  %6869 = vmatprep.subr.bf16.mxu0 0
  %6870 = vmatpush2.bf16.msra.mxu0 0
  %6871 = vmatprep.subr.bf16.mxu0 0
  %6872 = vmatpush2.bf16.msra.mxu0 0
  %6873 = vmatprep.subr.bf16.mxu0 0
  %6874 = vmatpush2.bf16.msra.mxu0 0
  %6875 = vmatprep.subr.bf16.mxu0 0
  %6876 = vmatpush2.bf16.msra.mxu0 0
  %6877 = vmatprep.mubr.bf16.mxu0 0
  %6878 = vmatmul.mubr.bf16.gmra.mxu0 %v419
  %v6879 = vpop.f32.mrf.mxu0
  %v6880 = vadd.f32 0.0, %v6879
  %v6881 = vpop.f32.mrf.mxu0
  %v6882 = vpop.f32.mrf.mxu0
  %v6883 = vpop.f32.mrf.mxu0
  %6884 = vdwg.mxu0
  %6885 = vst.msk [vmem:[#allocation2 + $0x1e0] sm:$0xff] %vm524, %v6880
  %s6886 = scalar_lea.vmem %s5, 3904
  %v6887 = vld [vmem:[%s6886] sm:$0xf]
  %v6888 = vld [vmem:[%s6886 + $0x4] sm:$0xf]
  %v6889 = vld [vmem:[%s6886 + $0x8] sm:$0xf]
  %v6890 = vld [vmem:[%s6886 + $0xc] sm:$0xf]
  %v6891 = vld [vmem:[%s6886 + $0x10] sm:$0xf]
  %v6892 = vld [vmem:[%s6886 + $0x14] sm:$0xf]
  %v6893 = vld [vmem:[%s6886 + $0x18] sm:$0xf]
  %v6894 = vld [vmem:[%s6886 + $0x1c] sm:$0xf]
  %v6895 = vld [vmem:[%s6886 + $0x20] sm:$0xf]
  %v6896 = vld [vmem:[%s6886 + $0x24] sm:$0xf]
  %v6897 = vld [vmem:[%s6886 + $0x28] sm:$0xf]
  %v6898 = vld [vmem:[%s6886 + $0x2c] sm:$0xf]
  %v6899 = vld [vmem:[%s6886 + $0x30] sm:$0xf]
  %v6900 = vld [vmem:[%s6886 + $0x34] sm:$0xf]
  %v6901 = vld [vmem:[%s6886 + $0x38] sm:$0xf]
  %v6902 = vld [vmem:[%s6886 + $0x3c] sm:$0xf]
  %v6919 = vunpack.c.l.b16 %v6887
  %v6920 = vunpack.c.l.b16 %v6888
  %v6921 = vunpack.c.l.b16 %v6889
  %v6922 = vunpack.c.l.b16 %v6890
  %v6923 = vunpack.c.l.b16 %v6891
  %v6924 = vunpack.c.l.b16 %v6892
  %v6925 = vunpack.c.l.b16 %v6893
  %v6926 = vunpack.c.l.b16 %v6894
  %v6927 = vunpack.c.l.b16 %v6895
  %v6928 = vunpack.c.l.b16 %v6896
  %v6929 = vunpack.c.l.b16 %v6897
  %v6930 = vunpack.c.l.b16 %v6898
  %v6931 = vunpack.c.l.b16 %v6899
  %v6932 = vunpack.c.l.b16 %v6900
  %v6933 = vunpack.c.l.b16 %v6901
  %v6934 = vunpack.c.l.b16 %v6902
  %v6935 = vpack.c.b16 %v6920, %v6919
  %v6936 = vpack.c.b16 %v6922, %v6921
  %v6937 = vpack.c.b16 %v6924, %v6923
  %v6938 = vpack.c.b16 %v6926, %v6925
  %v6939 = vpack.c.b16 %v6928, %v6927
  %v6940 = vpack.c.b16 %v6930, %v6929
  %v6941 = vpack.c.b16 %v6932, %v6931
  %v6942 = vpack.c.b16 %v6934, %v6933
  %6951 = vmatprep.subr.bf16.mxu0 0
  %6952 = vmatpush1.bf16.msra.mxu0 %v6942
  %6953 = vmatprep.subr.bf16.mxu0 0
  %6954 = vmatpush1.bf16.msra.mxu0 %v6941
  %6955 = vmatprep.subr.bf16.mxu0 0
  %6956 = vmatpush1.bf16.msra.mxu0 %v6940
  %6957 = vmatprep.subr.bf16.mxu0 0
  %6958 = vmatpush1.bf16.msra.mxu0 %v6939
  %6959 = vmatprep.subr.bf16.mxu0 0
  %6960 = vmatpush1.bf16.msra.mxu0 %v6938
  %6961 = vmatprep.subr.bf16.mxu0 0
  %6962 = vmatpush1.bf16.msra.mxu0 %v6937
  %6963 = vmatprep.subr.bf16.mxu0 0
  %6964 = vmatpush1.bf16.msra.mxu0 %v6936
  %6965 = vmatprep.subr.bf16.mxu0 0
  %6966 = vmatpush1.bf16.msra.mxu0 %v6935
  %6967 = vmatprep.subr.bf16.mxu0 0
  %6968 = vmatpush2.bf16.msra.mxu0 0
  %6969 = vmatprep.subr.bf16.mxu0 0
  %6970 = vmatpush2.bf16.msra.mxu0 0
  %6971 = vmatprep.subr.bf16.mxu0 0
  %6972 = vmatpush2.bf16.msra.mxu0 0
  %6973 = vmatprep.subr.bf16.mxu0 0
  %6974 = vmatpush2.bf16.msra.mxu0 0
  %6975 = vmatprep.subr.bf16.mxu0 0
  %6976 = vmatpush2.bf16.msra.mxu0 0
  %6977 = vmatprep.subr.bf16.mxu0 0
  %6978 = vmatpush2.bf16.msra.mxu0 0
  %6979 = vmatprep.subr.bf16.mxu0 0
  %6980 = vmatpush2.bf16.msra.mxu0 0
  %6981 = vmatprep.subr.bf16.mxu0 0
  %6982 = vmatpush2.bf16.msra.mxu0 0
  %6983 = vmatprep.mubr.bf16.mxu0 0
  %6984 = vmatmul.mubr.bf16.gmra.mxu0 %v419
  %v6985 = vpop.f32.mrf.mxu0
  %v6986 = vadd.f32 0.0, %v6985
  %v6987 = vpop.f32.mrf.mxu0
  %v6988 = vpop.f32.mrf.mxu0
  %v6989 = vpop.f32.mrf.mxu0
  %6990 = vdwg.mxu0
  %6991 = vst.msk [vmem:[#allocation2 + $0x1e8] sm:$0xff] %vm524, %v6986
  %s6992 = scalar_lea.vmem %s5, 3968
  %v6993 = vld [vmem:[%s6992] sm:$0xf]
  %v6994 = vld [vmem:[%s6992 + $0x4] sm:$0xf]
  %v6995 = vld [vmem:[%s6992 + $0x8] sm:$0xf]
  %v6996 = vld [vmem:[%s6992 + $0xc] sm:$0xf]
  %v6997 = vld [vmem:[%s6992 + $0x10] sm:$0xf]
  %v6998 = vld [vmem:[%s6992 + $0x14] sm:$0xf]
  %v6999 = vld [vmem:[%s6992 + $0x18] sm:$0xf]
  %v7000 = vld [vmem:[%s6992 + $0x1c] sm:$0xf]
  %v7001 = vld [vmem:[%s6992 + $0x20] sm:$0xf]
  %v7002 = vld [vmem:[%s6992 + $0x24] sm:$0xf]
  %v7003 = vld [vmem:[%s6992 + $0x28] sm:$0xf]
  %v7004 = vld [vmem:[%s6992 + $0x2c] sm:$0xf]
  %v7005 = vld [vmem:[%s6992 + $0x30] sm:$0xf]
  %v7006 = vld [vmem:[%s6992 + $0x34] sm:$0xf]
  %v7007 = vld [vmem:[%s6992 + $0x38] sm:$0xf]
  %v7008 = vld [vmem:[%s6992 + $0x3c] sm:$0xf]
  %v7025 = vunpack.c.l.b16 %v6993
  %v7026 = vunpack.c.l.b16 %v6994
  %v7027 = vunpack.c.l.b16 %v6995
  %v7028 = vunpack.c.l.b16 %v6996
  %v7029 = vunpack.c.l.b16 %v6997
  %v7030 = vunpack.c.l.b16 %v6998
  %v7031 = vunpack.c.l.b16 %v6999
  %v7032 = vunpack.c.l.b16 %v7000
  %v7033 = vunpack.c.l.b16 %v7001
  %v7034 = vunpack.c.l.b16 %v7002
  %v7035 = vunpack.c.l.b16 %v7003
  %v7036 = vunpack.c.l.b16 %v7004
  %v7037 = vunpack.c.l.b16 %v7005
  %v7038 = vunpack.c.l.b16 %v7006
  %v7039 = vunpack.c.l.b16 %v7007
  %v7040 = vunpack.c.l.b16 %v7008
  %v7041 = vpack.c.b16 %v7026, %v7025
  %v7042 = vpack.c.b16 %v7028, %v7027
  %v7043 = vpack.c.b16 %v7030, %v7029
  %v7044 = vpack.c.b16 %v7032, %v7031
  %v7045 = vpack.c.b16 %v7034, %v7033
  %v7046 = vpack.c.b16 %v7036, %v7035
  %v7047 = vpack.c.b16 %v7038, %v7037
  %v7048 = vpack.c.b16 %v7040, %v7039
  %7057 = vmatprep.subr.bf16.mxu0 0
  %7058 = vmatpush1.bf16.msra.mxu0 %v7048
  %7059 = vmatprep.subr.bf16.mxu0 0
  %7060 = vmatpush1.bf16.msra.mxu0 %v7047
  %7061 = vmatprep.subr.bf16.mxu0 0
  %7062 = vmatpush1.bf16.msra.mxu0 %v7046
  %7063 = vmatprep.subr.bf16.mxu0 0
  %7064 = vmatpush1.bf16.msra.mxu0 %v7045
  %7065 = vmatprep.subr.bf16.mxu0 0
  %7066 = vmatpush1.bf16.msra.mxu0 %v7044
  %7067 = vmatprep.subr.bf16.mxu0 0
  %7068 = vmatpush1.bf16.msra.mxu0 %v7043
  %7069 = vmatprep.subr.bf16.mxu0 0
  %7070 = vmatpush1.bf16.msra.mxu0 %v7042
  %7071 = vmatprep.subr.bf16.mxu0 0
  %7072 = vmatpush1.bf16.msra.mxu0 %v7041
  %7073 = vmatprep.subr.bf16.mxu0 0
  %7074 = vmatpush2.bf16.msra.mxu0 0
  %7075 = vmatprep.subr.bf16.mxu0 0
  %7076 = vmatpush2.bf16.msra.mxu0 0
  %7077 = vmatprep.subr.bf16.mxu0 0
  %7078 = vmatpush2.bf16.msra.mxu0 0
  %7079 = vmatprep.subr.bf16.mxu0 0
  %7080 = vmatpush2.bf16.msra.mxu0 0
  %7081 = vmatprep.subr.bf16.mxu0 0
  %7082 = vmatpush2.bf16.msra.mxu0 0
  %7083 = vmatprep.subr.bf16.mxu0 0
  %7084 = vmatpush2.bf16.msra.mxu0 0
  %7085 = vmatprep.subr.bf16.mxu0 0
  %7086 = vmatpush2.bf16.msra.mxu0 0
  %7087 = vmatprep.subr.bf16.mxu0 0
  %7088 = vmatpush2.bf16.msra.mxu0 0
  %7089 = vmatprep.mubr.bf16.mxu0 0
  %7090 = vmatmul.mubr.bf16.gmra.mxu0 %v419
  %v7091 = vpop.f32.mrf.mxu0
  %v7092 = vadd.f32 0.0, %v7091
  %v7093 = vpop.f32.mrf.mxu0
  %v7094 = vpop.f32.mrf.mxu0
  %v7095 = vpop.f32.mrf.mxu0
  %7096 = vdwg.mxu0
  %7097 = vst.msk [vmem:[#allocation2 + $0x1f0] sm:$0xff] %vm524, %v7092
  %s7098 = scalar_lea.vmem %s5, 4032
  %v7099 = vld [vmem:[%s7098] sm:$0xf]
  %v7100 = vld [vmem:[%s7098 + $0x4] sm:$0xf]
  %v7101 = vld [vmem:[%s7098 + $0x8] sm:$0xf]
  %v7102 = vld [vmem:[%s7098 + $0xc] sm:$0xf]
  %v7103 = vld [vmem:[%s7098 + $0x10] sm:$0xf]
  %v7104 = vld [vmem:[%s7098 + $0x14] sm:$0xf]
  %v7105 = vld [vmem:[%s7098 + $0x18] sm:$0xf]
  %v7106 = vld [vmem:[%s7098 + $0x1c] sm:$0xf]
  %v7107 = vld [vmem:[%s7098 + $0x20] sm:$0xf]
  %v7108 = vld [vmem:[%s7098 + $0x24] sm:$0xf]
  %v7109 = vld [vmem:[%s7098 + $0x28] sm:$0xf]
  %v7110 = vld [vmem:[%s7098 + $0x2c] sm:$0xf]
  %v7111 = vld [vmem:[%s7098 + $0x30] sm:$0xf]
  %v7112 = vld [vmem:[%s7098 + $0x34] sm:$0xf]
  %v7113 = vld [vmem:[%s7098 + $0x38] sm:$0xf]
  %v7114 = vld [vmem:[%s7098 + $0x3c] sm:$0xf]
  %v7131 = vunpack.c.l.b16 %v7099
  %v7132 = vunpack.c.l.b16 %v7100
  %v7133 = vunpack.c.l.b16 %v7101
  %v7134 = vunpack.c.l.b16 %v7102
  %v7135 = vunpack.c.l.b16 %v7103
  %v7136 = vunpack.c.l.b16 %v7104
  %v7137 = vunpack.c.l.b16 %v7105
  %v7138 = vunpack.c.l.b16 %v7106
  %v7139 = vunpack.c.l.b16 %v7107
  %v7140 = vunpack.c.l.b16 %v7108
  %v7141 = vunpack.c.l.b16 %v7109
  %v7142 = vunpack.c.l.b16 %v7110
  %v7143 = vunpack.c.l.b16 %v7111
  %v7144 = vunpack.c.l.b16 %v7112
  %v7145 = vunpack.c.l.b16 %v7113
  %v7146 = vunpack.c.l.b16 %v7114
  %v7147 = vpack.c.b16 %v7132, %v7131
  %v7148 = vpack.c.b16 %v7134, %v7133
  %v7149 = vpack.c.b16 %v7136, %v7135
  %v7150 = vpack.c.b16 %v7138, %v7137
  %v7151 = vpack.c.b16 %v7140, %v7139
  %v7152 = vpack.c.b16 %v7142, %v7141
  %v7153 = vpack.c.b16 %v7144, %v7143
  %v7154 = vpack.c.b16 %v7146, %v7145
  %7163 = vmatprep.subr.bf16.mxu0 0
  %7164 = vmatpush1.bf16.msra.mxu0 %v7154
  %7165 = vmatprep.subr.bf16.mxu0 0
  %7166 = vmatpush1.bf16.msra.mxu0 %v7153
  %7167 = vmatprep.subr.bf16.mxu0 0
  %7168 = vmatpush1.bf16.msra.mxu0 %v7152
  %7169 = vmatprep.subr.bf16.mxu0 0
  %7170 = vmatpush1.bf16.msra.mxu0 %v7151
  %7171 = vmatprep.subr.bf16.mxu0 0
  %7172 = vmatpush1.bf16.msra.mxu0 %v7150
  %7173 = vmatprep.subr.bf16.mxu0 0
  %7174 = vmatpush1.bf16.msra.mxu0 %v7149
  %7175 = vmatprep.subr.bf16.mxu0 0
  %7176 = vmatpush1.bf16.msra.mxu0 %v7148
  %7177 = vmatprep.subr.bf16.mxu0 0
  %7178 = vmatpush1.bf16.msra.mxu0 %v7147
  %7179 = vmatprep.subr.bf16.mxu0 0
  %7180 = vmatpush2.bf16.msra.mxu0 0
  %7181 = vmatprep.subr.bf16.mxu0 0
  %7182 = vmatpush2.bf16.msra.mxu0 0
  %7183 = vmatprep.subr.bf16.mxu0 0
  %7184 = vmatpush2.bf16.msra.mxu0 0
  %7185 = vmatprep.subr.bf16.mxu0 0
  %7186 = vmatpush2.bf16.msra.mxu0 0
  %7187 = vmatprep.subr.bf16.mxu0 0
  %7188 = vmatpush2.bf16.msra.mxu0 0
  %7189 = vmatprep.subr.bf16.mxu0 0
  %7190 = vmatpush2.bf16.msra.mxu0 0
  %7191 = vmatprep.subr.bf16.mxu0 0
  %7192 = vmatpush2.bf16.msra.mxu0 0
  %7193 = vmatprep.subr.bf16.mxu0 0
  %7194 = vmatpush2.bf16.msra.mxu0 0
  %7195 = vmatprep.mubr.bf16.mxu0 0
  %7196 = vmatmul.mubr.bf16.gmra.mxu0 %v419
  %v7197 = vpop.f32.mrf.mxu0
  %v7198 = vadd.f32 0.0, %v7197
  %v7199 = vpop.f32.mrf.mxu0
  %v7200 = vpop.f32.mrf.mxu0
  %v7201 = vpop.f32.mrf.mxu0
  %7202 = vdwg.mxu0
  %7203 = vst.msk [vmem:[#allocation2 + $0x1f8] sm:$0xff] %vm524, %v7198
  %v7204 = vld [vmem:[%s4] sm:$0xff]
  %v7205 = vld [vmem:[%s4 + $0x8] sm:$0xff]
  %v7206 = vld [vmem:[%s4 + $0x10] sm:$0xff]
  %v7207 = vld [vmem:[%s4 + $0x18] sm:$0xff]
  %v7208 = vld [vmem:[#allocation2] sm:$0xff]
  %v7209 = vld [vmem:[#allocation2 + $0x8] sm:$0xff]
  %v7210 = vld [vmem:[#allocation2 + $0x10] sm:$0xff]
  %v7211 = vld [vmem:[#allocation2 + $0x18] sm:$0xff]
  %v7212 = vld [vmem:[#allocation2 + $0x20] sm:$0xff]
  %v7213 = vld [vmem:[#allocation2 + $0x28] sm:$0xff]
  %v7214 = vld [vmem:[#allocation2 + $0x30] sm:$0xff]
  %v7215 = vld [vmem:[#allocation2 + $0x38] sm:$0xff]
  %v7216 = vld [vmem:[#allocation2 + $0x40] sm:$0xff]
  %v7217 = vld [vmem:[#allocation2 + $0x48] sm:$0xff]
  %v7218 = vld [vmem:[#allocation2 + $0x50] sm:$0xff]
  %v7219 = vld [vmem:[#allocation2 + $0x58] sm:$0xff]
  %v7220 = vld [vmem:[#allocation2 + $0x60] sm:$0xff]
  %v7221 = vld [vmem:[#allocation2 + $0x68] sm:$0xff]
  %v7222 = vld [vmem:[#allocation2 + $0x70] sm:$0xff]
  %v7223 = vld [vmem:[#allocation2 + $0x78] sm:$0xff]
  %v7224 = vld [vmem:[#allocation2 + $0x80] sm:$0xff]
  %v7225 = vld [vmem:[#allocation2 + $0x88] sm:$0xff]
  %v7226 = vld [vmem:[#allocation2 + $0x90] sm:$0xff]
  %v7227 = vld [vmem:[#allocation2 + $0x98] sm:$0xff]
  %v7228 = vld [vmem:[#allocation2 + $0xa0] sm:$0xff]
  %v7229 = vld [vmem:[#allocation2 + $0xa8] sm:$0xff]
  %v7230 = vld [vmem:[#allocation2 + $0xb0] sm:$0xff]
  %v7231 = vld [vmem:[#allocation2 + $0xb8] sm:$0xff]
  %v7232 = vld [vmem:[#allocation2 + $0xc0] sm:$0xff]
  %v7233 = vld [vmem:[#allocation2 + $0xc8] sm:$0xff]
  %v7234 = vld [vmem:[#allocation2 + $0xd0] sm:$0xff]
  %v7235 = vld [vmem:[#allocation2 + $0xd8] sm:$0xff]
  %v7236 = vld [vmem:[#allocation2 + $0xe0] sm:$0xff]
  %v7237 = vld [vmem:[#allocation2 + $0xe8] sm:$0xff]
  %v7238 = vld [vmem:[#allocation2 + $0xf0] sm:$0xff]
  %v7239 = vld [vmem:[#allocation2 + $0xf8] sm:$0xff]
  %v7240 = vld [vmem:[#allocation2 + $0x100] sm:$0xff]
  %v7241 = vld [vmem:[#allocation2 + $0x108] sm:$0xff]
  %v7242 = vld [vmem:[#allocation2 + $0x110] sm:$0xff]
  %v7243 = vld [vmem:[#allocation2 + $0x118] sm:$0xff]
  %v7244 = vld [vmem:[#allocation2 + $0x120] sm:$0xff]
  %v7245 = vld [vmem:[#allocation2 + $0x128] sm:$0xff]
  %v7246 = vld [vmem:[#allocation2 + $0x130] sm:$0xff]
  %v7247 = vld [vmem:[#allocation2 + $0x138] sm:$0xff]
  %v7248 = vld [vmem:[#allocation2 + $0x140] sm:$0xff]
  %v7249 = vld [vmem:[#allocation2 + $0x148] sm:$0xff]
  %v7250 = vld [vmem:[#allocation2 + $0x150] sm:$0xff]
  %v7251 = vld [vmem:[#allocation2 + $0x158] sm:$0xff]
  %v7252 = vld [vmem:[#allocation2 + $0x160] sm:$0xff]
  %v7253 = vld [vmem:[#allocation2 + $0x168] sm:$0xff]
  %v7254 = vld [vmem:[#allocation2 + $0x170] sm:$0xff]
  %v7255 = vld [vmem:[#allocation2 + $0x178] sm:$0xff]
  %v7256 = vld [vmem:[#allocation2 + $0x180] sm:$0xff]
  %v7257 = vld [vmem:[#allocation2 + $0x188] sm:$0xff]
  %v7258 = vld [vmem:[#allocation2 + $0x190] sm:$0xff]
  %v7259 = vld [vmem:[#allocation2 + $0x198] sm:$0xff]
  %v7260 = vld [vmem:[#allocation2 + $0x1a0] sm:$0xff]
  %v7261 = vld [vmem:[#allocation2 + $0x1a8] sm:$0xff]
  %v7262 = vld [vmem:[#allocation2 + $0x1b0] sm:$0xff]
  %v7263 = vld [vmem:[#allocation2 + $0x1b8] sm:$0xff]
  %v7264 = vld [vmem:[#allocation2 + $0x1c0] sm:$0xff]
  %v7265 = vld [vmem:[#allocation2 + $0x1c8] sm:$0xff]
  %v7266 = vld [vmem:[#allocation2 + $0x1d0] sm:$0xff]
  %v7267 = vld [vmem:[#allocation2 + $0x1d8] sm:$0xff]
  %v7268 = vld [vmem:[#allocation2 + $0x1e0] sm:$0xff]
  %v7269 = vld [vmem:[#allocation2 + $0x1e8] sm:$0xff]
  %v7270 = vld [vmem:[#allocation2 + $0x1f0] sm:$0xff]
  %v7271 = vld [vmem:[#allocation2 + $0x1f8] sm:$0xff]
  %v7272 = vpack.c.bf16 %v7209, %v7208
  %v7273 = vpack.c.bf16 %v7211, %v7210
  %v7274 = vpack.c.bf16 %v7213, %v7212
  %v7275 = vpack.c.bf16 %v7215, %v7214
  %v7276 = vpack.c.bf16 %v7217, %v7216
  %v7277 = vpack.c.bf16 %v7219, %v7218
  %v7278 = vpack.c.bf16 %v7221, %v7220
  %v7279 = vpack.c.bf16 %v7223, %v7222
  %v7280 = vpack.c.bf16 %v7225, %v7224
  %v7281 = vpack.c.bf16 %v7227, %v7226
  %v7282 = vpack.c.bf16 %v7229, %v7228
  %v7283 = vpack.c.bf16 %v7231, %v7230
  %v7284 = vpack.c.bf16 %v7233, %v7232
  %v7285 = vpack.c.bf16 %v7235, %v7234
  %v7286 = vpack.c.bf16 %v7237, %v7236
  %v7287 = vpack.c.bf16 %v7239, %v7238
  %v7288 = vpack.c.bf16 %v7241, %v7240
  %v7289 = vpack.c.bf16 %v7243, %v7242
  %v7290 = vpack.c.bf16 %v7245, %v7244
  %v7291 = vpack.c.bf16 %v7247, %v7246
  %v7292 = vpack.c.bf16 %v7249, %v7248
  %v7293 = vpack.c.bf16 %v7251, %v7250
  %v7294 = vpack.c.bf16 %v7253, %v7252
  %v7295 = vpack.c.bf16 %v7255, %v7254
  %v7296 = vpack.c.bf16 %v7257, %v7256
  %v7297 = vpack.c.bf16 %v7259, %v7258
  %v7298 = vpack.c.bf16 %v7261, %v7260
  %v7299 = vpack.c.bf16 %v7263, %v7262
  %v7300 = vpack.c.bf16 %v7265, %v7264
  %v7301 = vpack.c.bf16 %v7267, %v7266
  %v7302 = vpack.c.bf16 %v7269, %v7268
  %v7303 = vpack.c.bf16 %v7271, %v7270
  %v7308 = vunpack.c.l.b16 %v7204
  %v7309 = vunpack.c.h.b16 %v7204
  %v7310 = vunpack.c.l.b16 %v7205
  %v7311 = vunpack.c.h.b16 %v7205
  %v7312 = vunpack.c.l.b16 %v7206
  %v7313 = vunpack.c.h.b16 %v7206
  %v7314 = vunpack.c.l.b16 %v7207
  %v7315 = vunpack.c.h.b16 %v7207
  %v7316 = vpack.c.b16 %v7312, %v7308
  %v7317 = vpack.c.b16 %v7313, %v7309
  %v7318 = vpack.c.b16 %v7314, %v7310
  %v7319 = vpack.c.b16 %v7315, %v7311
  %7324 = vmatprep.subr.bf16.mxu0 0
  %7325 = vmatpush1.bf16.msra.mxu0 %v7279
  %7326 = vmatprep.subr.bf16.mxu0 0
  %7327 = vmatpush1.bf16.msra.mxu0 %v7278
  %7328 = vmatprep.subr.bf16.mxu0 0
  %7329 = vmatpush1.bf16.msra.mxu0 %v7277
  %7330 = vmatprep.subr.bf16.mxu0 0
  %7331 = vmatpush1.bf16.msra.mxu0 %v7276
  %7332 = vmatprep.subr.bf16.mxu0 0
  %7333 = vmatpush1.bf16.msra.mxu0 %v7275
  %7334 = vmatprep.subr.bf16.mxu0 0
  %7335 = vmatpush1.bf16.msra.mxu0 %v7274
  %7336 = vmatprep.subr.bf16.mxu0 0
  %7337 = vmatpush1.bf16.msra.mxu0 %v7273
  %7338 = vmatprep.subr.bf16.mxu0 0
  %7339 = vmatpush1.bf16.msra.mxu0 %v7272
  %7340 = vmatprep.subr.bf16.mxu0 0
  %7341 = vmatpush2.bf16.msra.mxu0 %v7287
  %7342 = vmatprep.subr.bf16.mxu0 0
  %7343 = vmatpush2.bf16.msra.mxu0 %v7286
  %7344 = vmatprep.subr.bf16.mxu0 0
  %7345 = vmatpush2.bf16.msra.mxu0 %v7285
  %7346 = vmatprep.subr.bf16.mxu0 0
  %7347 = vmatpush2.bf16.msra.mxu0 %v7284
  %7348 = vmatprep.subr.bf16.mxu0 0
  %7349 = vmatpush2.bf16.msra.mxu0 %v7283
  %7350 = vmatprep.subr.bf16.mxu0 0
  %7351 = vmatpush2.bf16.msra.mxu0 %v7282
  %7352 = vmatprep.subr.bf16.mxu0 0
  %7353 = vmatpush2.bf16.msra.mxu0 %v7281
  %7354 = vmatprep.subr.bf16.mxu0 0
  %7355 = vmatpush2.bf16.msra.mxu0 %v7280
  %7356 = vmatprep.mubr.bf16.mxu0 %v7317
  %7357 = vmatmul.mubr.bf16.gmra.mxu0 %v7316
  %v7358 = vpop.f32.mrf.mxu0
  %v7359 = vadd.f32 0.0, %v7358
  %v7360 = vpop.f32.mrf.mxu0
  %v7361 = vpop.f32.mrf.mxu0
  %v7362 = vadd.f32 0.0, %v7361
  %v7363 = vpop.f32.mrf.mxu0
  %7364 = vdwg.mxu0
  %7365 = vmatprep.subr.bf16.mxu0 0
  %7366 = vmatpush1.bf16.msra.mxu0 %v7295
  %7367 = vmatprep.subr.bf16.mxu0 0
  %7368 = vmatpush1.bf16.msra.mxu0 %v7294
  %7369 = vmatprep.subr.bf16.mxu0 0
  %7370 = vmatpush1.bf16.msra.mxu0 %v7293
  %7371 = vmatprep.subr.bf16.mxu0 0
  %7372 = vmatpush1.bf16.msra.mxu0 %v7292
  %7373 = vmatprep.subr.bf16.mxu0 0
  %7374 = vmatpush1.bf16.msra.mxu0 %v7291
  %7375 = vmatprep.subr.bf16.mxu0 0
  %7376 = vmatpush1.bf16.msra.mxu0 %v7290
  %7377 = vmatprep.subr.bf16.mxu0 0
  %7378 = vmatpush1.bf16.msra.mxu0 %v7289
  %7379 = vmatprep.subr.bf16.mxu0 0
  %7380 = vmatpush1.bf16.msra.mxu0 %v7288
  %7381 = vmatprep.subr.bf16.mxu0 0
  %7382 = vmatpush2.bf16.msra.mxu0 %v7303
  %7383 = vmatprep.subr.bf16.mxu0 0
  %7384 = vmatpush2.bf16.msra.mxu0 %v7302
  %7385 = vmatprep.subr.bf16.mxu0 0
  %7386 = vmatpush2.bf16.msra.mxu0 %v7301
  %7387 = vmatprep.subr.bf16.mxu0 0
  %7388 = vmatpush2.bf16.msra.mxu0 %v7300
  %7389 = vmatprep.subr.bf16.mxu0 0
  %7390 = vmatpush2.bf16.msra.mxu0 %v7299
  %7391 = vmatprep.subr.bf16.mxu0 0
  %7392 = vmatpush2.bf16.msra.mxu0 %v7298
  %7393 = vmatprep.subr.bf16.mxu0 0
  %7394 = vmatpush2.bf16.msra.mxu0 %v7297
  %7395 = vmatprep.subr.bf16.mxu0 0
  %7396 = vmatpush2.bf16.msra.mxu0 %v7296
  %7397 = vmatprep.mubr.bf16.mxu0 %v7319
  %7398 = vmatmul.mubr.bf16.gmra.mxu0 %v7318
  %v7399 = vpop.f32.mrf.mxu0
  %v7400 = vadd.f32 %v7359, %v7399
  %v7401 = vpop.f32.mrf.mxu0
  %v7402 = vpop.f32.mrf.mxu0
  %v7403 = vadd.f32 %v7362, %v7402
  %v7404 = vpop.f32.mrf.mxu0
  %7405 = vdwg.mxu0
  %v7406 = vsel %vm524, %v7400, 0.0
  %7407 = vadd.xlane.f32.xlu0 %v7406
  %v7408 = vpop.xlane.xlu0 %7407
  %v7409 = vsel %vm524, %v7403, 0.0
  %7410 = vadd.xlane.f32.xlu0 %v7409
  %v7411 = vpop.xlane.xlu0 %7410
  %v7412 = vrcp.pop 16.0
  %v7413 = vmul.f32 %v7408, %v7412
  %v7414 = vmul.f32 %v7411, %v7412
  %v7415 = vsub.f32 %v7400, %v7413
  %v7416 = vsub.f32 %v7403, %v7414
  %v7417 = vmul.f32 %v7415, %v7415
  %v7418 = vmul.f32 %v7416, %v7416
  %v7419 = vsel %vm524, %v7417, 0.0
  %7420 = vadd.xlane.f32.xlu0 %v7419
  %v7421 = vpop.xlane.xlu0 %7420
  %v7422 = vsel %vm524, %v7418, 0.0
  %7423 = vadd.xlane.f32.xlu0 %v7422
  %v7424 = vpop.xlane.xlu0 %7423
  %v7425 = vmul.f32 %v7421, %v7412
  %v7426 = vmul.f32 %v7424, %v7412
  %v7427 = vadd.f32 %v7425, 1e-05
  %v7428 = vadd.f32 %v7426, 1e-05
  %v7429 = vrsqrt.pop %v7427
  %v7430 = vrsqrt.pop %v7428
  %v7431 = vmul.f32 %v7415, %v7429
  %v7432 = vmul.f32 %v7416, %v7430
  %v7433 = vld [vmem:[%s6] sm:$0xff]
  %v7434 = vld [vmem:[%s6 + $0x8] sm:$0xff]
  %7436 = vset.pattern.permute.xlu0 0
  %7437 = vperm.xlu0 %7436, %v7433
  %v7438 = vpop.permute.xlu0 %7437
  %7441 = vset.pattern.permute.xlu0 0
  %7442 = vperm.xlu0 %7441, %v7434
  %v7443 = vpop.permute.xlu0 %7442
  %v7445 = vmul.f32 %v7431, %v7438
  %v7446 = vmul.f32 %v7432, %v7443
  %v7447 = vld [vmem:[%s7] sm:$0xff]
  %v7448 = vld [vmem:[%s7 + $0x8] sm:$0xff]
  %7450 = vset.pattern.permute.xlu0 0
  %7451 = vperm.xlu0 %7450, %v7447
  %v7452 = vpop.permute.xlu0 %7451
  %7455 = vset.pattern.permute.xlu0 0
  %7456 = vperm.xlu0 %7455, %v7448
  %v7457 = vpop.permute.xlu0 %7456
  %v7459 = vadd.f32 %v7445, %v7452
  %v7460 = vadd.f32 %v7446, %v7457
  %vm7461 = vcmp.ge.f32.partialorder %v7459, 0.0
  %vm7462 = vcmp.ge.f32.partialorder %v7460, 0.0
  %v7463 = vmul.f32 %v7459, 0.2
  %v7464 = vmul.f32 %v7460, 0.2
  %v7465 = vsel %vm7461, %v7459, %v7463
  %v7466 = vsel %vm7462, %v7460, %v7464
  %v7467 = vld [vmem:[%s8] sm:$0xff]
  %v7468 = vld [vmem:[%s8 + $0x8] sm:$0xff]
  %7471 = vrot.lane.b32.xlu0 %v7467, 8
  %v7472 = vpop.permute.xlu0 %7471
  %7473 = vrot.lane.b32.xlu0 %v7468, 8
  %v7474 = vpop.permute.xlu0 %7473
  %vm7477 = vcmask 64512
  %v7478 = vsel %vm7477, %v7467, %v7472
  %v7479 = vsel %vm7477, %v7468, %v7474
  %v7480 = vmul.f32 %v7465, %v7478
  %v7481 = vmul.f32 %v7466, %v7479
  %v7482 = vsel %vm524, %v7480, 0.0
  %v7483 = vsel %vm524, %v7481, 0.0
  %v7484 = vadd.f32 %v7482, %v7483
  %v7485 = vrot.slane %v7484, 4
  %v7486 = vadd.f32 %v7484, %v7485
  %v7487 = vrot.slane %v7486, 2
  %v7488 = vadd.f32 %v7486, %v7487
  %v7489 = vrot.slane %v7488, 1
  %v7490 = vadd.f32 %v7488, %v7489
  %v7491 = vsel %vm7477, %v7490, 0.0
  %7492 = vadd.xlane.f32.xlu0 %v7491
  %v7493 = vpop.xlane.xlu0 %7492
  %7495 = vrot.lane.b32.xlu0 %v7490, 120
  %v7496 = vpop.permute.xlu0 %7495
  %v7498 = vsel %vm7477, %v7496, 0.0
  %7499 = vadd.xlane.f32.xlu0 %v7498
  %v7500 = vpop.xlane.xlu0 %7499
  %vm7501 = vcmask 1040384
  %v7502 = vsel %vm7501, %v7493, %v7500
  %v7503 = vld [vmem:[#allocation3] sm:$0x1]
  %v7505 = vlaneseq
  %v7506 = vshrl.u32 %v7505, 7
  %v7507 = vsub.s32 0, %v7506
  %v7508 = vrot.slane %v7503, %v7507
  %v7510 = vadd.f32 %v7502, %v7508
  %vm7511 = vcmask 1024
  %7512 = vst.msk [vmem:[%s10] sm:$0x3] %vm7511, %v7510
  // Predicated region
  $region42: #{was_dis_forward.3} parent=0 // pred_check
    _
  $region43: #{was_dis_forward.3} parent=0 // pred_check_branch
    %7514 = sbr.rel (0) target = $region45
  $region44: #{was_dis_forward.3} parent=0 // pred_region
    _
  $region45: #{was_dis_forward.3} parent=0 // pred_fallthru
    _
  // Predicated region
  $region46: #{was_dis_forward.3} parent=0 // pred_check
    _
  $region47: #{was_dis_forward.3} parent=0 // pred_check_branch
    %7516 = sbr.rel (0) target = $region49
  $region48: #{was_dis_forward.3} parent=0 // pred_region
    _
  $region49: #{was_dis_forward.3} parent=0 // pred_fallthru
    _

</llo_original>
